<compile_context>
chip_gen: v7x
topology: tpu7x:2x2x1
jax: 0.10.0
libtpu: 0.0.40
codegen_flags: <defaults>
</compile_context>

<pallas_src>
import numpy as np
import jax
import jax.numpy as jnp
from jax.experimental import pallas as pl
from jax.experimental.pallas import tpu as pltpu


_MiB = 1 << 20
_PHYS_VMEM = None


def _physical_vmem_bytes():
    """Per-TensorCore physical VMEM (128 MiB on v5e/v6e, 64 MiB on v7x)."""
    global _PHYS_VMEM
    if _PHYS_VMEM is None:
        phys = 0
        try:
            phys = int(pltpu.get_tpu_info().vmem_capacity_bytes)
        except Exception:
            phys = 0
        if phys <= 0:
            try:
                kind = jax.devices()[0].device_kind.lower()
                phys = 64 * _MiB if "7" in kind else 128 * _MiB
            except Exception:
                phys = 64 * _MiB
        _PHYS_VMEM = phys
    return _PHYS_VMEM


def _vmem_cap_bytes():
    """Generation-dependent scoped-VMEM budget: ~48 MiB (v7x), ~96 MiB (v5e/v6e)."""
    return int(min(96 * _MiB, max(32 * _MiB, (_physical_vmem_bytes() * 3) // 4)))


def _rup(x, m):
    return (x + m - 1) // m * m


def _choose_block_m(M, rows_per_item, target):
    """Row-tile size for the (M, K) @ (K, N) matmul.

    Prefers tiles that (a) are whole multiples of `rows_per_item` (one image's
    worth of output rows) so every tile divides M exactly and no masked tail is
    DMA'd/computed, (b) are multiples of 8 (sublane alignment), (c) are as large
    as possible up to `target`, and (d) leave >= 2 grid steps so both v7x
    TensorCores get work.
    """
    rows_per_item = max(1, rows_per_item)
    n_items = max(1, M // rows_per_item)
    best = None
    best_multi = None
    for k in range(1, n_items + 1):
        bm = k * rows_per_item
        if bm > target:
            break
        if n_items % k:
            continue
        if bm != M and bm % 8:
            continue
        best = bm
        if n_items // k >= 2:
            best_multi = bm
    if best_multi is not None:
        return best_multi
    if best is None:
        best = M if M <= target else max(8, target - target % 8)
    if best == M and M >= 256:
        # No exactly-tiling way to get >= 2 grid steps: force a split so both
        # v7x TensorCores get work (the tail tile is masked -> correct).
        half = _rup(-(-M // 2), 8)
        if half < M:
            return half
    return best


def _tile_vmem_bytes(bm, K, N, x_itemsize, w_itemsize, o_itemsize):
    """Conservative per-grid-step VMEM footprint (double-buffered)."""
    kp = _rup(K, 128)
    npad = _rup(N, 128)
    bmp = _rup(bm, 8)
    return 2 * (bmp * kp * x_itemsize        # streamed x tile
                + kp * npad * w_itemsize     # resident weight (2 bufs assumed)
                + bmp * npad * o_itemsize    # output tile
                + npad * 4)                  # f32 bias


# ----------------------------- Pallas kernel ------------------------------ #
def _matmul_bias_relu_kernel(x_ref, w_ref, b_ref, o_ref):
    # x: (TM, K) bf16, w: (K, N) bf16, b: (1, N) f32 -> ReLU(x @ w + b): (TM, N)
    acc = jnp.dot(x_ref[...], w_ref[...], preferred_element_type=jnp.float32)
    o_ref[...] = jnp.maximum(acc + b_ref[...], 0.0).astype(o_ref.dtype)


def matmul_bias_relu(x, w, b, *, rows_per_item=1, target_rows=1024,
                     out_dtype=None):
    """ReLU(x @ w + b): row-tiled Pallas kernel with VMEM-resident w / b."""
    M, K = x.shape
    K2, N = w.shape
    assert K == K2, (K, K2)
    if out_dtype is None:
        out_dtype = x.dtype
    b2 = b.reshape(1, N).astype(jnp.float32)

    cap = _vmem_cap_bytes()
    bm = _choose_block_m(M, rows_per_item, target_rows)
    itemsizes = (x.dtype.itemsize, w.dtype.itemsize, jnp.dtype(out_dtype).itemsize)
    fp = _tile_vmem_bytes(bm, K, N, *itemsizes)
    # Defensive shrink: never exceed the generation-dependent VMEM budget.
    while fp > int(0.85 * cap) and bm > 8:
        bm = max(8, (bm // 2) // 8 * 8)
        fp = _tile_vmem_bytes(bm, K, N, *itemsizes)
    assert fp <= cap, ("per-step VMEM footprint exceeds budget", fp, cap)

    grid_m = pl.cdiv(M, bm)
    return pl.pallas_call(
        _matmul_bias_relu_kernel,
        out_shape=jax.ShapeDtypeStruct((M, N), out_dtype),
        grid=(grid_m,),
        in_specs=[
            # Streamed bf16 row tiles of x (double-buffered by the pipeline).
            pl.BlockSpec((bm, K), lambda i: (i, 0)),
            # Weight / bias stay VMEM-resident across the whole M grid.
            pl.BlockSpec((K, N), lambda i: (0, 0)),
            pl.BlockSpec((1, N), lambda i: (0, 0)),
        ],
        out_specs=pl.BlockSpec((bm, N), lambda i: (i, 0)),
        compiler_params=pltpu.CompilerParams(
            dimension_semantics=("parallel",),   # shard row tiles across TCs (v7x)
            vmem_limit_bytes=int(cap),
        ),
    )(x, w, b2)


# ------------------------------ conv via im2col ---------------------------- #
def _im2col(x_nhwc, k, stride):
    N, H, W, C = x_nhwc.shape
    Hout = (H - k) // stride + 1
    Wout = (W - k) // stride + 1
    patches = []
    for i in range(k):
        for j in range(k):
            patches.append(
                x_nhwc[:, i:i + stride * Hout:stride, j:j + stride * Wout:stride, :]
            )
    p = jnp.stack(patches, axis=3)                  # (N, Hout, Wout, k*k, C)
    return p.reshape(N * Hout * Wout, k * k * C), Hout, Wout


def conv2d_relu(x_nhwc, w_mat, b, k, stride, *, target_rows=2048):
    """VALID conv (stride) + bias + ReLU; the matmul runs in the Pallas kernel.

    w_mat is pre-packed to (k*k*Cin, Cout) matching the im2col column order.
    """
    # TODO(synk): fuse this patch extraction into the Pallas kernel (manual
    # windowed DMA + on-chip patch build) so the expanded im2col matrix never
    # round-trips through HBM; with bf16 streaming it is the dominant HBM term.
    cols, Hout, Wout = _im2col(x_nhwc, k, stride)
    out = matmul_bias_relu(cols, w_mat, b,
                           rows_per_item=Hout * Wout,
                           target_rows=target_rows,
                           out_dtype=jnp.bfloat16)
    N = x_nhwc.shape[0]
    return out.reshape(N, Hout, Wout, w_mat.shape[1])


# ------------------------------ parameters --------------------------------- #
def init_params(key, inputlen=4, hidden_size=512):
    """PyTorch-layout parameters (Conv2d: OIHW, Linear: (out, in)), f32."""
    ks = jax.random.split(key, 8)

    def w(k, shape, fan_in):
        return (jax.random.normal(k, shape, jnp.float32) / np.sqrt(fan_in)).astype(
            jnp.float32
        )

    return {
        "w1": w(ks[0], (32, inputlen, 8, 8), inputlen * 8 * 8),
        "b1": w(ks[1], (32,), 32),
        "w2": w(ks[2], (64, 32, 4, 4), 32 * 4 * 4),
        "b2": w(ks[3], (64,), 64),
        "w3": w(ks[4], (64, 64, 3, 3), 64 * 3 * 3),
        "b3": w(ks[5], (64,), 64),
        "wfc": w(ks[6], (hidden_size, 64 * 7 * 7), 64 * 7 * 7),
        "bfc": w(ks[7], (hidden_size,), hidden_size),
    }


def prepare_params(params):
    """One-time packing of PyTorch-layout params into matmul-ready bf16 layout."""
    def pack_conv(w_oihw):
        Cout, Cin, kh, kw = w_oihw.shape
        # (kh, kw, Cin, Cout) matches the im2col column ordering.
        return jnp.transpose(w_oihw, (2, 3, 1, 0)).reshape(
            kh * kw * Cin, Cout).astype(jnp.bfloat16)

    wfc = params["wfc"]                       # (hidden, 64*7*7), (C,H,W) order
    hidden = wfc.shape[0]
    # Permute rows to NHWC-flatten order so the forward pass needs no
    # activation transpose before the FC layer: row (h*7*64 + w*64 + c).
    wfc_nhwc = jnp.transpose(wfc.reshape(hidden, 64, 7, 7), (2, 3, 1, 0))
    return {
        "w1": pack_conv(params["w1"]), "b1": params["b1"],
        "w2": pack_conv(params["w2"]), "b2": params["b2"],
        "w3": pack_conv(params["w3"]), "b3": params["b3"],
        "wfc": wfc_nhwc.reshape(7 * 7 * 64, hidden).astype(jnp.bfloat16),
        "bfc": params["bfc"],
    }


# ------------------------------ model -------------------------------------- #
def atari_cnn_forward(packed, x_nchw):
    # NCHW -> NHWC and cast to bf16 once, so all streamed data is half-width.
    x = jnp.transpose(x_nchw, (0, 2, 3, 1)).astype(jnp.bfloat16)
    x = conv2d_relu(x, packed["w1"], packed["b1"], 8, 4)         # (N, 20, 20, 32)
    x = conv2d_relu(x, packed["w2"], packed["b2"], 4, 2)         # (N, 9, 9, 64)
    x = conv2d_relu(x, packed["w3"], packed["b3"], 3, 1)         # (N, 7, 7, 64)
    # FC weight rows are pre-permuted to NHWC flatten order -> plain reshape,
    # no per-forward transpose (semantics still match PyTorch's NCHW flatten).
    x = x.reshape(x.shape[0], -1)                                # (N, 3136)
    fc_target = 512 if _vmem_cap_bytes() < 64 * _MiB else 1024   # v7x vs v5e/v6e
    return matmul_bias_relu(x, packed["wfc"], packed["bfc"],
                            rows_per_item=1, target_rows=fc_target,
                            out_dtype=jnp.float32)               # (N, hidden)


# ------------------------------ reference ---------------------------------- #
def _reference_forward(params, x_nchw):
    def conv(x, w, b, s):
        y = jax.lax.conv_general_dilated(
            x, w, (s, s), "VALID", dimension_numbers=("NCHW", "OIHW", "NCHW")
        )
        return jax.nn.relu(y + b[None, :, None, None])

    x = conv(x_nchw, params["w1"], params["b1"], 4)
    x = conv(x, params["w2"], params["b2"], 2)
    x = conv(x, params["w3"], params["b3"], 1)
    x = x.reshape(x.shape[0], -1)
    return jax.nn.relu(x @ params["wfc"].T + params["bfc"])


if __name__ == "__main__":
    key = jax.random.PRNGKey(0)
    k_param, k_x = jax.random.split(key)
    # Spatial size must be 84x84 so the conv stack yields 7x7x64 for the FC
    # layer; batch/channels kept small for the smoke test.
    x = jax.random.normal(k_x, (2, 4, 84, 84), jnp.float32)
    params = init_params(k_param, inputlen=4, hidden_size=512)
    packed = prepare_params(params)   # one-time weight packing (outside forward)

    fwd = jax.jit(atari_cnn_forward)
    out = jax.block_until_ready(fwd(packed, x))
    assert out.shape == (2, 512), out.shape

    # bf16-streamed matmuls (f32 accumulate) vs the pure-f32 XLA reference:
    # expect ~1% relative deviation, so check at 5e-2.
    ref = jax.block_until_ready(_reference_forward(params, x))
    np.testing.assert_allclose(np.asarray(out), np.asarray(ref), rtol=5e-2, atol=5e-2)

    print("KERNEL_OK")
</pallas_src>

<mosaic_0001>
module attributes {stable_mosaic.version = 11 : i64} {
  func.func @_matmul_bias_relu_kernel(%arg0: i32, %arg1: memref<400x256xbf16, #tpu.memory_space<vmem>>, %arg2: memref<256x32xbf16, #tpu.memory_space<vmem>>, %arg3: memref<1x32xf32, #tpu.memory_space<vmem>>, %arg4: memref<400x32xbf16, #tpu.memory_space<vmem>>) attributes {dimension_semantics = [#tpu.dimension_semantics<parallel>], iteration_bounds = array<i64: 2>, scalar_prefetch = 0 : i64, scratch_operands = 0 : i64, tpu.core_type = #tpu.core_type<tc>, window_params = [{transform_indices = @transform_0, window_bounds = array<i64: 400, 256>}, {pipeline_mode = #tpu.pipeline_mode<synchronous>, transform_indices = @transform_1, window_bounds = array<i64: 256, 32>}, {pipeline_mode = #tpu.pipeline_mode<synchronous>, transform_indices = @transform_2, window_bounds = array<i64: 1, 32>}, {transform_indices = @transform_3, window_bounds = array<i64: 400, 32>}]} {
    %c0 = arith.constant 0 : index
    %c0_0 = arith.constant 0 : index
    %0 = vector.load %arg1[%c0, %c0_0] : memref<400x256xbf16, #tpu.memory_space<vmem>>, vector<400x256xbf16>
    %c0_1 = arith.constant 0 : index
    %c0_2 = arith.constant 0 : index
    %1 = vector.load %arg2[%c0_1, %c0_2] : memref<256x32xbf16, #tpu.memory_space<vmem>>, vector<256x32xbf16>
    %cst = arith.constant dense<0.000000e+00> : vector<400x32xf32>
    %2 = tpu.matmul %0, %1, %cst {dimension_numbers = #tpu.dot_dimension_numbers<[1], [0], [0], [1], [0, 0, 1, 1], [], []>} : vector<400x256xbf16>, vector<256x32xbf16>, vector<400x32xf32> -> vector<400x32xf32>
    %c0_3 = arith.constant 0 : index
    %c0_4 = arith.constant 0 : index
    %3 = vector.load %arg3[%c0_3, %c0_4] : memref<1x32xf32, #tpu.memory_space<vmem>>, vector<1x32xf32>
    %4 = vector.broadcast %3 : vector<1x32xf32> to vector<400x32xf32>
    %5 = arith.addf %2, %4 : vector<400x32xf32>
    %cst_5 = arith.constant 0.000000e+00 : f32
    %6 = vector.broadcast %cst_5 : f32 to vector<400x32xf32>
    %7 = arith.maximumf %5, %6 : vector<400x32xf32>
    %8 = arith.truncf %7 : vector<400x32xf32> to vector<400x32xbf16>
    %c0_6 = arith.constant 0 : index
    %c0_7 = arith.constant 0 : index
    %9 = vector.load %arg4[%c0_6, %c0_7] : memref<400x32xbf16, #tpu.memory_space<vmem>>, vector<400x32xbf16>
    tpu.vector_store %arg4[%c0_6, %c0_7], %8 {strides = array<i32>} : memref<400x32xbf16, #tpu.memory_space<vmem>>, vector<400x32xbf16>,
    return
  }
  func.func @transform_0(%arg0: i32) -> (i32, i32) {
    %c0_i32 = arith.constant 0 : i32
    %c0_i32_0 = arith.constant 0 : i32
    return %arg0, %c0_i32 : i32, i32
  }
  func.func @transform_1(%arg0: i32) -> (i32, i32) {
    %c0_i32 = arith.constant 0 : i32
    %c0_i32_0 = arith.constant 0 : i32
    %c0_i32_1 = arith.constant 0 : i32
    return %c0_i32, %c0_i32_0 : i32, i32
  }
  func.func @transform_2(%arg0: i32) -> (i32, i32) {
    %c0_i32 = arith.constant 0 : i32
    %c0_i32_0 = arith.constant 0 : i32
    %c0_i32_1 = arith.constant 0 : i32
    return %c0_i32, %c0_i32_0 : i32, i32
  }
  func.func @transform_3(%arg0: i32) -> (i32, i32) {
    %c0_i32 = arith.constant 0 : i32
    %c0_i32_0 = arith.constant 0 : i32
    return %arg0, %c0_i32 : i32, i32
  }
}

module attributes {stable_mosaic.version = 11 : i64} {
  func.func @_matmul_bias_relu_kernel(%arg0: i32, %arg1: memref<162x512xbf16, #tpu.memory_space<vmem>>, %arg2: memref<512x64xbf16, #tpu.memory_space<vmem>>, %arg3: memref<1x64xf32, #tpu.memory_space<vmem>>, %arg4: memref<162x64xbf16, #tpu.memory_space<vmem>>) attributes {dimension_semantics = [#tpu.dimension_semantics<parallel>], iteration_bounds = array<i64: 1>, scalar_prefetch = 0 : i64, scratch_operands = 0 : i64, tpu.core_type = #tpu.core_type<tc>, window_params = [{transform_indices = @transform_0, window_bounds = array<i64: 162, 512>}, {pipeline_mode = #tpu.pipeline_mode<synchronous>, transform_indices = @transform_1, window_bounds = array<i64: 512, 64>}, {pipeline_mode = #tpu.pipeline_mode<synchronous>, transform_indices = @transform_2, window_bounds = array<i64: 1, 64>}, {transform_indices = @transform_3, window_bounds = array<i64: 162, 64>}]} {
    %c0 = arith.constant 0 : index
    %c0_0 = arith.constant 0 : index
    %0 = vector.load %arg1[%c0, %c0_0] : memref<162x512xbf16, #tpu.memory_space<vmem>>, vector<162x512xbf16>
    %c0_1 = arith.constant 0 : index
    %c0_2 = arith.constant 0 : index
    %1 = vector.load %arg2[%c0_1, %c0_2] : memref<512x64xbf16, #tpu.memory_space<vmem>>, vector<512x64xbf16>
    %cst = arith.constant dense<0.000000e+00> : vector<162x64xf32>
    %2 = tpu.matmul %0, %1, %cst {dimension_numbers = #tpu.dot_dimension_numbers<[1], [0], [0], [1], [0, 0, 1, 1], [], []>} : vector<162x512xbf16>, vector<512x64xbf16>, vector<162x64xf32> -> vector<162x64xf32>
    %c0_3 = arith.constant 0 : index
    %c0_4 = arith.constant 0 : index
    %3 = vector.load %arg3[%c0_3, %c0_4] : memref<1x64xf32, #tpu.memory_space<vmem>>, vector<1x64xf32>
    %4 = vector.broadcast %3 : vector<1x64xf32> to vector<162x64xf32>
    %5 = arith.addf %2, %4 : vector<162x64xf32>
    %cst_5 = arith.constant 0.000000e+00 : f32
    %6 = vector.broadcast %cst_5 : f32 to vector<162x64xf32>
    %7 = arith.maximumf %5, %6 : vector<162x64xf32>
    %8 = arith.truncf %7 : vector<162x64xf32> to vector<162x64xbf16>
    %c0_6 = arith.constant 0 : index
    %c0_7 = arith.constant 0 : index
    %9 = vector.load %arg4[%c0_6, %c0_7] : memref<162x64xbf16, #tpu.memory_space<vmem>>, vector<162x64xbf16>
    tpu.vector_store %arg4[%c0_6, %c0_7], %8 {strides = array<i32>} : memref<162x64xbf16, #tpu.memory_space<vmem>>, vector<162x64xbf16>,
    return
  }
  func.func @transform_0(%arg0: i32) -> (i32, i32) {
    %c0_i32 = arith.constant 0 : i32
    %c0_i32_0 = arith.constant 0 : i32
    return %arg0, %c0_i32 : i32, i32
  }
  func.func @transform_1(%arg0: i32) -> (i32, i32) {
    %c0_i32 = arith.constant 0 : i32
    %c0_i32_0 = arith.constant 0 : i32
    %c0_i32_1 = arith.constant 0 : i32
    return %c0_i32, %c0_i32_0 : i32, i32
  }
  func.func @transform_2(%arg0: i32) -> (i32, i32) {
    %c0_i32 = arith.constant 0 : i32
    %c0_i32_0 = arith.constant 0 : i32
    %c0_i32_1 = arith.constant 0 : i32
    return %c0_i32, %c0_i32_0 : i32, i32
  }
  func.func @transform_3(%arg0: i32) -> (i32, i32) {
    %c0_i32 = arith.constant 0 : i32
    %c0_i32_0 = arith.constant 0 : i32
    return %arg0, %c0_i32 : i32, i32
  }
}

module attributes {stable_mosaic.version = 11 : i64} {
  func.func @_matmul_bias_relu_kernel(%arg0: i32, %arg1: memref<98x576xbf16, #tpu.memory_space<vmem>>, %arg2: memref<576x64xbf16, #tpu.memory_space<vmem>>, %arg3: memref<1x64xf32, #tpu.memory_space<vmem>>, %arg4: memref<98x64xbf16, #tpu.memory_space<vmem>>) attributes {dimension_semantics = [#tpu.dimension_semantics<parallel>], iteration_bounds = array<i64: 1>, scalar_prefetch = 0 : i64, scratch_operands = 0 : i64, tpu.core_type = #tpu.core_type<tc>, window_params = [{transform_indices = @transform_0, window_bounds = array<i64: 98, 576>}, {pipeline_mode = #tpu.pipeline_mode<synchronous>, transform_indices = @transform_1, window_bounds = array<i64: 576, 64>}, {pipeline_mode = #tpu.pipeline_mode<synchronous>, transform_indices = @transform_2, window_bounds = array<i64: 1, 64>}, {transform_indices = @transform_3, window_bounds = array<i64: 98, 64>}]} {
    %c0 = arith.constant 0 : index
    %c0_0 = arith.constant 0 : index
    %0 = vector.load %arg1[%c0, %c0_0] : memref<98x576xbf16, #tpu.memory_space<vmem>>, vector<98x576xbf16>
    %c0_1 = arith.constant 0 : index
    %c0_2 = arith.constant 0 : index
    %1 = vector.load %arg2[%c0_1, %c0_2] : memref<576x64xbf16, #tpu.memory_space<vmem>>, vector<576x64xbf16>
    %cst = arith.constant dense<0.000000e+00> : vector<98x64xf32>
    %2 = tpu.matmul %0, %1, %cst {dimension_numbers = #tpu.dot_dimension_numbers<[1], [0], [0], [1], [0, 0, 1, 1], [], []>} : vector<98x576xbf16>, vector<576x64xbf16>, vector<98x64xf32> -> vector<98x64xf32>
    %c0_3 = arith.constant 0 : index
    %c0_4 = arith.constant 0 : index
    %3 = vector.load %arg3[%c0_3, %c0_4] : memref<1x64xf32, #tpu.memory_space<vmem>>, vector<1x64xf32>
    %4 = vector.broadcast %3 : vector<1x64xf32> to vector<98x64xf32>
    %5 = arith.addf %2, %4 : vector<98x64xf32>
    %cst_5 = arith.constant 0.000000e+00 : f32
    %6 = vector.broadcast %cst_5 : f32 to vector<98x64xf32>
    %7 = arith.maximumf %5, %6 : vector<98x64xf32>
    %8 = arith.truncf %7 : vector<98x64xf32> to vector<98x64xbf16>
    %c0_6 = arith.constant 0 : index
    %c0_7 = arith.constant 0 : index
    %9 = vector.load %arg4[%c0_6, %c0_7] : memref<98x64xbf16, #tpu.memory_space<vmem>>, vector<98x64xbf16>
    tpu.vector_store %arg4[%c0_6, %c0_7], %8 {strides = array<i32>} : memref<98x64xbf16, #tpu.memory_space<vmem>>, vector<98x64xbf16>,
    return
  }
  func.func @transform_0(%arg0: i32) -> (i32, i32) {
    %c0_i32 = arith.constant 0 : i32
    %c0_i32_0 = arith.constant 0 : i32
    return %arg0, %c0_i32 : i32, i32
  }
  func.func @transform_1(%arg0: i32) -> (i32, i32) {
    %c0_i32 = arith.constant 0 : i32
    %c0_i32_0 = arith.constant 0 : i32
    %c0_i32_1 = arith.constant 0 : i32
    return %c0_i32, %c0_i32_0 : i32, i32
  }
  func.func @transform_2(%arg0: i32) -> (i32, i32) {
    %c0_i32 = arith.constant 0 : i32
    %c0_i32_0 = arith.constant 0 : i32
    %c0_i32_1 = arith.constant 0 : i32
    return %c0_i32, %c0_i32_0 : i32, i32
  }
  func.func @transform_3(%arg0: i32) -> (i32, i32) {
    %c0_i32 = arith.constant 0 : i32
    %c0_i32_0 = arith.constant 0 : i32
    return %arg0, %c0_i32 : i32, i32
  }
}

module attributes {stable_mosaic.version = 11 : i64} {
  func.func @_matmul_bias_relu_kernel(%arg0: i32, %arg1: memref<2x3136xbf16, #tpu.memory_space<vmem>>, %arg2: memref<3136x512xbf16, #tpu.memory_space<vmem>>, %arg3: memref<1x512xf32, #tpu.memory_space<vmem>>, %arg4: memref<2x512xf32, #tpu.memory_space<vmem>>) attributes {dimension_semantics = [#tpu.dimension_semantics<parallel>], iteration_bounds = array<i64: 1>, scalar_prefetch = 0 : i64, scratch_operands = 0 : i64, tpu.core_type = #tpu.core_type<tc>, window_params = [{transform_indices = @transform_0, window_bounds = array<i64: 2, 3136>}, {pipeline_mode = #tpu.pipeline_mode<synchronous>, transform_indices = @transform_1, window_bounds = array<i64: 3136, 512>}, {pipeline_mode = #tpu.pipeline_mode<synchronous>, transform_indices = @transform_2, window_bounds = array<i64: 1, 512>}, {transform_indices = @transform_3, window_bounds = array<i64: 2, 512>}]} {
    %c0 = arith.constant 0 : index
    %c0_0 = arith.constant 0 : index
    %0 = vector.load %arg1[%c0, %c0_0] : memref<2x3136xbf16, #tpu.memory_space<vmem>>, vector<2x3136xbf16>
    %c0_1 = arith.constant 0 : index
    %c0_2 = arith.constant 0 : index
    %1 = vector.load %arg2[%c0_1, %c0_2] : memref<3136x512xbf16, #tpu.memory_space<vmem>>, vector<3136x512xbf16>
    %cst = arith.constant dense<0.000000e+00> : vector<2x512xf32>
    %2 = tpu.matmul %0, %1, %cst {dimension_numbers = #tpu.dot_dimension_numbers<[1], [0], [0], [1], [0, 0, 1, 1], [], []>} : vector<2x3136xbf16>, vector<3136x512xbf16>, vector<2x512xf32> -> vector<2x512xf32>
    %c0_3 = arith.constant 0 : index
    %c0_4 = arith.constant 0 : index
    %3 = vector.load %arg3[%c0_3, %c0_4] : memref<1x512xf32, #tpu.memory_space<vmem>>, vector<1x512xf32>
    %4 = vector.broadcast %3 : vector<1x512xf32> to vector<2x512xf32>
    %5 = arith.addf %2, %4 : vector<2x512xf32>
    %cst_5 = arith.constant 0.000000e+00 : f32
    %6 = vector.broadcast %cst_5 : f32 to vector<2x512xf32>
    %7 = arith.maximumf %5, %6 : vector<2x512xf32>
    %c0_6 = arith.constant 0 : index
    %c0_7 = arith.constant 0 : index
    %8 = vector.load %arg4[%c0_6, %c0_7] : memref<2x512xf32, #tpu.memory_space<vmem>>, vector<2x512xf32>
    tpu.vector_store %arg4[%c0_6, %c0_7], %7 {strides = array<i32>} : memref<2x512xf32, #tpu.memory_space<vmem>>, vector<2x512xf32>,
    return
  }
  func.func @transform_0(%arg0: i32) -> (i32, i32) {
    %c0_i32 = arith.constant 0 : i32
    %c0_i32_0 = arith.constant 0 : i32
    return %arg0, %c0_i32 : i32, i32
  }
  func.func @transform_1(%arg0: i32) -> (i32, i32) {
    %c0_i32 = arith.constant 0 : i32
    %c0_i32_0 = arith.constant 0 : i32
    %c0_i32_1 = arith.constant 0 : i32
    return %c0_i32, %c0_i32_0 : i32, i32
  }
  func.func @transform_2(%arg0: i32) -> (i32, i32) {
    %c0_i32 = arith.constant 0 : i32
    %c0_i32_0 = arith.constant 0 : i32
    %c0_i32_1 = arith.constant 0 : i32
    return %c0_i32, %c0_i32_0 : i32, i32
  }
  func.func @transform_3(%arg0: i32) -> (i32, i32) {
    %c0_i32 = arith.constant 0 : i32
    %c0_i32_0 = arith.constant 0 : i32
    return %arg0, %c0_i32 : i32, i32
  }
}

</mosaic_0001>

<llo_original>
// kernel: atari_cnn_forward.4
$region0: #{atari_cnn_forward.4}
  #allocation0 [shape = 'u32[]', space=smem, size = 0x4, offset = 0x4, fixed_abs, tag = 'smem constant byte address 0x4 - core index']
  #allocation1 [shape = 'u32[144,128]{1,0:T(1,128)}', space=vmem, size = 0x12000, scoped, tag = 'internal scratch']
  %s0 = inlined_call_operand.hbm [shape: bf16[800,256], index: 0, kind: input, shape index: {}]
  %s1 = inlined_call_operand.hbm [shape: bf16[256,32], index: 1, kind: input, shape index: {}]
  %s2 = inlined_call_operand.hbm [shape: f32[1,32], index: 2, kind: input, shape index: {}]
  %s3 = inlined_call_operand.hbm [shape: bf16[800,32], index: 3, kind: output, shape index: {}]
  %s4 = sld [smem:[#allocation0]]
  $region57: #{atari_cnn_forward.4} parent=0
    _
  %s6 = ssub.s32 1, %s4
  %s7 = scalar_select 0, %s6, %s4
  $region1: #{atari_cnn_forward.4} parent=0
    #allocation2 [shape = 'u8[409600]{0}', space=vmem, size = 0x64000, scoped, tag = 'input window, operand 0']
    #allocation3 [shape = 's32[2]{0}', space=sflag, size = 0x8, scoped, tag = 'scoped memory for atari_cnn_forward.4']
    #allocation4 [shape = 's32[2]{0}', space=sflag, size = 0x8, scoped, tag = 'scoped memory for atari_cnn_forward.4']
    #allocation5 [shape = 'u8[65536]{0}', space=vmem, size = 0x10000, scoped, tag = 'input window, operand 1, single buffered']
    #allocation6 [shape = 's32[1]{0}', space=sflag, size = 0x4, scoped, tag = 'scoped memory for atari_cnn_forward.4']
    #allocation7 [shape = 'u8[512]{0}', space=vmem, size = 0x400, scoped, tag = 'input window, operand 2, single buffered']
    #allocation8 [shape = 'u8[204800]{0}', space=vmem, size = 0x32000, scoped, tag = 'output window, operand 0']
    %8 = vsyncpa [#allocation3], 0
    %s9 = scalar_lea.sflag [#allocation3], 1
    %10 = vsyncpa %s9, 0
    %11 = vsyncpa [#allocation6], 0
    %12 = vsyncpa [#allocation4], 0
    %s13 = scalar_lea.sflag [#allocation4], 1
    %14 = vsyncpa %s13, 0
    loop: start=0, step=1, limit=4
    $region2: #{atari_cnn_forward.4} parent=1 // loop_pre_header
      _
    $region3: #{atari_cnn_forward.4} parent=1 // loop_header
      %s16 = sphi 0, %s20
      %p17 = scmp.ge.s32.totalorder %s16, 4
      %s26 = sphi 0, %s28
      %s29 = sphi 0, %s26
      %s30 = sphi 0, %s29
      %s46 = sphi 0, %s30
      %s50 = sphi 0, %s50
      %s52 = sphi 0, %s50
      %s53 = sphi 0, %s52
      %s67 = sphi 0, %s53
      %s71 = sphi 0, %s71
      %s73 = sphi 0, %s71
      %s74 = sphi 0, %s73
      %s88 = sphi 0, %s74
      %s94 = sphi 0, %s96
      %s97 = sphi 0, %s94
      %s98 = sphi 0, %s97
      %s114 = sphi 0, %s98
    $region4: #{atari_cnn_forward.4} parent=1 // loop_header_branch
      %19 = sbr.rel (%p17) target = $region8
    $region5: #{atari_cnn_forward.4} parent=1 // loop_body
      %s21 = ssub.s32 %s16, 1
      %s22 = ssub.s32 %s16, 2
      %s23 = sadd.s32 %s16, 1
      %s24 = ssub.s32 %s16, %s23
      %p25 = scmp.eq.s32.totalorder %s24, 0
      %s27 = sadd.s32 %s26, 1
      %s28 = scalar_select %p25, %s26, %s27
      %p31 = pneg %p25
      %p32 = scmp.eq.s32.totalorder %s16, 1
      %p33 = por %p31, %p32
      %p34 = scmp.ne.s32.totalorder %s26, %s29
      %p35 = scmp.eq.s32.totalorder %s16, 0
      %p36 = por %p34, %p35
      %p37 = scmp.ne.s32.totalorder %s26, %s29
      %p38 = scmp.eq.s32.totalorder %s21, 1
      %p39 = por %p37, %p38
      %p40 = scmp.ne.s32.totalorder %s29, %s30
      %p41 = scmp.eq.s32.totalorder %s21, 0
      %p42 = por %p40, %p41
      %p43 = scmp.ne.s32.totalorder %s29, %s30
      %p44 = scmp.eq.s32.totalorder %s22, 1
      %p45 = por %p43, %p44
      %p47 = scmp.ne.s32.totalorder %s30, %s46
      %p48 = scmp.eq.s32.totalorder %s22, 0
      %p49 = por %p47, %p48
      %s51 = sadd.s32 %s50, 1
      %p54 = scmp.eq.s32.totalorder %s16, 1
      %p55 = scmp.ne.s32.totalorder %s50, %s52
      %p56 = scmp.eq.s32.totalorder %s16, 0
      %p57 = por %p55, %p56
      %p58 = scmp.ne.s32.totalorder %s50, %s52
      %p59 = scmp.eq.s32.totalorder %s21, 1
      %p60 = por %p58, %p59
      %p61 = scmp.ne.s32.totalorder %s52, %s53
      %p62 = scmp.eq.s32.totalorder %s21, 0
      %p63 = por %p61, %p62
      %p64 = scmp.ne.s32.totalorder %s52, %s53
      %p65 = scmp.eq.s32.totalorder %s22, 1
      %p66 = por %p64, %p65
      %p68 = scmp.ne.s32.totalorder %s53, %s67
      %p69 = scmp.eq.s32.totalorder %s22, 0
      %p70 = por %p68, %p69
      %s72 = sadd.s32 %s71, 1
      %p75 = scmp.eq.s32.totalorder %s16, 1
      %p76 = scmp.ne.s32.totalorder %s71, %s73
      %p77 = scmp.eq.s32.totalorder %s16, 0
      %p78 = por %p76, %p77
      %p79 = scmp.ne.s32.totalorder %s71, %s73
      %p80 = scmp.eq.s32.totalorder %s21, 1
      %p81 = por %p79, %p80
      %p82 = scmp.ne.s32.totalorder %s73, %s74
      %p83 = scmp.eq.s32.totalorder %s21, 0
      %p84 = por %p82, %p83
      %p85 = scmp.ne.s32.totalorder %s73, %s74
      %p86 = scmp.eq.s32.totalorder %s22, 1
      %p87 = por %p85, %p86
      %p89 = scmp.ne.s32.totalorder %s74, %s88
      %p90 = scmp.eq.s32.totalorder %s22, 0
      %p91 = por %p89, %p90
      %s92 = ssub.s32 %s16, %s23
      %p93 = scmp.eq.s32.totalorder %s92, 0
      %s95 = sadd.s32 %s94, 1
      %s96 = scalar_select %p93, %s94, %s95
      %p99 = pneg %p93
      %p100 = scmp.eq.s32.totalorder %s16, 1
      %p101 = por %p99, %p100
      %p102 = scmp.ne.s32.totalorder %s94, %s97
      %p103 = scmp.eq.s32.totalorder %s16, 0
      %p104 = por %p102, %p103
      %p105 = scmp.ne.s32.totalorder %s94, %s97
      %p106 = scmp.eq.s32.totalorder %s21, 1
      %p107 = por %p105, %p106
      %p108 = scmp.ne.s32.totalorder %s97, %s98
      %p109 = scmp.eq.s32.totalorder %s21, 0
      %p110 = por %p108, %p109
      %p111 = scmp.ne.s32.totalorder %s97, %s98
      %p112 = scmp.eq.s32.totalorder %s22, 1
      %p113 = por %p111, %p112
      %p115 = scmp.ne.s32.totalorder %s98, %s114
      %p116 = scmp.eq.s32.totalorder %s22, 0
      %p117 = por %p115, %p116
      %p118 = scmp.le.s32.totalorder 1, %s16
      %p119 = scmp.lt.s32.totalorder %s16, 3
      %p120 = pnand %p118, %p119
      %p121 = pneg %p120
      // Predicated region
      $region9: #{atari_cnn_forward.4} parent=5 // pred_check
        _
      $region10: #{atari_cnn_forward.4} parent=5 // pred_check_branch
        %123 = sbr.rel (%p120) target = $region12
      $region11: #{atari_cnn_forward.4} parent=5 // pred_region
        %s124 = ssub.s32 %s16, 1
        // Predicated region
        $region13: #{atari_cnn_forward.4} parent=11 // pred_check
          %p125 = pneg %p63
        $region14: #{atari_cnn_forward.4} parent=11 // pred_check_branch
          %127 = sbr.rel (%p125) target = $region16
        $region15: #{atari_cnn_forward.4} parent=11 // pred_region
          %s129 = ssub.s32 2048, 2048
          %130 = vsyncadd [#allocation6], %s129
          %s131 = sshll.u32 [#allocation5], 4
          %s132 = int_to_ptr.vmem [resolvable:$true] %s131
          %137 = dma.hbm_to_vmem [thread:$0]  %s1, 2048, %s132, [#allocation6], 64, 64, 4
        $region16: #{atari_cnn_forward.4} parent=11 // pred_fallthru
          _
        // Predicated region
        $region17: #{atari_cnn_forward.4} parent=11 // pred_check
          %p138 = pneg %p84
        $region18: #{atari_cnn_forward.4} parent=11 // pred_check_branch
          %140 = sbr.rel (%p138) target = $region20
        $region19: #{atari_cnn_forward.4} parent=11 // pred_region
          %s142 = ssub.s32 16, 16
          %143 = vsyncadd [#allocation6], %s142
          %s145 = sshll.u32 [#allocation7], 4
          %s146 = int_to_ptr.vmem [resolvable:$true] %s145
          %148 = dma.hbm_to_vmem [thread:$0]  %s2, 16, %s146, [#allocation6]
        $region20: #{atari_cnn_forward.4} parent=11 // pred_fallthru
          _
      $region12: #{atari_cnn_forward.4} parent=5 // pred_fallthru
        _
      %p149 = scmp.lt.s32.totalorder %s16, 2
      // Predicated region
      $region21: #{atari_cnn_forward.4} parent=5 // pred_check
        %p150 = pneg %p149
      $region22: #{atari_cnn_forward.4} parent=5 // pred_check_branch
        %152 = sbr.rel (%p150) target = $region24
      $region23: #{atari_cnn_forward.4} parent=5 // pred_region
        // Predicated region
        $region25: #{atari_cnn_forward.4} parent=23 // pred_check
          %p153 = pneg %p36
        $region26: #{atari_cnn_forward.4} parent=23 // pred_check_branch
          %155 = sbr.rel (%p153) target = $region28
        $region27: #{atari_cnn_forward.4} parent=23 // pred_region
          %s156 = sand.u32 %s26, 1
          %s157 = scalar_lea.sflag [#allocation3], %s156
          %s158 = sand.u32 %s26, 1
          %s159 = smul.addr %s158, 400
          %s160 = scalar_lea.vmem [#allocation2], %s159
          %s161 = smul.u32 50, %s16
          %s163 = ssub.s32 6400, 6400
          %164 = vsyncadd %s157, %s163
          %s165 = smul.addr %s161, 2
          %s166 = smul.addr %s165, 64
          %s167 = scalar_lea.hbm %s0, %s166
          %s168 = sshll.u32 %s160, 4
          %s169 = int_to_ptr.vmem [resolvable:$true] %s168
          %174 = dma.hbm_to_vmem [thread:$0]  %s167, 6400, %s169, %s157, 128, 128, 8
        $region28: #{atari_cnn_forward.4} parent=23 // pred_fallthru
          _
      $region24: #{atari_cnn_forward.4} parent=5 // pred_fallthru
        _
      %p175 = scmp.le.s32.totalorder 1, %s16
      %p176 = scmp.lt.s32.totalorder %s16, 3
      %p177 = pnand %p175, %p176
      %p178 = pneg %p177
      // Predicated region
      $region29: #{atari_cnn_forward.4} parent=5 // pred_check
        _
      $region30: #{atari_cnn_forward.4} parent=5 // pred_check_branch
        %180 = sbr.rel (%p177) target = $region32
      $region31: #{atari_cnn_forward.4} parent=5 // pred_region
        %s181 = ssub.s32 %s16, 1
        %s182 = sand.u32 %s29, 1
        %s183 = scalar_lea.sflag [#allocation3], %s182
        %s184 = sand.u32 %s29, 1
        %s185 = smul.addr %s184, 400
        %s186 = scalar_lea.vmem [#allocation2], %s185
        // Predicated region
        $region33: #{atari_cnn_forward.4} parent=31 // pred_check
          %p187 = pneg %p42
        $region34: #{atari_cnn_forward.4} parent=31 // pred_check_branch
          %189 = sbr.rel (%p187) target = $region36
        $region35: #{atari_cnn_forward.4} parent=31 // pred_region
          %190 = dma.done %s183, 6400
        $region36: #{atari_cnn_forward.4} parent=31 // pred_fallthru
          _
        // Predicated region
        $region37: #{atari_cnn_forward.4} parent=31 // pred_check
          %p191 = pneg %p63
        $region38: #{atari_cnn_forward.4} parent=31 // pred_check_branch
          %193 = sbr.rel (%p191) target = $region40
        $region39: #{atari_cnn_forward.4} parent=31 // pred_region
          %194 = dma.done [#allocation6], 2048
        $region40: #{atari_cnn_forward.4} parent=31 // pred_fallthru
          _
        // Predicated region
        $region41: #{atari_cnn_forward.4} parent=31 // pred_check
          %p195 = pneg %p84
        $region42: #{atari_cnn_forward.4} parent=31 // pred_check_branch
          %197 = sbr.rel (%p195) target = $region44
        $region43: #{atari_cnn_forward.4} parent=31 // pred_region
          %198 = dma.done [#allocation6], 16
        $region44: #{atari_cnn_forward.4} parent=31 // pred_fallthru
          _
        %s199 = sand.u32 %s29, 1
        %s200 = scalar_lea.sflag [#allocation3], %s199
        %s201 = sand.u32 %s29, 1
        %s202 = smul.addr %s201, 400
        %s203 = scalar_lea.vmem [#allocation2], %s202
        %p204 = pneg %p42
        %p205 = pneg %p39
        %p206 = pneg %p63
        %p207 = pneg %p60
        %p208 = pneg %p84
        %p209 = pneg %p81
        %p210 = pneg %p110
        %p211 = pneg %p107
        %s212 = sand.u32 %s97, 1
        %s213 = scalar_lea.sflag [#allocation4], %s212
        %s214 = sand.u32 %s97, 1
        %s215 = smul.addr %s214, 200
        %s216 = scalar_lea.vmem [#allocation8], %s215
        %s217 = smul.u32 50, %s21
        %s218 = smul.u32 50, %s21
        %v220 = vld [vmem:[%s186] sm:$0xff]
        %v221 = vld [vmem:[%s186 + $0x8] sm:$0xff]
        %v222 = vld [vmem:[%s186 + $0x10] sm:$0xff]
        %v223 = vld [vmem:[%s186 + $0x18] sm:$0xff]
        %v224 = vld [vmem:[%s186 + $0x20] sm:$0xff]
        %v225 = vld [vmem:[%s186 + $0x28] sm:$0xff]
        %v226 = vld [vmem:[%s186 + $0x30] sm:$0xff]
        %v227 = vld [vmem:[%s186 + $0x38] sm:$0xff]
        %v228 = vld [vmem:[%s186 + $0x40] sm:$0xff]
        %v229 = vld [vmem:[%s186 + $0x48] sm:$0xff]
        %v230 = vld [vmem:[%s186 + $0x50] sm:$0xff]
        %v231 = vld [vmem:[%s186 + $0x58] sm:$0xff]
        %v232 = vld [vmem:[%s186 + $0x60] sm:$0xff]
        %v233 = vld [vmem:[%s186 + $0x68] sm:$0xff]
        %v234 = vld [vmem:[%s186 + $0x70] sm:$0xff]
        %v235 = vld [vmem:[%s186 + $0x78] sm:$0xff]
        %v236 = vld [vmem:[%s186 + $0x80] sm:$0xff]
        %v237 = vld [vmem:[%s186 + $0x88] sm:$0xff]
        %v238 = vld [vmem:[%s186 + $0x90] sm:$0xff]
        %v239 = vld [vmem:[%s186 + $0x98] sm:$0xff]
        %v240 = vld [vmem:[%s186 + $0xa0] sm:$0xff]
        %v241 = vld [vmem:[%s186 + $0xa8] sm:$0xff]
        %v242 = vld [vmem:[%s186 + $0xb0] sm:$0xff]
        %v243 = vld [vmem:[%s186 + $0xb8] sm:$0xff]
        %v244 = vld [vmem:[%s186 + $0xc0] sm:$0xff]
        %v245 = vld [vmem:[%s186 + $0xc8] sm:$0xff]
        %v246 = vld [vmem:[%s186 + $0xd0] sm:$0xff]
        %v247 = vld [vmem:[%s186 + $0xd8] sm:$0xff]
        %v248 = vld [vmem:[%s186 + $0xe0] sm:$0xff]
        %v249 = vld [vmem:[%s186 + $0xe8] sm:$0xff]
        %v250 = vld [vmem:[%s186 + $0xf0] sm:$0xff]
        %v251 = vld [vmem:[%s186 + $0xf8] sm:$0xff]
        %v252 = vld [vmem:[%s186 + $0x100] sm:$0xff]
        %v253 = vld [vmem:[%s186 + $0x108] sm:$0xff]
        %v254 = vld [vmem:[%s186 + $0x110] sm:$0xff]
        %v255 = vld [vmem:[%s186 + $0x118] sm:$0xff]
        %v256 = vld [vmem:[%s186 + $0x120] sm:$0xff]
        %v257 = vld [vmem:[%s186 + $0x128] sm:$0xff]
        %v258 = vld [vmem:[%s186 + $0x130] sm:$0xff]
        %v259 = vld [vmem:[%s186 + $0x138] sm:$0xff]
        %v260 = vld [vmem:[%s186 + $0x140] sm:$0xff]
        %v261 = vld [vmem:[%s186 + $0x148] sm:$0xff]
        %v262 = vld [vmem:[%s186 + $0x150] sm:$0xff]
        %v263 = vld [vmem:[%s186 + $0x158] sm:$0xff]
        %v264 = vld [vmem:[%s186 + $0x160] sm:$0xff]
        %v265 = vld [vmem:[%s186 + $0x168] sm:$0xff]
        %v266 = vld [vmem:[%s186 + $0x170] sm:$0xff]
        %v267 = vld [vmem:[%s186 + $0x178] sm:$0xff]
        %v268 = vld [vmem:[%s186 + $0x180] sm:$0xff]
        %v269 = vld [vmem:[%s186 + $0x188] sm:$0xff]
        %v270 = vld [vmem:[#allocation5] sm:$0xf]
        %v271 = vld [vmem:[#allocation5 + $0x4] sm:$0xf]
        %v272 = vld [vmem:[#allocation5 + $0x8] sm:$0xf]
        %v273 = vld [vmem:[#allocation5 + $0xc] sm:$0xf]
        %v274 = vld [vmem:[#allocation5 + $0x10] sm:$0xf]
        %v275 = vld [vmem:[#allocation5 + $0x14] sm:$0xf]
        %v276 = vld [vmem:[#allocation5 + $0x18] sm:$0xf]
        %v277 = vld [vmem:[#allocation5 + $0x1c] sm:$0xf]
        %v278 = vld [vmem:[#allocation5 + $0x20] sm:$0xf]
        %v279 = vld [vmem:[#allocation5 + $0x24] sm:$0xf]
        %v280 = vld [vmem:[#allocation5 + $0x28] sm:$0xf]
        %v281 = vld [vmem:[#allocation5 + $0x2c] sm:$0xf]
        %v282 = vld [vmem:[#allocation5 + $0x30] sm:$0xf]
        %v283 = vld [vmem:[#allocation5 + $0x34] sm:$0xf]
        %v284 = vld [vmem:[#allocation5 + $0x38] sm:$0xf]
        %v285 = vld [vmem:[#allocation5 + $0x3c] sm:$0xf]
        %v286 = vld [vmem:[#allocation5 + $0x40] sm:$0xf]
        %v287 = vld [vmem:[#allocation5 + $0x44] sm:$0xf]
        %v288 = vld [vmem:[#allocation5 + $0x48] sm:$0xf]
        %v289 = vld [vmem:[#allocation5 + $0x4c] sm:$0xf]
        %v290 = vld [vmem:[#allocation5 + $0x50] sm:$0xf]
        %v291 = vld [vmem:[#allocation5 + $0x54] sm:$0xf]
        %v292 = vld [vmem:[#allocation5 + $0x58] sm:$0xf]
        %v293 = vld [vmem:[#allocation5 + $0x5c] sm:$0xf]
        %v294 = vld [vmem:[#allocation5 + $0x60] sm:$0xf]
        %v295 = vld [vmem:[#allocation5 + $0x64] sm:$0xf]
        %v296 = vld [vmem:[#allocation5 + $0x68] sm:$0xf]
        %v297 = vld [vmem:[#allocation5 + $0x6c] sm:$0xf]
        %v298 = vld [vmem:[#allocation5 + $0x70] sm:$0xf]
        %v299 = vld [vmem:[#allocation5 + $0x74] sm:$0xf]
        %v300 = vld [vmem:[#allocation5 + $0x78] sm:$0xf]
        %v301 = vld [vmem:[#allocation5 + $0x7c] sm:$0xf]
        %v302 = vld [vmem:[#allocation7] sm:$0x1]
        %v304 = vlaneseq
        %v305 = vshrl.u32 %v304, 7
        %v306 = vsub.s32 0, %v305
        %v307 = vrot.slane %v302, %v306
        %v359 = vunpack.c.l.b16 %v220
        %v360 = vunpack.c.h.b16 %v220
        %v361 = vunpack.c.l.b16 %v221
        %v362 = vunpack.c.h.b16 %v221
        %v363 = vunpack.c.l.b16 %v222
        %v364 = vunpack.c.h.b16 %v222
        %v365 = vunpack.c.l.b16 %v223
        %v366 = vunpack.c.h.b16 %v223
        %v367 = vunpack.c.l.b16 %v224
        %v368 = vunpack.c.h.b16 %v224
        %v369 = vunpack.c.l.b16 %v225
        %v370 = vunpack.c.h.b16 %v225
        %v371 = vunpack.c.l.b16 %v226
        %v372 = vunpack.c.h.b16 %v226
        %v373 = vunpack.c.l.b16 %v227
        %v374 = vunpack.c.h.b16 %v227
        %v375 = vunpack.c.l.b16 %v228
        %v376 = vunpack.c.h.b16 %v228
        %v377 = vunpack.c.l.b16 %v229
        %v378 = vunpack.c.h.b16 %v229
        %v379 = vunpack.c.l.b16 %v230
        %v380 = vunpack.c.h.b16 %v230
        %v381 = vunpack.c.l.b16 %v231
        %v382 = vunpack.c.h.b16 %v231
        %v383 = vunpack.c.l.b16 %v232
        %v384 = vunpack.c.h.b16 %v232
        %v385 = vunpack.c.l.b16 %v233
        %v386 = vunpack.c.h.b16 %v233
        %v387 = vunpack.c.l.b16 %v234
        %v388 = vunpack.c.h.b16 %v234
        %v389 = vunpack.c.l.b16 %v235
        %v390 = vunpack.c.h.b16 %v235
        %v391 = vunpack.c.l.b16 %v236
        %v392 = vunpack.c.h.b16 %v236
        %v393 = vunpack.c.l.b16 %v237
        %v394 = vunpack.c.h.b16 %v237
        %v395 = vunpack.c.l.b16 %v238
        %v396 = vunpack.c.h.b16 %v238
        %v397 = vunpack.c.l.b16 %v239
        %v398 = vunpack.c.h.b16 %v239
        %v399 = vunpack.c.l.b16 %v240
        %v400 = vunpack.c.h.b16 %v240
        %v401 = vunpack.c.l.b16 %v241
        %v402 = vunpack.c.h.b16 %v241
        %v403 = vunpack.c.l.b16 %v242
        %v404 = vunpack.c.h.b16 %v242
        %v405 = vunpack.c.l.b16 %v243
        %v406 = vunpack.c.h.b16 %v243
        %v407 = vunpack.c.l.b16 %v244
        %v408 = vunpack.c.h.b16 %v244
        %v409 = vunpack.c.l.b16 %v245
        %v410 = vunpack.c.h.b16 %v245
        %v411 = vunpack.c.l.b16 %v246
        %v412 = vunpack.c.h.b16 %v246
        %v413 = vunpack.c.l.b16 %v247
        %v414 = vunpack.c.h.b16 %v247
        %v415 = vunpack.c.l.b16 %v248
        %v416 = vunpack.c.h.b16 %v248
        %v417 = vunpack.c.l.b16 %v249
        %v418 = vunpack.c.h.b16 %v249
        %v419 = vunpack.c.l.b16 %v250
        %v420 = vunpack.c.h.b16 %v250
        %v421 = vunpack.c.l.b16 %v251
        %v422 = vunpack.c.h.b16 %v251
        %v423 = vunpack.c.l.b16 %v252
        %v424 = vunpack.c.h.b16 %v252
        %v425 = vunpack.c.l.b16 %v253
        %v426 = vunpack.c.h.b16 %v253
        %v427 = vunpack.c.l.b16 %v254
        %v428 = vunpack.c.h.b16 %v254
        %v429 = vunpack.c.l.b16 %v255
        %v430 = vunpack.c.h.b16 %v255
        %v431 = vunpack.c.l.b16 %v256
        %v432 = vunpack.c.h.b16 %v256
        %v433 = vunpack.c.l.b16 %v257
        %v434 = vunpack.c.h.b16 %v257
        %v435 = vunpack.c.l.b16 %v258
        %v436 = vunpack.c.h.b16 %v258
        %v437 = vunpack.c.l.b16 %v259
        %v438 = vunpack.c.h.b16 %v259
        %v439 = vunpack.c.l.b16 %v260
        %v440 = vunpack.c.h.b16 %v260
        %v441 = vunpack.c.l.b16 %v261
        %v442 = vunpack.c.h.b16 %v261
        %v443 = vunpack.c.l.b16 %v262
        %v444 = vunpack.c.h.b16 %v262
        %v445 = vunpack.c.l.b16 %v263
        %v446 = vunpack.c.h.b16 %v263
        %v447 = vunpack.c.l.b16 %v264
        %v448 = vunpack.c.h.b16 %v264
        %v449 = vunpack.c.l.b16 %v265
        %v450 = vunpack.c.h.b16 %v265
        %v451 = vunpack.c.l.b16 %v266
        %v452 = vunpack.c.h.b16 %v266
        %v453 = vunpack.c.l.b16 %v267
        %v454 = vunpack.c.h.b16 %v267
        %v455 = vunpack.c.l.b16 %v268
        %v456 = vunpack.c.h.b16 %v268
        %v457 = vunpack.c.l.b16 %v269
        %v458 = vunpack.c.h.b16 %v269
        %v459 = vpack.c.b16 %v361, %v359
        %v460 = vpack.c.b16 %v362, %v360
        %v461 = vpack.c.b16 %v365, %v363
        %v462 = vpack.c.b16 %v366, %v364
        %v463 = vpack.c.b16 %v369, %v367
        %v464 = vpack.c.b16 %v370, %v368
        %v465 = vpack.c.b16 %v373, %v371
        %v466 = vpack.c.b16 %v374, %v372
        %v467 = vpack.c.b16 %v377, %v375
        %v468 = vpack.c.b16 %v378, %v376
        %v469 = vpack.c.b16 %v381, %v379
        %v470 = vpack.c.b16 %v382, %v380
        %v471 = vpack.c.b16 %v385, %v383
        %v472 = vpack.c.b16 %v386, %v384
        %v473 = vpack.c.b16 %v389, %v387
        %v474 = vpack.c.b16 %v390, %v388
        %v475 = vpack.c.b16 %v393, %v391
        %v476 = vpack.c.b16 %v394, %v392
        %v477 = vpack.c.b16 %v397, %v395
        %v478 = vpack.c.b16 %v398, %v396
        %v479 = vpack.c.b16 %v401, %v399
        %v480 = vpack.c.b16 %v402, %v400
        %v481 = vpack.c.b16 %v405, %v403
        %v482 = vpack.c.b16 %v406, %v404
        %v483 = vpack.c.b16 %v409, %v407
        %v484 = vpack.c.b16 %v410, %v408
        %v485 = vpack.c.b16 %v413, %v411
        %v486 = vpack.c.b16 %v414, %v412
        %v487 = vpack.c.b16 %v417, %v415
        %v488 = vpack.c.b16 %v418, %v416
        %v489 = vpack.c.b16 %v421, %v419
        %v490 = vpack.c.b16 %v422, %v420
        %v491 = vpack.c.b16 %v425, %v423
        %v492 = vpack.c.b16 %v426, %v424
        %v493 = vpack.c.b16 %v429, %v427
        %v494 = vpack.c.b16 %v430, %v428
        %v495 = vpack.c.b16 %v433, %v431
        %v496 = vpack.c.b16 %v434, %v432
        %v497 = vpack.c.b16 %v437, %v435
        %v498 = vpack.c.b16 %v438, %v436
        %v499 = vpack.c.b16 %v441, %v439
        %v500 = vpack.c.b16 %v442, %v440
        %v501 = vpack.c.b16 %v445, %v443
        %v502 = vpack.c.b16 %v446, %v444
        %v503 = vpack.c.b16 %v449, %v447
        %v504 = vpack.c.b16 %v450, %v448
        %v505 = vpack.c.b16 %v453, %v451
        %v506 = vpack.c.b16 %v454, %v452
        %v507 = vpack.c.b16 %v457, %v455
        %v508 = vpack.c.b16 %v458, %v456
        %v591 = vunpack.c.l.b16 %v270
        %v592 = vunpack.c.l.b16 %v271
        %v593 = vunpack.c.l.b16 %v272
        %v594 = vunpack.c.l.b16 %v273
        %v595 = vunpack.c.l.b16 %v274
        %v596 = vunpack.c.l.b16 %v275
        %v597 = vunpack.c.l.b16 %v276
        %v598 = vunpack.c.l.b16 %v277
        %v599 = vunpack.c.l.b16 %v278
        %v600 = vunpack.c.l.b16 %v279
        %v601 = vunpack.c.l.b16 %v280
        %v602 = vunpack.c.l.b16 %v281
        %v603 = vunpack.c.l.b16 %v282
        %v604 = vunpack.c.l.b16 %v283
        %v605 = vunpack.c.l.b16 %v284
        %v606 = vunpack.c.l.b16 %v285
        %v607 = vunpack.c.l.b16 %v286
        %v608 = vunpack.c.l.b16 %v287
        %v609 = vunpack.c.l.b16 %v288
        %v610 = vunpack.c.l.b16 %v289
        %v611 = vunpack.c.l.b16 %v290
        %v612 = vunpack.c.l.b16 %v291
        %v613 = vunpack.c.l.b16 %v292
        %v614 = vunpack.c.l.b16 %v293
        %v615 = vunpack.c.l.b16 %v294
        %v616 = vunpack.c.l.b16 %v295
        %v617 = vunpack.c.l.b16 %v296
        %v618 = vunpack.c.l.b16 %v297
        %v619 = vunpack.c.l.b16 %v298
        %v620 = vunpack.c.l.b16 %v299
        %v621 = vunpack.c.l.b16 %v300
        %v622 = vunpack.c.l.b16 %v301
        %v623 = vpack.c.b16 %v592, %v591
        %v624 = vpack.c.b16 %v594, %v593
        %v625 = vpack.c.b16 %v596, %v595
        %v626 = vpack.c.b16 %v598, %v597
        %v627 = vpack.c.b16 %v600, %v599
        %v628 = vpack.c.b16 %v602, %v601
        %v629 = vpack.c.b16 %v604, %v603
        %v630 = vpack.c.b16 %v606, %v605
        %v631 = vpack.c.b16 %v608, %v607
        %v632 = vpack.c.b16 %v610, %v609
        %v633 = vpack.c.b16 %v612, %v611
        %v634 = vpack.c.b16 %v614, %v613
        %v635 = vpack.c.b16 %v616, %v615
        %v636 = vpack.c.b16 %v618, %v617
        %v637 = vpack.c.b16 %v620, %v619
        %v638 = vpack.c.b16 %v622, %v621
        %655 = vmatprep.subr.bf16.mxu0 0
        %656 = vmatpush1.bf16.msra.mxu0 %v623
        %657 = vmatprep.subr.bf16.mxu0 0
        %658 = vmatpush1.bf16.msra.mxu0 %v624
        %659 = vmatprep.subr.bf16.mxu0 0
        %660 = vmatpush1.bf16.msra.mxu0 %v625
        %661 = vmatprep.subr.bf16.mxu0 0
        %662 = vmatpush1.bf16.msra.mxu0 %v626
        %663 = vmatprep.subr.bf16.mxu0 0
        %664 = vmatpush1.bf16.msra.mxu0 %v627
        %665 = vmatprep.subr.bf16.mxu0 0
        %666 = vmatpush1.bf16.msra.mxu0 %v628
        %667 = vmatprep.subr.bf16.mxu0 0
        %668 = vmatpush1.bf16.msra.mxu0 %v629
        %669 = vmatprep.subr.bf16.mxu0 0
        %670 = vmatpush1.bf16.msra.mxu0 %v630
        %671 = vmatprep.subr.bf16.mxu0 0
        %672 = vmatpush1.bf16.msra.mxu0 %v631
        %673 = vmatprep.subr.bf16.mxu0 0
        %674 = vmatpush1.bf16.msra.mxu0 %v632
        %675 = vmatprep.subr.bf16.mxu0 0
        %676 = vmatpush1.bf16.msra.mxu0 %v633
        %677 = vmatprep.subr.bf16.mxu0 0
        %678 = vmatpush1.bf16.msra.mxu0 %v634
        %679 = vmatprep.subr.bf16.mxu0 0
        %680 = vmatpush1.bf16.msra.mxu0 %v635
        %681 = vmatprep.subr.bf16.mxu0 0
        %682 = vmatpush1.bf16.msra.mxu0 %v636
        %683 = vmatprep.subr.bf16.mxu0 0
        %684 = vmatpush1.bf16.msra.mxu0 %v637
        %685 = vmatprep.subr.bf16.mxu0 0
        %686 = vmatpush1.bf16.msra.mxu0 %v638
        %687 = vmatprep.mubr.bf16.mxu0 %v460
        %688 = vmatmul.mubr.bf16.gmra.mrb[0].mxu0 %v459
        %v689 = vpop.f32.mrb[0].mxu0
        %v690 = vadd.f32 %v307, %v689
        %v691 = vpop.f32.mrb[0].mxu0
        %v692 = vpop.f32.mrb[0].mxu0
        %v693 = vadd.f32 %v307, %v692
        %v694 = vpop.f32.mrb[0].mxu0
        %695 = vmatprep.mubr.bf16.mxu0 %v462
        %696 = vmatmul.mubr.bf16.gmra.mrb[0].mxu0 %v461
        %v697 = vpop.f32.mrb[0].mxu0
        %v698 = vadd.f32 %v307, %v697
        %v699 = vpop.f32.mrb[0].mxu0
        %v700 = vpop.f32.mrb[0].mxu0
        %v701 = vadd.f32 %v307, %v700
        %v702 = vpop.f32.mrb[0].mxu0
        %703 = vmatprep.mubr.bf16.mxu0 %v464
        %704 = vmatmul.mubr.bf16.gmra.mrb[0].mxu0 %v463
        %v705 = vpop.f32.mrb[0].mxu0
        %v706 = vadd.f32 %v307, %v705
        %v707 = vpop.f32.mrb[0].mxu0
        %v708 = vpop.f32.mrb[0].mxu0
        %v709 = vadd.f32 %v307, %v708
        %v710 = vpop.f32.mrb[0].mxu0
        %711 = vmatprep.mubr.bf16.mxu0 %v466
        %712 = vmatmul.mubr.bf16.gmra.mrb[0].mxu0 %v465
        %v713 = vpop.f32.mrb[0].mxu0
        %v714 = vadd.f32 %v307, %v713
        %v715 = vpop.f32.mrb[0].mxu0
        %v716 = vpop.f32.mrb[0].mxu0
        %v717 = vadd.f32 %v307, %v716
        %v718 = vpop.f32.mrb[0].mxu0
        %719 = vmatprep.mubr.bf16.mxu0 %v468
        %720 = vmatmul.mubr.bf16.gmra.mrb[0].mxu0 %v467
        %v721 = vpop.f32.mrb[0].mxu0
        %v722 = vadd.f32 %v307, %v721
        %v723 = vpop.f32.mrb[0].mxu0
        %v724 = vpop.f32.mrb[0].mxu0
        %v725 = vadd.f32 %v307, %v724
        %v726 = vpop.f32.mrb[0].mxu0
        %727 = vmatprep.mubr.bf16.mxu0 %v470
        %728 = vmatmul.mubr.bf16.gmra.mrb[0].mxu0 %v469
        %v729 = vpop.f32.mrb[0].mxu0
        %v730 = vadd.f32 %v307, %v729
        %v731 = vpop.f32.mrb[0].mxu0
        %v732 = vpop.f32.mrb[0].mxu0
        %v733 = vadd.f32 %v307, %v732
        %v734 = vpop.f32.mrb[0].mxu0
        %735 = vmatprep.mubr.bf16.mxu0 %v472
        %736 = vmatmul.mubr.bf16.gmra.mrb[0].mxu0 %v471
        %v737 = vpop.f32.mrb[0].mxu0
        %v738 = vadd.f32 %v307, %v737
        %v739 = vpop.f32.mrb[0].mxu0
        %v740 = vpop.f32.mrb[0].mxu0
        %v741 = vadd.f32 %v307, %v740
        %v742 = vpop.f32.mrb[0].mxu0
        %743 = vmatprep.mubr.bf16.mxu0 %v474
        %744 = vmatmul.mubr.bf16.gmra.mrb[0].mxu0 %v473
        %v745 = vpop.f32.mrb[0].mxu0
        %v746 = vadd.f32 %v307, %v745
        %v747 = vpop.f32.mrb[0].mxu0
        %v748 = vpop.f32.mrb[0].mxu0
        %v749 = vadd.f32 %v307, %v748
        %v750 = vpop.f32.mrb[0].mxu0
        %751 = vmatprep.mubr.bf16.mxu0 %v476
        %752 = vmatmul.mubr.bf16.gmra.mrb[0].mxu0 %v475
        %v753 = vpop.f32.mrb[0].mxu0
        %v754 = vadd.f32 %v307, %v753
        %v755 = vpop.f32.mrb[0].mxu0
        %v756 = vpop.f32.mrb[0].mxu0
        %v757 = vadd.f32 %v307, %v756
        %v758 = vpop.f32.mrb[0].mxu0
        %759 = vmatprep.mubr.bf16.mxu0 %v478
        %760 = vmatmul.mubr.bf16.gmra.mrb[0].mxu0 %v477
        %v761 = vpop.f32.mrb[0].mxu0
        %v762 = vadd.f32 %v307, %v761
        %v763 = vpop.f32.mrb[0].mxu0
        %v764 = vpop.f32.mrb[0].mxu0
        %v765 = vadd.f32 %v307, %v764
        %v766 = vpop.f32.mrb[0].mxu0
        %767 = vmatprep.mubr.bf16.mxu0 %v480
        %768 = vmatmul.mubr.bf16.gmra.mrb[0].mxu0 %v479
        %v769 = vpop.f32.mrb[0].mxu0
        %v770 = vadd.f32 %v307, %v769
        %v771 = vpop.f32.mrb[0].mxu0
        %v772 = vpop.f32.mrb[0].mxu0
        %v773 = vadd.f32 %v307, %v772
        %v774 = vpop.f32.mrb[0].mxu0
        %775 = vmatprep.mubr.bf16.mxu0 %v482
        %776 = vmatmul.mubr.bf16.gmra.mrb[0].mxu0 %v481
        %v777 = vpop.f32.mrb[0].mxu0
        %v778 = vadd.f32 %v307, %v777
        %v779 = vpop.f32.mrb[0].mxu0
        %v780 = vpop.f32.mrb[0].mxu0
        %v781 = vadd.f32 %v307, %v780
        %v782 = vpop.f32.mrb[0].mxu0
        %783 = vmatprep.mubr.bf16.mxu0 %v484
        %784 = vmatmul.mubr.bf16.gmra.mrb[0].mxu0 %v483
        %v785 = vpop.f32.mrb[0].mxu0
        %v786 = vadd.f32 %v307, %v785
        %v787 = vpop.f32.mrb[0].mxu0
        %v788 = vpop.f32.mrb[0].mxu0
        %v789 = vadd.f32 %v307, %v788
        %v790 = vpop.f32.mrb[0].mxu0
        %791 = vmatprep.mubr.bf16.mxu0 %v486
        %792 = vmatmul.mubr.bf16.gmra.mrb[0].mxu0 %v485
        %v793 = vpop.f32.mrb[0].mxu0
        %v794 = vadd.f32 %v307, %v793
        %v795 = vpop.f32.mrb[0].mxu0
        %v796 = vpop.f32.mrb[0].mxu0
        %v797 = vadd.f32 %v307, %v796
        %v798 = vpop.f32.mrb[0].mxu0
        %799 = vmatprep.mubr.bf16.mxu0 %v488
        %800 = vmatmul.mubr.bf16.gmra.mrb[0].mxu0 %v487
        %v801 = vpop.f32.mrb[0].mxu0
        %v802 = vadd.f32 %v307, %v801
        %v803 = vpop.f32.mrb[0].mxu0
        %v804 = vpop.f32.mrb[0].mxu0
        %v805 = vadd.f32 %v307, %v804
        %v806 = vpop.f32.mrb[0].mxu0
        %807 = vmatprep.mubr.bf16.mxu0 %v490
        %808 = vmatmul.mubr.bf16.gmra.mrb[0].mxu0 %v489
        %v809 = vpop.f32.mrb[0].mxu0
        %v810 = vadd.f32 %v307, %v809
        %v811 = vpop.f32.mrb[0].mxu0
        %v812 = vpop.f32.mrb[0].mxu0
        %v813 = vadd.f32 %v307, %v812
        %v814 = vpop.f32.mrb[0].mxu0
        %815 = vmatprep.mubr.bf16.mxu0 %v492
        %816 = vmatmul.mubr.bf16.gmra.mrb[0].mxu0 %v491
        %v817 = vpop.f32.mrb[0].mxu0
        %v818 = vadd.f32 %v307, %v817
        %v819 = vpop.f32.mrb[0].mxu0
        %v820 = vpop.f32.mrb[0].mxu0
        %v821 = vadd.f32 %v307, %v820
        %v822 = vpop.f32.mrb[0].mxu0
        %823 = vmatprep.mubr.bf16.mxu0 %v494
        %824 = vmatmul.mubr.bf16.gmra.mrb[0].mxu0 %v493
        %v825 = vpop.f32.mrb[0].mxu0
        %v826 = vadd.f32 %v307, %v825
        %v827 = vpop.f32.mrb[0].mxu0
        %v828 = vpop.f32.mrb[0].mxu0
        %v829 = vadd.f32 %v307, %v828
        %v830 = vpop.f32.mrb[0].mxu0
        %831 = vmatprep.mubr.bf16.mxu0 %v496
        %832 = vmatmul.mubr.bf16.gmra.mrb[0].mxu0 %v495
        %v833 = vpop.f32.mrb[0].mxu0
        %v834 = vadd.f32 %v307, %v833
        %v835 = vpop.f32.mrb[0].mxu0
        %v836 = vpop.f32.mrb[0].mxu0
        %v837 = vadd.f32 %v307, %v836
        %v838 = vpop.f32.mrb[0].mxu0
        %839 = vmatprep.mubr.bf16.mxu0 %v498
        %840 = vmatmul.mubr.bf16.gmra.mrb[0].mxu0 %v497
        %v841 = vpop.f32.mrb[0].mxu0
        %v842 = vadd.f32 %v307, %v841
        %v843 = vpop.f32.mrb[0].mxu0
        %v844 = vpop.f32.mrb[0].mxu0
        %v845 = vadd.f32 %v307, %v844
        %v846 = vpop.f32.mrb[0].mxu0
        %847 = vmatprep.mubr.bf16.mxu0 %v500
        %848 = vmatmul.mubr.bf16.gmra.mrb[0].mxu0 %v499
        %v849 = vpop.f32.mrb[0].mxu0
        %v850 = vadd.f32 %v307, %v849
        %v851 = vpop.f32.mrb[0].mxu0
        %v852 = vpop.f32.mrb[0].mxu0
        %v853 = vadd.f32 %v307, %v852
        %v854 = vpop.f32.mrb[0].mxu0
        %855 = vmatprep.mubr.bf16.mxu0 %v502
        %856 = vmatmul.mubr.bf16.gmra.mrb[0].mxu0 %v501
        %v857 = vpop.f32.mrb[0].mxu0
        %v858 = vadd.f32 %v307, %v857
        %v859 = vpop.f32.mrb[0].mxu0
        %v860 = vpop.f32.mrb[0].mxu0
        %v861 = vadd.f32 %v307, %v860
        %v862 = vpop.f32.mrb[0].mxu0
        %863 = vmatprep.mubr.bf16.mxu0 %v504
        %864 = vmatmul.mubr.bf16.gmra.mrb[0].mxu0 %v503
        %v865 = vpop.f32.mrb[0].mxu0
        %v866 = vadd.f32 %v307, %v865
        %v867 = vpop.f32.mrb[0].mxu0
        %v868 = vpop.f32.mrb[0].mxu0
        %v869 = vadd.f32 %v307, %v868
        %v870 = vpop.f32.mrb[0].mxu0
        %871 = vmatprep.mubr.bf16.mxu0 %v506
        %872 = vmatmul.mubr.bf16.gmra.mrb[0].mxu0 %v505
        %v873 = vpop.f32.mrb[0].mxu0
        %v874 = vadd.f32 %v307, %v873
        %v875 = vpop.f32.mrb[0].mxu0
        %v876 = vpop.f32.mrb[0].mxu0
        %v877 = vadd.f32 %v307, %v876
        %v878 = vpop.f32.mrb[0].mxu0
        %879 = vmatprep.mubr.bf16.mxu0 %v508
        %880 = vmatmul.mubr.bf16.gmra.mrb[0].mxu0 %v507
        %v881 = vpop.f32.mrb[0].mxu0
        %v882 = vadd.f32 %v307, %v881
        %v883 = vpop.f32.mrb[0].mxu0
        %v884 = vpop.f32.mrb[0].mxu0
        %v885 = vadd.f32 %v307, %v884
        %v886 = vpop.f32.mrb[0].mxu0
        %887 = vdwg.mxu0
        %v888 = vmax.f32 %v690, 0.0
        %v889 = vmax.f32 %v693, 0.0
        %v890 = vmax.f32 %v698, 0.0
        %v891 = vmax.f32 %v701, 0.0
        %v892 = vmax.f32 %v706, 0.0
        %v893 = vmax.f32 %v709, 0.0
        %v894 = vmax.f32 %v714, 0.0
        %v895 = vmax.f32 %v717, 0.0
        %v896 = vmax.f32 %v722, 0.0
        %v897 = vmax.f32 %v725, 0.0
        %v898 = vmax.f32 %v730, 0.0
        %v899 = vmax.f32 %v733, 0.0
        %v900 = vmax.f32 %v738, 0.0
        %v901 = vmax.f32 %v741, 0.0
        %v902 = vmax.f32 %v746, 0.0
        %v903 = vmax.f32 %v749, 0.0
        %v904 = vmax.f32 %v754, 0.0
        %v905 = vmax.f32 %v757, 0.0
        %v906 = vmax.f32 %v762, 0.0
        %v907 = vmax.f32 %v765, 0.0
        %v908 = vmax.f32 %v770, 0.0
        %v909 = vmax.f32 %v773, 0.0
        %v910 = vmax.f32 %v778, 0.0
        %v911 = vmax.f32 %v781, 0.0
        %v912 = vmax.f32 %v786, 0.0
        %v913 = vmax.f32 %v789, 0.0
        %v914 = vmax.f32 %v794, 0.0
        %v915 = vmax.f32 %v797, 0.0
        %v916 = vmax.f32 %v802, 0.0
        %v917 = vmax.f32 %v805, 0.0
        %v918 = vmax.f32 %v810, 0.0
        %v919 = vmax.f32 %v813, 0.0
        %v920 = vmax.f32 %v818, 0.0
        %v921 = vmax.f32 %v821, 0.0
        %v922 = vmax.f32 %v826, 0.0
        %v923 = vmax.f32 %v829, 0.0
        %v924 = vmax.f32 %v834, 0.0
        %v925 = vmax.f32 %v837, 0.0
        %v926 = vmax.f32 %v842, 0.0
        %v927 = vmax.f32 %v845, 0.0
        %v928 = vmax.f32 %v850, 0.0
        %v929 = vmax.f32 %v853, 0.0
        %v930 = vmax.f32 %v858, 0.0
        %v931 = vmax.f32 %v861, 0.0
        %v932 = vmax.f32 %v866, 0.0
        %v933 = vmax.f32 %v869, 0.0
        %v934 = vmax.f32 %v874, 0.0
        %v935 = vmax.f32 %v877, 0.0
        %v936 = vmax.f32 %v882, 0.0
        %v937 = vmax.f32 %v885, 0.0
        %v938 = vpack.c.bf16 %v889, %v888
        %v939 = vpack.c.bf16 %v891, %v890
        %v940 = vpack.c.bf16 %v893, %v892
        %v941 = vpack.c.bf16 %v895, %v894
        %v942 = vpack.c.bf16 %v897, %v896
        %v943 = vpack.c.bf16 %v899, %v898
        %v944 = vpack.c.bf16 %v901, %v900
        %v945 = vpack.c.bf16 %v903, %v902
        %v946 = vpack.c.bf16 %v905, %v904
        %v947 = vpack.c.bf16 %v907, %v906
        %v948 = vpack.c.bf16 %v909, %v908
        %v949 = vpack.c.bf16 %v911, %v910
        %v950 = vpack.c.bf16 %v913, %v912
        %v951 = vpack.c.bf16 %v915, %v914
        %v952 = vpack.c.bf16 %v917, %v916
        %v953 = vpack.c.bf16 %v919, %v918
        %v954 = vpack.c.bf16 %v921, %v920
        %v955 = vpack.c.bf16 %v923, %v922
        %v956 = vpack.c.bf16 %v925, %v924
        %v957 = vpack.c.bf16 %v927, %v926
        %v958 = vpack.c.bf16 %v929, %v928
        %v959 = vpack.c.bf16 %v931, %v930
        %v960 = vpack.c.bf16 %v933, %v932
        %v961 = vpack.c.bf16 %v935, %v934
        %v962 = vpack.c.bf16 %v937, %v936
        %v988 = vunpack.c.l.b16 %v938
        %v989 = vunpack.c.h.b16 %v938
        %v990 = vunpack.c.l.b16 %v939
        %v991 = vunpack.c.h.b16 %v939
        %v992 = vunpack.c.l.b16 %v940
        %v993 = vunpack.c.h.b16 %v940
        %v994 = vunpack.c.l.b16 %v941
        %v995 = vunpack.c.h.b16 %v941
        %v996 = vunpack.c.l.b16 %v942
        %v997 = vunpack.c.h.b16 %v942
        %v998 = vunpack.c.l.b16 %v943
        %v999 = vunpack.c.h.b16 %v943
        %v1000 = vunpack.c.l.b16 %v944
        %v1001 = vunpack.c.h.b16 %v944
        %v1002 = vunpack.c.l.b16 %v945
        %v1003 = vunpack.c.h.b16 %v945
        %v1004 = vunpack.c.l.b16 %v946
        %v1005 = vunpack.c.h.b16 %v946
        %v1006 = vunpack.c.l.b16 %v947
        %v1007 = vunpack.c.h.b16 %v947
        %v1008 = vunpack.c.l.b16 %v948
        %v1009 = vunpack.c.h.b16 %v948
        %v1010 = vunpack.c.l.b16 %v949
        %v1011 = vunpack.c.h.b16 %v949
        %v1012 = vunpack.c.l.b16 %v950
        %v1013 = vunpack.c.h.b16 %v950
        %v1014 = vunpack.c.l.b16 %v951
        %v1015 = vunpack.c.h.b16 %v951
        %v1016 = vunpack.c.l.b16 %v952
        %v1017 = vunpack.c.h.b16 %v952
        %v1018 = vunpack.c.l.b16 %v953
        %v1019 = vunpack.c.h.b16 %v953
        %v1020 = vunpack.c.l.b16 %v954
        %v1021 = vunpack.c.h.b16 %v954
        %v1022 = vunpack.c.l.b16 %v955
        %v1023 = vunpack.c.h.b16 %v955
        %v1024 = vunpack.c.l.b16 %v956
        %v1025 = vunpack.c.h.b16 %v956
        %v1026 = vunpack.c.l.b16 %v957
        %v1027 = vunpack.c.h.b16 %v957
        %v1028 = vunpack.c.l.b16 %v958
        %v1029 = vunpack.c.h.b16 %v958
        %v1030 = vunpack.c.l.b16 %v959
        %v1031 = vunpack.c.h.b16 %v959
        %v1032 = vunpack.c.l.b16 %v960
        %v1033 = vunpack.c.h.b16 %v960
        %v1034 = vunpack.c.l.b16 %v961
        %v1035 = vunpack.c.h.b16 %v961
        %v1036 = vunpack.c.l.b16 %v962
        %v1037 = vunpack.c.h.b16 %v962
        %v1038 = vpack.c.b16 %v988, %v988
        %v1039 = vpack.c.b16 %v989, %v989
        %v1040 = vpack.c.b16 %v990, %v990
        %v1041 = vpack.c.b16 %v991, %v991
        %v1042 = vpack.c.b16 %v992, %v992
        %v1043 = vpack.c.b16 %v993, %v993
        %v1044 = vpack.c.b16 %v994, %v994
        %v1045 = vpack.c.b16 %v995, %v995
        %v1046 = vpack.c.b16 %v996, %v996
        %v1047 = vpack.c.b16 %v997, %v997
        %v1048 = vpack.c.b16 %v998, %v998
        %v1049 = vpack.c.b16 %v999, %v999
        %v1050 = vpack.c.b16 %v1000, %v1000
        %v1051 = vpack.c.b16 %v1001, %v1001
        %v1052 = vpack.c.b16 %v1002, %v1002
        %v1053 = vpack.c.b16 %v1003, %v1003
        %v1054 = vpack.c.b16 %v1004, %v1004
        %v1055 = vpack.c.b16 %v1005, %v1005
        %v1056 = vpack.c.b16 %v1006, %v1006
        %v1057 = vpack.c.b16 %v1007, %v1007
        %v1058 = vpack.c.b16 %v1008, %v1008
        %v1059 = vpack.c.b16 %v1009, %v1009
        %v1060 = vpack.c.b16 %v1010, %v1010
        %v1061 = vpack.c.b16 %v1011, %v1011
        %v1062 = vpack.c.b16 %v1012, %v1012
        %v1063 = vpack.c.b16 %v1013, %v1013
        %v1064 = vpack.c.b16 %v1014, %v1014
        %v1065 = vpack.c.b16 %v1015, %v1015
        %v1066 = vpack.c.b16 %v1016, %v1016
        %v1067 = vpack.c.b16 %v1017, %v1017
        %v1068 = vpack.c.b16 %v1018, %v1018
        %v1069 = vpack.c.b16 %v1019, %v1019
        %v1070 = vpack.c.b16 %v1020, %v1020
        %v1071 = vpack.c.b16 %v1021, %v1021
        %v1072 = vpack.c.b16 %v1022, %v1022
        %v1073 = vpack.c.b16 %v1023, %v1023
        %v1074 = vpack.c.b16 %v1024, %v1024
        %v1075 = vpack.c.b16 %v1025, %v1025
        %v1076 = vpack.c.b16 %v1026, %v1026
        %v1077 = vpack.c.b16 %v1027, %v1027
        %v1078 = vpack.c.b16 %v1028, %v1028
        %v1079 = vpack.c.b16 %v1029, %v1029
        %v1080 = vpack.c.b16 %v1030, %v1030
        %v1081 = vpack.c.b16 %v1031, %v1031
        %v1082 = vpack.c.b16 %v1032, %v1032
        %v1083 = vpack.c.b16 %v1033, %v1033
        %v1084 = vpack.c.b16 %v1034, %v1034
        %v1085 = vpack.c.b16 %v1035, %v1035
        %v1086 = vpack.c.b16 %v1036, %v1036
        %v1087 = vpack.c.b16 %v1037, %v1037
        %vm1138 = vcmask 257024
        %1139 = vst.msk [vmem:[%s216] sm:$0xf] %vm1138, %v1038
        %1140 = vst.msk [vmem:[%s216 + $0x4] sm:$0xf] %vm1138, %v1039
        %1141 = vst.msk [vmem:[%s216 + $0x8] sm:$0xf] %vm1138, %v1040
        %1142 = vst.msk [vmem:[%s216 + $0xc] sm:$0xf] %vm1138, %v1041
        %1143 = vst.msk [vmem:[%s216 + $0x10] sm:$0xf] %vm1138, %v1042
        %1144 = vst.msk [vmem:[%s216 + $0x14] sm:$0xf] %vm1138, %v1043
        %1145 = vst.msk [vmem:[%s216 + $0x18] sm:$0xf] %vm1138, %v1044
        %1146 = vst.msk [vmem:[%s216 + $0x1c] sm:$0xf] %vm1138, %v1045
        %1147 = vst.msk [vmem:[%s216 + $0x20] sm:$0xf] %vm1138, %v1046
        %1148 = vst.msk [vmem:[%s216 + $0x24] sm:$0xf] %vm1138, %v1047
        %1149 = vst.msk [vmem:[%s216 + $0x28] sm:$0xf] %vm1138, %v1048
        %1150 = vst.msk [vmem:[%s216 + $0x2c] sm:$0xf] %vm1138, %v1049
        %1151 = vst.msk [vmem:[%s216 + $0x30] sm:$0xf] %vm1138, %v1050
        %1152 = vst.msk [vmem:[%s216 + $0x34] sm:$0xf] %vm1138, %v1051
        %1153 = vst.msk [vmem:[%s216 + $0x38] sm:$0xf] %vm1138, %v1052
        %1154 = vst.msk [vmem:[%s216 + $0x3c] sm:$0xf] %vm1138, %v1053
        %1155 = vst.msk [vmem:[%s216 + $0x40] sm:$0xf] %vm1138, %v1054
        %1156 = vst.msk [vmem:[%s216 + $0x44] sm:$0xf] %vm1138, %v1055
        %1157 = vst.msk [vmem:[%s216 + $0x48] sm:$0xf] %vm1138, %v1056
        %1158 = vst.msk [vmem:[%s216 + $0x4c] sm:$0xf] %vm1138, %v1057
        %1159 = vst.msk [vmem:[%s216 + $0x50] sm:$0xf] %vm1138, %v1058
        %1160 = vst.msk [vmem:[%s216 + $0x54] sm:$0xf] %vm1138, %v1059
        %1161 = vst.msk [vmem:[%s216 + $0x58] sm:$0xf] %vm1138, %v1060
        %1162 = vst.msk [vmem:[%s216 + $0x5c] sm:$0xf] %vm1138, %v1061
        %1163 = vst.msk [vmem:[%s216 + $0x60] sm:$0xf] %vm1138, %v1062
        %1164 = vst.msk [vmem:[%s216 + $0x64] sm:$0xf] %vm1138, %v1063
        %1165 = vst.msk [vmem:[%s216 + $0x68] sm:$0xf] %vm1138, %v1064
        %1166 = vst.msk [vmem:[%s216 + $0x6c] sm:$0xf] %vm1138, %v1065
        %1167 = vst.msk [vmem:[%s216 + $0x70] sm:$0xf] %vm1138, %v1066
        %1168 = vst.msk [vmem:[%s216 + $0x74] sm:$0xf] %vm1138, %v1067
        %1169 = vst.msk [vmem:[%s216 + $0x78] sm:$0xf] %vm1138, %v1068
        %1170 = vst.msk [vmem:[%s216 + $0x7c] sm:$0xf] %vm1138, %v1069
        %1171 = vst.msk [vmem:[%s216 + $0x80] sm:$0xf] %vm1138, %v1070
        %1172 = vst.msk [vmem:[%s216 + $0x84] sm:$0xf] %vm1138, %v1071
        %1173 = vst.msk [vmem:[%s216 + $0x88] sm:$0xf] %vm1138, %v1072
        %1174 = vst.msk [vmem:[%s216 + $0x8c] sm:$0xf] %vm1138, %v1073
        %1175 = vst.msk [vmem:[%s216 + $0x90] sm:$0xf] %vm1138, %v1074
        %1176 = vst.msk [vmem:[%s216 + $0x94] sm:$0xf] %vm1138, %v1075
        %1177 = vst.msk [vmem:[%s216 + $0x98] sm:$0xf] %vm1138, %v1076
        %1178 = vst.msk [vmem:[%s216 + $0x9c] sm:$0xf] %vm1138, %v1077
        %1179 = vst.msk [vmem:[%s216 + $0xa0] sm:$0xf] %vm1138, %v1078
        %1180 = vst.msk [vmem:[%s216 + $0xa4] sm:$0xf] %vm1138, %v1079
        %1181 = vst.msk [vmem:[%s216 + $0xa8] sm:$0xf] %vm1138, %v1080
        %1182 = vst.msk [vmem:[%s216 + $0xac] sm:$0xf] %vm1138, %v1081
        %1183 = vst.msk [vmem:[%s216 + $0xb0] sm:$0xf] %vm1138, %v1082
        %1184 = vst.msk [vmem:[%s216 + $0xb4] sm:$0xf] %vm1138, %v1083
        %1185 = vst.msk [vmem:[%s216 + $0xb8] sm:$0xf] %vm1138, %v1084
        %1186 = vst.msk [vmem:[%s216 + $0xbc] sm:$0xf] %vm1138, %v1085
        %1187 = vst.msk [vmem:[%s216 + $0xc0] sm:$0xf] %vm1138, %v1086
        %1188 = vst.msk [vmem:[%s216 + $0xc4] sm:$0xf] %vm1138, %v1087
        %s1189 = sand.u32 %s97, 1
        %s1190 = scalar_lea.sflag [#allocation4], %s1189
        %s1191 = sand.u32 %s97, 1
        %s1192 = smul.addr %s1191, 200
        %s1193 = scalar_lea.vmem [#allocation8], %s1192
        // Predicated region
        $region45: #{atari_cnn_forward.4} parent=31 // pred_check
          %p1194 = pneg %p107
        $region46: #{atari_cnn_forward.4} parent=31 // pred_check_branch
          %1196 = sbr.rel (%p1194) target = $region48
        $region47: #{atari_cnn_forward.4} parent=31 // pred_region
          %s1197 = smul.u32 50, %s21
          %s1199 = ssub.s32 3200, 3200
          %1200 = vsyncadd %s1190, %s1199
          %s1201 = smul.addr %s1197, 64
          %s1202 = scalar_lea.hbm %s3, %s1201
          %s1203 = sshll.u32 %s1193, 4
          %s1204 = int_to_ptr.vmem [resolvable:$true] %s1203
          %1209 = dma.vmem_to_hbm [thread:$0]  %s1204, 3200, %s1202, %s1190, 64, 64, 4
        $region48: #{atari_cnn_forward.4} parent=31 // pred_fallthru
          _
      $region32: #{atari_cnn_forward.4} parent=5 // pred_fallthru
        _
      %p1210 = scmp.le.s32.totalorder 2, %s16
      // Predicated region
      $region49: #{atari_cnn_forward.4} parent=5 // pred_check
        %p1211 = pneg %p1210
      $region50: #{atari_cnn_forward.4} parent=5 // pred_check_branch
        %1213 = sbr.rel (%p1211) target = $region52
      $region51: #{atari_cnn_forward.4} parent=5 // pred_region
        %s1214 = ssub.s32 %s16, 2
        // Predicated region
        $region53: #{atari_cnn_forward.4} parent=51 // pred_check
          %p1215 = pneg %p113
        $region54: #{atari_cnn_forward.4} parent=51 // pred_check_branch
          %1217 = sbr.rel (%p1215) target = $region56
        $region55: #{atari_cnn_forward.4} parent=51 // pred_region
          %s1218 = sand.u32 %s98, 1
          %s1219 = scalar_lea.sflag [#allocation4], %s1218
          %s1220 = sand.u32 %s98, 1
          %s1221 = smul.addr %s1220, 200
          %s1222 = scalar_lea.vmem [#allocation8], %s1221
          %1223 = dma.done %s1219, 3200
        $region56: #{atari_cnn_forward.4} parent=51 // pred_fallthru
          _
      $region52: #{atari_cnn_forward.4} parent=5 // pred_fallthru
        _
    $region6: #{atari_cnn_forward.4} parent=1 // loop_footer
      %s20 = sadd.s32 1, %s16
    $region7: #{atari_cnn_forward.4} parent=1 // loop_footer_branch
      %15 = sbr.rel target = $region3
    $region8: #{atari_cnn_forward.4} parent=1 // loop_exit
      _
    %1224 = vsyncpa [#allocation3], 1
    %s1225 = scalar_lea.sflag [#allocation3], 1
    %1226 = vsyncpa %s1225, 1
    %1227 = vsyncpa [#allocation6], 1
    %1228 = vsyncpa [#allocation4], 1
    %s1229 = scalar_lea.sflag [#allocation4], 1
    %1230 = vsyncpa %s1229, 1

// kernel: atari_cnn_forward.5
$region0: #{atari_cnn_forward.5}
  #allocation0 [shape = 'u32[]', space=smem, size = 0x4, offset = 0x4, fixed_abs, tag = 'smem constant byte address 0x4 - core index']
  #allocation1 [shape = 'u32[144,128]{1,0:T(1,128)}', space=vmem, size = 0x12000, scoped, tag = 'internal scratch']
  %s0 = inlined_call_operand.hbm [shape: bf16[162,512], index: 0, kind: input, shape index: {}]
  %s1 = inlined_call_operand.hbm [shape: bf16[512,64], index: 1, kind: input, shape index: {}]
  %s2 = inlined_call_operand.hbm [shape: f32[1,64], index: 2, kind: input, shape index: {}]
  %s3 = inlined_call_operand.hbm [shape: bf16[162,64], index: 3, kind: output, shape index: {}]
  %s4 = sld [smem:[#allocation0]]
  $region34: #{atari_cnn_forward.5} parent=0
    _
  %s6 = ssub.s32 1, %s4
  %s7 = scalar_select 0, %s6, %s4
  $region1: #{atari_cnn_forward.5} parent=0
    #allocation2 [shape = 'u8[172032]{0}', space=vmem, size = 0x2a000, scoped, tag = 'input window, operand 0, single buffered']
    #allocation3 [shape = 's32[1]{0}', space=sflag, size = 0x4, scoped, tag = 'scoped memory for atari_cnn_forward.5']
    #allocation4 [shape = 's32[1]{0}', space=sflag, size = 0x4, scoped, tag = 'scoped memory for atari_cnn_forward.5']
    #allocation5 [shape = 'u8[131072]{0}', space=vmem, size = 0x20000, scoped, tag = 'input window, operand 1, single buffered']
    #allocation6 [shape = 's32[1]{0}', space=sflag, size = 0x4, scoped, tag = 'scoped memory for atari_cnn_forward.5']
    #allocation7 [shape = 'u8[512]{0}', space=vmem, size = 0x400, scoped, tag = 'input window, operand 2, single buffered']
    #allocation8 [shape = 'u8[43008]{0}', space=vmem, size = 0xa800, scoped, tag = 'output window, operand 0, single buffered']
    %8 = vsyncpa [#allocation3], 0
    %9 = vsyncpa [#allocation6], 0
    %10 = vsyncpa [#allocation4], 0
    // Predicated region
    $region2: #{atari_cnn_forward.5} parent=1 // pred_check
      _
    $region3: #{atari_cnn_forward.5} parent=1 // pred_check_branch
      %12 = sbr.rel (0) target = $region5
    $region4: #{atari_cnn_forward.5} parent=1 // pred_region
      %s14 = ssub.s32 5376, 5376
      %15 = vsyncadd [#allocation3], %s14
      %s16 = sshll.u32 [#allocation2], 4
      %s17 = int_to_ptr.vmem [resolvable:$true] %s16
      %22 = dma.hbm_to_vmem [thread:$0]  %s0, 5376, %s17, [#allocation3], 256, 256, 16
    $region5: #{atari_cnn_forward.5} parent=1 // pred_fallthru
      _
    // Predicated region
    $region6: #{atari_cnn_forward.5} parent=1 // pred_check
      _
    $region7: #{atari_cnn_forward.5} parent=1 // pred_check_branch
      %24 = sbr.rel (0) target = $region9
    $region8: #{atari_cnn_forward.5} parent=1 // pred_region
      %s26 = ssub.s32 4096, 4096
      %27 = vsyncadd [#allocation6], %s26
      %s28 = sshll.u32 [#allocation5], 4
      %s29 = int_to_ptr.vmem [resolvable:$true] %s28
      %34 = dma.hbm_to_vmem [thread:$0]  %s1, 4096, %s29, [#allocation6], 64, 64, 4
    $region9: #{atari_cnn_forward.5} parent=1 // pred_fallthru
      _
    // Predicated region
    $region10: #{atari_cnn_forward.5} parent=1 // pred_check
      _
    $region11: #{atari_cnn_forward.5} parent=1 // pred_check_branch
      %36 = sbr.rel (0) target = $region13
    $region12: #{atari_cnn_forward.5} parent=1 // pred_region
      %s38 = ssub.s32 16, 16
      %39 = vsyncadd [#allocation6], %s38
      %s41 = sshll.u32 [#allocation7], 4
      %s42 = int_to_ptr.vmem [resolvable:$true] %s41
      %44 = dma.hbm_to_vmem [thread:$0]  %s2, 16, %s42, [#allocation6]
    $region13: #{atari_cnn_forward.5} parent=1 // pred_fallthru
      _
    // Predicated region
    $region14: #{atari_cnn_forward.5} parent=1 // pred_check
      _
    $region15: #{atari_cnn_forward.5} parent=1 // pred_check_branch
      %46 = sbr.rel (0) target = $region17
    $region16: #{atari_cnn_forward.5} parent=1 // pred_region
      %47 = dma.done [#allocation3], 5376
    $region17: #{atari_cnn_forward.5} parent=1 // pred_fallthru
      _
    // Predicated region
    $region18: #{atari_cnn_forward.5} parent=1 // pred_check
      _
    $region19: #{atari_cnn_forward.5} parent=1 // pred_check_branch
      %49 = sbr.rel (0) target = $region21
    $region20: #{atari_cnn_forward.5} parent=1 // pred_region
      %50 = dma.done [#allocation6], 4096
    $region21: #{atari_cnn_forward.5} parent=1 // pred_fallthru
      _
    // Predicated region
    $region22: #{atari_cnn_forward.5} parent=1 // pred_check
      _
    $region23: #{atari_cnn_forward.5} parent=1 // pred_check_branch
      %52 = sbr.rel (0) target = $region25
    $region24: #{atari_cnn_forward.5} parent=1 // pred_region
      %53 = dma.done [#allocation6], 16
    $region25: #{atari_cnn_forward.5} parent=1 // pred_fallthru
      _
    %v55 = vld [vmem:[#allocation2] sm:$0xff]
    %v56 = vld [vmem:[#allocation2 + $0x8] sm:$0xff]
    %v57 = vld [vmem:[#allocation2 + $0x10] sm:$0xff]
    %v58 = vld [vmem:[#allocation2 + $0x18] sm:$0xff]
    %v59 = vld [vmem:[#allocation2 + $0x20] sm:$0xff]
    %v60 = vld [vmem:[#allocation2 + $0x28] sm:$0xff]
    %v61 = vld [vmem:[#allocation2 + $0x30] sm:$0xff]
    %v62 = vld [vmem:[#allocation2 + $0x38] sm:$0xff]
    %v63 = vld [vmem:[#allocation2 + $0x40] sm:$0xff]
    %v64 = vld [vmem:[#allocation2 + $0x48] sm:$0xff]
    %v65 = vld [vmem:[#allocation2 + $0x50] sm:$0xff]
    %v66 = vld [vmem:[#allocation2 + $0x58] sm:$0xff]
    %v67 = vld [vmem:[#allocation2 + $0x60] sm:$0xff]
    %v68 = vld [vmem:[#allocation2 + $0x68] sm:$0xff]
    %v69 = vld [vmem:[#allocation2 + $0x70] sm:$0xff]
    %v70 = vld [vmem:[#allocation2 + $0x78] sm:$0xff]
    %v71 = vld [vmem:[#allocation2 + $0x80] sm:$0xff]
    %v72 = vld [vmem:[#allocation2 + $0x88] sm:$0xff]
    %v73 = vld [vmem:[#allocation2 + $0x90] sm:$0xff]
    %v74 = vld [vmem:[#allocation2 + $0x98] sm:$0xff]
    %v75 = vld [vmem:[#allocation2 + $0xa0] sm:$0xff]
    %v76 = vld [vmem:[#allocation2 + $0xa8] sm:$0xff]
    %v77 = vld [vmem:[#allocation2 + $0xb0] sm:$0xff]
    %v78 = vld [vmem:[#allocation2 + $0xb8] sm:$0xff]
    %v79 = vld [vmem:[#allocation2 + $0xc0] sm:$0xff]
    %v80 = vld [vmem:[#allocation2 + $0xc8] sm:$0xff]
    %v81 = vld [vmem:[#allocation2 + $0xd0] sm:$0xff]
    %v82 = vld [vmem:[#allocation2 + $0xd8] sm:$0xff]
    %v83 = vld [vmem:[#allocation2 + $0xe0] sm:$0xff]
    %v84 = vld [vmem:[#allocation2 + $0xe8] sm:$0xff]
    %v85 = vld [vmem:[#allocation2 + $0xf0] sm:$0xff]
    %v86 = vld [vmem:[#allocation2 + $0xf8] sm:$0xff]
    %v87 = vld [vmem:[#allocation2 + $0x100] sm:$0xff]
    %v88 = vld [vmem:[#allocation2 + $0x108] sm:$0xff]
    %v89 = vld [vmem:[#allocation2 + $0x110] sm:$0xff]
    %v90 = vld [vmem:[#allocation2 + $0x118] sm:$0xff]
    %v91 = vld [vmem:[#allocation2 + $0x120] sm:$0xff]
    %v92 = vld [vmem:[#allocation2 + $0x128] sm:$0xff]
    %v93 = vld [vmem:[#allocation2 + $0x130] sm:$0xff]
    %v94 = vld [vmem:[#allocation2 + $0x138] sm:$0xff]
    %v95 = vld [vmem:[#allocation2 + $0x140] sm:$0x11]
    %v96 = vld [vmem:[#allocation2 + $0x148] sm:$0x11]
    %v97 = vld [vmem:[#allocation5] sm:$0xf]
    %v98 = vld [vmem:[#allocation5 + $0x4] sm:$0xf]
    %v99 = vld [vmem:[#allocation5 + $0x8] sm:$0xf]
    %v100 = vld [vmem:[#allocation5 + $0xc] sm:$0xf]
    %v101 = vld [vmem:[#allocation5 + $0x10] sm:$0xf]
    %v102 = vld [vmem:[#allocation5 + $0x14] sm:$0xf]
    %v103 = vld [vmem:[#allocation5 + $0x18] sm:$0xf]
    %v104 = vld [vmem:[#allocation5 + $0x1c] sm:$0xf]
    %v105 = vld [vmem:[#allocation5 + $0x20] sm:$0xf]
    %v106 = vld [vmem:[#allocation5 + $0x24] sm:$0xf]
    %v107 = vld [vmem:[#allocation5 + $0x28] sm:$0xf]
    %v108 = vld [vmem:[#allocation5 + $0x2c] sm:$0xf]
    %v109 = vld [vmem:[#allocation5 + $0x30] sm:$0xf]
    %v110 = vld [vmem:[#allocation5 + $0x34] sm:$0xf]
    %v111 = vld [vmem:[#allocation5 + $0x38] sm:$0xf]
    %v112 = vld [vmem:[#allocation5 + $0x3c] sm:$0xf]
    %v113 = vld [vmem:[#allocation5 + $0x40] sm:$0xf]
    %v114 = vld [vmem:[#allocation5 + $0x44] sm:$0xf]
    %v115 = vld [vmem:[#allocation5 + $0x48] sm:$0xf]
    %v116 = vld [vmem:[#allocation5 + $0x4c] sm:$0xf]
    %v117 = vld [vmem:[#allocation5 + $0x50] sm:$0xf]
    %v118 = vld [vmem:[#allocation5 + $0x54] sm:$0xf]
    %v119 = vld [vmem:[#allocation5 + $0x58] sm:$0xf]
    %v120 = vld [vmem:[#allocation5 + $0x5c] sm:$0xf]
    %v121 = vld [vmem:[#allocation5 + $0x60] sm:$0xf]
    %v122 = vld [vmem:[#allocation5 + $0x64] sm:$0xf]
    %v123 = vld [vmem:[#allocation5 + $0x68] sm:$0xf]
    %v124 = vld [vmem:[#allocation5 + $0x6c] sm:$0xf]
    %v125 = vld [vmem:[#allocation5 + $0x70] sm:$0xf]
    %v126 = vld [vmem:[#allocation5 + $0x74] sm:$0xf]
    %v127 = vld [vmem:[#allocation5 + $0x78] sm:$0xf]
    %v128 = vld [vmem:[#allocation5 + $0x7c] sm:$0xf]
    %v129 = vld [vmem:[#allocation5 + $0x80] sm:$0xf]
    %v130 = vld [vmem:[#allocation5 + $0x84] sm:$0xf]
    %v131 = vld [vmem:[#allocation5 + $0x88] sm:$0xf]
    %v132 = vld [vmem:[#allocation5 + $0x8c] sm:$0xf]
    %v133 = vld [vmem:[#allocation5 + $0x90] sm:$0xf]
    %v134 = vld [vmem:[#allocation5 + $0x94] sm:$0xf]
    %v135 = vld [vmem:[#allocation5 + $0x98] sm:$0xf]
    %v136 = vld [vmem:[#allocation5 + $0x9c] sm:$0xf]
    %v137 = vld [vmem:[#allocation5 + $0xa0] sm:$0xf]
    %v138 = vld [vmem:[#allocation5 + $0xa4] sm:$0xf]
    %v139 = vld [vmem:[#allocation5 + $0xa8] sm:$0xf]
    %v140 = vld [vmem:[#allocation5 + $0xac] sm:$0xf]
    %v141 = vld [vmem:[#allocation5 + $0xb0] sm:$0xf]
    %v142 = vld [vmem:[#allocation5 + $0xb4] sm:$0xf]
    %v143 = vld [vmem:[#allocation5 + $0xb8] sm:$0xf]
    %v144 = vld [vmem:[#allocation5 + $0xbc] sm:$0xf]
    %v145 = vld [vmem:[#allocation5 + $0xc0] sm:$0xf]
    %v146 = vld [vmem:[#allocation5 + $0xc4] sm:$0xf]
    %v147 = vld [vmem:[#allocation5 + $0xc8] sm:$0xf]
    %v148 = vld [vmem:[#allocation5 + $0xcc] sm:$0xf]
    %v149 = vld [vmem:[#allocation5 + $0xd0] sm:$0xf]
    %v150 = vld [vmem:[#allocation5 + $0xd4] sm:$0xf]
    %v151 = vld [vmem:[#allocation5 + $0xd8] sm:$0xf]
    %v152 = vld [vmem:[#allocation5 + $0xdc] sm:$0xf]
    %v153 = vld [vmem:[#allocation5 + $0xe0] sm:$0xf]
    %v154 = vld [vmem:[#allocation5 + $0xe4] sm:$0xf]
    %v155 = vld [vmem:[#allocation5 + $0xe8] sm:$0xf]
    %v156 = vld [vmem:[#allocation5 + $0xec] sm:$0xf]
    %v157 = vld [vmem:[#allocation5 + $0xf0] sm:$0xf]
    %v158 = vld [vmem:[#allocation5 + $0xf4] sm:$0xf]
    %v159 = vld [vmem:[#allocation5 + $0xf8] sm:$0xf]
    %v160 = vld [vmem:[#allocation5 + $0xfc] sm:$0xf]
    %v161 = vld [vmem:[#allocation7] sm:$0x1]
    %v163 = vlaneseq
    %v164 = vshrl.u32 %v163, 7
    %v165 = vsub.s32 0, %v164
    %v166 = vrot.slane %v161, %v165
    %v210 = vunpack.c.l.b16 %v55
    %v211 = vunpack.c.h.b16 %v55
    %v212 = vunpack.c.l.b16 %v56
    %v213 = vunpack.c.h.b16 %v56
    %v214 = vunpack.c.l.b16 %v57
    %v215 = vunpack.c.h.b16 %v57
    %v216 = vunpack.c.l.b16 %v58
    %v217 = vunpack.c.h.b16 %v58
    %v218 = vunpack.c.l.b16 %v59
    %v219 = vunpack.c.h.b16 %v59
    %v220 = vunpack.c.l.b16 %v60
    %v221 = vunpack.c.h.b16 %v60
    %v222 = vunpack.c.l.b16 %v61
    %v223 = vunpack.c.h.b16 %v61
    %v224 = vunpack.c.l.b16 %v62
    %v225 = vunpack.c.h.b16 %v62
    %v226 = vunpack.c.l.b16 %v63
    %v227 = vunpack.c.h.b16 %v63
    %v228 = vunpack.c.l.b16 %v64
    %v229 = vunpack.c.h.b16 %v64
    %v230 = vunpack.c.l.b16 %v65
    %v231 = vunpack.c.h.b16 %v65
    %v232 = vunpack.c.l.b16 %v66
    %v233 = vunpack.c.h.b16 %v66
    %v234 = vunpack.c.l.b16 %v67
    %v235 = vunpack.c.h.b16 %v67
    %v236 = vunpack.c.l.b16 %v68
    %v237 = vunpack.c.h.b16 %v68
    %v238 = vunpack.c.l.b16 %v69
    %v239 = vunpack.c.h.b16 %v69
    %v240 = vunpack.c.l.b16 %v70
    %v241 = vunpack.c.h.b16 %v70
    %v242 = vunpack.c.l.b16 %v71
    %v243 = vunpack.c.h.b16 %v71
    %v244 = vunpack.c.l.b16 %v72
    %v245 = vunpack.c.h.b16 %v72
    %v246 = vunpack.c.l.b16 %v73
    %v247 = vunpack.c.h.b16 %v73
    %v248 = vunpack.c.l.b16 %v74
    %v249 = vunpack.c.h.b16 %v74
    %v250 = vunpack.c.l.b16 %v75
    %v251 = vunpack.c.h.b16 %v75
    %v252 = vunpack.c.l.b16 %v76
    %v253 = vunpack.c.h.b16 %v76
    %v254 = vunpack.c.l.b16 %v77
    %v255 = vunpack.c.h.b16 %v77
    %v256 = vunpack.c.l.b16 %v78
    %v257 = vunpack.c.h.b16 %v78
    %v258 = vunpack.c.l.b16 %v79
    %v259 = vunpack.c.h.b16 %v79
    %v260 = vunpack.c.l.b16 %v80
    %v261 = vunpack.c.h.b16 %v80
    %v262 = vunpack.c.l.b16 %v81
    %v263 = vunpack.c.h.b16 %v81
    %v264 = vunpack.c.l.b16 %v82
    %v265 = vunpack.c.h.b16 %v82
    %v266 = vunpack.c.l.b16 %v83
    %v267 = vunpack.c.h.b16 %v83
    %v268 = vunpack.c.l.b16 %v84
    %v269 = vunpack.c.h.b16 %v84
    %v270 = vunpack.c.l.b16 %v85
    %v271 = vunpack.c.h.b16 %v85
    %v272 = vunpack.c.l.b16 %v86
    %v273 = vunpack.c.h.b16 %v86
    %v274 = vunpack.c.l.b16 %v87
    %v275 = vunpack.c.h.b16 %v87
    %v276 = vunpack.c.l.b16 %v88
    %v277 = vunpack.c.h.b16 %v88
    %v278 = vunpack.c.l.b16 %v89
    %v279 = vunpack.c.h.b16 %v89
    %v280 = vunpack.c.l.b16 %v90
    %v281 = vunpack.c.h.b16 %v90
    %v282 = vunpack.c.l.b16 %v91
    %v283 = vunpack.c.h.b16 %v91
    %v284 = vunpack.c.l.b16 %v92
    %v285 = vunpack.c.h.b16 %v92
    %v286 = vunpack.c.l.b16 %v93
    %v287 = vunpack.c.h.b16 %v93
    %v288 = vunpack.c.l.b16 %v94
    %v289 = vunpack.c.h.b16 %v94
    %v290 = vunpack.c.l.b16 %v95
    %v291 = vunpack.c.h.b16 %v95
    %v292 = vunpack.c.l.b16 %v96
    %v293 = vunpack.c.h.b16 %v96
    %v294 = vpack.c.b16 %v214, %v210
    %v295 = vpack.c.b16 %v215, %v211
    %v296 = vpack.c.b16 %v216, %v212
    %v297 = vpack.c.b16 %v217, %v213
    %v298 = vpack.c.b16 %v222, %v218
    %v299 = vpack.c.b16 %v223, %v219
    %v300 = vpack.c.b16 %v224, %v220
    %v301 = vpack.c.b16 %v225, %v221
    %v302 = vpack.c.b16 %v230, %v226
    %v303 = vpack.c.b16 %v231, %v227
    %v304 = vpack.c.b16 %v232, %v228
    %v305 = vpack.c.b16 %v233, %v229
    %v306 = vpack.c.b16 %v238, %v234
    %v307 = vpack.c.b16 %v239, %v235
    %v308 = vpack.c.b16 %v240, %v236
    %v309 = vpack.c.b16 %v241, %v237
    %v310 = vpack.c.b16 %v246, %v242
    %v311 = vpack.c.b16 %v247, %v243
    %v312 = vpack.c.b16 %v248, %v244
    %v313 = vpack.c.b16 %v249, %v245
    %v314 = vpack.c.b16 %v254, %v250
    %v315 = vpack.c.b16 %v255, %v251
    %v316 = vpack.c.b16 %v256, %v252
    %v317 = vpack.c.b16 %v257, %v253
    %v318 = vpack.c.b16 %v262, %v258
    %v319 = vpack.c.b16 %v263, %v259
    %v320 = vpack.c.b16 %v264, %v260
    %v321 = vpack.c.b16 %v265, %v261
    %v322 = vpack.c.b16 %v270, %v266
    %v323 = vpack.c.b16 %v271, %v267
    %v324 = vpack.c.b16 %v272, %v268
    %v325 = vpack.c.b16 %v273, %v269
    %v326 = vpack.c.b16 %v278, %v274
    %v327 = vpack.c.b16 %v279, %v275
    %v328 = vpack.c.b16 %v280, %v276
    %v329 = vpack.c.b16 %v281, %v277
    %v330 = vpack.c.b16 %v286, %v282
    %v331 = vpack.c.b16 %v287, %v283
    %v332 = vpack.c.b16 %v288, %v284
    %v333 = vpack.c.b16 %v289, %v285
    %v334 = vpack.c.b16 %v290, %v290
    %v335 = vpack.c.b16 %v291, %v291
    %v336 = vpack.c.b16 %v292, %v292
    %v337 = vpack.c.b16 %v293, %v293
    %v446 = vunpack.c.l.b16 %v97
    %v447 = vunpack.c.l.b16 %v98
    %v448 = vunpack.c.l.b16 %v99
    %v449 = vunpack.c.l.b16 %v100
    %v450 = vunpack.c.l.b16 %v101
    %v451 = vunpack.c.l.b16 %v102
    %v452 = vunpack.c.l.b16 %v103
    %v453 = vunpack.c.l.b16 %v104
    %v454 = vunpack.c.l.b16 %v105
    %v455 = vunpack.c.l.b16 %v106
    %v456 = vunpack.c.l.b16 %v107
    %v457 = vunpack.c.l.b16 %v108
    %v458 = vunpack.c.l.b16 %v109
    %v459 = vunpack.c.l.b16 %v110
    %v460 = vunpack.c.l.b16 %v111
    %v461 = vunpack.c.l.b16 %v112
    %v462 = vunpack.c.l.b16 %v113
    %v463 = vunpack.c.l.b16 %v114
    %v464 = vunpack.c.l.b16 %v115
    %v465 = vunpack.c.l.b16 %v116
    %v466 = vunpack.c.l.b16 %v117
    %v467 = vunpack.c.l.b16 %v118
    %v468 = vunpack.c.l.b16 %v119
    %v469 = vunpack.c.l.b16 %v120
    %v470 = vunpack.c.l.b16 %v121
    %v471 = vunpack.c.l.b16 %v122
    %v472 = vunpack.c.l.b16 %v123
    %v473 = vunpack.c.l.b16 %v124
    %v474 = vunpack.c.l.b16 %v125
    %v475 = vunpack.c.l.b16 %v126
    %v476 = vunpack.c.l.b16 %v127
    %v477 = vunpack.c.l.b16 %v128
    %v478 = vunpack.c.l.b16 %v129
    %v479 = vunpack.c.l.b16 %v130
    %v480 = vunpack.c.l.b16 %v131
    %v481 = vunpack.c.l.b16 %v132
    %v482 = vunpack.c.l.b16 %v133
    %v483 = vunpack.c.l.b16 %v134
    %v484 = vunpack.c.l.b16 %v135
    %v485 = vunpack.c.l.b16 %v136
    %v486 = vunpack.c.l.b16 %v137
    %v487 = vunpack.c.l.b16 %v138
    %v488 = vunpack.c.l.b16 %v139
    %v489 = vunpack.c.l.b16 %v140
    %v490 = vunpack.c.l.b16 %v141
    %v491 = vunpack.c.l.b16 %v142
    %v492 = vunpack.c.l.b16 %v143
    %v493 = vunpack.c.l.b16 %v144
    %v494 = vunpack.c.l.b16 %v145
    %v495 = vunpack.c.l.b16 %v146
    %v496 = vunpack.c.l.b16 %v147
    %v497 = vunpack.c.l.b16 %v148
    %v498 = vunpack.c.l.b16 %v149
    %v499 = vunpack.c.l.b16 %v150
    %v500 = vunpack.c.l.b16 %v151
    %v501 = vunpack.c.l.b16 %v152
    %v502 = vunpack.c.l.b16 %v153
    %v503 = vunpack.c.l.b16 %v154
    %v504 = vunpack.c.l.b16 %v155
    %v505 = vunpack.c.l.b16 %v156
    %v506 = vunpack.c.l.b16 %v157
    %v507 = vunpack.c.l.b16 %v158
    %v508 = vunpack.c.l.b16 %v159
    %v509 = vunpack.c.l.b16 %v160
    %v510 = vpack.c.b16 %v447, %v446
    %v511 = vpack.c.b16 %v449, %v448
    %v512 = vpack.c.b16 %v451, %v450
    %v513 = vpack.c.b16 %v453, %v452
    %v514 = vpack.c.b16 %v455, %v454
    %v515 = vpack.c.b16 %v457, %v456
    %v516 = vpack.c.b16 %v459, %v458
    %v517 = vpack.c.b16 %v461, %v460
    %v518 = vpack.c.b16 %v463, %v462
    %v519 = vpack.c.b16 %v465, %v464
    %v520 = vpack.c.b16 %v467, %v466
    %v521 = vpack.c.b16 %v469, %v468
    %v522 = vpack.c.b16 %v471, %v470
    %v523 = vpack.c.b16 %v473, %v472
    %v524 = vpack.c.b16 %v475, %v474
    %v525 = vpack.c.b16 %v477, %v476
    %v526 = vpack.c.b16 %v479, %v478
    %v527 = vpack.c.b16 %v481, %v480
    %v528 = vpack.c.b16 %v483, %v482
    %v529 = vpack.c.b16 %v485, %v484
    %v530 = vpack.c.b16 %v487, %v486
    %v531 = vpack.c.b16 %v489, %v488
    %v532 = vpack.c.b16 %v491, %v490
    %v533 = vpack.c.b16 %v493, %v492
    %v534 = vpack.c.b16 %v495, %v494
    %v535 = vpack.c.b16 %v497, %v496
    %v536 = vpack.c.b16 %v499, %v498
    %v537 = vpack.c.b16 %v501, %v500
    %v538 = vpack.c.b16 %v503, %v502
    %v539 = vpack.c.b16 %v505, %v504
    %v540 = vpack.c.b16 %v507, %v506
    %v541 = vpack.c.b16 %v509, %v508
    %574 = vmatprep.subr.bf16.mxu0 0
    %575 = vmatpush1.bf16.msra.mxu0 %v510
    %576 = vmatprep.subr.bf16.mxu0 0
    %577 = vmatpush1.bf16.msra.mxu0 %v511
    %578 = vmatprep.subr.bf16.mxu0 0
    %579 = vmatpush1.bf16.msra.mxu0 %v512
    %580 = vmatprep.subr.bf16.mxu0 0
    %581 = vmatpush1.bf16.msra.mxu0 %v513
    %582 = vmatprep.subr.bf16.mxu0 0
    %583 = vmatpush1.bf16.msra.mxu0 %v514
    %584 = vmatprep.subr.bf16.mxu0 0
    %585 = vmatpush1.bf16.msra.mxu0 %v515
    %586 = vmatprep.subr.bf16.mxu0 0
    %587 = vmatpush1.bf16.msra.mxu0 %v516
    %588 = vmatprep.subr.bf16.mxu0 0
    %589 = vmatpush1.bf16.msra.mxu0 %v517
    %590 = vmatprep.subr.bf16.mxu0 0
    %591 = vmatpush1.bf16.msra.mxu0 %v518
    %592 = vmatprep.subr.bf16.mxu0 0
    %593 = vmatpush1.bf16.msra.mxu0 %v519
    %594 = vmatprep.subr.bf16.mxu0 0
    %595 = vmatpush1.bf16.msra.mxu0 %v520
    %596 = vmatprep.subr.bf16.mxu0 0
    %597 = vmatpush1.bf16.msra.mxu0 %v521
    %598 = vmatprep.subr.bf16.mxu0 0
    %599 = vmatpush1.bf16.msra.mxu0 %v522
    %600 = vmatprep.subr.bf16.mxu0 0
    %601 = vmatpush1.bf16.msra.mxu0 %v523
    %602 = vmatprep.subr.bf16.mxu0 0
    %603 = vmatpush1.bf16.msra.mxu0 %v524
    %604 = vmatprep.subr.bf16.mxu0 0
    %605 = vmatpush1.bf16.msra.mxu0 %v525
    %606 = vmatprep.mubr.bf16.mxu0 %v295
    %607 = vmatmul.mubr.bf16.gmra.mrb[0].mxu0 %v294
    %v608 = vpop.f32.mrb[0].mxu0
    %v609 = vadd.f32 %v166, %v608
    %v610 = vpop.f32.mrb[0].mxu0
    %v611 = vpop.f32.mrb[0].mxu0
    %v612 = vadd.f32 %v166, %v611
    %v613 = vpop.f32.mrb[0].mxu0
    %614 = vmatprep.mubr.bf16.mxu0 %v299
    %615 = vmatmul.mubr.bf16.gmra.mrb[0].mxu0 %v298
    %v616 = vpop.f32.mrb[0].mxu0
    %v617 = vadd.f32 %v166, %v616
    %v618 = vpop.f32.mrb[0].mxu0
    %v619 = vpop.f32.mrb[0].mxu0
    %v620 = vadd.f32 %v166, %v619
    %v621 = vpop.f32.mrb[0].mxu0
    %622 = vmatprep.mubr.bf16.mxu0 %v303
    %623 = vmatmul.mubr.bf16.gmra.mrb[0].mxu0 %v302
    %v624 = vpop.f32.mrb[0].mxu0
    %v625 = vadd.f32 %v166, %v624
    %v626 = vpop.f32.mrb[0].mxu0
    %v627 = vpop.f32.mrb[0].mxu0
    %v628 = vadd.f32 %v166, %v627
    %v629 = vpop.f32.mrb[0].mxu0
    %630 = vmatprep.mubr.bf16.mxu0 %v307
    %631 = vmatmul.mubr.bf16.gmra.mrb[0].mxu0 %v306
    %v632 = vpop.f32.mrb[0].mxu0
    %v633 = vadd.f32 %v166, %v632
    %v634 = vpop.f32.mrb[0].mxu0
    %v635 = vpop.f32.mrb[0].mxu0
    %v636 = vadd.f32 %v166, %v635
    %v637 = vpop.f32.mrb[0].mxu0
    %638 = vmatprep.mubr.bf16.mxu0 %v311
    %639 = vmatmul.mubr.bf16.gmra.mrb[0].mxu0 %v310
    %v640 = vpop.f32.mrb[0].mxu0
    %v641 = vadd.f32 %v166, %v640
    %v642 = vpop.f32.mrb[0].mxu0
    %v643 = vpop.f32.mrb[0].mxu0
    %v644 = vadd.f32 %v166, %v643
    %v645 = vpop.f32.mrb[0].mxu0
    %646 = vmatprep.mubr.bf16.mxu0 %v315
    %647 = vmatmul.mubr.bf16.gmra.mrb[0].mxu0 %v314
    %v648 = vpop.f32.mrb[0].mxu0
    %v649 = vadd.f32 %v166, %v648
    %v650 = vpop.f32.mrb[0].mxu0
    %v651 = vpop.f32.mrb[0].mxu0
    %v652 = vadd.f32 %v166, %v651
    %v653 = vpop.f32.mrb[0].mxu0
    %654 = vmatprep.mubr.bf16.mxu0 %v319
    %655 = vmatmul.mubr.bf16.gmra.mrb[0].mxu0 %v318
    %v656 = vpop.f32.mrb[0].mxu0
    %v657 = vadd.f32 %v166, %v656
    %v658 = vpop.f32.mrb[0].mxu0
    %v659 = vpop.f32.mrb[0].mxu0
    %v660 = vadd.f32 %v166, %v659
    %v661 = vpop.f32.mrb[0].mxu0
    %662 = vmatprep.mubr.bf16.mxu0 %v323
    %663 = vmatmul.mubr.bf16.gmra.mrb[0].mxu0 %v322
    %v664 = vpop.f32.mrb[0].mxu0
    %v665 = vadd.f32 %v166, %v664
    %v666 = vpop.f32.mrb[0].mxu0
    %v667 = vpop.f32.mrb[0].mxu0
    %v668 = vadd.f32 %v166, %v667
    %v669 = vpop.f32.mrb[0].mxu0
    %670 = vmatprep.mubr.bf16.mxu0 %v327
    %671 = vmatmul.mubr.bf16.gmra.mrb[0].mxu0 %v326
    %v672 = vpop.f32.mrb[0].mxu0
    %v673 = vadd.f32 %v166, %v672
    %v674 = vpop.f32.mrb[0].mxu0
    %v675 = vpop.f32.mrb[0].mxu0
    %v676 = vadd.f32 %v166, %v675
    %v677 = vpop.f32.mrb[0].mxu0
    %678 = vmatprep.mubr.bf16.mxu0 %v331
    %679 = vmatmul.mubr.bf16.gmra.mrb[0].mxu0 %v330
    %v680 = vpop.f32.mrb[0].mxu0
    %v681 = vadd.f32 %v166, %v680
    %v682 = vpop.f32.mrb[0].mxu0
    %v683 = vpop.f32.mrb[0].mxu0
    %v684 = vadd.f32 %v166, %v683
    %v685 = vpop.f32.mrb[0].mxu0
    %686 = vmatprep.mubr.bf16.mxu0 %v335
    %687 = vmatmul.mubr.bf16.gmra.mrb[0].mxu0 %v334
    %v688 = vpop.f32.mrb[0].mxu0
    %v689 = vadd.f32 %v166, %v688
    %v690 = vpop.f32.mrb[0].mxu0
    %v691 = vpop.f32.mrb[0].mxu0
    %v692 = vpop.f32.mrb[0].mxu0
    %693 = vdwg.mxu0
    %694 = vmatprep.subr.bf16.mxu0 0
    %695 = vmatpush1.bf16.msra.mxu0 %v526
    %696 = vmatprep.subr.bf16.mxu0 0
    %697 = vmatpush1.bf16.msra.mxu0 %v527
    %698 = vmatprep.subr.bf16.mxu0 0
    %699 = vmatpush1.bf16.msra.mxu0 %v528
    %700 = vmatprep.subr.bf16.mxu0 0
    %701 = vmatpush1.bf16.msra.mxu0 %v529
    %702 = vmatprep.subr.bf16.mxu0 0
    %703 = vmatpush1.bf16.msra.mxu0 %v530
    %704 = vmatprep.subr.bf16.mxu0 0
    %705 = vmatpush1.bf16.msra.mxu0 %v531
    %706 = vmatprep.subr.bf16.mxu0 0
    %707 = vmatpush1.bf16.msra.mxu0 %v532
    %708 = vmatprep.subr.bf16.mxu0 0
    %709 = vmatpush1.bf16.msra.mxu0 %v533
    %710 = vmatprep.subr.bf16.mxu0 0
    %711 = vmatpush1.bf16.msra.mxu0 %v534
    %712 = vmatprep.subr.bf16.mxu0 0
    %713 = vmatpush1.bf16.msra.mxu0 %v535
    %714 = vmatprep.subr.bf16.mxu0 0
    %715 = vmatpush1.bf16.msra.mxu0 %v536
    %716 = vmatprep.subr.bf16.mxu0 0
    %717 = vmatpush1.bf16.msra.mxu0 %v537
    %718 = vmatprep.subr.bf16.mxu0 0
    %719 = vmatpush1.bf16.msra.mxu0 %v538
    %720 = vmatprep.subr.bf16.mxu0 0
    %721 = vmatpush1.bf16.msra.mxu0 %v539
    %722 = vmatprep.subr.bf16.mxu0 0
    %723 = vmatpush1.bf16.msra.mxu0 %v540
    %724 = vmatprep.subr.bf16.mxu0 0
    %725 = vmatpush1.bf16.msra.mxu0 %v541
    %726 = vmatprep.mubr.bf16.mxu0 %v297
    %727 = vmatmul.mubr.bf16.gmra.mrb[0].mxu0 %v296
    %v728 = vpop.f32.mrb[0].mxu0
    %v729 = vadd.f32 %v609, %v728
    %v730 = vpop.f32.mrb[0].mxu0
    %v731 = vpop.f32.mrb[0].mxu0
    %v732 = vadd.f32 %v612, %v731
    %v733 = vpop.f32.mrb[0].mxu0
    %734 = vmatprep.mubr.bf16.mxu0 %v301
    %735 = vmatmul.mubr.bf16.gmra.mrb[0].mxu0 %v300
    %v736 = vpop.f32.mrb[0].mxu0
    %v737 = vadd.f32 %v617, %v736
    %v738 = vpop.f32.mrb[0].mxu0
    %v739 = vpop.f32.mrb[0].mxu0
    %v740 = vadd.f32 %v620, %v739
    %v741 = vpop.f32.mrb[0].mxu0
    %742 = vmatprep.mubr.bf16.mxu0 %v305
    %743 = vmatmul.mubr.bf16.gmra.mrb[0].mxu0 %v304
    %v744 = vpop.f32.mrb[0].mxu0
    %v745 = vadd.f32 %v625, %v744
    %v746 = vpop.f32.mrb[0].mxu0
    %v747 = vpop.f32.mrb[0].mxu0
    %v748 = vadd.f32 %v628, %v747
    %v749 = vpop.f32.mrb[0].mxu0
    %750 = vmatprep.mubr.bf16.mxu0 %v309
    %751 = vmatmul.mubr.bf16.gmra.mrb[0].mxu0 %v308
    %v752 = vpop.f32.mrb[0].mxu0
    %v753 = vadd.f32 %v633, %v752
    %v754 = vpop.f32.mrb[0].mxu0
    %v755 = vpop.f32.mrb[0].mxu0
    %v756 = vadd.f32 %v636, %v755
    %v757 = vpop.f32.mrb[0].mxu0
    %758 = vmatprep.mubr.bf16.mxu0 %v313
    %759 = vmatmul.mubr.bf16.gmra.mrb[0].mxu0 %v312
    %v760 = vpop.f32.mrb[0].mxu0
    %v761 = vadd.f32 %v641, %v760
    %v762 = vpop.f32.mrb[0].mxu0
    %v763 = vpop.f32.mrb[0].mxu0
    %v764 = vadd.f32 %v644, %v763
    %v765 = vpop.f32.mrb[0].mxu0
    %766 = vmatprep.mubr.bf16.mxu0 %v317
    %767 = vmatmul.mubr.bf16.gmra.mrb[0].mxu0 %v316
    %v768 = vpop.f32.mrb[0].mxu0
    %v769 = vadd.f32 %v649, %v768
    %v770 = vpop.f32.mrb[0].mxu0
    %v771 = vpop.f32.mrb[0].mxu0
    %v772 = vadd.f32 %v652, %v771
    %v773 = vpop.f32.mrb[0].mxu0
    %774 = vmatprep.mubr.bf16.mxu0 %v321
    %775 = vmatmul.mubr.bf16.gmra.mrb[0].mxu0 %v320
    %v776 = vpop.f32.mrb[0].mxu0
    %v777 = vadd.f32 %v657, %v776
    %v778 = vpop.f32.mrb[0].mxu0
    %v779 = vpop.f32.mrb[0].mxu0
    %v780 = vadd.f32 %v660, %v779
    %v781 = vpop.f32.mrb[0].mxu0
    %782 = vmatprep.mubr.bf16.mxu0 %v325
    %783 = vmatmul.mubr.bf16.gmra.mrb[0].mxu0 %v324
    %v784 = vpop.f32.mrb[0].mxu0
    %v785 = vadd.f32 %v665, %v784
    %v786 = vpop.f32.mrb[0].mxu0
    %v787 = vpop.f32.mrb[0].mxu0
    %v788 = vadd.f32 %v668, %v787
    %v789 = vpop.f32.mrb[0].mxu0
    %790 = vmatprep.mubr.bf16.mxu0 %v329
    %791 = vmatmul.mubr.bf16.gmra.mrb[0].mxu0 %v328
    %v792 = vpop.f32.mrb[0].mxu0
    %v793 = vadd.f32 %v673, %v792
    %v794 = vpop.f32.mrb[0].mxu0
    %v795 = vpop.f32.mrb[0].mxu0
    %v796 = vadd.f32 %v676, %v795
    %v797 = vpop.f32.mrb[0].mxu0
    %798 = vmatprep.mubr.bf16.mxu0 %v333
    %799 = vmatmul.mubr.bf16.gmra.mrb[0].mxu0 %v332
    %v800 = vpop.f32.mrb[0].mxu0
    %v801 = vadd.f32 %v681, %v800
    %v802 = vpop.f32.mrb[0].mxu0
    %v803 = vpop.f32.mrb[0].mxu0
    %v804 = vadd.f32 %v684, %v803
    %v805 = vpop.f32.mrb[0].mxu0
    %806 = vmatprep.mubr.bf16.mxu0 %v337
    %807 = vmatmul.mubr.bf16.gmra.mrb[0].mxu0 %v336
    %v808 = vpop.f32.mrb[0].mxu0
    %v809 = vadd.f32 %v689, %v808
    %v810 = vpop.f32.mrb[0].mxu0
    %v811 = vpop.f32.mrb[0].mxu0
    %v812 = vpop.f32.mrb[0].mxu0
    %813 = vdwg.mxu0
    %v814 = vmax.f32 %v729, 0.0
    %v815 = vmax.f32 %v732, 0.0
    %v816 = vmax.f32 %v737, 0.0
    %v817 = vmax.f32 %v740, 0.0
    %v818 = vmax.f32 %v745, 0.0
    %v819 = vmax.f32 %v748, 0.0
    %v820 = vmax.f32 %v753, 0.0
    %v821 = vmax.f32 %v756, 0.0
    %v822 = vmax.f32 %v761, 0.0
    %v823 = vmax.f32 %v764, 0.0
    %v824 = vmax.f32 %v769, 0.0
    %v825 = vmax.f32 %v772, 0.0
    %v826 = vmax.f32 %v777, 0.0
    %v827 = vmax.f32 %v780, 0.0
    %v828 = vmax.f32 %v785, 0.0
    %v829 = vmax.f32 %v788, 0.0
    %v830 = vmax.f32 %v793, 0.0
    %v831 = vmax.f32 %v796, 0.0
    %v832 = vmax.f32 %v801, 0.0
    %v833 = vmax.f32 %v804, 0.0
    %v834 = vmax.f32 %v809, 0.0
    %v835 = vpack.c.bf16 %v815, %v814
    %v836 = vpack.c.bf16 %v817, %v816
    %v837 = vpack.c.bf16 %v819, %v818
    %v838 = vpack.c.bf16 %v821, %v820
    %v839 = vpack.c.bf16 %v823, %v822
    %v840 = vpack.c.bf16 %v825, %v824
    %v841 = vpack.c.bf16 %v827, %v826
    %v842 = vpack.c.bf16 %v829, %v828
    %v843 = vpack.c.bf16 %v831, %v830
    %v844 = vpack.c.bf16 %v833, %v832
    %v845 = vpack.c.bf16 %v834, %v834
    %v857 = vunpack.c.l.b16 %v835
    %v858 = vunpack.c.h.b16 %v835
    %v859 = vunpack.c.l.b16 %v836
    %v860 = vunpack.c.h.b16 %v836
    %v861 = vunpack.c.l.b16 %v837
    %v862 = vunpack.c.h.b16 %v837
    %v863 = vunpack.c.l.b16 %v838
    %v864 = vunpack.c.h.b16 %v838
    %v865 = vunpack.c.l.b16 %v839
    %v866 = vunpack.c.h.b16 %v839
    %v867 = vunpack.c.l.b16 %v840
    %v868 = vunpack.c.h.b16 %v840
    %v869 = vunpack.c.l.b16 %v841
    %v870 = vunpack.c.h.b16 %v841
    %v871 = vunpack.c.l.b16 %v842
    %v872 = vunpack.c.h.b16 %v842
    %v873 = vunpack.c.l.b16 %v843
    %v874 = vunpack.c.h.b16 %v843
    %v875 = vunpack.c.l.b16 %v844
    %v876 = vunpack.c.h.b16 %v844
    %v877 = vunpack.c.l.b16 %v845
    %v878 = vpack.c.b16 %v857, %v857
    %v879 = vpack.c.b16 %v858, %v858
    %v880 = vpack.c.b16 %v859, %v859
    %v881 = vpack.c.b16 %v860, %v860
    %v882 = vpack.c.b16 %v861, %v861
    %v883 = vpack.c.b16 %v862, %v862
    %v884 = vpack.c.b16 %v863, %v863
    %v885 = vpack.c.b16 %v864, %v864
    %v886 = vpack.c.b16 %v865, %v865
    %v887 = vpack.c.b16 %v866, %v866
    %v888 = vpack.c.b16 %v867, %v867
    %v889 = vpack.c.b16 %v868, %v868
    %v890 = vpack.c.b16 %v869, %v869
    %v891 = vpack.c.b16 %v870, %v870
    %v892 = vpack.c.b16 %v871, %v871
    %v893 = vpack.c.b16 %v872, %v872
    %v894 = vpack.c.b16 %v873, %v873
    %v895 = vpack.c.b16 %v874, %v874
    %v896 = vpack.c.b16 %v875, %v875
    %v897 = vpack.c.b16 %v876, %v876
    %v898 = vpack.c.b16 %v877, %v877
    %vm920 = vcmask 519168
    %921 = vst.msk [vmem:[#allocation8] sm:$0xf] %vm920, %v878
    %922 = vst.msk [vmem:[#allocation8 + $0x4] sm:$0xf] %vm920, %v879
    %923 = vst.msk [vmem:[#allocation8 + $0x8] sm:$0xf] %vm920, %v880
    %924 = vst.msk [vmem:[#allocation8 + $0xc] sm:$0xf] %vm920, %v881
    %925 = vst.msk [vmem:[#allocation8 + $0x10] sm:$0xf] %vm920, %v882
    %926 = vst.msk [vmem:[#allocation8 + $0x14] sm:$0xf] %vm920, %v883
    %927 = vst.msk [vmem:[#allocation8 + $0x18] sm:$0xf] %vm920, %v884
    %928 = vst.msk [vmem:[#allocation8 + $0x1c] sm:$0xf] %vm920, %v885
    %929 = vst.msk [vmem:[#allocation8 + $0x20] sm:$0xf] %vm920, %v886
    %930 = vst.msk [vmem:[#allocation8 + $0x24] sm:$0xf] %vm920, %v887
    %931 = vst.msk [vmem:[#allocation8 + $0x28] sm:$0xf] %vm920, %v888
    %932 = vst.msk [vmem:[#allocation8 + $0x2c] sm:$0xf] %vm920, %v889
    %933 = vst.msk [vmem:[#allocation8 + $0x30] sm:$0xf] %vm920, %v890
    %934 = vst.msk [vmem:[#allocation8 + $0x34] sm:$0xf] %vm920, %v891
    %935 = vst.msk [vmem:[#allocation8 + $0x38] sm:$0xf] %vm920, %v892
    %936 = vst.msk [vmem:[#allocation8 + $0x3c] sm:$0xf] %vm920, %v893
    %937 = vst.msk [vmem:[#allocation8 + $0x40] sm:$0xf] %vm920, %v894
    %938 = vst.msk [vmem:[#allocation8 + $0x44] sm:$0xf] %vm920, %v895
    %939 = vst.msk [vmem:[#allocation8 + $0x48] sm:$0xf] %vm920, %v896
    %940 = vst.msk [vmem:[#allocation8 + $0x4c] sm:$0xf] %vm920, %v897
    %vm941 = vcmask 516096
    %942 = vst.msk [vmem:[#allocation8 + $0x50] sm:$0x1] %vm941, %v898
    // Predicated region
    $region26: #{atari_cnn_forward.5} parent=1 // pred_check
      _
    $region27: #{atari_cnn_forward.5} parent=1 // pred_check_branch
      %944 = sbr.rel (0) target = $region29
    $region28: #{atari_cnn_forward.5} parent=1 // pred_region
      %s946 = ssub.s32 1344, 1344
      %947 = vsyncadd [#allocation4], %s946
      %s948 = sshll.u32 [#allocation8], 4
      %s949 = int_to_ptr.vmem [resolvable:$true] %s948
      %954 = dma.vmem_to_hbm [thread:$0]  %s949, 1344, %s3, [#allocation4], 64, 64, 4
    $region29: #{atari_cnn_forward.5} parent=1 // pred_fallthru
      _
    // Predicated region
    $region30: #{atari_cnn_forward.5} parent=1 // pred_check
      _
    $region31: #{atari_cnn_forward.5} parent=1 // pred_check_branch
      %956 = sbr.rel (0) target = $region33
    $region32: #{atari_cnn_forward.5} parent=1 // pred_region
      %957 = dma.done [#allocation4], 1344
    $region33: #{atari_cnn_forward.5} parent=1 // pred_fallthru
      _
    %958 = vsyncpa [#allocation3], 1
    %959 = vsyncpa [#allocation6], 1
    %960 = vsyncpa [#allocation4], 1

// kernel: atari_cnn_forward.6
$region0: #{atari_cnn_forward.6}
  #allocation0 [shape = 'u32[]', space=smem, size = 0x4, offset = 0x4, fixed_abs, tag = 'smem constant byte address 0x4 - core index']
  #allocation1 [shape = 'u32[144,128]{1,0:T(1,128)}', space=vmem, size = 0x12000, scoped, tag = 'internal scratch']
  %s0 = inlined_call_operand.hbm [shape: bf16[98,576], index: 0, kind: input, shape index: {}]
  %s1 = inlined_call_operand.hbm [shape: bf16[576,64], index: 1, kind: input, shape index: {}]
  %s2 = inlined_call_operand.hbm [shape: f32[1,64], index: 2, kind: input, shape index: {}]
  %s3 = inlined_call_operand.hbm [shape: bf16[98,64], index: 3, kind: output, shape index: {}]
  %s4 = sld [smem:[#allocation0]]
  $region34: #{atari_cnn_forward.6} parent=0
    _
  %s6 = ssub.s32 1, %s4
  %s7 = scalar_select 0, %s6, %s4
  $region1: #{atari_cnn_forward.6} parent=0
    #allocation2 [shape = 'u8[133120]{0}', space=vmem, size = 0x20800, scoped, tag = 'input window, operand 0, single buffered']
    #allocation3 [shape = 's32[1]{0}', space=sflag, size = 0x4, scoped, tag = 'scoped memory for atari_cnn_forward.6']
    #allocation4 [shape = 's32[1]{0}', space=sflag, size = 0x4, scoped, tag = 'scoped memory for atari_cnn_forward.6']
    #allocation5 [shape = 'u8[147456]{0}', space=vmem, size = 0x24000, scoped, tag = 'input window, operand 1, single buffered']
    #allocation6 [shape = 's32[1]{0}', space=sflag, size = 0x4, scoped, tag = 'scoped memory for atari_cnn_forward.6']
    #allocation7 [shape = 'u8[512]{0}', space=vmem, size = 0x400, scoped, tag = 'input window, operand 2, single buffered']
    #allocation8 [shape = 'u8[26624]{0}', space=vmem, size = 0x6800, scoped, tag = 'output window, operand 0, single buffered']
    %8 = vsyncpa [#allocation3], 0
    %9 = vsyncpa [#allocation6], 0
    %10 = vsyncpa [#allocation4], 0
    // Predicated region
    $region2: #{atari_cnn_forward.6} parent=1 // pred_check
      _
    $region3: #{atari_cnn_forward.6} parent=1 // pred_check_branch
      %12 = sbr.rel (0) target = $region5
    $region4: #{atari_cnn_forward.6} parent=1 // pred_region
      %s14 = ssub.s32 4160, 4160
      %15 = vsyncadd [#allocation3], %s14
      %s16 = sshll.u32 [#allocation2], 4
      %s17 = int_to_ptr.vmem [resolvable:$true] %s16
      %22 = dma.hbm_to_vmem [thread:$0]  %s0, 4160, %s17, [#allocation3], 320, 320, 20
    $region5: #{atari_cnn_forward.6} parent=1 // pred_fallthru
      _
    // Predicated region
    $region6: #{atari_cnn_forward.6} parent=1 // pred_check
      _
    $region7: #{atari_cnn_forward.6} parent=1 // pred_check_branch
      %24 = sbr.rel (0) target = $region9
    $region8: #{atari_cnn_forward.6} parent=1 // pred_region
      %s26 = ssub.s32 4608, 4608
      %27 = vsyncadd [#allocation6], %s26
      %s28 = sshll.u32 [#allocation5], 4
      %s29 = int_to_ptr.vmem [resolvable:$true] %s28
      %34 = dma.hbm_to_vmem [thread:$0]  %s1, 4608, %s29, [#allocation6], 64, 64, 4
    $region9: #{atari_cnn_forward.6} parent=1 // pred_fallthru
      _
    // Predicated region
    $region10: #{atari_cnn_forward.6} parent=1 // pred_check
      _
    $region11: #{atari_cnn_forward.6} parent=1 // pred_check_branch
      %36 = sbr.rel (0) target = $region13
    $region12: #{atari_cnn_forward.6} parent=1 // pred_region
      %s38 = ssub.s32 16, 16
      %39 = vsyncadd [#allocation6], %s38
      %s41 = sshll.u32 [#allocation7], 4
      %s42 = int_to_ptr.vmem [resolvable:$true] %s41
      %44 = dma.hbm_to_vmem [thread:$0]  %s2, 16, %s42, [#allocation6]
    $region13: #{atari_cnn_forward.6} parent=1 // pred_fallthru
      _
    // Predicated region
    $region14: #{atari_cnn_forward.6} parent=1 // pred_check
      _
    $region15: #{atari_cnn_forward.6} parent=1 // pred_check_branch
      %46 = sbr.rel (0) target = $region17
    $region16: #{atari_cnn_forward.6} parent=1 // pred_region
      %47 = dma.done [#allocation3], 4160
    $region17: #{atari_cnn_forward.6} parent=1 // pred_fallthru
      _
    // Predicated region
    $region18: #{atari_cnn_forward.6} parent=1 // pred_check
      _
    $region19: #{atari_cnn_forward.6} parent=1 // pred_check_branch
      %49 = sbr.rel (0) target = $region21
    $region20: #{atari_cnn_forward.6} parent=1 // pred_region
      %50 = dma.done [#allocation6], 4608
    $region21: #{atari_cnn_forward.6} parent=1 // pred_fallthru
      _
    // Predicated region
    $region22: #{atari_cnn_forward.6} parent=1 // pred_check
      _
    $region23: #{atari_cnn_forward.6} parent=1 // pred_check_branch
      %52 = sbr.rel (0) target = $region25
    $region24: #{atari_cnn_forward.6} parent=1 // pred_region
      %53 = dma.done [#allocation6], 16
    $region25: #{atari_cnn_forward.6} parent=1 // pred_fallthru
      _
    %v55 = vld [vmem:[#allocation2] sm:$0xff]
    %v56 = vld [vmem:[#allocation2 + $0x8] sm:$0xff]
    %v57 = vld [vmem:[#allocation2 + $0x10] sm:$0xf]
    %v58 = vld [vmem:[#allocation2 + $0x14] sm:$0xff]
    %v59 = vld [vmem:[#allocation2 + $0x1c] sm:$0xff]
    %v60 = vld [vmem:[#allocation2 + $0x24] sm:$0xf]
    %v61 = vld [vmem:[#allocation2 + $0x28] sm:$0xff]
    %v62 = vld [vmem:[#allocation2 + $0x30] sm:$0xff]
    %v63 = vld [vmem:[#allocation2 + $0x38] sm:$0xf]
    %v64 = vld [vmem:[#allocation2 + $0x3c] sm:$0xff]
    %v65 = vld [vmem:[#allocation2 + $0x44] sm:$0xff]
    %v66 = vld [vmem:[#allocation2 + $0x4c] sm:$0xf]
    %v67 = vld [vmem:[#allocation2 + $0x50] sm:$0xff]
    %v68 = vld [vmem:[#allocation2 + $0x58] sm:$0xff]
    %v69 = vld [vmem:[#allocation2 + $0x60] sm:$0xf]
    %v70 = vld [vmem:[#allocation2 + $0x64] sm:$0xff]
    %v71 = vld [vmem:[#allocation2 + $0x6c] sm:$0xff]
    %v72 = vld [vmem:[#allocation2 + $0x74] sm:$0xf]
    %v73 = vld [vmem:[#allocation2 + $0x78] sm:$0xff]
    %v74 = vld [vmem:[#allocation2 + $0x80] sm:$0xff]
    %v75 = vld [vmem:[#allocation2 + $0x88] sm:$0xf]
    %v76 = vld [vmem:[#allocation2 + $0x8c] sm:$0xff]
    %v77 = vld [vmem:[#allocation2 + $0x94] sm:$0xff]
    %v78 = vld [vmem:[#allocation2 + $0x9c] sm:$0xf]
    %v79 = vld [vmem:[#allocation2 + $0xa0] sm:$0xff]
    %v80 = vld [vmem:[#allocation2 + $0xa8] sm:$0xff]
    %v81 = vld [vmem:[#allocation2 + $0xb0] sm:$0xf]
    %v82 = vld [vmem:[#allocation2 + $0xb4] sm:$0xff]
    %v83 = vld [vmem:[#allocation2 + $0xbc] sm:$0xff]
    %v84 = vld [vmem:[#allocation2 + $0xc4] sm:$0xf]
    %v85 = vld [vmem:[#allocation2 + $0xc8] sm:$0xff]
    %v86 = vld [vmem:[#allocation2 + $0xd0] sm:$0xff]
    %v87 = vld [vmem:[#allocation2 + $0xd8] sm:$0xf]
    %v88 = vld [vmem:[#allocation2 + $0xdc] sm:$0xff]
    %v89 = vld [vmem:[#allocation2 + $0xe4] sm:$0xff]
    %v90 = vld [vmem:[#allocation2 + $0xec] sm:$0xf]
    %v91 = vld [vmem:[#allocation2 + $0xf0] sm:$0x11]
    %v92 = vld [vmem:[#allocation2 + $0xf8] sm:$0x11]
    %v93 = vld [vmem:[#allocation2 + $0x100] sm:$0x1]
    %v94 = vld [vmem:[#allocation5] sm:$0xf]
    %v95 = vld [vmem:[#allocation5 + $0x4] sm:$0xf]
    %v96 = vld [vmem:[#allocation5 + $0x8] sm:$0xf]
    %v97 = vld [vmem:[#allocation5 + $0xc] sm:$0xf]
    %v98 = vld [vmem:[#allocation5 + $0x10] sm:$0xf]
    %v99 = vld [vmem:[#allocation5 + $0x14] sm:$0xf]
    %v100 = vld [vmem:[#allocation5 + $0x18] sm:$0xf]
    %v101 = vld [vmem:[#allocation5 + $0x1c] sm:$0xf]
    %v102 = vld [vmem:[#allocation5 + $0x20] sm:$0xf]
    %v103 = vld [vmem:[#allocation5 + $0x24] sm:$0xf]
    %v104 = vld [vmem:[#allocation5 + $0x28] sm:$0xf]
    %v105 = vld [vmem:[#allocation5 + $0x2c] sm:$0xf]
    %v106 = vld [vmem:[#allocation5 + $0x30] sm:$0xf]
    %v107 = vld [vmem:[#allocation5 + $0x34] sm:$0xf]
    %v108 = vld [vmem:[#allocation5 + $0x38] sm:$0xf]
    %v109 = vld [vmem:[#allocation5 + $0x3c] sm:$0xf]
    %v110 = vld [vmem:[#allocation5 + $0x40] sm:$0xf]
    %v111 = vld [vmem:[#allocation5 + $0x44] sm:$0xf]
    %v112 = vld [vmem:[#allocation5 + $0x48] sm:$0xf]
    %v113 = vld [vmem:[#allocation5 + $0x4c] sm:$0xf]
    %v114 = vld [vmem:[#allocation5 + $0x50] sm:$0xf]
    %v115 = vld [vmem:[#allocation5 + $0x54] sm:$0xf]
    %v116 = vld [vmem:[#allocation5 + $0x58] sm:$0xf]
    %v117 = vld [vmem:[#allocation5 + $0x5c] sm:$0xf]
    %v118 = vld [vmem:[#allocation5 + $0x60] sm:$0xf]
    %v119 = vld [vmem:[#allocation5 + $0x64] sm:$0xf]
    %v120 = vld [vmem:[#allocation5 + $0x68] sm:$0xf]
    %v121 = vld [vmem:[#allocation5 + $0x6c] sm:$0xf]
    %v122 = vld [vmem:[#allocation5 + $0x70] sm:$0xf]
    %v123 = vld [vmem:[#allocation5 + $0x74] sm:$0xf]
    %v124 = vld [vmem:[#allocation5 + $0x78] sm:$0xf]
    %v125 = vld [vmem:[#allocation5 + $0x7c] sm:$0xf]
    %v126 = vld [vmem:[#allocation5 + $0x80] sm:$0xf]
    %v127 = vld [vmem:[#allocation5 + $0x84] sm:$0xf]
    %v128 = vld [vmem:[#allocation5 + $0x88] sm:$0xf]
    %v129 = vld [vmem:[#allocation5 + $0x8c] sm:$0xf]
    %v130 = vld [vmem:[#allocation5 + $0x90] sm:$0xf]
    %v131 = vld [vmem:[#allocation5 + $0x94] sm:$0xf]
    %v132 = vld [vmem:[#allocation5 + $0x98] sm:$0xf]
    %v133 = vld [vmem:[#allocation5 + $0x9c] sm:$0xf]
    %v134 = vld [vmem:[#allocation5 + $0xa0] sm:$0xf]
    %v135 = vld [vmem:[#allocation5 + $0xa4] sm:$0xf]
    %v136 = vld [vmem:[#allocation5 + $0xa8] sm:$0xf]
    %v137 = vld [vmem:[#allocation5 + $0xac] sm:$0xf]
    %v138 = vld [vmem:[#allocation5 + $0xb0] sm:$0xf]
    %v139 = vld [vmem:[#allocation5 + $0xb4] sm:$0xf]
    %v140 = vld [vmem:[#allocation5 + $0xb8] sm:$0xf]
    %v141 = vld [vmem:[#allocation5 + $0xbc] sm:$0xf]
    %v142 = vld [vmem:[#allocation5 + $0xc0] sm:$0xf]
    %v143 = vld [vmem:[#allocation5 + $0xc4] sm:$0xf]
    %v144 = vld [vmem:[#allocation5 + $0xc8] sm:$0xf]
    %v145 = vld [vmem:[#allocation5 + $0xcc] sm:$0xf]
    %v146 = vld [vmem:[#allocation5 + $0xd0] sm:$0xf]
    %v147 = vld [vmem:[#allocation5 + $0xd4] sm:$0xf]
    %v148 = vld [vmem:[#allocation5 + $0xd8] sm:$0xf]
    %v149 = vld [vmem:[#allocation5 + $0xdc] sm:$0xf]
    %v150 = vld [vmem:[#allocation5 + $0xe0] sm:$0xf]
    %v151 = vld [vmem:[#allocation5 + $0xe4] sm:$0xf]
    %v152 = vld [vmem:[#allocation5 + $0xe8] sm:$0xf]
    %v153 = vld [vmem:[#allocation5 + $0xec] sm:$0xf]
    %v154 = vld [vmem:[#allocation5 + $0xf0] sm:$0xf]
    %v155 = vld [vmem:[#allocation5 + $0xf4] sm:$0xf]
    %v156 = vld [vmem:[#allocation5 + $0xf8] sm:$0xf]
    %v157 = vld [vmem:[#allocation5 + $0xfc] sm:$0xf]
    %v158 = vld [vmem:[#allocation5 + $0x100] sm:$0xf]
    %v159 = vld [vmem:[#allocation5 + $0x104] sm:$0xf]
    %v160 = vld [vmem:[#allocation5 + $0x108] sm:$0xf]
    %v161 = vld [vmem:[#allocation5 + $0x10c] sm:$0xf]
    %v162 = vld [vmem:[#allocation5 + $0x110] sm:$0xf]
    %v163 = vld [vmem:[#allocation5 + $0x114] sm:$0xf]
    %v164 = vld [vmem:[#allocation5 + $0x118] sm:$0xf]
    %v165 = vld [vmem:[#allocation5 + $0x11c] sm:$0xf]
    %v166 = vld [vmem:[#allocation7] sm:$0x1]
    %v168 = vlaneseq
    %v169 = vshrl.u32 %v168, 7
    %v170 = vsub.s32 0, %v169
    %v171 = vrot.slane %v166, %v170
    %v212 = vunpack.c.l.b16 %v55
    %v213 = vunpack.c.h.b16 %v55
    %v214 = vunpack.c.l.b16 %v56
    %v215 = vunpack.c.h.b16 %v56
    %v216 = vunpack.c.l.b16 %v57
    %v217 = vunpack.c.l.b16 %v58
    %v218 = vunpack.c.h.b16 %v58
    %v219 = vunpack.c.l.b16 %v59
    %v220 = vunpack.c.h.b16 %v59
    %v221 = vunpack.c.l.b16 %v60
    %v222 = vunpack.c.l.b16 %v61
    %v223 = vunpack.c.h.b16 %v61
    %v224 = vunpack.c.l.b16 %v62
    %v225 = vunpack.c.h.b16 %v62
    %v226 = vunpack.c.l.b16 %v63
    %v227 = vunpack.c.l.b16 %v64
    %v228 = vunpack.c.h.b16 %v64
    %v229 = vunpack.c.l.b16 %v65
    %v230 = vunpack.c.h.b16 %v65
    %v231 = vunpack.c.l.b16 %v66
    %v232 = vunpack.c.l.b16 %v67
    %v233 = vunpack.c.h.b16 %v67
    %v234 = vunpack.c.l.b16 %v68
    %v235 = vunpack.c.h.b16 %v68
    %v236 = vunpack.c.l.b16 %v69
    %v237 = vunpack.c.l.b16 %v70
    %v238 = vunpack.c.h.b16 %v70
    %v239 = vunpack.c.l.b16 %v71
    %v240 = vunpack.c.h.b16 %v71
    %v241 = vunpack.c.l.b16 %v72
    %v242 = vunpack.c.l.b16 %v73
    %v243 = vunpack.c.h.b16 %v73
    %v244 = vunpack.c.l.b16 %v74
    %v245 = vunpack.c.h.b16 %v74
    %v246 = vunpack.c.l.b16 %v75
    %v247 = vunpack.c.l.b16 %v76
    %v248 = vunpack.c.h.b16 %v76
    %v249 = vunpack.c.l.b16 %v77
    %v250 = vunpack.c.h.b16 %v77
    %v251 = vunpack.c.l.b16 %v78
    %v252 = vunpack.c.l.b16 %v79
    %v253 = vunpack.c.h.b16 %v79
    %v254 = vunpack.c.l.b16 %v80
    %v255 = vunpack.c.h.b16 %v80
    %v256 = vunpack.c.l.b16 %v81
    %v257 = vunpack.c.l.b16 %v82
    %v258 = vunpack.c.h.b16 %v82
    %v259 = vunpack.c.l.b16 %v83
    %v260 = vunpack.c.h.b16 %v83
    %v261 = vunpack.c.l.b16 %v84
    %v262 = vunpack.c.l.b16 %v85
    %v263 = vunpack.c.h.b16 %v85
    %v264 = vunpack.c.l.b16 %v86
    %v265 = vunpack.c.h.b16 %v86
    %v266 = vunpack.c.l.b16 %v87
    %v267 = vunpack.c.l.b16 %v88
    %v268 = vunpack.c.h.b16 %v88
    %v269 = vunpack.c.l.b16 %v89
    %v270 = vunpack.c.h.b16 %v89
    %v271 = vunpack.c.l.b16 %v90
    %v272 = vunpack.c.l.b16 %v91
    %v273 = vunpack.c.h.b16 %v91
    %v274 = vunpack.c.l.b16 %v92
    %v275 = vunpack.c.h.b16 %v92
    %v276 = vunpack.c.l.b16 %v93
    %v277 = vpack.c.b16 %v217, %v212
    %v278 = vpack.c.b16 %v218, %v213
    %v279 = vpack.c.b16 %v219, %v214
    %v280 = vpack.c.b16 %v220, %v215
    %v281 = vpack.c.b16 %v221, %v216
    %v282 = vpack.c.b16 %v227, %v222
    %v283 = vpack.c.b16 %v228, %v223
    %v284 = vpack.c.b16 %v229, %v224
    %v285 = vpack.c.b16 %v230, %v225
    %v286 = vpack.c.b16 %v231, %v226
    %v287 = vpack.c.b16 %v237, %v232
    %v288 = vpack.c.b16 %v238, %v233
    %v289 = vpack.c.b16 %v239, %v234
    %v290 = vpack.c.b16 %v240, %v235
    %v291 = vpack.c.b16 %v241, %v236
    %v292 = vpack.c.b16 %v247, %v242
    %v293 = vpack.c.b16 %v248, %v243
    %v294 = vpack.c.b16 %v249, %v244
    %v295 = vpack.c.b16 %v250, %v245
    %v296 = vpack.c.b16 %v251, %v246
    %v297 = vpack.c.b16 %v257, %v252
    %v298 = vpack.c.b16 %v258, %v253
    %v299 = vpack.c.b16 %v259, %v254
    %v300 = vpack.c.b16 %v260, %v255
    %v301 = vpack.c.b16 %v261, %v256
    %v302 = vpack.c.b16 %v267, %v262
    %v303 = vpack.c.b16 %v268, %v263
    %v304 = vpack.c.b16 %v269, %v264
    %v305 = vpack.c.b16 %v270, %v265
    %v306 = vpack.c.b16 %v271, %v266
    %v307 = vpack.c.b16 %v272, %v272
    %v308 = vpack.c.b16 %v273, %v273
    %v309 = vpack.c.b16 %v274, %v274
    %v310 = vpack.c.b16 %v275, %v275
    %v311 = vpack.c.b16 %v276, %v276
    %v412 = vunpack.c.l.b16 %v94
    %v413 = vunpack.c.l.b16 %v95
    %v414 = vunpack.c.l.b16 %v96
    %v415 = vunpack.c.l.b16 %v97
    %v416 = vunpack.c.l.b16 %v98
    %v417 = vunpack.c.l.b16 %v99
    %v418 = vunpack.c.l.b16 %v100
    %v419 = vunpack.c.l.b16 %v101
    %v420 = vunpack.c.l.b16 %v102
    %v421 = vunpack.c.l.b16 %v103
    %v422 = vunpack.c.l.b16 %v104
    %v423 = vunpack.c.l.b16 %v105
    %v424 = vunpack.c.l.b16 %v106
    %v425 = vunpack.c.l.b16 %v107
    %v426 = vunpack.c.l.b16 %v108
    %v427 = vunpack.c.l.b16 %v109
    %v428 = vunpack.c.l.b16 %v110
    %v429 = vunpack.c.l.b16 %v111
    %v430 = vunpack.c.l.b16 %v112
    %v431 = vunpack.c.l.b16 %v113
    %v432 = vunpack.c.l.b16 %v114
    %v433 = vunpack.c.l.b16 %v115
    %v434 = vunpack.c.l.b16 %v116
    %v435 = vunpack.c.l.b16 %v117
    %v436 = vunpack.c.l.b16 %v118
    %v437 = vunpack.c.l.b16 %v119
    %v438 = vunpack.c.l.b16 %v120
    %v439 = vunpack.c.l.b16 %v121
    %v440 = vunpack.c.l.b16 %v122
    %v441 = vunpack.c.l.b16 %v123
    %v442 = vunpack.c.l.b16 %v124
    %v443 = vunpack.c.l.b16 %v125
    %v444 = vunpack.c.l.b16 %v126
    %v445 = vunpack.c.l.b16 %v127
    %v446 = vunpack.c.l.b16 %v128
    %v447 = vunpack.c.l.b16 %v129
    %v448 = vunpack.c.l.b16 %v130
    %v449 = vunpack.c.l.b16 %v131
    %v450 = vunpack.c.l.b16 %v132
    %v451 = vunpack.c.l.b16 %v133
    %v452 = vunpack.c.l.b16 %v134
    %v453 = vunpack.c.l.b16 %v135
    %v454 = vunpack.c.l.b16 %v136
    %v455 = vunpack.c.l.b16 %v137
    %v456 = vunpack.c.l.b16 %v138
    %v457 = vunpack.c.l.b16 %v139
    %v458 = vunpack.c.l.b16 %v140
    %v459 = vunpack.c.l.b16 %v141
    %v460 = vunpack.c.l.b16 %v142
    %v461 = vunpack.c.l.b16 %v143
    %v462 = vunpack.c.l.b16 %v144
    %v463 = vunpack.c.l.b16 %v145
    %v464 = vunpack.c.l.b16 %v146
    %v465 = vunpack.c.l.b16 %v147
    %v466 = vunpack.c.l.b16 %v148
    %v467 = vunpack.c.l.b16 %v149
    %v468 = vunpack.c.l.b16 %v150
    %v469 = vunpack.c.l.b16 %v151
    %v470 = vunpack.c.l.b16 %v152
    %v471 = vunpack.c.l.b16 %v153
    %v472 = vunpack.c.l.b16 %v154
    %v473 = vunpack.c.l.b16 %v155
    %v474 = vunpack.c.l.b16 %v156
    %v475 = vunpack.c.l.b16 %v157
    %v476 = vunpack.c.l.b16 %v158
    %v477 = vunpack.c.l.b16 %v159
    %v478 = vunpack.c.l.b16 %v160
    %v479 = vunpack.c.l.b16 %v161
    %v480 = vunpack.c.l.b16 %v162
    %v481 = vunpack.c.l.b16 %v163
    %v482 = vunpack.c.l.b16 %v164
    %v483 = vunpack.c.l.b16 %v165
    %v484 = vpack.c.b16 %v413, %v412
    %v485 = vpack.c.b16 %v415, %v414
    %v486 = vpack.c.b16 %v417, %v416
    %v487 = vpack.c.b16 %v419, %v418
    %v488 = vpack.c.b16 %v421, %v420
    %v489 = vpack.c.b16 %v423, %v422
    %v490 = vpack.c.b16 %v425, %v424
    %v491 = vpack.c.b16 %v427, %v426
    %v492 = vpack.c.b16 %v429, %v428
    %v493 = vpack.c.b16 %v431, %v430
    %v494 = vpack.c.b16 %v433, %v432
    %v495 = vpack.c.b16 %v435, %v434
    %v496 = vpack.c.b16 %v437, %v436
    %v497 = vpack.c.b16 %v439, %v438
    %v498 = vpack.c.b16 %v441, %v440
    %v499 = vpack.c.b16 %v443, %v442
    %v500 = vpack.c.b16 %v445, %v444
    %v501 = vpack.c.b16 %v447, %v446
    %v502 = vpack.c.b16 %v449, %v448
    %v503 = vpack.c.b16 %v451, %v450
    %v504 = vpack.c.b16 %v453, %v452
    %v505 = vpack.c.b16 %v455, %v454
    %v506 = vpack.c.b16 %v457, %v456
    %v507 = vpack.c.b16 %v459, %v458
    %v508 = vpack.c.b16 %v461, %v460
    %v509 = vpack.c.b16 %v463, %v462
    %v510 = vpack.c.b16 %v465, %v464
    %v511 = vpack.c.b16 %v467, %v466
    %v512 = vpack.c.b16 %v469, %v468
    %v513 = vpack.c.b16 %v471, %v470
    %v514 = vpack.c.b16 %v473, %v472
    %v515 = vpack.c.b16 %v475, %v474
    %v516 = vpack.c.b16 %v477, %v476
    %v517 = vpack.c.b16 %v479, %v478
    %v518 = vpack.c.b16 %v481, %v480
    %v519 = vpack.c.b16 %v483, %v482
    %vm556 = vcmask 523264
    %v558 = vsel %vm556, %v281, 0
    %v561 = vsel %vm556, %v286, 0
    %v564 = vsel %vm556, %v291, 0
    %v567 = vsel %vm556, %v296, 0
    %v570 = vsel %vm556, %v301, 0
    %v573 = vsel %vm556, %v306, 0
    %v576 = vsel %vm556, %v311, 0
    %578 = vmatprep.subr.bf16.mxu0 0
    %579 = vmatpush1.bf16.msra.mxu0 %v484
    %580 = vmatprep.subr.bf16.mxu0 0
    %581 = vmatpush1.bf16.msra.mxu0 %v485
    %582 = vmatprep.subr.bf16.mxu0 0
    %583 = vmatpush1.bf16.msra.mxu0 %v486
    %584 = vmatprep.subr.bf16.mxu0 0
    %585 = vmatpush1.bf16.msra.mxu0 %v487
    %586 = vmatprep.subr.bf16.mxu0 0
    %587 = vmatpush1.bf16.msra.mxu0 %v488
    %588 = vmatprep.subr.bf16.mxu0 0
    %589 = vmatpush1.bf16.msra.mxu0 %v489
    %590 = vmatprep.subr.bf16.mxu0 0
    %591 = vmatpush1.bf16.msra.mxu0 %v490
    %592 = vmatprep.subr.bf16.mxu0 0
    %593 = vmatpush1.bf16.msra.mxu0 %v491
    %594 = vmatprep.subr.bf16.mxu0 0
    %595 = vmatpush1.bf16.msra.mxu0 %v492
    %596 = vmatprep.subr.bf16.mxu0 0
    %597 = vmatpush1.bf16.msra.mxu0 %v493
    %598 = vmatprep.subr.bf16.mxu0 0
    %599 = vmatpush1.bf16.msra.mxu0 %v494
    %600 = vmatprep.subr.bf16.mxu0 0
    %601 = vmatpush1.bf16.msra.mxu0 %v495
    %602 = vmatprep.subr.bf16.mxu0 0
    %603 = vmatpush1.bf16.msra.mxu0 %v496
    %604 = vmatprep.subr.bf16.mxu0 0
    %605 = vmatpush1.bf16.msra.mxu0 %v497
    %606 = vmatprep.subr.bf16.mxu0 0
    %607 = vmatpush1.bf16.msra.mxu0 %v498
    %608 = vmatprep.subr.bf16.mxu0 0
    %609 = vmatpush1.bf16.msra.mxu0 %v499
    %610 = vmatprep.mubr.bf16.mxu0 %v278
    %611 = vmatmul.mubr.bf16.gmra.mrb[0].mxu0 %v277
    %v612 = vpop.f32.mrb[0].mxu0
    %v613 = vadd.f32 %v171, %v612
    %v614 = vpop.f32.mrb[0].mxu0
    %v615 = vpop.f32.mrb[0].mxu0
    %v616 = vadd.f32 %v171, %v615
    %v617 = vpop.f32.mrb[0].mxu0
    %618 = vmatprep.mubr.bf16.mxu0 %v283
    %619 = vmatmul.mubr.bf16.gmra.mrb[0].mxu0 %v282
    %v620 = vpop.f32.mrb[0].mxu0
    %v621 = vadd.f32 %v171, %v620
    %v622 = vpop.f32.mrb[0].mxu0
    %v623 = vpop.f32.mrb[0].mxu0
    %v624 = vadd.f32 %v171, %v623
    %v625 = vpop.f32.mrb[0].mxu0
    %626 = vmatprep.mubr.bf16.mxu0 %v288
    %627 = vmatmul.mubr.bf16.gmra.mrb[0].mxu0 %v287
    %v628 = vpop.f32.mrb[0].mxu0
    %v629 = vadd.f32 %v171, %v628
    %v630 = vpop.f32.mrb[0].mxu0
    %v631 = vpop.f32.mrb[0].mxu0
    %v632 = vadd.f32 %v171, %v631
    %v633 = vpop.f32.mrb[0].mxu0
    %634 = vmatprep.mubr.bf16.mxu0 %v293
    %635 = vmatmul.mubr.bf16.gmra.mrb[0].mxu0 %v292
    %v636 = vpop.f32.mrb[0].mxu0
    %v637 = vadd.f32 %v171, %v636
    %v638 = vpop.f32.mrb[0].mxu0
    %v639 = vpop.f32.mrb[0].mxu0
    %v640 = vadd.f32 %v171, %v639
    %v641 = vpop.f32.mrb[0].mxu0
    %642 = vmatprep.mubr.bf16.mxu0 %v298
    %643 = vmatmul.mubr.bf16.gmra.mrb[0].mxu0 %v297
    %v644 = vpop.f32.mrb[0].mxu0
    %v645 = vadd.f32 %v171, %v644
    %v646 = vpop.f32.mrb[0].mxu0
    %v647 = vpop.f32.mrb[0].mxu0
    %v648 = vadd.f32 %v171, %v647
    %v649 = vpop.f32.mrb[0].mxu0
    %650 = vmatprep.mubr.bf16.mxu0 %v303
    %651 = vmatmul.mubr.bf16.gmra.mrb[0].mxu0 %v302
    %v652 = vpop.f32.mrb[0].mxu0
    %v653 = vadd.f32 %v171, %v652
    %v654 = vpop.f32.mrb[0].mxu0
    %v655 = vpop.f32.mrb[0].mxu0
    %v656 = vadd.f32 %v171, %v655
    %v657 = vpop.f32.mrb[0].mxu0
    %658 = vmatprep.mubr.bf16.mxu0 %v308
    %659 = vmatmul.mubr.bf16.gmra.mrb[0].mxu0 %v307
    %v660 = vpop.f32.mrb[0].mxu0
    %v661 = vadd.f32 %v171, %v660
    %v662 = vpop.f32.mrb[0].mxu0
    %v663 = vpop.f32.mrb[0].mxu0
    %v664 = vpop.f32.mrb[0].mxu0
    %665 = vdwg.mxu0
    %666 = vmatprep.subr.bf16.mxu0 0
    %667 = vmatpush1.bf16.msra.mxu0 %v500
    %668 = vmatprep.subr.bf16.mxu0 0
    %669 = vmatpush1.bf16.msra.mxu0 %v501
    %670 = vmatprep.subr.bf16.mxu0 0
    %671 = vmatpush1.bf16.msra.mxu0 %v502
    %672 = vmatprep.subr.bf16.mxu0 0
    %673 = vmatpush1.bf16.msra.mxu0 %v503
    %674 = vmatprep.subr.bf16.mxu0 0
    %675 = vmatpush1.bf16.msra.mxu0 %v504
    %676 = vmatprep.subr.bf16.mxu0 0
    %677 = vmatpush1.bf16.msra.mxu0 %v505
    %678 = vmatprep.subr.bf16.mxu0 0
    %679 = vmatpush1.bf16.msra.mxu0 %v506
    %680 = vmatprep.subr.bf16.mxu0 0
    %681 = vmatpush1.bf16.msra.mxu0 %v507
    %682 = vmatprep.subr.bf16.mxu0 0
    %683 = vmatpush1.bf16.msra.mxu0 %v508
    %684 = vmatprep.subr.bf16.mxu0 0
    %685 = vmatpush1.bf16.msra.mxu0 %v509
    %686 = vmatprep.subr.bf16.mxu0 0
    %687 = vmatpush1.bf16.msra.mxu0 %v510
    %688 = vmatprep.subr.bf16.mxu0 0
    %689 = vmatpush1.bf16.msra.mxu0 %v511
    %690 = vmatprep.subr.bf16.mxu0 0
    %691 = vmatpush1.bf16.msra.mxu0 %v512
    %692 = vmatprep.subr.bf16.mxu0 0
    %693 = vmatpush1.bf16.msra.mxu0 %v513
    %694 = vmatprep.subr.bf16.mxu0 0
    %695 = vmatpush1.bf16.msra.mxu0 %v514
    %696 = vmatprep.subr.bf16.mxu0 0
    %697 = vmatpush1.bf16.msra.mxu0 %v515
    %698 = vmatprep.mubr.bf16.mxu0 %v280
    %699 = vmatmul.mubr.bf16.gmra.mrb[0].mxu0 %v279
    %v700 = vpop.f32.mrb[0].mxu0
    %v701 = vadd.f32 %v613, %v700
    %v702 = vpop.f32.mrb[0].mxu0
    %v703 = vpop.f32.mrb[0].mxu0
    %v704 = vadd.f32 %v616, %v703
    %v705 = vpop.f32.mrb[0].mxu0
    %706 = vmatprep.mubr.bf16.mxu0 %v285
    %707 = vmatmul.mubr.bf16.gmra.mrb[0].mxu0 %v284
    %v708 = vpop.f32.mrb[0].mxu0
    %v709 = vadd.f32 %v621, %v708
    %v710 = vpop.f32.mrb[0].mxu0
    %v711 = vpop.f32.mrb[0].mxu0
    %v712 = vadd.f32 %v624, %v711
    %v713 = vpop.f32.mrb[0].mxu0
    %714 = vmatprep.mubr.bf16.mxu0 %v290
    %715 = vmatmul.mubr.bf16.gmra.mrb[0].mxu0 %v289
    %v716 = vpop.f32.mrb[0].mxu0
    %v717 = vadd.f32 %v629, %v716
    %v718 = vpop.f32.mrb[0].mxu0
    %v719 = vpop.f32.mrb[0].mxu0
    %v720 = vadd.f32 %v632, %v719
    %v721 = vpop.f32.mrb[0].mxu0
    %722 = vmatprep.mubr.bf16.mxu0 %v295
    %723 = vmatmul.mubr.bf16.gmra.mrb[0].mxu0 %v294
    %v724 = vpop.f32.mrb[0].mxu0
    %v725 = vadd.f32 %v637, %v724
    %v726 = vpop.f32.mrb[0].mxu0
    %v727 = vpop.f32.mrb[0].mxu0
    %v728 = vadd.f32 %v640, %v727
    %v729 = vpop.f32.mrb[0].mxu0
    %730 = vmatprep.mubr.bf16.mxu0 %v300
    %731 = vmatmul.mubr.bf16.gmra.mrb[0].mxu0 %v299
    %v732 = vpop.f32.mrb[0].mxu0
    %v733 = vadd.f32 %v645, %v732
    %v734 = vpop.f32.mrb[0].mxu0
    %v735 = vpop.f32.mrb[0].mxu0
    %v736 = vadd.f32 %v648, %v735
    %v737 = vpop.f32.mrb[0].mxu0
    %738 = vmatprep.mubr.bf16.mxu0 %v305
    %739 = vmatmul.mubr.bf16.gmra.mrb[0].mxu0 %v304
    %v740 = vpop.f32.mrb[0].mxu0
    %v741 = vadd.f32 %v653, %v740
    %v742 = vpop.f32.mrb[0].mxu0
    %v743 = vpop.f32.mrb[0].mxu0
    %v744 = vadd.f32 %v656, %v743
    %v745 = vpop.f32.mrb[0].mxu0
    %746 = vmatprep.mubr.bf16.mxu0 %v310
    %747 = vmatmul.mubr.bf16.gmra.mrb[0].mxu0 %v309
    %v748 = vpop.f32.mrb[0].mxu0
    %v749 = vadd.f32 %v661, %v748
    %v750 = vpop.f32.mrb[0].mxu0
    %v751 = vpop.f32.mrb[0].mxu0
    %v752 = vpop.f32.mrb[0].mxu0
    %753 = vdwg.mxu0
    %754 = vmatprep.subr.bf16.mxu0 0
    %755 = vmatpush1.bf16.msra.mxu0 %v516
    %756 = vmatprep.subr.bf16.mxu0 0
    %757 = vmatpush1.bf16.msra.mxu0 %v517
    %758 = vmatprep.subr.bf16.mxu0 0
    %759 = vmatpush1.bf16.msra.mxu0 %v518
    %760 = vmatprep.subr.bf16.mxu0 0
    %761 = vmatpush1.bf16.msra.mxu0 %v519
    %762 = vmatprep.subr.bf16.mxu0 0
    %763 = vmatpush1.bf16.msra.mxu0 0
    %764 = vmatprep.subr.bf16.mxu0 0
    %765 = vmatpush1.bf16.msra.mxu0 0
    %766 = vmatprep.subr.bf16.mxu0 0
    %767 = vmatpush1.bf16.msra.mxu0 0
    %768 = vmatprep.subr.bf16.mxu0 0
    %769 = vmatpush1.bf16.msra.mxu0 0
    %770 = vmatprep.subr.bf16.mxu0 0
    %771 = vmatpush1.bf16.msra.mxu0 0
    %772 = vmatprep.subr.bf16.mxu0 0
    %773 = vmatpush1.bf16.msra.mxu0 0
    %774 = vmatprep.subr.bf16.mxu0 0
    %775 = vmatpush1.bf16.msra.mxu0 0
    %776 = vmatprep.subr.bf16.mxu0 0
    %777 = vmatpush1.bf16.msra.mxu0 0
    %778 = vmatprep.subr.bf16.mxu0 0
    %779 = vmatpush1.bf16.msra.mxu0 0
    %780 = vmatprep.subr.bf16.mxu0 0
    %781 = vmatpush1.bf16.msra.mxu0 0
    %782 = vmatprep.subr.bf16.mxu0 0
    %783 = vmatpush1.bf16.msra.mxu0 0
    %784 = vmatprep.subr.bf16.mxu0 0
    %785 = vmatpush1.bf16.msra.mxu0 0
    %786 = vmatprep.mubr.bf16.mxu0 0
    %787 = vmatmul.mubr.bf16.gmra.mrb[0].mxu0 %v558
    %v788 = vpop.f32.mrb[0].mxu0
    %v789 = vadd.f32 %v701, %v788
    %v790 = vpop.f32.mrb[0].mxu0
    %v791 = vpop.f32.mrb[0].mxu0
    %v792 = vadd.f32 %v704, %v791
    %v793 = vpop.f32.mrb[0].mxu0
    %794 = vmatprep.mubr.bf16.mxu0 0
    %795 = vmatmul.mubr.bf16.gmra.mrb[0].mxu0 %v561
    %v796 = vpop.f32.mrb[0].mxu0
    %v797 = vadd.f32 %v709, %v796
    %v798 = vpop.f32.mrb[0].mxu0
    %v799 = vpop.f32.mrb[0].mxu0
    %v800 = vadd.f32 %v712, %v799
    %v801 = vpop.f32.mrb[0].mxu0
    %802 = vmatprep.mubr.bf16.mxu0 0
    %803 = vmatmul.mubr.bf16.gmra.mrb[0].mxu0 %v564
    %v804 = vpop.f32.mrb[0].mxu0
    %v805 = vadd.f32 %v717, %v804
    %v806 = vpop.f32.mrb[0].mxu0
    %v807 = vpop.f32.mrb[0].mxu0
    %v808 = vadd.f32 %v720, %v807
    %v809 = vpop.f32.mrb[0].mxu0
    %810 = vmatprep.mubr.bf16.mxu0 0
    %811 = vmatmul.mubr.bf16.gmra.mrb[0].mxu0 %v567
    %v812 = vpop.f32.mrb[0].mxu0
    %v813 = vadd.f32 %v725, %v812
    %v814 = vpop.f32.mrb[0].mxu0
    %v815 = vpop.f32.mrb[0].mxu0
    %v816 = vadd.f32 %v728, %v815
    %v817 = vpop.f32.mrb[0].mxu0
    %818 = vmatprep.mubr.bf16.mxu0 0
    %819 = vmatmul.mubr.bf16.gmra.mrb[0].mxu0 %v570
    %v820 = vpop.f32.mrb[0].mxu0
    %v821 = vadd.f32 %v733, %v820
    %v822 = vpop.f32.mrb[0].mxu0
    %v823 = vpop.f32.mrb[0].mxu0
    %v824 = vadd.f32 %v736, %v823
    %v825 = vpop.f32.mrb[0].mxu0
    %826 = vmatprep.mubr.bf16.mxu0 0
    %827 = vmatmul.mubr.bf16.gmra.mrb[0].mxu0 %v573
    %v828 = vpop.f32.mrb[0].mxu0
    %v829 = vadd.f32 %v741, %v828
    %v830 = vpop.f32.mrb[0].mxu0
    %v831 = vpop.f32.mrb[0].mxu0
    %v832 = vadd.f32 %v744, %v831
    %v833 = vpop.f32.mrb[0].mxu0
    %834 = vmatprep.mubr.bf16.mxu0 0
    %835 = vmatmul.mubr.bf16.gmra.mrb[0].mxu0 %v576
    %v836 = vpop.f32.mrb[0].mxu0
    %v837 = vadd.f32 %v749, %v836
    %v838 = vpop.f32.mrb[0].mxu0
    %v839 = vpop.f32.mrb[0].mxu0
    %v840 = vpop.f32.mrb[0].mxu0
    %841 = vdwg.mxu0
    %v842 = vmax.f32 %v789, 0.0
    %v843 = vmax.f32 %v792, 0.0
    %v844 = vmax.f32 %v797, 0.0
    %v845 = vmax.f32 %v800, 0.0
    %v846 = vmax.f32 %v805, 0.0
    %v847 = vmax.f32 %v808, 0.0
    %v848 = vmax.f32 %v813, 0.0
    %v849 = vmax.f32 %v816, 0.0
    %v850 = vmax.f32 %v821, 0.0
    %v851 = vmax.f32 %v824, 0.0
    %v852 = vmax.f32 %v829, 0.0
    %v853 = vmax.f32 %v832, 0.0
    %v854 = vmax.f32 %v837, 0.0
    %v855 = vpack.c.bf16 %v843, %v842
    %v856 = vpack.c.bf16 %v845, %v844
    %v857 = vpack.c.bf16 %v847, %v846
    %v858 = vpack.c.bf16 %v849, %v848
    %v859 = vpack.c.bf16 %v851, %v850
    %v860 = vpack.c.bf16 %v853, %v852
    %v861 = vpack.c.bf16 %v854, %v854
    %v869 = vunpack.c.l.b16 %v855
    %v870 = vunpack.c.h.b16 %v855
    %v871 = vunpack.c.l.b16 %v856
    %v872 = vunpack.c.h.b16 %v856
    %v873 = vunpack.c.l.b16 %v857
    %v874 = vunpack.c.h.b16 %v857
    %v875 = vunpack.c.l.b16 %v858
    %v876 = vunpack.c.h.b16 %v858
    %v877 = vunpack.c.l.b16 %v859
    %v878 = vunpack.c.h.b16 %v859
    %v879 = vunpack.c.l.b16 %v860
    %v880 = vunpack.c.h.b16 %v860
    %v881 = vunpack.c.l.b16 %v861
    %v882 = vpack.c.b16 %v869, %v869
    %v883 = vpack.c.b16 %v870, %v870
    %v884 = vpack.c.b16 %v871, %v871
    %v885 = vpack.c.b16 %v872, %v872
    %v886 = vpack.c.b16 %v873, %v873
    %v887 = vpack.c.b16 %v874, %v874
    %v888 = vpack.c.b16 %v875, %v875
    %v889 = vpack.c.b16 %v876, %v876
    %v890 = vpack.c.b16 %v877, %v877
    %v891 = vpack.c.b16 %v878, %v878
    %v892 = vpack.c.b16 %v879, %v879
    %v893 = vpack.c.b16 %v880, %v880
    %v894 = vpack.c.b16 %v881, %v881
    %vm908 = vcmask 519168
    %909 = vst.msk [vmem:[#allocation8] sm:$0xf] %vm908, %v882
    %910 = vst.msk [vmem:[#allocation8 + $0x4] sm:$0xf] %vm908, %v883
    %911 = vst.msk [vmem:[#allocation8 + $0x8] sm:$0xf] %vm908, %v884
    %912 = vst.msk [vmem:[#allocation8 + $0xc] sm:$0xf] %vm908, %v885
    %913 = vst.msk [vmem:[#allocation8 + $0x10] sm:$0xf] %vm908, %v886
    %914 = vst.msk [vmem:[#allocation8 + $0x14] sm:$0xf] %vm908, %v887
    %915 = vst.msk [vmem:[#allocation8 + $0x18] sm:$0xf] %vm908, %v888
    %916 = vst.msk [vmem:[#allocation8 + $0x1c] sm:$0xf] %vm908, %v889
    %917 = vst.msk [vmem:[#allocation8 + $0x20] sm:$0xf] %vm908, %v890
    %918 = vst.msk [vmem:[#allocation8 + $0x24] sm:$0xf] %vm908, %v891
    %919 = vst.msk [vmem:[#allocation8 + $0x28] sm:$0xf] %vm908, %v892
    %920 = vst.msk [vmem:[#allocation8 + $0x2c] sm:$0xf] %vm908, %v893
    %vm921 = vcmask 516096
    %922 = vst.msk [vmem:[#allocation8 + $0x30] sm:$0x1] %vm921, %v894
    // Predicated region
    $region26: #{atari_cnn_forward.6} parent=1 // pred_check
      _
    $region27: #{atari_cnn_forward.6} parent=1 // pred_check_branch
      %924 = sbr.rel (0) target = $region29
    $region28: #{atari_cnn_forward.6} parent=1 // pred_region
      %s926 = ssub.s32 832, 832
      %927 = vsyncadd [#allocation4], %s926
      %s928 = sshll.u32 [#allocation8], 4
      %s929 = int_to_ptr.vmem [resolvable:$true] %s928
      %934 = dma.vmem_to_hbm [thread:$0]  %s929, 832, %s3, [#allocation4], 64, 64, 4
    $region29: #{atari_cnn_forward.6} parent=1 // pred_fallthru
      _
    // Predicated region
    $region30: #{atari_cnn_forward.6} parent=1 // pred_check
      _
    $region31: #{atari_cnn_forward.6} parent=1 // pred_check_branch
      %936 = sbr.rel (0) target = $region33
    $region32: #{atari_cnn_forward.6} parent=1 // pred_region
      %937 = dma.done [#allocation4], 832
    $region33: #{atari_cnn_forward.6} parent=1 // pred_fallthru
      _
    %938 = vsyncpa [#allocation3], 1
    %939 = vsyncpa [#allocation6], 1
    %940 = vsyncpa [#allocation4], 1

// kernel: atari_cnn_forward.7
$region0: #{atari_cnn_forward.7}
  #allocation0 [shape = 'u32[]', space=smem, size = 0x4, offset = 0x4, fixed_abs, tag = 'smem constant byte address 0x4 - core index']
  #allocation1 [shape = 'u32[144,128]{1,0:T(1,128)}', space=vmem, size = 0x12000, scoped, tag = 'internal scratch']
  %s0 = inlined_call_operand.hbm [shape: bf16[2,3136], index: 0, kind: input, shape index: {}]
  %s1 = inlined_call_operand.hbm [shape: bf16[3136,512], index: 1, kind: input, shape index: {}]
  %s2 = inlined_call_operand.hbm [shape: f32[1,512], index: 2, kind: input, shape index: {}]
  %s3 = inlined_call_operand.hbm [shape: f32[2,512], index: 3, kind: output, shape index: {}]
  %s4 = sld [smem:[#allocation0]]
  $region34: #{atari_cnn_forward.7} parent=0
    _
  %s6 = ssub.s32 1, %s4
  %s7 = scalar_select 0, %s6, %s4
  $region1: #{atari_cnn_forward.7} parent=0
    #allocation2 [shape = 'u8[12800]{0}', space=vmem, size = 0x3400, scoped, tag = 'input window, operand 0, single buffered']
    #allocation3 [shape = 's32[1]{0}', space=sflag, size = 0x4, scoped, tag = 'scoped memory for atari_cnn_forward.7']
    #allocation4 [shape = 's32[1]{0}', space=sflag, size = 0x4, scoped, tag = 'scoped memory for atari_cnn_forward.7']
    #allocation5 [shape = 'u8[3211264]{0}', space=vmem, size = 0x310000, scoped, tag = 'input window, operand 1, single buffered']
    #allocation6 [shape = 's32[1]{0}', space=sflag, size = 0x4, scoped, tag = 'scoped memory for atari_cnn_forward.7']
    #allocation7 [shape = 'u8[2048]{0}', space=vmem, size = 0x800, scoped, tag = 'input window, operand 2, single buffered']
    #allocation8 [shape = 'u8[4096]{0}', space=vmem, size = 0x1000, scoped, tag = 'output window, operand 0, single buffered']
    %8 = vsyncpa [#allocation3], 0
    %9 = vsyncpa [#allocation6], 0
    %10 = vsyncpa [#allocation4], 0
    // Predicated region
    $region2: #{atari_cnn_forward.7} parent=1 // pred_check
      _
    $region3: #{atari_cnn_forward.7} parent=1 // pred_check_branch
      %12 = sbr.rel (0) target = $region5
    $region4: #{atari_cnn_forward.7} parent=1 // pred_region
      %s14 = ssub.s32 400, 400
      %15 = vsyncadd [#allocation3], %s14
      %s17 = sshll.u32 [#allocation2], 4
      %s18 = int_to_ptr.vmem [resolvable:$true] %s17
      %20 = dma.hbm_to_vmem [thread:$0]  %s0, 400, %s18, [#allocation3]
    $region5: #{atari_cnn_forward.7} parent=1 // pred_fallthru
      _
    // Predicated region
    $region6: #{atari_cnn_forward.7} parent=1 // pred_check
      _
    $region7: #{atari_cnn_forward.7} parent=1 // pred_check_branch
      %22 = sbr.rel (0) target = $region9
    $region8: #{atari_cnn_forward.7} parent=1 // pred_region
      %s24 = ssub.s32 100352, 100352
      %25 = vsyncadd [#allocation6], %s24
      %s26 = sshll.u32 [#allocation5], 4
      %s27 = int_to_ptr.vmem [resolvable:$true] %s26
      %32 = dma.hbm_to_vmem [thread:$0]  %s1, 100352, %s27, [#allocation6], 256, 256, 16
    $region9: #{atari_cnn_forward.7} parent=1 // pred_fallthru
      _
    // Predicated region
    $region10: #{atari_cnn_forward.7} parent=1 // pred_check
      _
    $region11: #{atari_cnn_forward.7} parent=1 // pred_check_branch
      %34 = sbr.rel (0) target = $region13
    $region12: #{atari_cnn_forward.7} parent=1 // pred_region
      %s36 = ssub.s32 64, 64
      %37 = vsyncadd [#allocation6], %s36
      %s39 = sshll.u32 [#allocation7], 4
      %s40 = int_to_ptr.vmem [resolvable:$true] %s39
      %42 = dma.hbm_to_vmem [thread:$0]  %s2, 64, %s40, [#allocation6]
    $region13: #{atari_cnn_forward.7} parent=1 // pred_fallthru
      _
    // Predicated region
    $region14: #{atari_cnn_forward.7} parent=1 // pred_check
      _
    $region15: #{atari_cnn_forward.7} parent=1 // pred_check_branch
      %44 = sbr.rel (0) target = $region17
    $region16: #{atari_cnn_forward.7} parent=1 // pred_region
      %45 = dma.done [#allocation3], 400
    $region17: #{atari_cnn_forward.7} parent=1 // pred_fallthru
      _
    // Predicated region
    $region18: #{atari_cnn_forward.7} parent=1 // pred_check
      _
    $region19: #{atari_cnn_forward.7} parent=1 // pred_check_branch
      %47 = sbr.rel (0) target = $region21
    $region20: #{atari_cnn_forward.7} parent=1 // pred_region
      %48 = dma.done [#allocation6], 100352
    $region21: #{atari_cnn_forward.7} parent=1 // pred_fallthru
      _
    // Predicated region
    $region22: #{atari_cnn_forward.7} parent=1 // pred_check
      _
    $region23: #{atari_cnn_forward.7} parent=1 // pred_check_branch
      %50 = sbr.rel (0) target = $region25
    $region24: #{atari_cnn_forward.7} parent=1 // pred_region
      %51 = dma.done [#allocation6], 64
    $region25: #{atari_cnn_forward.7} parent=1 // pred_fallthru
      _
    %v53 = vld [vmem:[#allocation2] sm:$0xff]
    %v54 = vld [vmem:[#allocation2 + $0x8] sm:$0xff]
    %v55 = vld [vmem:[#allocation2 + $0x10] sm:$0xff]
    %v56 = vld [vmem:[#allocation2 + $0x18] sm:$0x1]
    %v57 = vld [vmem:[#allocation5] sm:$0xff]
    %v58 = vld [vmem:[#allocation5 + $0x8] sm:$0xff]
    %v59 = vld [vmem:[#allocation5 + $0x10] sm:$0xff]
    %v60 = vld [vmem:[#allocation5 + $0x18] sm:$0xff]
    %v61 = vld [vmem:[#allocation5 + $0x20] sm:$0xff]
    %v62 = vld [vmem:[#allocation5 + $0x28] sm:$0xff]
    %v63 = vld [vmem:[#allocation5 + $0x30] sm:$0xff]
    %v64 = vld [vmem:[#allocation5 + $0x38] sm:$0xff]
    %v65 = vld [vmem:[#allocation5 + $0x40] sm:$0xff]
    %v66 = vld [vmem:[#allocation5 + $0x48] sm:$0xff]
    %v67 = vld [vmem:[#allocation5 + $0x50] sm:$0xff]
    %v68 = vld [vmem:[#allocation5 + $0x58] sm:$0xff]
    %v69 = vld [vmem:[#allocation5 + $0x60] sm:$0xff]
    %v70 = vld [vmem:[#allocation5 + $0x68] sm:$0xff]
    %v71 = vld [vmem:[#allocation5 + $0x70] sm:$0xff]
    %v72 = vld [vmem:[#allocation5 + $0x78] sm:$0xff]
    %v73 = vld [vmem:[#allocation5 + $0x80] sm:$0xff]
    %v74 = vld [vmem:[#allocation5 + $0x88] sm:$0xff]
    %v75 = vld [vmem:[#allocation5 + $0x90] sm:$0xff]
    %v76 = vld [vmem:[#allocation5 + $0x98] sm:$0xff]
    %v77 = vld [vmem:[#allocation5 + $0xa0] sm:$0xff]
    %v78 = vld [vmem:[#allocation5 + $0xa8] sm:$0xff]
    %v79 = vld [vmem:[#allocation5 + $0xb0] sm:$0xff]
    %v80 = vld [vmem:[#allocation5 + $0xb8] sm:$0xff]
    %v81 = vld [vmem:[#allocation5 + $0xc0] sm:$0xff]
    %v82 = vld [vmem:[#allocation5 + $0xc8] sm:$0xff]
    %v83 = vld [vmem:[#allocation5 + $0xd0] sm:$0xff]
    %v84 = vld [vmem:[#allocation5 + $0xd8] sm:$0xff]
    %v85 = vld [vmem:[#allocation5 + $0xe0] sm:$0xff]
    %v86 = vld [vmem:[#allocation5 + $0xe8] sm:$0xff]
    %v87 = vld [vmem:[#allocation5 + $0xf0] sm:$0xff]
    %v88 = vld [vmem:[#allocation5 + $0xf8] sm:$0xff]
    %v89 = vld [vmem:[#allocation5 + $0x100] sm:$0xff]
    %v90 = vld [vmem:[#allocation5 + $0x108] sm:$0xff]
    %v91 = vld [vmem:[#allocation5 + $0x110] sm:$0xff]
    %v92 = vld [vmem:[#allocation5 + $0x118] sm:$0xff]
    %v93 = vld [vmem:[#allocation5 + $0x120] sm:$0xff]
    %v94 = vld [vmem:[#allocation5 + $0x128] sm:$0xff]
    %v95 = vld [vmem:[#allocation5 + $0x130] sm:$0xff]
    %v96 = vld [vmem:[#allocation5 + $0x138] sm:$0xff]
    %v97 = vld [vmem:[#allocation5 + $0x140] sm:$0xff]
    %v98 = vld [vmem:[#allocation5 + $0x148] sm:$0xff]
    %v99 = vld [vmem:[#allocation5 + $0x150] sm:$0xff]
    %v100 = vld [vmem:[#allocation5 + $0x158] sm:$0xff]
    %v101 = vld [vmem:[#allocation5 + $0x160] sm:$0xff]
    %v102 = vld [vmem:[#allocation5 + $0x168] sm:$0xff]
    %v103 = vld [vmem:[#allocation5 + $0x170] sm:$0xff]
    %v104 = vld [vmem:[#allocation5 + $0x178] sm:$0xff]
    %v105 = vld [vmem:[#allocation5 + $0x180] sm:$0xff]
    %v106 = vld [vmem:[#allocation5 + $0x188] sm:$0xff]
    %v107 = vld [vmem:[#allocation5 + $0x190] sm:$0xff]
    %v108 = vld [vmem:[#allocation5 + $0x198] sm:$0xff]
    %v109 = vld [vmem:[#allocation5 + $0x1a0] sm:$0xff]
    %v110 = vld [vmem:[#allocation5 + $0x1a8] sm:$0xff]
    %v111 = vld [vmem:[#allocation5 + $0x1b0] sm:$0xff]
    %v112 = vld [vmem:[#allocation5 + $0x1b8] sm:$0xff]
    %v113 = vld [vmem:[#allocation5 + $0x1c0] sm:$0xff]
    %v114 = vld [vmem:[#allocation5 + $0x1c8] sm:$0xff]
    %v115 = vld [vmem:[#allocation5 + $0x1d0] sm:$0xff]
    %v116 = vld [vmem:[#allocation5 + $0x1d8] sm:$0xff]
    %v117 = vld [vmem:[#allocation5 + $0x1e0] sm:$0xff]
    %v118 = vld [vmem:[#allocation5 + $0x1e8] sm:$0xff]
    %v119 = vld [vmem:[#allocation5 + $0x1f0] sm:$0xff]
    %v120 = vld [vmem:[#allocation5 + $0x1f8] sm:$0xff]
    %v121 = vld [vmem:[#allocation5 + $0x200] sm:$0xff]
    %v122 = vld [vmem:[#allocation5 + $0x208] sm:$0xff]
    %v123 = vld [vmem:[#allocation5 + $0x210] sm:$0xff]
    %v124 = vld [vmem:[#allocation5 + $0x218] sm:$0xff]
    %v125 = vld [vmem:[#allocation5 + $0x220] sm:$0xff]
    %v126 = vld [vmem:[#allocation5 + $0x228] sm:$0xff]
    %v127 = vld [vmem:[#allocation5 + $0x230] sm:$0xff]
    %v128 = vld [vmem:[#allocation5 + $0x238] sm:$0xff]
    %v129 = vld [vmem:[#allocation5 + $0x240] sm:$0xff]
    %v130 = vld [vmem:[#allocation5 + $0x248] sm:$0xff]
    %v131 = vld [vmem:[#allocation5 + $0x250] sm:$0xff]
    %v132 = vld [vmem:[#allocation5 + $0x258] sm:$0xff]
    %v133 = vld [vmem:[#allocation5 + $0x260] sm:$0xff]
    %v134 = vld [vmem:[#allocation5 + $0x268] sm:$0xff]
    %v135 = vld [vmem:[#allocation5 + $0x270] sm:$0xff]
    %v136 = vld [vmem:[#allocation5 + $0x278] sm:$0xff]
    %v137 = vld [vmem:[#allocation5 + $0x280] sm:$0xff]
    %v138 = vld [vmem:[#allocation5 + $0x288] sm:$0xff]
    %v139 = vld [vmem:[#allocation5 + $0x290] sm:$0xff]
    %v140 = vld [vmem:[#allocation5 + $0x298] sm:$0xff]
    %v141 = vld [vmem:[#allocation5 + $0x2a0] sm:$0xff]
    %v142 = vld [vmem:[#allocation5 + $0x2a8] sm:$0xff]
    %v143 = vld [vmem:[#allocation5 + $0x2b0] sm:$0xff]
    %v144 = vld [vmem:[#allocation5 + $0x2b8] sm:$0xff]
    %v145 = vld [vmem:[#allocation5 + $0x2c0] sm:$0xff]
    %v146 = vld [vmem:[#allocation5 + $0x2c8] sm:$0xff]
    %v147 = vld [vmem:[#allocation5 + $0x2d0] sm:$0xff]
    %v148 = vld [vmem:[#allocation5 + $0x2d8] sm:$0xff]
    %v149 = vld [vmem:[#allocation5 + $0x2e0] sm:$0xff]
    %v150 = vld [vmem:[#allocation5 + $0x2e8] sm:$0xff]
    %v151 = vld [vmem:[#allocation5 + $0x2f0] sm:$0xff]
    %v152 = vld [vmem:[#allocation5 + $0x2f8] sm:$0xff]
    %v153 = vld [vmem:[#allocation5 + $0x300] sm:$0xff]
    %v154 = vld [vmem:[#allocation5 + $0x308] sm:$0xff]
    %v155 = vld [vmem:[#allocation5 + $0x310] sm:$0xff]
    %v156 = vld [vmem:[#allocation5 + $0x318] sm:$0xff]
    %v157 = vld [vmem:[#allocation5 + $0x320] sm:$0xff]
    %v158 = vld [vmem:[#allocation5 + $0x328] sm:$0xff]
    %v159 = vld [vmem:[#allocation5 + $0x330] sm:$0xff]
    %v160 = vld [vmem:[#allocation5 + $0x338] sm:$0xff]
    %v161 = vld [vmem:[#allocation5 + $0x340] sm:$0xff]
    %v162 = vld [vmem:[#allocation5 + $0x348] sm:$0xff]
    %v163 = vld [vmem:[#allocation5 + $0x350] sm:$0xff]
    %v164 = vld [vmem:[#allocation5 + $0x358] sm:$0xff]
    %v165 = vld [vmem:[#allocation5 + $0x360] sm:$0xff]
    %v166 = vld [vmem:[#allocation5 + $0x368] sm:$0xff]
    %v167 = vld [vmem:[#allocation5 + $0x370] sm:$0xff]
    %v168 = vld [vmem:[#allocation5 + $0x378] sm:$0xff]
    %v169 = vld [vmem:[#allocation5 + $0x380] sm:$0xff]
    %v170 = vld [vmem:[#allocation5 + $0x388] sm:$0xff]
    %v171 = vld [vmem:[#allocation5 + $0x390] sm:$0xff]
    %v172 = vld [vmem:[#allocation5 + $0x398] sm:$0xff]
    %v173 = vld [vmem:[#allocation5 + $0x3a0] sm:$0xff]
    %v174 = vld [vmem:[#allocation5 + $0x3a8] sm:$0xff]
    %v175 = vld [vmem:[#allocation5 + $0x3b0] sm:$0xff]
    %v176 = vld [vmem:[#allocation5 + $0x3b8] sm:$0xff]
    %v177 = vld [vmem:[#allocation5 + $0x3c0] sm:$0xff]
    %v178 = vld [vmem:[#allocation5 + $0x3c8] sm:$0xff]
    %v179 = vld [vmem:[#allocation5 + $0x3d0] sm:$0xff]
    %v180 = vld [vmem:[#allocation5 + $0x3d8] sm:$0xff]
    %v181 = vld [vmem:[#allocation5 + $0x3e0] sm:$0xff]
    %v182 = vld [vmem:[#allocation5 + $0x3e8] sm:$0xff]
    %v183 = vld [vmem:[#allocation5 + $0x3f0] sm:$0xff]
    %v184 = vld [vmem:[#allocation5 + $0x3f8] sm:$0xff]
    %v185 = vld [vmem:[#allocation5 + $0x400] sm:$0xff]
    %v186 = vld [vmem:[#allocation5 + $0x408] sm:$0xff]
    %v187 = vld [vmem:[#allocation5 + $0x410] sm:$0xff]
    %v188 = vld [vmem:[#allocation5 + $0x418] sm:$0xff]
    %v189 = vld [vmem:[#allocation5 + $0x420] sm:$0xff]
    %v190 = vld [vmem:[#allocation5 + $0x428] sm:$0xff]
    %v191 = vld [vmem:[#allocation5 + $0x430] sm:$0xff]
    %v192 = vld [vmem:[#allocation5 + $0x438] sm:$0xff]
    %v193 = vld [vmem:[#allocation5 + $0x440] sm:$0xff]
    %v194 = vld [vmem:[#allocation5 + $0x448] sm:$0xff]
    %v195 = vld [vmem:[#allocation5 + $0x450] sm:$0xff]
    %v196 = vld [vmem:[#allocation5 + $0x458] sm:$0xff]
    %v197 = vld [vmem:[#allocation5 + $0x460] sm:$0xff]
    %v198 = vld [vmem:[#allocation5 + $0x468] sm:$0xff]
    %v199 = vld [vmem:[#allocation5 + $0x470] sm:$0xff]
    %v200 = vld [vmem:[#allocation5 + $0x478] sm:$0xff]
    %v201 = vld [vmem:[#allocation5 + $0x480] sm:$0xff]
    %v202 = vld [vmem:[#allocation5 + $0x488] sm:$0xff]
    %v203 = vld [vmem:[#allocation5 + $0x490] sm:$0xff]
    %v204 = vld [vmem:[#allocation5 + $0x498] sm:$0xff]
    %v205 = vld [vmem:[#allocation5 + $0x4a0] sm:$0xff]
    %v206 = vld [vmem:[#allocation5 + $0x4a8] sm:$0xff]
    %v207 = vld [vmem:[#allocation5 + $0x4b0] sm:$0xff]
    %v208 = vld [vmem:[#allocation5 + $0x4b8] sm:$0xff]
    %v209 = vld [vmem:[#allocation5 + $0x4c0] sm:$0xff]
    %v210 = vld [vmem:[#allocation5 + $0x4c8] sm:$0xff]
    %v211 = vld [vmem:[#allocation5 + $0x4d0] sm:$0xff]
    %v212 = vld [vmem:[#allocation5 + $0x4d8] sm:$0xff]
    %v213 = vld [vmem:[#allocation5 + $0x4e0] sm:$0xff]
    %v214 = vld [vmem:[#allocation5 + $0x4e8] sm:$0xff]
    %v215 = vld [vmem:[#allocation5 + $0x4f0] sm:$0xff]
    %v216 = vld [vmem:[#allocation5 + $0x4f8] sm:$0xff]
    %v217 = vld [vmem:[#allocation5 + $0x500] sm:$0xff]
    %v218 = vld [vmem:[#allocation5 + $0x508] sm:$0xff]
    %v219 = vld [vmem:[#allocation5 + $0x510] sm:$0xff]
    %v220 = vld [vmem:[#allocation5 + $0x518] sm:$0xff]
    %v221 = vld [vmem:[#allocation5 + $0x520] sm:$0xff]
    %v222 = vld [vmem:[#allocation5 + $0x528] sm:$0xff]
    %v223 = vld [vmem:[#allocation5 + $0x530] sm:$0xff]
    %v224 = vld [vmem:[#allocation5 + $0x538] sm:$0xff]
    %v225 = vld [vmem:[#allocation5 + $0x540] sm:$0xff]
    %v226 = vld [vmem:[#allocation5 + $0x548] sm:$0xff]
    %v227 = vld [vmem:[#allocation5 + $0x550] sm:$0xff]
    %v228 = vld [vmem:[#allocation5 + $0x558] sm:$0xff]
    %v229 = vld [vmem:[#allocation5 + $0x560] sm:$0xff]
    %v230 = vld [vmem:[#allocation5 + $0x568] sm:$0xff]
    %v231 = vld [vmem:[#allocation5 + $0x570] sm:$0xff]
    %v232 = vld [vmem:[#allocation5 + $0x578] sm:$0xff]
    %v233 = vld [vmem:[#allocation5 + $0x580] sm:$0xff]
    %v234 = vld [vmem:[#allocation5 + $0x588] sm:$0xff]
    %v235 = vld [vmem:[#allocation5 + $0x590] sm:$0xff]
    %v236 = vld [vmem:[#allocation5 + $0x598] sm:$0xff]
    %v237 = vld [vmem:[#allocation5 + $0x5a0] sm:$0xff]
    %v238 = vld [vmem:[#allocation5 + $0x5a8] sm:$0xff]
    %v239 = vld [vmem:[#allocation5 + $0x5b0] sm:$0xff]
    %v240 = vld [vmem:[#allocation5 + $0x5b8] sm:$0xff]
    %v241 = vld [vmem:[#allocation5 + $0x5c0] sm:$0xff]
    %v242 = vld [vmem:[#allocation5 + $0x5c8] sm:$0xff]
    %v243 = vld [vmem:[#allocation5 + $0x5d0] sm:$0xff]
    %v244 = vld [vmem:[#allocation5 + $0x5d8] sm:$0xff]
    %v245 = vld [vmem:[#allocation5 + $0x5e0] sm:$0xff]
    %v246 = vld [vmem:[#allocation5 + $0x5e8] sm:$0xff]
    %v247 = vld [vmem:[#allocation5 + $0x5f0] sm:$0xff]
    %v248 = vld [vmem:[#allocation5 + $0x5f8] sm:$0xff]
    %v249 = vld [vmem:[#allocation5 + $0x600] sm:$0xff]
    %v250 = vld [vmem:[#allocation5 + $0x608] sm:$0xff]
    %v251 = vld [vmem:[#allocation5 + $0x610] sm:$0xff]
    %v252 = vld [vmem:[#allocation5 + $0x618] sm:$0xff]
    %v253 = vld [vmem:[#allocation5 + $0x620] sm:$0xff]
    %v254 = vld [vmem:[#allocation5 + $0x628] sm:$0xff]
    %v255 = vld [vmem:[#allocation5 + $0x630] sm:$0xff]
    %v256 = vld [vmem:[#allocation5 + $0x638] sm:$0xff]
    %v257 = vld [vmem:[#allocation5 + $0x640] sm:$0xff]
    %v258 = vld [vmem:[#allocation5 + $0x648] sm:$0xff]
    %v259 = vld [vmem:[#allocation5 + $0x650] sm:$0xff]
    %v260 = vld [vmem:[#allocation5 + $0x658] sm:$0xff]
    %v261 = vld [vmem:[#allocation5 + $0x660] sm:$0xff]
    %v262 = vld [vmem:[#allocation5 + $0x668] sm:$0xff]
    %v263 = vld [vmem:[#allocation5 + $0x670] sm:$0xff]
    %v264 = vld [vmem:[#allocation5 + $0x678] sm:$0xff]
    %v265 = vld [vmem:[#allocation5 + $0x680] sm:$0xff]
    %v266 = vld [vmem:[#allocation5 + $0x688] sm:$0xff]
    %v267 = vld [vmem:[#allocation5 + $0x690] sm:$0xff]
    %v268 = vld [vmem:[#allocation5 + $0x698] sm:$0xff]
    %v269 = vld [vmem:[#allocation5 + $0x6a0] sm:$0xff]
    %v270 = vld [vmem:[#allocation5 + $0x6a8] sm:$0xff]
    %v271 = vld [vmem:[#allocation5 + $0x6b0] sm:$0xff]
    %v272 = vld [vmem:[#allocation5 + $0x6b8] sm:$0xff]
    %v273 = vld [vmem:[#allocation5 + $0x6c0] sm:$0xff]
    %v274 = vld [vmem:[#allocation5 + $0x6c8] sm:$0xff]
    %v275 = vld [vmem:[#allocation5 + $0x6d0] sm:$0xff]
    %v276 = vld [vmem:[#allocation5 + $0x6d8] sm:$0xff]
    %v277 = vld [vmem:[#allocation5 + $0x6e0] sm:$0xff]
    %v278 = vld [vmem:[#allocation5 + $0x6e8] sm:$0xff]
    %v279 = vld [vmem:[#allocation5 + $0x6f0] sm:$0xff]
    %v280 = vld [vmem:[#allocation5 + $0x6f8] sm:$0xff]
    %v281 = vld [vmem:[#allocation5 + $0x700] sm:$0xff]
    %v282 = vld [vmem:[#allocation5 + $0x708] sm:$0xff]
    %v283 = vld [vmem:[#allocation5 + $0x710] sm:$0xff]
    %v284 = vld [vmem:[#allocation5 + $0x718] sm:$0xff]
    %v285 = vld [vmem:[#allocation5 + $0x720] sm:$0xff]
    %v286 = vld [vmem:[#allocation5 + $0x728] sm:$0xff]
    %v287 = vld [vmem:[#allocation5 + $0x730] sm:$0xff]
    %v288 = vld [vmem:[#allocation5 + $0x738] sm:$0xff]
    %v289 = vld [vmem:[#allocation5 + $0x740] sm:$0xff]
    %v290 = vld [vmem:[#allocation5 + $0x748] sm:$0xff]
    %v291 = vld [vmem:[#allocation5 + $0x750] sm:$0xff]
    %v292 = vld [vmem:[#allocation5 + $0x758] sm:$0xff]
    %v293 = vld [vmem:[#allocation5 + $0x760] sm:$0xff]
    %v294 = vld [vmem:[#allocation5 + $0x768] sm:$0xff]
    %v295 = vld [vmem:[#allocation5 + $0x770] sm:$0xff]
    %v296 = vld [vmem:[#allocation5 + $0x778] sm:$0xff]
    %v297 = vld [vmem:[#allocation5 + $0x780] sm:$0xff]
    %v298 = vld [vmem:[#allocation5 + $0x788] sm:$0xff]
    %v299 = vld [vmem:[#allocation5 + $0x790] sm:$0xff]
    %v300 = vld [vmem:[#allocation5 + $0x798] sm:$0xff]
    %v301 = vld [vmem:[#allocation5 + $0x7a0] sm:$0xff]
    %v302 = vld [vmem:[#allocation5 + $0x7a8] sm:$0xff]
    %v303 = vld [vmem:[#allocation5 + $0x7b0] sm:$0xff]
    %v304 = vld [vmem:[#allocation5 + $0x7b8] sm:$0xff]
    %v305 = vld [vmem:[#allocation5 + $0x7c0] sm:$0xff]
    %v306 = vld [vmem:[#allocation5 + $0x7c8] sm:$0xff]
    %v307 = vld [vmem:[#allocation5 + $0x7d0] sm:$0xff]
    %v308 = vld [vmem:[#allocation5 + $0x7d8] sm:$0xff]
    %v309 = vld [vmem:[#allocation5 + $0x7e0] sm:$0xff]
    %v310 = vld [vmem:[#allocation5 + $0x7e8] sm:$0xff]
    %v311 = vld [vmem:[#allocation5 + $0x7f0] sm:$0xff]
    %v312 = vld [vmem:[#allocation5 + $0x7f8] sm:$0xff]
    %v313 = vld [vmem:[#allocation5 + $0x800] sm:$0xff]
    %v314 = vld [vmem:[#allocation5 + $0x808] sm:$0xff]
    %v315 = vld [vmem:[#allocation5 + $0x810] sm:$0xff]
    %v316 = vld [vmem:[#allocation5 + $0x818] sm:$0xff]
    %v317 = vld [vmem:[#allocation5 + $0x820] sm:$0xff]
    %v318 = vld [vmem:[#allocation5 + $0x828] sm:$0xff]
    %v319 = vld [vmem:[#allocation5 + $0x830] sm:$0xff]
    %v320 = vld [vmem:[#allocation5 + $0x838] sm:$0xff]
    %v321 = vld [vmem:[#allocation5 + $0x840] sm:$0xff]
    %v322 = vld [vmem:[#allocation5 + $0x848] sm:$0xff]
    %v323 = vld [vmem:[#allocation5 + $0x850] sm:$0xff]
    %v324 = vld [vmem:[#allocation5 + $0x858] sm:$0xff]
    %v325 = vld [vmem:[#allocation5 + $0x860] sm:$0xff]
    %v326 = vld [vmem:[#allocation5 + $0x868] sm:$0xff]
    %v327 = vld [vmem:[#allocation5 + $0x870] sm:$0xff]
    %v328 = vld [vmem:[#allocation5 + $0x878] sm:$0xff]
    %v329 = vld [vmem:[#allocation5 + $0x880] sm:$0xff]
    %v330 = vld [vmem:[#allocation5 + $0x888] sm:$0xff]
    %v331 = vld [vmem:[#allocation5 + $0x890] sm:$0xff]
    %v332 = vld [vmem:[#allocation5 + $0x898] sm:$0xff]
    %v333 = vld [vmem:[#allocation5 + $0x8a0] sm:$0xff]
    %v334 = vld [vmem:[#allocation5 + $0x8a8] sm:$0xff]
    %v335 = vld [vmem:[#allocation5 + $0x8b0] sm:$0xff]
    %v336 = vld [vmem:[#allocation5 + $0x8b8] sm:$0xff]
    %v337 = vld [vmem:[#allocation5 + $0x8c0] sm:$0xff]
    %v338 = vld [vmem:[#allocation5 + $0x8c8] sm:$0xff]
    %v339 = vld [vmem:[#allocation5 + $0x8d0] sm:$0xff]
    %v340 = vld [vmem:[#allocation5 + $0x8d8] sm:$0xff]
    %v341 = vld [vmem:[#allocation5 + $0x8e0] sm:$0xff]
    %v342 = vld [vmem:[#allocation5 + $0x8e8] sm:$0xff]
    %v343 = vld [vmem:[#allocation5 + $0x8f0] sm:$0xff]
    %v344 = vld [vmem:[#allocation5 + $0x8f8] sm:$0xff]
    %v345 = vld [vmem:[#allocation5 + $0x900] sm:$0xff]
    %v346 = vld [vmem:[#allocation5 + $0x908] sm:$0xff]
    %v347 = vld [vmem:[#allocation5 + $0x910] sm:$0xff]
    %v348 = vld [vmem:[#allocation5 + $0x918] sm:$0xff]
    %v349 = vld [vmem:[#allocation5 + $0x920] sm:$0xff]
    %v350 = vld [vmem:[#allocation5 + $0x928] sm:$0xff]
    %v351 = vld [vmem:[#allocation5 + $0x930] sm:$0xff]
    %v352 = vld [vmem:[#allocation5 + $0x938] sm:$0xff]
    %v353 = vld [vmem:[#allocation5 + $0x940] sm:$0xff]
    %v354 = vld [vmem:[#allocation5 + $0x948] sm:$0xff]
    %v355 = vld [vmem:[#allocation5 + $0x950] sm:$0xff]
    %v356 = vld [vmem:[#allocation5 + $0x958] sm:$0xff]
    %v357 = vld [vmem:[#allocation5 + $0x960] sm:$0xff]
    %v358 = vld [vmem:[#allocation5 + $0x968] sm:$0xff]
    %v359 = vld [vmem:[#allocation5 + $0x970] sm:$0xff]
    %v360 = vld [vmem:[#allocation5 + $0x978] sm:$0xff]
    %v361 = vld [vmem:[#allocation5 + $0x980] sm:$0xff]
    %v362 = vld [vmem:[#allocation5 + $0x988] sm:$0xff]
    %v363 = vld [vmem:[#allocation5 + $0x990] sm:$0xff]
    %v364 = vld [vmem:[#allocation5 + $0x998] sm:$0xff]
    %v365 = vld [vmem:[#allocation5 + $0x9a0] sm:$0xff]
    %v366 = vld [vmem:[#allocation5 + $0x9a8] sm:$0xff]
    %v367 = vld [vmem:[#allocation5 + $0x9b0] sm:$0xff]
    %v368 = vld [vmem:[#allocation5 + $0x9b8] sm:$0xff]
    %v369 = vld [vmem:[#allocation5 + $0x9c0] sm:$0xff]
    %v370 = vld [vmem:[#allocation5 + $0x9c8] sm:$0xff]
    %v371 = vld [vmem:[#allocation5 + $0x9d0] sm:$0xff]
    %v372 = vld [vmem:[#allocation5 + $0x9d8] sm:$0xff]
    %v373 = vld [vmem:[#allocation5 + $0x9e0] sm:$0xff]
    %v374 = vld [vmem:[#allocation5 + $0x9e8] sm:$0xff]
    %v375 = vld [vmem:[#allocation5 + $0x9f0] sm:$0xff]
    %v376 = vld [vmem:[#allocation5 + $0x9f8] sm:$0xff]
    %v377 = vld [vmem:[#allocation5 + $0xa00] sm:$0xff]
    %v378 = vld [vmem:[#allocation5 + $0xa08] sm:$0xff]
    %v379 = vld [vmem:[#allocation5 + $0xa10] sm:$0xff]
    %v380 = vld [vmem:[#allocation5 + $0xa18] sm:$0xff]
    %v381 = vld [vmem:[#allocation5 + $0xa20] sm:$0xff]
    %v382 = vld [vmem:[#allocation5 + $0xa28] sm:$0xff]
    %v383 = vld [vmem:[#allocation5 + $0xa30] sm:$0xff]
    %v384 = vld [vmem:[#allocation5 + $0xa38] sm:$0xff]
    %v385 = vld [vmem:[#allocation5 + $0xa40] sm:$0xff]
    %v386 = vld [vmem:[#allocation5 + $0xa48] sm:$0xff]
    %v387 = vld [vmem:[#allocation5 + $0xa50] sm:$0xff]
    %v388 = vld [vmem:[#allocation5 + $0xa58] sm:$0xff]
    %v389 = vld [vmem:[#allocation5 + $0xa60] sm:$0xff]
    %v390 = vld [vmem:[#allocation5 + $0xa68] sm:$0xff]
    %v391 = vld [vmem:[#allocation5 + $0xa70] sm:$0xff]
    %v392 = vld [vmem:[#allocation5 + $0xa78] sm:$0xff]
    %v393 = vld [vmem:[#allocation5 + $0xa80] sm:$0xff]
    %v394 = vld [vmem:[#allocation5 + $0xa88] sm:$0xff]
    %v395 = vld [vmem:[#allocation5 + $0xa90] sm:$0xff]
    %v396 = vld [vmem:[#allocation5 + $0xa98] sm:$0xff]
    %v397 = vld [vmem:[#allocation5 + $0xaa0] sm:$0xff]
    %v398 = vld [vmem:[#allocation5 + $0xaa8] sm:$0xff]
    %v399 = vld [vmem:[#allocation5 + $0xab0] sm:$0xff]
    %v400 = vld [vmem:[#allocation5 + $0xab8] sm:$0xff]
    %v401 = vld [vmem:[#allocation5 + $0xac0] sm:$0xff]
    %v402 = vld [vmem:[#allocation5 + $0xac8] sm:$0xff]
    %v403 = vld [vmem:[#allocation5 + $0xad0] sm:$0xff]
    %v404 = vld [vmem:[#allocation5 + $0xad8] sm:$0xff]
    %v405 = vld [vmem:[#allocation5 + $0xae0] sm:$0xff]
    %v406 = vld [vmem:[#allocation5 + $0xae8] sm:$0xff]
    %v407 = vld [vmem:[#allocation5 + $0xaf0] sm:$0xff]
    %v408 = vld [vmem:[#allocation5 + $0xaf8] sm:$0xff]
    %v409 = vld [vmem:[#allocation5 + $0xb00] sm:$0xff]
    %v410 = vld [vmem:[#allocation5 + $0xb08] sm:$0xff]
    %v411 = vld [vmem:[#allocation5 + $0xb10] sm:$0xff]
    %v412 = vld [vmem:[#allocation5 + $0xb18] sm:$0xff]
    %v413 = vld [vmem:[#allocation5 + $0xb20] sm:$0xff]
    %v414 = vld [vmem:[#allocation5 + $0xb28] sm:$0xff]
    %v415 = vld [vmem:[#allocation5 + $0xb30] sm:$0xff]
    %v416 = vld [vmem:[#allocation5 + $0xb38] sm:$0xff]
    %v417 = vld [vmem:[#allocation5 + $0xb40] sm:$0xff]
    %v418 = vld [vmem:[#allocation5 + $0xb48] sm:$0xff]
    %v419 = vld [vmem:[#allocation5 + $0xb50] sm:$0xff]
    %v420 = vld [vmem:[#allocation5 + $0xb58] sm:$0xff]
    %v421 = vld [vmem:[#allocation5 + $0xb60] sm:$0xff]
    %v422 = vld [vmem:[#allocation5 + $0xb68] sm:$0xff]
    %v423 = vld [vmem:[#allocation5 + $0xb70] sm:$0xff]
    %v424 = vld [vmem:[#allocation5 + $0xb78] sm:$0xff]
    %v425 = vld [vmem:[#allocation5 + $0xb80] sm:$0xff]
    %v426 = vld [vmem:[#allocation5 + $0xb88] sm:$0xff]
    %v427 = vld [vmem:[#allocation5 + $0xb90] sm:$0xff]
    %v428 = vld [vmem:[#allocation5 + $0xb98] sm:$0xff]
    %v429 = vld [vmem:[#allocation5 + $0xba0] sm:$0xff]
    %v430 = vld [vmem:[#allocation5 + $0xba8] sm:$0xff]
    %v431 = vld [vmem:[#allocation5 + $0xbb0] sm:$0xff]
    %v432 = vld [vmem:[#allocation5 + $0xbb8] sm:$0xff]
    %v433 = vld [vmem:[#allocation5 + $0xbc0] sm:$0xff]
    %v434 = vld [vmem:[#allocation5 + $0xbc8] sm:$0xff]
    %v435 = vld [vmem:[#allocation5 + $0xbd0] sm:$0xff]
    %v436 = vld [vmem:[#allocation5 + $0xbd8] sm:$0xff]
    %v437 = vld [vmem:[#allocation5 + $0xbe0] sm:$0xff]
    %v438 = vld [vmem:[#allocation5 + $0xbe8] sm:$0xff]
    %v439 = vld [vmem:[#allocation5 + $0xbf0] sm:$0xff]
    %v440 = vld [vmem:[#allocation5 + $0xbf8] sm:$0xff]
    %v441 = vld [vmem:[#allocation5 + $0xc00] sm:$0xff]
    %v442 = vld [vmem:[#allocation5 + $0xc08] sm:$0xff]
    %v443 = vld [vmem:[#allocation5 + $0xc10] sm:$0xff]
    %v444 = vld [vmem:[#allocation5 + $0xc18] sm:$0xff]
    %v445 = vld [vmem:[#allocation5 + $0xc20] sm:$0xff]
    %v446 = vld [vmem:[#allocation5 + $0xc28] sm:$0xff]
    %v447 = vld [vmem:[#allocation5 + $0xc30] sm:$0xff]
    %v448 = vld [vmem:[#allocation5 + $0xc38] sm:$0xff]
    %v449 = vld [vmem:[#allocation5 + $0xc40] sm:$0xff]
    %v450 = vld [vmem:[#allocation5 + $0xc48] sm:$0xff]
    %v451 = vld [vmem:[#allocation5 + $0xc50] sm:$0xff]
    %v452 = vld [vmem:[#allocation5 + $0xc58] sm:$0xff]
    %v453 = vld [vmem:[#allocation5 + $0xc60] sm:$0xff]
    %v454 = vld [vmem:[#allocation5 + $0xc68] sm:$0xff]
    %v455 = vld [vmem:[#allocation5 + $0xc70] sm:$0xff]
    %v456 = vld [vmem:[#allocation5 + $0xc78] sm:$0xff]
    %v457 = vld [vmem:[#allocation5 + $0xc80] sm:$0xff]
    %v458 = vld [vmem:[#allocation5 + $0xc88] sm:$0xff]
    %v459 = vld [vmem:[#allocation5 + $0xc90] sm:$0xff]
    %v460 = vld [vmem:[#allocation5 + $0xc98] sm:$0xff]
    %v461 = vld [vmem:[#allocation5 + $0xca0] sm:$0xff]
    %v462 = vld [vmem:[#allocation5 + $0xca8] sm:$0xff]
    %v463 = vld [vmem:[#allocation5 + $0xcb0] sm:$0xff]
    %v464 = vld [vmem:[#allocation5 + $0xcb8] sm:$0xff]
    %v465 = vld [vmem:[#allocation5 + $0xcc0] sm:$0xff]
    %v466 = vld [vmem:[#allocation5 + $0xcc8] sm:$0xff]
    %v467 = vld [vmem:[#allocation5 + $0xcd0] sm:$0xff]
    %v468 = vld [vmem:[#allocation5 + $0xcd8] sm:$0xff]
    %v469 = vld [vmem:[#allocation5 + $0xce0] sm:$0xff]
    %v470 = vld [vmem:[#allocation5 + $0xce8] sm:$0xff]
    %v471 = vld [vmem:[#allocation5 + $0xcf0] sm:$0xff]
    %v472 = vld [vmem:[#allocation5 + $0xcf8] sm:$0xff]
    %v473 = vld [vmem:[#allocation5 + $0xd00] sm:$0xff]
    %v474 = vld [vmem:[#allocation5 + $0xd08] sm:$0xff]
    %v475 = vld [vmem:[#allocation5 + $0xd10] sm:$0xff]
    %v476 = vld [vmem:[#allocation5 + $0xd18] sm:$0xff]
    %v477 = vld [vmem:[#allocation5 + $0xd20] sm:$0xff]
    %v478 = vld [vmem:[#allocation5 + $0xd28] sm:$0xff]
    %v479 = vld [vmem:[#allocation5 + $0xd30] sm:$0xff]
    %v480 = vld [vmem:[#allocation5 + $0xd38] sm:$0xff]
    %v481 = vld [vmem:[#allocation5 + $0xd40] sm:$0xff]
    %v482 = vld [vmem:[#allocation5 + $0xd48] sm:$0xff]
    %v483 = vld [vmem:[#allocation5 + $0xd50] sm:$0xff]
    %v484 = vld [vmem:[#allocation5 + $0xd58] sm:$0xff]
    %v485 = vld [vmem:[#allocation5 + $0xd60] sm:$0xff]
    %v486 = vld [vmem:[#allocation5 + $0xd68] sm:$0xff]
    %v487 = vld [vmem:[#allocation5 + $0xd70] sm:$0xff]
    %v488 = vld [vmem:[#allocation5 + $0xd78] sm:$0xff]
    %v489 = vld [vmem:[#allocation5 + $0xd80] sm:$0xff]
    %v490 = vld [vmem:[#allocation5 + $0xd88] sm:$0xff]
    %v491 = vld [vmem:[#allocation5 + $0xd90] sm:$0xff]
    %v492 = vld [vmem:[#allocation5 + $0xd98] sm:$0xff]
    %v493 = vld [vmem:[#allocation5 + $0xda0] sm:$0xff]
    %v494 = vld [vmem:[#allocation5 + $0xda8] sm:$0xff]
    %v495 = vld [vmem:[#allocation5 + $0xdb0] sm:$0xff]
    %v496 = vld [vmem:[#allocation5 + $0xdb8] sm:$0xff]
    %v497 = vld [vmem:[#allocation5 + $0xdc0] sm:$0xff]
    %v498 = vld [vmem:[#allocation5 + $0xdc8] sm:$0xff]
    %v499 = vld [vmem:[#allocation5 + $0xdd0] sm:$0xff]
    %v500 = vld [vmem:[#allocation5 + $0xdd8] sm:$0xff]
    %v501 = vld [vmem:[#allocation5 + $0xde0] sm:$0xff]
    %v502 = vld [vmem:[#allocation5 + $0xde8] sm:$0xff]
    %v503 = vld [vmem:[#allocation5 + $0xdf0] sm:$0xff]
    %v504 = vld [vmem:[#allocation5 + $0xdf8] sm:$0xff]
    %v505 = vld [vmem:[#allocation5 + $0xe00] sm:$0xff]
    %v506 = vld [vmem:[#allocation5 + $0xe08] sm:$0xff]
    %v507 = vld [vmem:[#allocation5 + $0xe10] sm:$0xff]
    %v508 = vld [vmem:[#allocation5 + $0xe18] sm:$0xff]
    %v509 = vld [vmem:[#allocation5 + $0xe20] sm:$0xff]
    %v510 = vld [vmem:[#allocation5 + $0xe28] sm:$0xff]
    %v511 = vld [vmem:[#allocation5 + $0xe30] sm:$0xff]
    %v512 = vld [vmem:[#allocation5 + $0xe38] sm:$0xff]
    %v513 = vld [vmem:[#allocation5 + $0xe40] sm:$0xff]
    %v514 = vld [vmem:[#allocation5 + $0xe48] sm:$0xff]
    %v515 = vld [vmem:[#allocation5 + $0xe50] sm:$0xff]
    %v516 = vld [vmem:[#allocation5 + $0xe58] sm:$0xff]
    %v517 = vld [vmem:[#allocation5 + $0xe60] sm:$0xff]
    %v518 = vld [vmem:[#allocation5 + $0xe68] sm:$0xff]
    %v519 = vld [vmem:[#allocation5 + $0xe70] sm:$0xff]
    %v520 = vld [vmem:[#allocation5 + $0xe78] sm:$0xff]
    %v521 = vld [vmem:[#allocation5 + $0xe80] sm:$0xff]
    %v522 = vld [vmem:[#allocation5 + $0xe88] sm:$0xff]
    %v523 = vld [vmem:[#allocation5 + $0xe90] sm:$0xff]
    %v524 = vld [vmem:[#allocation5 + $0xe98] sm:$0xff]
    %v525 = vld [vmem:[#allocation5 + $0xea0] sm:$0xff]
    %v526 = vld [vmem:[#allocation5 + $0xea8] sm:$0xff]
    %v527 = vld [vmem:[#allocation5 + $0xeb0] sm:$0xff]
    %v528 = vld [vmem:[#allocation5 + $0xeb8] sm:$0xff]
    %v529 = vld [vmem:[#allocation5 + $0xec0] sm:$0xff]
    %v530 = vld [vmem:[#allocation5 + $0xec8] sm:$0xff]
    %v531 = vld [vmem:[#allocation5 + $0xed0] sm:$0xff]
    %v532 = vld [vmem:[#allocation5 + $0xed8] sm:$0xff]
    %v533 = vld [vmem:[#allocation5 + $0xee0] sm:$0xff]
    %v534 = vld [vmem:[#allocation5 + $0xee8] sm:$0xff]
    %v535 = vld [vmem:[#allocation5 + $0xef0] sm:$0xff]
    %v536 = vld [vmem:[#allocation5 + $0xef8] sm:$0xff]
    %v537 = vld [vmem:[#allocation5 + $0xf00] sm:$0xff]
    %v538 = vld [vmem:[#allocation5 + $0xf08] sm:$0xff]
    %v539 = vld [vmem:[#allocation5 + $0xf10] sm:$0xff]
    %v540 = vld [vmem:[#allocation5 + $0xf18] sm:$0xff]
    %v541 = vld [vmem:[#allocation5 + $0xf20] sm:$0xff]
    %v542 = vld [vmem:[#allocation5 + $0xf28] sm:$0xff]
    %v543 = vld [vmem:[#allocation5 + $0xf30] sm:$0xff]
    %v544 = vld [vmem:[#allocation5 + $0xf38] sm:$0xff]
    %v545 = vld [vmem:[#allocation5 + $0xf40] sm:$0xff]
    %v546 = vld [vmem:[#allocation5 + $0xf48] sm:$0xff]
    %v547 = vld [vmem:[#allocation5 + $0xf50] sm:$0xff]
    %v548 = vld [vmem:[#allocation5 + $0xf58] sm:$0xff]
    %v549 = vld [vmem:[#allocation5 + $0xf60] sm:$0xff]
    %v550 = vld [vmem:[#allocation5 + $0xf68] sm:$0xff]
    %v551 = vld [vmem:[#allocation5 + $0xf70] sm:$0xff]
    %v552 = vld [vmem:[#allocation5 + $0xf78] sm:$0xff]
    %v553 = vld [vmem:[#allocation5 + $0xf80] sm:$0xff]
    %v554 = vld [vmem:[#allocation5 + $0xf88] sm:$0xff]
    %v555 = vld [vmem:[#allocation5 + $0xf90] sm:$0xff]
    %v556 = vld [vmem:[#allocation5 + $0xf98] sm:$0xff]
    %v557 = vld [vmem:[#allocation5 + $0xfa0] sm:$0xff]
    %v558 = vld [vmem:[#allocation5 + $0xfa8] sm:$0xff]
    %v559 = vld [vmem:[#allocation5 + $0xfb0] sm:$0xff]
    %v560 = vld [vmem:[#allocation5 + $0xfb8] sm:$0xff]
    %v561 = vld [vmem:[#allocation5 + $0xfc0] sm:$0xff]
    %v562 = vld [vmem:[#allocation5 + $0xfc8] sm:$0xff]
    %v563 = vld [vmem:[#allocation5 + $0xfd0] sm:$0xff]
    %v564 = vld [vmem:[#allocation5 + $0xfd8] sm:$0xff]
    %v565 = vld [vmem:[#allocation5 + $0xfe0] sm:$0xff]
    %v566 = vld [vmem:[#allocation5 + $0xfe8] sm:$0xff]
    %v567 = vld [vmem:[#allocation5 + $0xff0] sm:$0xff]
    %v568 = vld [vmem:[#allocation5 + $0xff8] sm:$0xff]
    %v569 = vld [vmem:[#allocation5 + $0x1000] sm:$0xff]
    %v570 = vld [vmem:[#allocation5 + $0x1008] sm:$0xff]
    %v571 = vld [vmem:[#allocation5 + $0x1010] sm:$0xff]
    %v572 = vld [vmem:[#allocation5 + $0x1018] sm:$0xff]
    %v573 = vld [vmem:[#allocation5 + $0x1020] sm:$0xff]
    %v574 = vld [vmem:[#allocation5 + $0x1028] sm:$0xff]
    %v575 = vld [vmem:[#allocation5 + $0x1030] sm:$0xff]
    %v576 = vld [vmem:[#allocation5 + $0x1038] sm:$0xff]
    %v577 = vld [vmem:[#allocation5 + $0x1040] sm:$0xff]
    %v578 = vld [vmem:[#allocation5 + $0x1048] sm:$0xff]
    %v579 = vld [vmem:[#allocation5 + $0x1050] sm:$0xff]
    %v580 = vld [vmem:[#allocation5 + $0x1058] sm:$0xff]
    %v581 = vld [vmem:[#allocation5 + $0x1060] sm:$0xff]
    %v582 = vld [vmem:[#allocation5 + $0x1068] sm:$0xff]
    %v583 = vld [vmem:[#allocation5 + $0x1070] sm:$0xff]
    %v584 = vld [vmem:[#allocation5 + $0x1078] sm:$0xff]
    %v585 = vld [vmem:[#allocation5 + $0x1080] sm:$0xff]
    %v586 = vld [vmem:[#allocation5 + $0x1088] sm:$0xff]
    %v587 = vld [vmem:[#allocation5 + $0x1090] sm:$0xff]
    %v588 = vld [vmem:[#allocation5 + $0x1098] sm:$0xff]
    %v589 = vld [vmem:[#allocation5 + $0x10a0] sm:$0xff]
    %v590 = vld [vmem:[#allocation5 + $0x10a8] sm:$0xff]
    %v591 = vld [vmem:[#allocation5 + $0x10b0] sm:$0xff]
    %v592 = vld [vmem:[#allocation5 + $0x10b8] sm:$0xff]
    %v593 = vld [vmem:[#allocation5 + $0x10c0] sm:$0xff]
    %v594 = vld [vmem:[#allocation5 + $0x10c8] sm:$0xff]
    %v595 = vld [vmem:[#allocation5 + $0x10d0] sm:$0xff]
    %v596 = vld [vmem:[#allocation5 + $0x10d8] sm:$0xff]
    %v597 = vld [vmem:[#allocation5 + $0x10e0] sm:$0xff]
    %v598 = vld [vmem:[#allocation5 + $0x10e8] sm:$0xff]
    %v599 = vld [vmem:[#allocation5 + $0x10f0] sm:$0xff]
    %v600 = vld [vmem:[#allocation5 + $0x10f8] sm:$0xff]
    %v601 = vld [vmem:[#allocation5 + $0x1100] sm:$0xff]
    %v602 = vld [vmem:[#allocation5 + $0x1108] sm:$0xff]
    %v603 = vld [vmem:[#allocation5 + $0x1110] sm:$0xff]
    %v604 = vld [vmem:[#allocation5 + $0x1118] sm:$0xff]
    %v605 = vld [vmem:[#allocation5 + $0x1120] sm:$0xff]
    %v606 = vld [vmem:[#allocation5 + $0x1128] sm:$0xff]
    %v607 = vld [vmem:[#allocation5 + $0x1130] sm:$0xff]
    %v608 = vld [vmem:[#allocation5 + $0x1138] sm:$0xff]
    %v609 = vld [vmem:[#allocation5 + $0x1140] sm:$0xff]
    %v610 = vld [vmem:[#allocation5 + $0x1148] sm:$0xff]
    %v611 = vld [vmem:[#allocation5 + $0x1150] sm:$0xff]
    %v612 = vld [vmem:[#allocation5 + $0x1158] sm:$0xff]
    %v613 = vld [vmem:[#allocation5 + $0x1160] sm:$0xff]
    %v614 = vld [vmem:[#allocation5 + $0x1168] sm:$0xff]
    %v615 = vld [vmem:[#allocation5 + $0x1170] sm:$0xff]
    %v616 = vld [vmem:[#allocation5 + $0x1178] sm:$0xff]
    %v617 = vld [vmem:[#allocation5 + $0x1180] sm:$0xff]
    %v618 = vld [vmem:[#allocation5 + $0x1188] sm:$0xff]
    %v619 = vld [vmem:[#allocation5 + $0x1190] sm:$0xff]
    %v620 = vld [vmem:[#allocation5 + $0x1198] sm:$0xff]
    %v621 = vld [vmem:[#allocation5 + $0x11a0] sm:$0xff]
    %v622 = vld [vmem:[#allocation5 + $0x11a8] sm:$0xff]
    %v623 = vld [vmem:[#allocation5 + $0x11b0] sm:$0xff]
    %v624 = vld [vmem:[#allocation5 + $0x11b8] sm:$0xff]
    %v625 = vld [vmem:[#allocation5 + $0x11c0] sm:$0xff]
    %v626 = vld [vmem:[#allocation5 + $0x11c8] sm:$0xff]
    %v627 = vld [vmem:[#allocation5 + $0x11d0] sm:$0xff]
    %v628 = vld [vmem:[#allocation5 + $0x11d8] sm:$0xff]
    %v629 = vld [vmem:[#allocation5 + $0x11e0] sm:$0xff]
    %v630 = vld [vmem:[#allocation5 + $0x11e8] sm:$0xff]
    %v631 = vld [vmem:[#allocation5 + $0x11f0] sm:$0xff]
    %v632 = vld [vmem:[#allocation5 + $0x11f8] sm:$0xff]
    %v633 = vld [vmem:[#allocation5 + $0x1200] sm:$0xff]
    %v634 = vld [vmem:[#allocation5 + $0x1208] sm:$0xff]
    %v635 = vld [vmem:[#allocation5 + $0x1210] sm:$0xff]
    %v636 = vld [vmem:[#allocation5 + $0x1218] sm:$0xff]
    %v637 = vld [vmem:[#allocation5 + $0x1220] sm:$0xff]
    %v638 = vld [vmem:[#allocation5 + $0x1228] sm:$0xff]
    %v639 = vld [vmem:[#allocation5 + $0x1230] sm:$0xff]
    %v640 = vld [vmem:[#allocation5 + $0x1238] sm:$0xff]
    %v641 = vld [vmem:[#allocation5 + $0x1240] sm:$0xff]
    %v642 = vld [vmem:[#allocation5 + $0x1248] sm:$0xff]
    %v643 = vld [vmem:[#allocation5 + $0x1250] sm:$0xff]
    %v644 = vld [vmem:[#allocation5 + $0x1258] sm:$0xff]
    %v645 = vld [vmem:[#allocation5 + $0x1260] sm:$0xff]
    %v646 = vld [vmem:[#allocation5 + $0x1268] sm:$0xff]
    %v647 = vld [vmem:[#allocation5 + $0x1270] sm:$0xff]
    %v648 = vld [vmem:[#allocation5 + $0x1278] sm:$0xff]
    %v649 = vld [vmem:[#allocation5 + $0x1280] sm:$0xff]
    %v650 = vld [vmem:[#allocation5 + $0x1288] sm:$0xff]
    %v651 = vld [vmem:[#allocation5 + $0x1290] sm:$0xff]
    %v652 = vld [vmem:[#allocation5 + $0x1298] sm:$0xff]
    %v653 = vld [vmem:[#allocation5 + $0x12a0] sm:$0xff]
    %v654 = vld [vmem:[#allocation5 + $0x12a8] sm:$0xff]
    %v655 = vld [vmem:[#allocation5 + $0x12b0] sm:$0xff]
    %v656 = vld [vmem:[#allocation5 + $0x12b8] sm:$0xff]
    %v657 = vld [vmem:[#allocation5 + $0x12c0] sm:$0xff]
    %v658 = vld [vmem:[#allocation5 + $0x12c8] sm:$0xff]
    %v659 = vld [vmem:[#allocation5 + $0x12d0] sm:$0xff]
    %v660 = vld [vmem:[#allocation5 + $0x12d8] sm:$0xff]
    %v661 = vld [vmem:[#allocation5 + $0x12e0] sm:$0xff]
    %v662 = vld [vmem:[#allocation5 + $0x12e8] sm:$0xff]
    %v663 = vld [vmem:[#allocation5 + $0x12f0] sm:$0xff]
    %v664 = vld [vmem:[#allocation5 + $0x12f8] sm:$0xff]
    %v665 = vld [vmem:[#allocation5 + $0x1300] sm:$0xff]
    %v666 = vld [vmem:[#allocation5 + $0x1308] sm:$0xff]
    %v667 = vld [vmem:[#allocation5 + $0x1310] sm:$0xff]
    %v668 = vld [vmem:[#allocation5 + $0x1318] sm:$0xff]
    %v669 = vld [vmem:[#allocation5 + $0x1320] sm:$0xff]
    %v670 = vld [vmem:[#allocation5 + $0x1328] sm:$0xff]
    %v671 = vld [vmem:[#allocation5 + $0x1330] sm:$0xff]
    %v672 = vld [vmem:[#allocation5 + $0x1338] sm:$0xff]
    %v673 = vld [vmem:[#allocation5 + $0x1340] sm:$0xff]
    %v674 = vld [vmem:[#allocation5 + $0x1348] sm:$0xff]
    %v675 = vld [vmem:[#allocation5 + $0x1350] sm:$0xff]
    %v676 = vld [vmem:[#allocation5 + $0x1358] sm:$0xff]
    %v677 = vld [vmem:[#allocation5 + $0x1360] sm:$0xff]
    %v678 = vld [vmem:[#allocation5 + $0x1368] sm:$0xff]
    %v679 = vld [vmem:[#allocation5 + $0x1370] sm:$0xff]
    %v680 = vld [vmem:[#allocation5 + $0x1378] sm:$0xff]
    %v681 = vld [vmem:[#allocation5 + $0x1380] sm:$0xff]
    %v682 = vld [vmem:[#allocation5 + $0x1388] sm:$0xff]
    %v683 = vld [vmem:[#allocation5 + $0x1390] sm:$0xff]
    %v684 = vld [vmem:[#allocation5 + $0x1398] sm:$0xff]
    %v685 = vld [vmem:[#allocation5 + $0x13a0] sm:$0xff]
    %v686 = vld [vmem:[#allocation5 + $0x13a8] sm:$0xff]
    %v687 = vld [vmem:[#allocation5 + $0x13b0] sm:$0xff]
    %v688 = vld [vmem:[#allocation5 + $0x13b8] sm:$0xff]
    %v689 = vld [vmem:[#allocation5 + $0x13c0] sm:$0xff]
    %v690 = vld [vmem:[#allocation5 + $0x13c8] sm:$0xff]
    %v691 = vld [vmem:[#allocation5 + $0x13d0] sm:$0xff]
    %v692 = vld [vmem:[#allocation5 + $0x13d8] sm:$0xff]
    %v693 = vld [vmem:[#allocation5 + $0x13e0] sm:$0xff]
    %v694 = vld [vmem:[#allocation5 + $0x13e8] sm:$0xff]
    %v695 = vld [vmem:[#allocation5 + $0x13f0] sm:$0xff]
    %v696 = vld [vmem:[#allocation5 + $0x13f8] sm:$0xff]
    %v697 = vld [vmem:[#allocation5 + $0x1400] sm:$0xff]
    %v698 = vld [vmem:[#allocation5 + $0x1408] sm:$0xff]
    %v699 = vld [vmem:[#allocation5 + $0x1410] sm:$0xff]
    %v700 = vld [vmem:[#allocation5 + $0x1418] sm:$0xff]
    %v701 = vld [vmem:[#allocation5 + $0x1420] sm:$0xff]
    %v702 = vld [vmem:[#allocation5 + $0x1428] sm:$0xff]
    %v703 = vld [vmem:[#allocation5 + $0x1430] sm:$0xff]
    %v704 = vld [vmem:[#allocation5 + $0x1438] sm:$0xff]
    %v705 = vld [vmem:[#allocation5 + $0x1440] sm:$0xff]
    %v706 = vld [vmem:[#allocation5 + $0x1448] sm:$0xff]
    %v707 = vld [vmem:[#allocation5 + $0x1450] sm:$0xff]
    %v708 = vld [vmem:[#allocation5 + $0x1458] sm:$0xff]
    %v709 = vld [vmem:[#allocation5 + $0x1460] sm:$0xff]
    %v710 = vld [vmem:[#allocation5 + $0x1468] sm:$0xff]
    %v711 = vld [vmem:[#allocation5 + $0x1470] sm:$0xff]
    %v712 = vld [vmem:[#allocation5 + $0x1478] sm:$0xff]
    %v713 = vld [vmem:[#allocation5 + $0x1480] sm:$0xff]
    %v714 = vld [vmem:[#allocation5 + $0x1488] sm:$0xff]
    %v715 = vld [vmem:[#allocation5 + $0x1490] sm:$0xff]
    %v716 = vld [vmem:[#allocation5 + $0x1498] sm:$0xff]
    %v717 = vld [vmem:[#allocation5 + $0x14a0] sm:$0xff]
    %v718 = vld [vmem:[#allocation5 + $0x14a8] sm:$0xff]
    %v719 = vld [vmem:[#allocation5 + $0x14b0] sm:$0xff]
    %v720 = vld [vmem:[#allocation5 + $0x14b8] sm:$0xff]
    %v721 = vld [vmem:[#allocation5 + $0x14c0] sm:$0xff]
    %v722 = vld [vmem:[#allocation5 + $0x14c8] sm:$0xff]
    %v723 = vld [vmem:[#allocation5 + $0x14d0] sm:$0xff]
    %v724 = vld [vmem:[#allocation5 + $0x14d8] sm:$0xff]
    %v725 = vld [vmem:[#allocation5 + $0x14e0] sm:$0xff]
    %v726 = vld [vmem:[#allocation5 + $0x14e8] sm:$0xff]
    %v727 = vld [vmem:[#allocation5 + $0x14f0] sm:$0xff]
    %v728 = vld [vmem:[#allocation5 + $0x14f8] sm:$0xff]
    %v729 = vld [vmem:[#allocation5 + $0x1500] sm:$0xff]
    %v730 = vld [vmem:[#allocation5 + $0x1508] sm:$0xff]
    %v731 = vld [vmem:[#allocation5 + $0x1510] sm:$0xff]
    %v732 = vld [vmem:[#allocation5 + $0x1518] sm:$0xff]
    %v733 = vld [vmem:[#allocation5 + $0x1520] sm:$0xff]
    %v734 = vld [vmem:[#allocation5 + $0x1528] sm:$0xff]
    %v735 = vld [vmem:[#allocation5 + $0x1530] sm:$0xff]
    %v736 = vld [vmem:[#allocation5 + $0x1538] sm:$0xff]
    %v737 = vld [vmem:[#allocation5 + $0x1540] sm:$0xff]
    %v738 = vld [vmem:[#allocation5 + $0x1548] sm:$0xff]
    %v739 = vld [vmem:[#allocation5 + $0x1550] sm:$0xff]
    %v740 = vld [vmem:[#allocation5 + $0x1558] sm:$0xff]
    %v741 = vld [vmem:[#allocation5 + $0x1560] sm:$0xff]
    %v742 = vld [vmem:[#allocation5 + $0x1568] sm:$0xff]
    %v743 = vld [vmem:[#allocation5 + $0x1570] sm:$0xff]
    %v744 = vld [vmem:[#allocation5 + $0x1578] sm:$0xff]
    %v745 = vld [vmem:[#allocation5 + $0x1580] sm:$0xff]
    %v746 = vld [vmem:[#allocation5 + $0x1588] sm:$0xff]
    %v747 = vld [vmem:[#allocation5 + $0x1590] sm:$0xff]
    %v748 = vld [vmem:[#allocation5 + $0x1598] sm:$0xff]
    %v749 = vld [vmem:[#allocation5 + $0x15a0] sm:$0xff]
    %v750 = vld [vmem:[#allocation5 + $0x15a8] sm:$0xff]
    %v751 = vld [vmem:[#allocation5 + $0x15b0] sm:$0xff]
    %v752 = vld [vmem:[#allocation5 + $0x15b8] sm:$0xff]
    %v753 = vld [vmem:[#allocation5 + $0x15c0] sm:$0xff]
    %v754 = vld [vmem:[#allocation5 + $0x15c8] sm:$0xff]
    %v755 = vld [vmem:[#allocation5 + $0x15d0] sm:$0xff]
    %v756 = vld [vmem:[#allocation5 + $0x15d8] sm:$0xff]
    %v757 = vld [vmem:[#allocation5 + $0x15e0] sm:$0xff]
    %v758 = vld [vmem:[#allocation5 + $0x15e8] sm:$0xff]
    %v759 = vld [vmem:[#allocation5 + $0x15f0] sm:$0xff]
    %v760 = vld [vmem:[#allocation5 + $0x15f8] sm:$0xff]
    %v761 = vld [vmem:[#allocation5 + $0x1600] sm:$0xff]
    %v762 = vld [vmem:[#allocation5 + $0x1608] sm:$0xff]
    %v763 = vld [vmem:[#allocation5 + $0x1610] sm:$0xff]
    %v764 = vld [vmem:[#allocation5 + $0x1618] sm:$0xff]
    %v765 = vld [vmem:[#allocation5 + $0x1620] sm:$0xff]
    %v766 = vld [vmem:[#allocation5 + $0x1628] sm:$0xff]
    %v767 = vld [vmem:[#allocation5 + $0x1630] sm:$0xff]
    %v768 = vld [vmem:[#allocation5 + $0x1638] sm:$0xff]
    %v769 = vld [vmem:[#allocation5 + $0x1640] sm:$0xff]
    %v770 = vld [vmem:[#allocation5 + $0x1648] sm:$0xff]
    %v771 = vld [vmem:[#allocation5 + $0x1650] sm:$0xff]
    %v772 = vld [vmem:[#allocation5 + $0x1658] sm:$0xff]
    %v773 = vld [vmem:[#allocation5 + $0x1660] sm:$0xff]
    %v774 = vld [vmem:[#allocation5 + $0x1668] sm:$0xff]
    %v775 = vld [vmem:[#allocation5 + $0x1670] sm:$0xff]
    %v776 = vld [vmem:[#allocation5 + $0x1678] sm:$0xff]
    %v777 = vld [vmem:[#allocation5 + $0x1680] sm:$0xff]
    %v778 = vld [vmem:[#allocation5 + $0x1688] sm:$0xff]
    %v779 = vld [vmem:[#allocation5 + $0x1690] sm:$0xff]
    %v780 = vld [vmem:[#allocation5 + $0x1698] sm:$0xff]
    %v781 = vld [vmem:[#allocation5 + $0x16a0] sm:$0xff]
    %v782 = vld [vmem:[#allocation5 + $0x16a8] sm:$0xff]
    %v783 = vld [vmem:[#allocation5 + $0x16b0] sm:$0xff]
    %v784 = vld [vmem:[#allocation5 + $0x16b8] sm:$0xff]
    %v785 = vld [vmem:[#allocation5 + $0x16c0] sm:$0xff]
    %v786 = vld [vmem:[#allocation5 + $0x16c8] sm:$0xff]
    %v787 = vld [vmem:[#allocation5 + $0x16d0] sm:$0xff]
    %v788 = vld [vmem:[#allocation5 + $0x16d8] sm:$0xff]
    %v789 = vld [vmem:[#allocation5 + $0x16e0] sm:$0xff]
    %v790 = vld [vmem:[#allocation5 + $0x16e8] sm:$0xff]
    %v791 = vld [vmem:[#allocation5 + $0x16f0] sm:$0xff]
    %v792 = vld [vmem:[#allocation5 + $0x16f8] sm:$0xff]
    %v793 = vld [vmem:[#allocation5 + $0x1700] sm:$0xff]
    %v794 = vld [vmem:[#allocation5 + $0x1708] sm:$0xff]
    %v795 = vld [vmem:[#allocation5 + $0x1710] sm:$0xff]
    %v796 = vld [vmem:[#allocation5 + $0x1718] sm:$0xff]
    %v797 = vld [vmem:[#allocation5 + $0x1720] sm:$0xff]
    %v798 = vld [vmem:[#allocation5 + $0x1728] sm:$0xff]
    %v799 = vld [vmem:[#allocation5 + $0x1730] sm:$0xff]
    %v800 = vld [vmem:[#allocation5 + $0x1738] sm:$0xff]
    %v801 = vld [vmem:[#allocation5 + $0x1740] sm:$0xff]
    %v802 = vld [vmem:[#allocation5 + $0x1748] sm:$0xff]
    %v803 = vld [vmem:[#allocation5 + $0x1750] sm:$0xff]
    %v804 = vld [vmem:[#allocation5 + $0x1758] sm:$0xff]
    %v805 = vld [vmem:[#allocation5 + $0x1760] sm:$0xff]
    %v806 = vld [vmem:[#allocation5 + $0x1768] sm:$0xff]
    %v807 = vld [vmem:[#allocation5 + $0x1770] sm:$0xff]
    %v808 = vld [vmem:[#allocation5 + $0x1778] sm:$0xff]
    %v809 = vld [vmem:[#allocation5 + $0x1780] sm:$0xff]
    %v810 = vld [vmem:[#allocation5 + $0x1788] sm:$0xff]
    %v811 = vld [vmem:[#allocation5 + $0x1790] sm:$0xff]
    %v812 = vld [vmem:[#allocation5 + $0x1798] sm:$0xff]
    %v813 = vld [vmem:[#allocation5 + $0x17a0] sm:$0xff]
    %v814 = vld [vmem:[#allocation5 + $0x17a8] sm:$0xff]
    %v815 = vld [vmem:[#allocation5 + $0x17b0] sm:$0xff]
    %v816 = vld [vmem:[#allocation5 + $0x17b8] sm:$0xff]
    %v817 = vld [vmem:[#allocation5 + $0x17c0] sm:$0xff]
    %v818 = vld [vmem:[#allocation5 + $0x17c8] sm:$0xff]
    %v819 = vld [vmem:[#allocation5 + $0x17d0] sm:$0xff]
    %v820 = vld [vmem:[#allocation5 + $0x17d8] sm:$0xff]
    %v821 = vld [vmem:[#allocation5 + $0x17e0] sm:$0xff]
    %v822 = vld [vmem:[#allocation5 + $0x17e8] sm:$0xff]
    %v823 = vld [vmem:[#allocation5 + $0x17f0] sm:$0xff]
    %v824 = vld [vmem:[#allocation5 + $0x17f8] sm:$0xff]
    %v825 = vld [vmem:[#allocation5 + $0x1800] sm:$0xff]
    %v826 = vld [vmem:[#allocation5 + $0x1808] sm:$0xff]
    %v827 = vld [vmem:[#allocation5 + $0x1810] sm:$0xff]
    %v828 = vld [vmem:[#allocation5 + $0x1818] sm:$0xff]
    %v829 = vld [vmem:[#allocation5 + $0x1820] sm:$0xff]
    %v830 = vld [vmem:[#allocation5 + $0x1828] sm:$0xff]
    %v831 = vld [vmem:[#allocation5 + $0x1830] sm:$0xff]
    %v832 = vld [vmem:[#allocation5 + $0x1838] sm:$0xff]
    %v833 = vld [vmem:[#allocation5 + $0x1840] sm:$0xff]
    %v834 = vld [vmem:[#allocation5 + $0x1848] sm:$0xff]
    %v835 = vld [vmem:[#allocation5 + $0x1850] sm:$0xff]
    %v836 = vld [vmem:[#allocation5 + $0x1858] sm:$0xff]
    %v837 = vld [vmem:[#allocation5 + $0x1860] sm:$0xff]
    %v838 = vld [vmem:[#allocation5 + $0x1868] sm:$0xff]
    %v839 = vld [vmem:[#allocation5 + $0x1870] sm:$0xff]
    %v840 = vld [vmem:[#allocation5 + $0x1878] sm:$0xff]
    %v841 = vld [vmem:[#allocation7] sm:$0xf]
    %v843 = vlaneseq
    %v844 = vshrl.u32 %v843, 7
    %v845 = vsub.s32 0, %v844
    %v846 = vrot.slane %v841, %v845
    %v847 = vlaneseq
    %v848 = vshrl.u32 %v847, 7
    %v849 = vsub.s32 1, %v848
    %v850 = vrot.slane %v841, %v849
    %v851 = vlaneseq
    %v852 = vshrl.u32 %v851, 7
    %v853 = vsub.s32 2, %v852
    %v854 = vrot.slane %v841, %v853
    %v855 = vlaneseq
    %v856 = vshrl.u32 %v855, 7
    %v857 = vsub.s32 3, %v856
    %v858 = vrot.slane %v841, %v857
    %v867 = vcombine.high %v53, %v53
    %v869 = vunpack.c.l.s4 1966171168
    %v870 = vunpack.c.0.s8 %v869
    %v871 = vlaneseq
    %v872 = vshrl.u32 %v871, 7
    %v873 = vsub.s32 %v870, %v872
    %v874 = vrot.slane %v53, %v873
    %v876 = vunpack.c.l.s4 1966171168
    %v877 = vunpack.c.0.s8 %v876
    %v878 = vlaneseq
    %v879 = vshrl.u32 %v878, 7
    %v880 = vsub.s32 %v877, %v879
    %v881 = vrot.slane %v867, %v880
    %v882 = vcombine.high %v874, %v874
    %v883 = vcombine.high %v881, %v881
    %v885 = vunpack.c.l.s4 1966171168
    %v886 = vunpack.c.0.s8 %v885
    %v887 = vlaneseq
    %v888 = vshrl.u32 %v887, 7
    %v889 = vsub.s32 %v886, %v888
    %v890 = vrot.slane %v874, %v889
    %v892 = vunpack.c.l.s4 1966171168
    %v893 = vunpack.c.0.s8 %v892
    %v894 = vlaneseq
    %v895 = vshrl.u32 %v894, 7
    %v896 = vsub.s32 %v893, %v895
    %v897 = vrot.slane %v881, %v896
    %v899 = vunpack.c.l.s4 1966171168
    %v900 = vunpack.c.0.s8 %v899
    %v901 = vlaneseq
    %v902 = vshrl.u32 %v901, 7
    %v903 = vsub.s32 %v900, %v902
    %v904 = vrot.slane %v882, %v903
    %v906 = vunpack.c.l.s4 1966171168
    %v907 = vunpack.c.0.s8 %v906
    %v908 = vlaneseq
    %v909 = vshrl.u32 %v908, 7
    %v910 = vsub.s32 %v907, %v909
    %v911 = vrot.slane %v883, %v910
    %v912 = vcombine.high %v890, %v890
    %v913 = vcombine.high %v897, %v897
    %v914 = vcombine.high %v904, %v904
    %v915 = vcombine.high %v911, %v911
    %v916 = vcombine.high %v54, %v54
    %v918 = vunpack.c.l.s4 1966171168
    %v919 = vunpack.c.0.s8 %v918
    %v920 = vlaneseq
    %v921 = vshrl.u32 %v920, 7
    %v922 = vsub.s32 %v919, %v921
    %v923 = vrot.slane %v54, %v922
    %v925 = vunpack.c.l.s4 1966171168
    %v926 = vunpack.c.0.s8 %v925
    %v927 = vlaneseq
    %v928 = vshrl.u32 %v927, 7
    %v929 = vsub.s32 %v926, %v928
    %v930 = vrot.slane %v916, %v929
    %v931 = vcombine.high %v923, %v923
    %v932 = vcombine.high %v930, %v930
    %v934 = vunpack.c.l.s4 1966171168
    %v935 = vunpack.c.0.s8 %v934
    %v936 = vlaneseq
    %v937 = vshrl.u32 %v936, 7
    %v938 = vsub.s32 %v935, %v937
    %v939 = vrot.slane %v923, %v938
    %v941 = vunpack.c.l.s4 1966171168
    %v942 = vunpack.c.0.s8 %v941
    %v943 = vlaneseq
    %v944 = vshrl.u32 %v943, 7
    %v945 = vsub.s32 %v942, %v944
    %v946 = vrot.slane %v930, %v945
    %v948 = vunpack.c.l.s4 1966171168
    %v949 = vunpack.c.0.s8 %v948
    %v950 = vlaneseq
    %v951 = vshrl.u32 %v950, 7
    %v952 = vsub.s32 %v949, %v951
    %v953 = vrot.slane %v931, %v952
    %v955 = vunpack.c.l.s4 1966171168
    %v956 = vunpack.c.0.s8 %v955
    %v957 = vlaneseq
    %v958 = vshrl.u32 %v957, 7
    %v959 = vsub.s32 %v956, %v958
    %v960 = vrot.slane %v932, %v959
    %v961 = vcombine.high %v939, %v939
    %v962 = vcombine.high %v946, %v946
    %v963 = vcombine.high %v953, %v953
    %v964 = vcombine.high %v960, %v960
    %v965 = vcombine.high %v55, %v55
    %v967 = vunpack.c.l.s4 1966171168
    %v968 = vunpack.c.0.s8 %v967
    %v969 = vlaneseq
    %v970 = vshrl.u32 %v969, 7
    %v971 = vsub.s32 %v968, %v970
    %v972 = vrot.slane %v55, %v971
    %v974 = vunpack.c.l.s4 1966171168
    %v975 = vunpack.c.0.s8 %v974
    %v976 = vlaneseq
    %v977 = vshrl.u32 %v976, 7
    %v978 = vsub.s32 %v975, %v977
    %v979 = vrot.slane %v965, %v978
    %v980 = vcombine.high %v972, %v972
    %v981 = vcombine.high %v979, %v979
    %v983 = vunpack.c.l.s4 1966171168
    %v984 = vunpack.c.0.s8 %v983
    %v985 = vlaneseq
    %v986 = vshrl.u32 %v985, 7
    %v987 = vsub.s32 %v984, %v986
    %v988 = vrot.slane %v972, %v987
    %v990 = vunpack.c.l.s4 1966171168
    %v991 = vunpack.c.0.s8 %v990
    %v992 = vlaneseq
    %v993 = vshrl.u32 %v992, 7
    %v994 = vsub.s32 %v991, %v993
    %v995 = vrot.slane %v979, %v994
    %v997 = vunpack.c.l.s4 1966171168
    %v998 = vunpack.c.0.s8 %v997
    %v999 = vlaneseq
    %v1000 = vshrl.u32 %v999, 7
    %v1001 = vsub.s32 %v998, %v1000
    %v1002 = vrot.slane %v980, %v1001
    %v1004 = vunpack.c.l.s4 1966171168
    %v1005 = vunpack.c.0.s8 %v1004
    %v1006 = vlaneseq
    %v1007 = vshrl.u32 %v1006, 7
    %v1008 = vsub.s32 %v1005, %v1007
    %v1009 = vrot.slane %v981, %v1008
    %v1010 = vcombine.high %v988, %v988
    %v1011 = vcombine.high %v995, %v995
    %v1012 = vcombine.high %v1002, %v1002
    %v1013 = vcombine.high %v1009, %v1009
    %v1015 = vunpack.c.l.s4 1966171168
    %v1016 = vunpack.c.0.s8 %v1015
    %v1017 = vlaneseq
    %v1018 = vshrl.u32 %v1017, 7
    %v1019 = vsub.s32 %v1016, %v1018
    %v1020 = vrot.slane %v56, %v1019
    %v1022 = vunpack.c.l.s4 1966171168
    %v1023 = vunpack.c.0.s8 %v1022
    %v1024 = vlaneseq
    %v1025 = vshrl.u32 %v1024, 7
    %v1026 = vsub.s32 %v1023, %v1025
    %v1027 = vrot.slane %v1020, %v1026
    %v1836 = vunpack.c.l.b16 %v57
    %v1837 = vunpack.c.h.b16 %v57
    %v1838 = vunpack.c.l.b16 %v58
    %v1839 = vunpack.c.h.b16 %v58
    %v1840 = vunpack.c.l.b16 %v59
    %v1841 = vunpack.c.h.b16 %v59
    %v1842 = vunpack.c.l.b16 %v60
    %v1843 = vunpack.c.h.b16 %v60
    %v1844 = vunpack.c.l.b16 %v61
    %v1845 = vunpack.c.h.b16 %v61
    %v1846 = vunpack.c.l.b16 %v62
    %v1847 = vunpack.c.h.b16 %v62
    %v1848 = vunpack.c.l.b16 %v63
    %v1849 = vunpack.c.h.b16 %v63
    %v1850 = vunpack.c.l.b16 %v64
    %v1851 = vunpack.c.h.b16 %v64
    %v1852 = vunpack.c.l.b16 %v65
    %v1853 = vunpack.c.h.b16 %v65
    %v1854 = vunpack.c.l.b16 %v66
    %v1855 = vunpack.c.h.b16 %v66
    %v1856 = vunpack.c.l.b16 %v67
    %v1857 = vunpack.c.h.b16 %v67
    %v1858 = vunpack.c.l.b16 %v68
    %v1859 = vunpack.c.h.b16 %v68
    %v1860 = vunpack.c.l.b16 %v69
    %v1861 = vunpack.c.h.b16 %v69
    %v1862 = vunpack.c.l.b16 %v70
    %v1863 = vunpack.c.h.b16 %v70
    %v1864 = vunpack.c.l.b16 %v71
    %v1865 = vunpack.c.h.b16 %v71
    %v1866 = vunpack.c.l.b16 %v72
    %v1867 = vunpack.c.h.b16 %v72
    %v1868 = vunpack.c.l.b16 %v73
    %v1869 = vunpack.c.h.b16 %v73
    %v1870 = vunpack.c.l.b16 %v74
    %v1871 = vunpack.c.h.b16 %v74
    %v1872 = vunpack.c.l.b16 %v75
    %v1873 = vunpack.c.h.b16 %v75
    %v1874 = vunpack.c.l.b16 %v76
    %v1875 = vunpack.c.h.b16 %v76
    %v1876 = vunpack.c.l.b16 %v77
    %v1877 = vunpack.c.h.b16 %v77
    %v1878 = vunpack.c.l.b16 %v78
    %v1879 = vunpack.c.h.b16 %v78
    %v1880 = vunpack.c.l.b16 %v79
    %v1881 = vunpack.c.h.b16 %v79
    %v1882 = vunpack.c.l.b16 %v80
    %v1883 = vunpack.c.h.b16 %v80
    %v1884 = vunpack.c.l.b16 %v81
    %v1885 = vunpack.c.h.b16 %v81
    %v1886 = vunpack.c.l.b16 %v82
    %v1887 = vunpack.c.h.b16 %v82
    %v1888 = vunpack.c.l.b16 %v83
    %v1889 = vunpack.c.h.b16 %v83
    %v1890 = vunpack.c.l.b16 %v84
    %v1891 = vunpack.c.h.b16 %v84
    %v1892 = vunpack.c.l.b16 %v85
    %v1893 = vunpack.c.h.b16 %v85
    %v1894 = vunpack.c.l.b16 %v86
    %v1895 = vunpack.c.h.b16 %v86
    %v1896 = vunpack.c.l.b16 %v87
    %v1897 = vunpack.c.h.b16 %v87
    %v1898 = vunpack.c.l.b16 %v88
    %v1899 = vunpack.c.h.b16 %v88
    %v1900 = vunpack.c.l.b16 %v89
    %v1901 = vunpack.c.h.b16 %v89
    %v1902 = vunpack.c.l.b16 %v90
    %v1903 = vunpack.c.h.b16 %v90
    %v1904 = vunpack.c.l.b16 %v91
    %v1905 = vunpack.c.h.b16 %v91
    %v1906 = vunpack.c.l.b16 %v92
    %v1907 = vunpack.c.h.b16 %v92
    %v1908 = vunpack.c.l.b16 %v93
    %v1909 = vunpack.c.h.b16 %v93
    %v1910 = vunpack.c.l.b16 %v94
    %v1911 = vunpack.c.h.b16 %v94
    %v1912 = vunpack.c.l.b16 %v95
    %v1913 = vunpack.c.h.b16 %v95
    %v1914 = vunpack.c.l.b16 %v96
    %v1915 = vunpack.c.h.b16 %v96
    %v1916 = vunpack.c.l.b16 %v97
    %v1917 = vunpack.c.h.b16 %v97
    %v1918 = vunpack.c.l.b16 %v98
    %v1919 = vunpack.c.h.b16 %v98
    %v1920 = vunpack.c.l.b16 %v99
    %v1921 = vunpack.c.h.b16 %v99
    %v1922 = vunpack.c.l.b16 %v100
    %v1923 = vunpack.c.h.b16 %v100
    %v1924 = vunpack.c.l.b16 %v101
    %v1925 = vunpack.c.h.b16 %v101
    %v1926 = vunpack.c.l.b16 %v102
    %v1927 = vunpack.c.h.b16 %v102
    %v1928 = vunpack.c.l.b16 %v103
    %v1929 = vunpack.c.h.b16 %v103
    %v1930 = vunpack.c.l.b16 %v104
    %v1931 = vunpack.c.h.b16 %v104
    %v1932 = vunpack.c.l.b16 %v105
    %v1933 = vunpack.c.h.b16 %v105
    %v1934 = vunpack.c.l.b16 %v106
    %v1935 = vunpack.c.h.b16 %v106
    %v1936 = vunpack.c.l.b16 %v107
    %v1937 = vunpack.c.h.b16 %v107
    %v1938 = vunpack.c.l.b16 %v108
    %v1939 = vunpack.c.h.b16 %v108
    %v1940 = vunpack.c.l.b16 %v109
    %v1941 = vunpack.c.h.b16 %v109
    %v1942 = vunpack.c.l.b16 %v110
    %v1943 = vunpack.c.h.b16 %v110
    %v1944 = vunpack.c.l.b16 %v111
    %v1945 = vunpack.c.h.b16 %v111
    %v1946 = vunpack.c.l.b16 %v112
    %v1947 = vunpack.c.h.b16 %v112
    %v1948 = vunpack.c.l.b16 %v113
    %v1949 = vunpack.c.h.b16 %v113
    %v1950 = vunpack.c.l.b16 %v114
    %v1951 = vunpack.c.h.b16 %v114
    %v1952 = vunpack.c.l.b16 %v115
    %v1953 = vunpack.c.h.b16 %v115
    %v1954 = vunpack.c.l.b16 %v116
    %v1955 = vunpack.c.h.b16 %v116
    %v1956 = vunpack.c.l.b16 %v117
    %v1957 = vunpack.c.h.b16 %v117
    %v1958 = vunpack.c.l.b16 %v118
    %v1959 = vunpack.c.h.b16 %v118
    %v1960 = vunpack.c.l.b16 %v119
    %v1961 = vunpack.c.h.b16 %v119
    %v1962 = vunpack.c.l.b16 %v120
    %v1963 = vunpack.c.h.b16 %v120
    %v1964 = vunpack.c.l.b16 %v121
    %v1965 = vunpack.c.h.b16 %v121
    %v1966 = vunpack.c.l.b16 %v122
    %v1967 = vunpack.c.h.b16 %v122
    %v1968 = vunpack.c.l.b16 %v123
    %v1969 = vunpack.c.h.b16 %v123
    %v1970 = vunpack.c.l.b16 %v124
    %v1971 = vunpack.c.h.b16 %v124
    %v1972 = vunpack.c.l.b16 %v125
    %v1973 = vunpack.c.h.b16 %v125
    %v1974 = vunpack.c.l.b16 %v126
    %v1975 = vunpack.c.h.b16 %v126
    %v1976 = vunpack.c.l.b16 %v127
    %v1977 = vunpack.c.h.b16 %v127
    %v1978 = vunpack.c.l.b16 %v128
    %v1979 = vunpack.c.h.b16 %v128
    %v1980 = vunpack.c.l.b16 %v129
    %v1981 = vunpack.c.h.b16 %v129
    %v1982 = vunpack.c.l.b16 %v130
    %v1983 = vunpack.c.h.b16 %v130
    %v1984 = vunpack.c.l.b16 %v131
    %v1985 = vunpack.c.h.b16 %v131
    %v1986 = vunpack.c.l.b16 %v132
    %v1987 = vunpack.c.h.b16 %v132
    %v1988 = vunpack.c.l.b16 %v133
    %v1989 = vunpack.c.h.b16 %v133
    %v1990 = vunpack.c.l.b16 %v134
    %v1991 = vunpack.c.h.b16 %v134
    %v1992 = vunpack.c.l.b16 %v135
    %v1993 = vunpack.c.h.b16 %v135
    %v1994 = vunpack.c.l.b16 %v136
    %v1995 = vunpack.c.h.b16 %v136
    %v1996 = vunpack.c.l.b16 %v137
    %v1997 = vunpack.c.h.b16 %v137
    %v1998 = vunpack.c.l.b16 %v138
    %v1999 = vunpack.c.h.b16 %v138
    %v2000 = vunpack.c.l.b16 %v139
    %v2001 = vunpack.c.h.b16 %v139
    %v2002 = vunpack.c.l.b16 %v140
    %v2003 = vunpack.c.h.b16 %v140
    %v2004 = vunpack.c.l.b16 %v141
    %v2005 = vunpack.c.h.b16 %v141
    %v2006 = vunpack.c.l.b16 %v142
    %v2007 = vunpack.c.h.b16 %v142
    %v2008 = vunpack.c.l.b16 %v143
    %v2009 = vunpack.c.h.b16 %v143
    %v2010 = vunpack.c.l.b16 %v144
    %v2011 = vunpack.c.h.b16 %v144
    %v2012 = vunpack.c.l.b16 %v145
    %v2013 = vunpack.c.h.b16 %v145
    %v2014 = vunpack.c.l.b16 %v146
    %v2015 = vunpack.c.h.b16 %v146
    %v2016 = vunpack.c.l.b16 %v147
    %v2017 = vunpack.c.h.b16 %v147
    %v2018 = vunpack.c.l.b16 %v148
    %v2019 = vunpack.c.h.b16 %v148
    %v2020 = vunpack.c.l.b16 %v149
    %v2021 = vunpack.c.h.b16 %v149
    %v2022 = vunpack.c.l.b16 %v150
    %v2023 = vunpack.c.h.b16 %v150
    %v2024 = vunpack.c.l.b16 %v151
    %v2025 = vunpack.c.h.b16 %v151
    %v2026 = vunpack.c.l.b16 %v152
    %v2027 = vunpack.c.h.b16 %v152
    %v2028 = vunpack.c.l.b16 %v153
    %v2029 = vunpack.c.h.b16 %v153
    %v2030 = vunpack.c.l.b16 %v154
    %v2031 = vunpack.c.h.b16 %v154
    %v2032 = vunpack.c.l.b16 %v155
    %v2033 = vunpack.c.h.b16 %v155
    %v2034 = vunpack.c.l.b16 %v156
    %v2035 = vunpack.c.h.b16 %v156
    %v2036 = vunpack.c.l.b16 %v157
    %v2037 = vunpack.c.h.b16 %v157
    %v2038 = vunpack.c.l.b16 %v158
    %v2039 = vunpack.c.h.b16 %v158
    %v2040 = vunpack.c.l.b16 %v159
    %v2041 = vunpack.c.h.b16 %v159
    %v2042 = vunpack.c.l.b16 %v160
    %v2043 = vunpack.c.h.b16 %v160
    %v2044 = vunpack.c.l.b16 %v161
    %v2045 = vunpack.c.h.b16 %v161
    %v2046 = vunpack.c.l.b16 %v162
    %v2047 = vunpack.c.h.b16 %v162
    %v2048 = vunpack.c.l.b16 %v163
    %v2049 = vunpack.c.h.b16 %v163
    %v2050 = vunpack.c.l.b16 %v164
    %v2051 = vunpack.c.h.b16 %v164
    %v2052 = vunpack.c.l.b16 %v165
    %v2053 = vunpack.c.h.b16 %v165
    %v2054 = vunpack.c.l.b16 %v166
    %v2055 = vunpack.c.h.b16 %v166
    %v2056 = vunpack.c.l.b16 %v167
    %v2057 = vunpack.c.h.b16 %v167
    %v2058 = vunpack.c.l.b16 %v168
    %v2059 = vunpack.c.h.b16 %v168
    %v2060 = vunpack.c.l.b16 %v169
    %v2061 = vunpack.c.h.b16 %v169
    %v2062 = vunpack.c.l.b16 %v170
    %v2063 = vunpack.c.h.b16 %v170
    %v2064 = vunpack.c.l.b16 %v171
    %v2065 = vunpack.c.h.b16 %v171
    %v2066 = vunpack.c.l.b16 %v172
    %v2067 = vunpack.c.h.b16 %v172
    %v2068 = vunpack.c.l.b16 %v173
    %v2069 = vunpack.c.h.b16 %v173
    %v2070 = vunpack.c.l.b16 %v174
    %v2071 = vunpack.c.h.b16 %v174
    %v2072 = vunpack.c.l.b16 %v175
    %v2073 = vunpack.c.h.b16 %v175
    %v2074 = vunpack.c.l.b16 %v176
    %v2075 = vunpack.c.h.b16 %v176
    %v2076 = vunpack.c.l.b16 %v177
    %v2077 = vunpack.c.h.b16 %v177
    %v2078 = vunpack.c.l.b16 %v178
    %v2079 = vunpack.c.h.b16 %v178
    %v2080 = vunpack.c.l.b16 %v179
    %v2081 = vunpack.c.h.b16 %v179
    %v2082 = vunpack.c.l.b16 %v180
    %v2083 = vunpack.c.h.b16 %v180
    %v2084 = vunpack.c.l.b16 %v181
    %v2085 = vunpack.c.h.b16 %v181
    %v2086 = vunpack.c.l.b16 %v182
    %v2087 = vunpack.c.h.b16 %v182
    %v2088 = vunpack.c.l.b16 %v183
    %v2089 = vunpack.c.h.b16 %v183
    %v2090 = vunpack.c.l.b16 %v184
    %v2091 = vunpack.c.h.b16 %v184
    %v2092 = vunpack.c.l.b16 %v185
    %v2093 = vunpack.c.h.b16 %v185
    %v2094 = vunpack.c.l.b16 %v186
    %v2095 = vunpack.c.h.b16 %v186
    %v2096 = vunpack.c.l.b16 %v187
    %v2097 = vunpack.c.h.b16 %v187
    %v2098 = vunpack.c.l.b16 %v188
    %v2099 = vunpack.c.h.b16 %v188
    %v2100 = vunpack.c.l.b16 %v189
    %v2101 = vunpack.c.h.b16 %v189
    %v2102 = vunpack.c.l.b16 %v190
    %v2103 = vunpack.c.h.b16 %v190
    %v2104 = vunpack.c.l.b16 %v191
    %v2105 = vunpack.c.h.b16 %v191
    %v2106 = vunpack.c.l.b16 %v192
    %v2107 = vunpack.c.h.b16 %v192
    %v2108 = vunpack.c.l.b16 %v193
    %v2109 = vunpack.c.h.b16 %v193
    %v2110 = vunpack.c.l.b16 %v194
    %v2111 = vunpack.c.h.b16 %v194
    %v2112 = vunpack.c.l.b16 %v195
    %v2113 = vunpack.c.h.b16 %v195
    %v2114 = vunpack.c.l.b16 %v196
    %v2115 = vunpack.c.h.b16 %v196
    %v2116 = vunpack.c.l.b16 %v197
    %v2117 = vunpack.c.h.b16 %v197
    %v2118 = vunpack.c.l.b16 %v198
    %v2119 = vunpack.c.h.b16 %v198
    %v2120 = vunpack.c.l.b16 %v199
    %v2121 = vunpack.c.h.b16 %v199
    %v2122 = vunpack.c.l.b16 %v200
    %v2123 = vunpack.c.h.b16 %v200
    %v2124 = vunpack.c.l.b16 %v201
    %v2125 = vunpack.c.h.b16 %v201
    %v2126 = vunpack.c.l.b16 %v202
    %v2127 = vunpack.c.h.b16 %v202
    %v2128 = vunpack.c.l.b16 %v203
    %v2129 = vunpack.c.h.b16 %v203
    %v2130 = vunpack.c.l.b16 %v204
    %v2131 = vunpack.c.h.b16 %v204
    %v2132 = vunpack.c.l.b16 %v205
    %v2133 = vunpack.c.h.b16 %v205
    %v2134 = vunpack.c.l.b16 %v206
    %v2135 = vunpack.c.h.b16 %v206
    %v2136 = vunpack.c.l.b16 %v207
    %v2137 = vunpack.c.h.b16 %v207
    %v2138 = vunpack.c.l.b16 %v208
    %v2139 = vunpack.c.h.b16 %v208
    %v2140 = vunpack.c.l.b16 %v209
    %v2141 = vunpack.c.h.b16 %v209
    %v2142 = vunpack.c.l.b16 %v210
    %v2143 = vunpack.c.h.b16 %v210
    %v2144 = vunpack.c.l.b16 %v211
    %v2145 = vunpack.c.h.b16 %v211
    %v2146 = vunpack.c.l.b16 %v212
    %v2147 = vunpack.c.h.b16 %v212
    %v2148 = vunpack.c.l.b16 %v213
    %v2149 = vunpack.c.h.b16 %v213
    %v2150 = vunpack.c.l.b16 %v214
    %v2151 = vunpack.c.h.b16 %v214
    %v2152 = vunpack.c.l.b16 %v215
    %v2153 = vunpack.c.h.b16 %v215
    %v2154 = vunpack.c.l.b16 %v216
    %v2155 = vunpack.c.h.b16 %v216
    %v2156 = vunpack.c.l.b16 %v217
    %v2157 = vunpack.c.h.b16 %v217
    %v2158 = vunpack.c.l.b16 %v218
    %v2159 = vunpack.c.h.b16 %v218
    %v2160 = vunpack.c.l.b16 %v219
    %v2161 = vunpack.c.h.b16 %v219
    %v2162 = vunpack.c.l.b16 %v220
    %v2163 = vunpack.c.h.b16 %v220
    %v2164 = vunpack.c.l.b16 %v221
    %v2165 = vunpack.c.h.b16 %v221
    %v2166 = vunpack.c.l.b16 %v222
    %v2167 = vunpack.c.h.b16 %v222
    %v2168 = vunpack.c.l.b16 %v223
    %v2169 = vunpack.c.h.b16 %v223
    %v2170 = vunpack.c.l.b16 %v224
    %v2171 = vunpack.c.h.b16 %v224
    %v2172 = vunpack.c.l.b16 %v225
    %v2173 = vunpack.c.h.b16 %v225
    %v2174 = vunpack.c.l.b16 %v226
    %v2175 = vunpack.c.h.b16 %v226
    %v2176 = vunpack.c.l.b16 %v227
    %v2177 = vunpack.c.h.b16 %v227
    %v2178 = vunpack.c.l.b16 %v228
    %v2179 = vunpack.c.h.b16 %v228
    %v2180 = vunpack.c.l.b16 %v229
    %v2181 = vunpack.c.h.b16 %v229
    %v2182 = vunpack.c.l.b16 %v230
    %v2183 = vunpack.c.h.b16 %v230
    %v2184 = vunpack.c.l.b16 %v231
    %v2185 = vunpack.c.h.b16 %v231
    %v2186 = vunpack.c.l.b16 %v232
    %v2187 = vunpack.c.h.b16 %v232
    %v2188 = vunpack.c.l.b16 %v233
    %v2189 = vunpack.c.h.b16 %v233
    %v2190 = vunpack.c.l.b16 %v234
    %v2191 = vunpack.c.h.b16 %v234
    %v2192 = vunpack.c.l.b16 %v235
    %v2193 = vunpack.c.h.b16 %v235
    %v2194 = vunpack.c.l.b16 %v236
    %v2195 = vunpack.c.h.b16 %v236
    %v2196 = vunpack.c.l.b16 %v237
    %v2197 = vunpack.c.h.b16 %v237
    %v2198 = vunpack.c.l.b16 %v238
    %v2199 = vunpack.c.h.b16 %v238
    %v2200 = vunpack.c.l.b16 %v239
    %v2201 = vunpack.c.h.b16 %v239
    %v2202 = vunpack.c.l.b16 %v240
    %v2203 = vunpack.c.h.b16 %v240
    %v2204 = vunpack.c.l.b16 %v241
    %v2205 = vunpack.c.h.b16 %v241
    %v2206 = vunpack.c.l.b16 %v242
    %v2207 = vunpack.c.h.b16 %v242
    %v2208 = vunpack.c.l.b16 %v243
    %v2209 = vunpack.c.h.b16 %v243
    %v2210 = vunpack.c.l.b16 %v244
    %v2211 = vunpack.c.h.b16 %v244
    %v2212 = vunpack.c.l.b16 %v245
    %v2213 = vunpack.c.h.b16 %v245
    %v2214 = vunpack.c.l.b16 %v246
    %v2215 = vunpack.c.h.b16 %v246
    %v2216 = vunpack.c.l.b16 %v247
    %v2217 = vunpack.c.h.b16 %v247
    %v2218 = vunpack.c.l.b16 %v248
    %v2219 = vunpack.c.h.b16 %v248
    %v2220 = vunpack.c.l.b16 %v249
    %v2221 = vunpack.c.h.b16 %v249
    %v2222 = vunpack.c.l.b16 %v250
    %v2223 = vunpack.c.h.b16 %v250
    %v2224 = vunpack.c.l.b16 %v251
    %v2225 = vunpack.c.h.b16 %v251
    %v2226 = vunpack.c.l.b16 %v252
    %v2227 = vunpack.c.h.b16 %v252
    %v2228 = vunpack.c.l.b16 %v253
    %v2229 = vunpack.c.h.b16 %v253
    %v2230 = vunpack.c.l.b16 %v254
    %v2231 = vunpack.c.h.b16 %v254
    %v2232 = vunpack.c.l.b16 %v255
    %v2233 = vunpack.c.h.b16 %v255
    %v2234 = vunpack.c.l.b16 %v256
    %v2235 = vunpack.c.h.b16 %v256
    %v2236 = vunpack.c.l.b16 %v257
    %v2237 = vunpack.c.h.b16 %v257
    %v2238 = vunpack.c.l.b16 %v258
    %v2239 = vunpack.c.h.b16 %v258
    %v2240 = vunpack.c.l.b16 %v259
    %v2241 = vunpack.c.h.b16 %v259
    %v2242 = vunpack.c.l.b16 %v260
    %v2243 = vunpack.c.h.b16 %v260
    %v2244 = vunpack.c.l.b16 %v261
    %v2245 = vunpack.c.h.b16 %v261
    %v2246 = vunpack.c.l.b16 %v262
    %v2247 = vunpack.c.h.b16 %v262
    %v2248 = vunpack.c.l.b16 %v263
    %v2249 = vunpack.c.h.b16 %v263
    %v2250 = vunpack.c.l.b16 %v264
    %v2251 = vunpack.c.h.b16 %v264
    %v2252 = vunpack.c.l.b16 %v265
    %v2253 = vunpack.c.h.b16 %v265
    %v2254 = vunpack.c.l.b16 %v266
    %v2255 = vunpack.c.h.b16 %v266
    %v2256 = vunpack.c.l.b16 %v267
    %v2257 = vunpack.c.h.b16 %v267
    %v2258 = vunpack.c.l.b16 %v268
    %v2259 = vunpack.c.h.b16 %v268
    %v2260 = vunpack.c.l.b16 %v269
    %v2261 = vunpack.c.h.b16 %v269
    %v2262 = vunpack.c.l.b16 %v270
    %v2263 = vunpack.c.h.b16 %v270
    %v2264 = vunpack.c.l.b16 %v271
    %v2265 = vunpack.c.h.b16 %v271
    %v2266 = vunpack.c.l.b16 %v272
    %v2267 = vunpack.c.h.b16 %v272
    %v2268 = vunpack.c.l.b16 %v273
    %v2269 = vunpack.c.h.b16 %v273
    %v2270 = vunpack.c.l.b16 %v274
    %v2271 = vunpack.c.h.b16 %v274
    %v2272 = vunpack.c.l.b16 %v275
    %v2273 = vunpack.c.h.b16 %v275
    %v2274 = vunpack.c.l.b16 %v276
    %v2275 = vunpack.c.h.b16 %v276
    %v2276 = vunpack.c.l.b16 %v277
    %v2277 = vunpack.c.h.b16 %v277
    %v2278 = vunpack.c.l.b16 %v278
    %v2279 = vunpack.c.h.b16 %v278
    %v2280 = vunpack.c.l.b16 %v279
    %v2281 = vunpack.c.h.b16 %v279
    %v2282 = vunpack.c.l.b16 %v280
    %v2283 = vunpack.c.h.b16 %v280
    %v2284 = vunpack.c.l.b16 %v281
    %v2285 = vunpack.c.h.b16 %v281
    %v2286 = vunpack.c.l.b16 %v282
    %v2287 = vunpack.c.h.b16 %v282
    %v2288 = vunpack.c.l.b16 %v283
    %v2289 = vunpack.c.h.b16 %v283
    %v2290 = vunpack.c.l.b16 %v284
    %v2291 = vunpack.c.h.b16 %v284
    %v2292 = vunpack.c.l.b16 %v285
    %v2293 = vunpack.c.h.b16 %v285
    %v2294 = vunpack.c.l.b16 %v286
    %v2295 = vunpack.c.h.b16 %v286
    %v2296 = vunpack.c.l.b16 %v287
    %v2297 = vunpack.c.h.b16 %v287
    %v2298 = vunpack.c.l.b16 %v288
    %v2299 = vunpack.c.h.b16 %v288
    %v2300 = vunpack.c.l.b16 %v289
    %v2301 = vunpack.c.h.b16 %v289
    %v2302 = vunpack.c.l.b16 %v290
    %v2303 = vunpack.c.h.b16 %v290
    %v2304 = vunpack.c.l.b16 %v291
    %v2305 = vunpack.c.h.b16 %v291
    %v2306 = vunpack.c.l.b16 %v292
    %v2307 = vunpack.c.h.b16 %v292
    %v2308 = vunpack.c.l.b16 %v293
    %v2309 = vunpack.c.h.b16 %v293
    %v2310 = vunpack.c.l.b16 %v294
    %v2311 = vunpack.c.h.b16 %v294
    %v2312 = vunpack.c.l.b16 %v295
    %v2313 = vunpack.c.h.b16 %v295
    %v2314 = vunpack.c.l.b16 %v296
    %v2315 = vunpack.c.h.b16 %v296
    %v2316 = vunpack.c.l.b16 %v297
    %v2317 = vunpack.c.h.b16 %v297
    %v2318 = vunpack.c.l.b16 %v298
    %v2319 = vunpack.c.h.b16 %v298
    %v2320 = vunpack.c.l.b16 %v299
    %v2321 = vunpack.c.h.b16 %v299
    %v2322 = vunpack.c.l.b16 %v300
    %v2323 = vunpack.c.h.b16 %v300
    %v2324 = vunpack.c.l.b16 %v301
    %v2325 = vunpack.c.h.b16 %v301
    %v2326 = vunpack.c.l.b16 %v302
    %v2327 = vunpack.c.h.b16 %v302
    %v2328 = vunpack.c.l.b16 %v303
    %v2329 = vunpack.c.h.b16 %v303
    %v2330 = vunpack.c.l.b16 %v304
    %v2331 = vunpack.c.h.b16 %v304
    %v2332 = vunpack.c.l.b16 %v305
    %v2333 = vunpack.c.h.b16 %v305
    %v2334 = vunpack.c.l.b16 %v306
    %v2335 = vunpack.c.h.b16 %v306
    %v2336 = vunpack.c.l.b16 %v307
    %v2337 = vunpack.c.h.b16 %v307
    %v2338 = vunpack.c.l.b16 %v308
    %v2339 = vunpack.c.h.b16 %v308
    %v2340 = vunpack.c.l.b16 %v309
    %v2341 = vunpack.c.h.b16 %v309
    %v2342 = vunpack.c.l.b16 %v310
    %v2343 = vunpack.c.h.b16 %v310
    %v2344 = vunpack.c.l.b16 %v311
    %v2345 = vunpack.c.h.b16 %v311
    %v2346 = vunpack.c.l.b16 %v312
    %v2347 = vunpack.c.h.b16 %v312
    %v2348 = vunpack.c.l.b16 %v313
    %v2349 = vunpack.c.h.b16 %v313
    %v2350 = vunpack.c.l.b16 %v314
    %v2351 = vunpack.c.h.b16 %v314
    %v2352 = vunpack.c.l.b16 %v315
    %v2353 = vunpack.c.h.b16 %v315
    %v2354 = vunpack.c.l.b16 %v316
    %v2355 = vunpack.c.h.b16 %v316
    %v2356 = vunpack.c.l.b16 %v317
    %v2357 = vunpack.c.h.b16 %v317
    %v2358 = vunpack.c.l.b16 %v318
    %v2359 = vunpack.c.h.b16 %v318
    %v2360 = vunpack.c.l.b16 %v319
    %v2361 = vunpack.c.h.b16 %v319
    %v2362 = vunpack.c.l.b16 %v320
    %v2363 = vunpack.c.h.b16 %v320
    %v2364 = vunpack.c.l.b16 %v321
    %v2365 = vunpack.c.h.b16 %v321
    %v2366 = vunpack.c.l.b16 %v322
    %v2367 = vunpack.c.h.b16 %v322
    %v2368 = vunpack.c.l.b16 %v323
    %v2369 = vunpack.c.h.b16 %v323
    %v2370 = vunpack.c.l.b16 %v324
    %v2371 = vunpack.c.h.b16 %v324
    %v2372 = vunpack.c.l.b16 %v325
    %v2373 = vunpack.c.h.b16 %v325
    %v2374 = vunpack.c.l.b16 %v326
    %v2375 = vunpack.c.h.b16 %v326
    %v2376 = vunpack.c.l.b16 %v327
    %v2377 = vunpack.c.h.b16 %v327
    %v2378 = vunpack.c.l.b16 %v328
    %v2379 = vunpack.c.h.b16 %v328
    %v2380 = vunpack.c.l.b16 %v329
    %v2381 = vunpack.c.h.b16 %v329
    %v2382 = vunpack.c.l.b16 %v330
    %v2383 = vunpack.c.h.b16 %v330
    %v2384 = vunpack.c.l.b16 %v331
    %v2385 = vunpack.c.h.b16 %v331
    %v2386 = vunpack.c.l.b16 %v332
    %v2387 = vunpack.c.h.b16 %v332
    %v2388 = vunpack.c.l.b16 %v333
    %v2389 = vunpack.c.h.b16 %v333
    %v2390 = vunpack.c.l.b16 %v334
    %v2391 = vunpack.c.h.b16 %v334
    %v2392 = vunpack.c.l.b16 %v335
    %v2393 = vunpack.c.h.b16 %v335
    %v2394 = vunpack.c.l.b16 %v336
    %v2395 = vunpack.c.h.b16 %v336
    %v2396 = vunpack.c.l.b16 %v337
    %v2397 = vunpack.c.h.b16 %v337
    %v2398 = vunpack.c.l.b16 %v338
    %v2399 = vunpack.c.h.b16 %v338
    %v2400 = vunpack.c.l.b16 %v339
    %v2401 = vunpack.c.h.b16 %v339
    %v2402 = vunpack.c.l.b16 %v340
    %v2403 = vunpack.c.h.b16 %v340
    %v2404 = vunpack.c.l.b16 %v341
    %v2405 = vunpack.c.h.b16 %v341
    %v2406 = vunpack.c.l.b16 %v342
    %v2407 = vunpack.c.h.b16 %v342
    %v2408 = vunpack.c.l.b16 %v343
    %v2409 = vunpack.c.h.b16 %v343
    %v2410 = vunpack.c.l.b16 %v344
    %v2411 = vunpack.c.h.b16 %v344
    %v2412 = vunpack.c.l.b16 %v345
    %v2413 = vunpack.c.h.b16 %v345
    %v2414 = vunpack.c.l.b16 %v346
    %v2415 = vunpack.c.h.b16 %v346
    %v2416 = vunpack.c.l.b16 %v347
    %v2417 = vunpack.c.h.b16 %v347
    %v2418 = vunpack.c.l.b16 %v348
    %v2419 = vunpack.c.h.b16 %v348
    %v2420 = vunpack.c.l.b16 %v349
    %v2421 = vunpack.c.h.b16 %v349
    %v2422 = vunpack.c.l.b16 %v350
    %v2423 = vunpack.c.h.b16 %v350
    %v2424 = vunpack.c.l.b16 %v351
    %v2425 = vunpack.c.h.b16 %v351
    %v2426 = vunpack.c.l.b16 %v352
    %v2427 = vunpack.c.h.b16 %v352
    %v2428 = vunpack.c.l.b16 %v353
    %v2429 = vunpack.c.h.b16 %v353
    %v2430 = vunpack.c.l.b16 %v354
    %v2431 = vunpack.c.h.b16 %v354
    %v2432 = vunpack.c.l.b16 %v355
    %v2433 = vunpack.c.h.b16 %v355
    %v2434 = vunpack.c.l.b16 %v356
    %v2435 = vunpack.c.h.b16 %v356
    %v2436 = vunpack.c.l.b16 %v357
    %v2437 = vunpack.c.h.b16 %v357
    %v2438 = vunpack.c.l.b16 %v358
    %v2439 = vunpack.c.h.b16 %v358
    %v2440 = vunpack.c.l.b16 %v359
    %v2441 = vunpack.c.h.b16 %v359
    %v2442 = vunpack.c.l.b16 %v360
    %v2443 = vunpack.c.h.b16 %v360
    %v2444 = vunpack.c.l.b16 %v361
    %v2445 = vunpack.c.h.b16 %v361
    %v2446 = vunpack.c.l.b16 %v362
    %v2447 = vunpack.c.h.b16 %v362
    %v2448 = vunpack.c.l.b16 %v363
    %v2449 = vunpack.c.h.b16 %v363
    %v2450 = vunpack.c.l.b16 %v364
    %v2451 = vunpack.c.h.b16 %v364
    %v2452 = vunpack.c.l.b16 %v365
    %v2453 = vunpack.c.h.b16 %v365
    %v2454 = vunpack.c.l.b16 %v366
    %v2455 = vunpack.c.h.b16 %v366
    %v2456 = vunpack.c.l.b16 %v367
    %v2457 = vunpack.c.h.b16 %v367
    %v2458 = vunpack.c.l.b16 %v368
    %v2459 = vunpack.c.h.b16 %v368
    %v2460 = vunpack.c.l.b16 %v369
    %v2461 = vunpack.c.h.b16 %v369
    %v2462 = vunpack.c.l.b16 %v370
    %v2463 = vunpack.c.h.b16 %v370
    %v2464 = vunpack.c.l.b16 %v371
    %v2465 = vunpack.c.h.b16 %v371
    %v2466 = vunpack.c.l.b16 %v372
    %v2467 = vunpack.c.h.b16 %v372
    %v2468 = vunpack.c.l.b16 %v373
    %v2469 = vunpack.c.h.b16 %v373
    %v2470 = vunpack.c.l.b16 %v374
    %v2471 = vunpack.c.h.b16 %v374
    %v2472 = vunpack.c.l.b16 %v375
    %v2473 = vunpack.c.h.b16 %v375
    %v2474 = vunpack.c.l.b16 %v376
    %v2475 = vunpack.c.h.b16 %v376
    %v2476 = vunpack.c.l.b16 %v377
    %v2477 = vunpack.c.h.b16 %v377
    %v2478 = vunpack.c.l.b16 %v378
    %v2479 = vunpack.c.h.b16 %v378
    %v2480 = vunpack.c.l.b16 %v379
    %v2481 = vunpack.c.h.b16 %v379
    %v2482 = vunpack.c.l.b16 %v380
    %v2483 = vunpack.c.h.b16 %v380
    %v2484 = vunpack.c.l.b16 %v381
    %v2485 = vunpack.c.h.b16 %v381
    %v2486 = vunpack.c.l.b16 %v382
    %v2487 = vunpack.c.h.b16 %v382
    %v2488 = vunpack.c.l.b16 %v383
    %v2489 = vunpack.c.h.b16 %v383
    %v2490 = vunpack.c.l.b16 %v384
    %v2491 = vunpack.c.h.b16 %v384
    %v2492 = vunpack.c.l.b16 %v385
    %v2493 = vunpack.c.h.b16 %v385
    %v2494 = vunpack.c.l.b16 %v386
    %v2495 = vunpack.c.h.b16 %v386
    %v2496 = vunpack.c.l.b16 %v387
    %v2497 = vunpack.c.h.b16 %v387
    %v2498 = vunpack.c.l.b16 %v388
    %v2499 = vunpack.c.h.b16 %v388
    %v2500 = vunpack.c.l.b16 %v389
    %v2501 = vunpack.c.h.b16 %v389
    %v2502 = vunpack.c.l.b16 %v390
    %v2503 = vunpack.c.h.b16 %v390
    %v2504 = vunpack.c.l.b16 %v391
    %v2505 = vunpack.c.h.b16 %v391
    %v2506 = vunpack.c.l.b16 %v392
    %v2507 = vunpack.c.h.b16 %v392
    %v2508 = vunpack.c.l.b16 %v393
    %v2509 = vunpack.c.h.b16 %v393
    %v2510 = vunpack.c.l.b16 %v394
    %v2511 = vunpack.c.h.b16 %v394
    %v2512 = vunpack.c.l.b16 %v395
    %v2513 = vunpack.c.h.b16 %v395
    %v2514 = vunpack.c.l.b16 %v396
    %v2515 = vunpack.c.h.b16 %v396
    %v2516 = vunpack.c.l.b16 %v397
    %v2517 = vunpack.c.h.b16 %v397
    %v2518 = vunpack.c.l.b16 %v398
    %v2519 = vunpack.c.h.b16 %v398
    %v2520 = vunpack.c.l.b16 %v399
    %v2521 = vunpack.c.h.b16 %v399
    %v2522 = vunpack.c.l.b16 %v400
    %v2523 = vunpack.c.h.b16 %v400
    %v2524 = vunpack.c.l.b16 %v401
    %v2525 = vunpack.c.h.b16 %v401
    %v2526 = vunpack.c.l.b16 %v402
    %v2527 = vunpack.c.h.b16 %v402
    %v2528 = vunpack.c.l.b16 %v403
    %v2529 = vunpack.c.h.b16 %v403
    %v2530 = vunpack.c.l.b16 %v404
    %v2531 = vunpack.c.h.b16 %v404
    %v2532 = vunpack.c.l.b16 %v405
    %v2533 = vunpack.c.h.b16 %v405
    %v2534 = vunpack.c.l.b16 %v406
    %v2535 = vunpack.c.h.b16 %v406
    %v2536 = vunpack.c.l.b16 %v407
    %v2537 = vunpack.c.h.b16 %v407
    %v2538 = vunpack.c.l.b16 %v408
    %v2539 = vunpack.c.h.b16 %v408
    %v2540 = vunpack.c.l.b16 %v409
    %v2541 = vunpack.c.h.b16 %v409
    %v2542 = vunpack.c.l.b16 %v410
    %v2543 = vunpack.c.h.b16 %v410
    %v2544 = vunpack.c.l.b16 %v411
    %v2545 = vunpack.c.h.b16 %v411
    %v2546 = vunpack.c.l.b16 %v412
    %v2547 = vunpack.c.h.b16 %v412
    %v2548 = vunpack.c.l.b16 %v413
    %v2549 = vunpack.c.h.b16 %v413
    %v2550 = vunpack.c.l.b16 %v414
    %v2551 = vunpack.c.h.b16 %v414
    %v2552 = vunpack.c.l.b16 %v415
    %v2553 = vunpack.c.h.b16 %v415
    %v2554 = vunpack.c.l.b16 %v416
    %v2555 = vunpack.c.h.b16 %v416
    %v2556 = vunpack.c.l.b16 %v417
    %v2557 = vunpack.c.h.b16 %v417
    %v2558 = vunpack.c.l.b16 %v418
    %v2559 = vunpack.c.h.b16 %v418
    %v2560 = vunpack.c.l.b16 %v419
    %v2561 = vunpack.c.h.b16 %v419
    %v2562 = vunpack.c.l.b16 %v420
    %v2563 = vunpack.c.h.b16 %v420
    %v2564 = vunpack.c.l.b16 %v421
    %v2565 = vunpack.c.h.b16 %v421
    %v2566 = vunpack.c.l.b16 %v422
    %v2567 = vunpack.c.h.b16 %v422
    %v2568 = vunpack.c.l.b16 %v423
    %v2569 = vunpack.c.h.b16 %v423
    %v2570 = vunpack.c.l.b16 %v424
    %v2571 = vunpack.c.h.b16 %v424
    %v2572 = vunpack.c.l.b16 %v425
    %v2573 = vunpack.c.h.b16 %v425
    %v2574 = vunpack.c.l.b16 %v426
    %v2575 = vunpack.c.h.b16 %v426
    %v2576 = vunpack.c.l.b16 %v427
    %v2577 = vunpack.c.h.b16 %v427
    %v2578 = vunpack.c.l.b16 %v428
    %v2579 = vunpack.c.h.b16 %v428
    %v2580 = vunpack.c.l.b16 %v429
    %v2581 = vunpack.c.h.b16 %v429
    %v2582 = vunpack.c.l.b16 %v430
    %v2583 = vunpack.c.h.b16 %v430
    %v2584 = vunpack.c.l.b16 %v431
    %v2585 = vunpack.c.h.b16 %v431
    %v2586 = vunpack.c.l.b16 %v432
    %v2587 = vunpack.c.h.b16 %v432
    %v2588 = vunpack.c.l.b16 %v433
    %v2589 = vunpack.c.h.b16 %v433
    %v2590 = vunpack.c.l.b16 %v434
    %v2591 = vunpack.c.h.b16 %v434
    %v2592 = vunpack.c.l.b16 %v435
    %v2593 = vunpack.c.h.b16 %v435
    %v2594 = vunpack.c.l.b16 %v436
    %v2595 = vunpack.c.h.b16 %v436
    %v2596 = vunpack.c.l.b16 %v437
    %v2597 = vunpack.c.h.b16 %v437
    %v2598 = vunpack.c.l.b16 %v438
    %v2599 = vunpack.c.h.b16 %v438
    %v2600 = vunpack.c.l.b16 %v439
    %v2601 = vunpack.c.h.b16 %v439
    %v2602 = vunpack.c.l.b16 %v440
    %v2603 = vunpack.c.h.b16 %v440
    %v2604 = vunpack.c.l.b16 %v441
    %v2605 = vunpack.c.h.b16 %v441
    %v2606 = vunpack.c.l.b16 %v442
    %v2607 = vunpack.c.h.b16 %v442
    %v2608 = vunpack.c.l.b16 %v443
    %v2609 = vunpack.c.h.b16 %v443
    %v2610 = vunpack.c.l.b16 %v444
    %v2611 = vunpack.c.h.b16 %v444
    %v2612 = vunpack.c.l.b16 %v445
    %v2613 = vunpack.c.h.b16 %v445
    %v2614 = vunpack.c.l.b16 %v446
    %v2615 = vunpack.c.h.b16 %v446
    %v2616 = vunpack.c.l.b16 %v447
    %v2617 = vunpack.c.h.b16 %v447
    %v2618 = vunpack.c.l.b16 %v448
    %v2619 = vunpack.c.h.b16 %v448
    %v2620 = vunpack.c.l.b16 %v449
    %v2621 = vunpack.c.h.b16 %v449
    %v2622 = vunpack.c.l.b16 %v450
    %v2623 = vunpack.c.h.b16 %v450
    %v2624 = vunpack.c.l.b16 %v451
    %v2625 = vunpack.c.h.b16 %v451
    %v2626 = vunpack.c.l.b16 %v452
    %v2627 = vunpack.c.h.b16 %v452
    %v2628 = vunpack.c.l.b16 %v453
    %v2629 = vunpack.c.h.b16 %v453
    %v2630 = vunpack.c.l.b16 %v454
    %v2631 = vunpack.c.h.b16 %v454
    %v2632 = vunpack.c.l.b16 %v455
    %v2633 = vunpack.c.h.b16 %v455
    %v2634 = vunpack.c.l.b16 %v456
    %v2635 = vunpack.c.h.b16 %v456
    %v2636 = vunpack.c.l.b16 %v457
    %v2637 = vunpack.c.h.b16 %v457
    %v2638 = vunpack.c.l.b16 %v458
    %v2639 = vunpack.c.h.b16 %v458
    %v2640 = vunpack.c.l.b16 %v459
    %v2641 = vunpack.c.h.b16 %v459
    %v2642 = vunpack.c.l.b16 %v460
    %v2643 = vunpack.c.h.b16 %v460
    %v2644 = vunpack.c.l.b16 %v461
    %v2645 = vunpack.c.h.b16 %v461
    %v2646 = vunpack.c.l.b16 %v462
    %v2647 = vunpack.c.h.b16 %v462
    %v2648 = vunpack.c.l.b16 %v463
    %v2649 = vunpack.c.h.b16 %v463
    %v2650 = vunpack.c.l.b16 %v464
    %v2651 = vunpack.c.h.b16 %v464
    %v2652 = vunpack.c.l.b16 %v465
    %v2653 = vunpack.c.h.b16 %v465
    %v2654 = vunpack.c.l.b16 %v466
    %v2655 = vunpack.c.h.b16 %v466
    %v2656 = vunpack.c.l.b16 %v467
    %v2657 = vunpack.c.h.b16 %v467
    %v2658 = vunpack.c.l.b16 %v468
    %v2659 = vunpack.c.h.b16 %v468
    %v2660 = vunpack.c.l.b16 %v469
    %v2661 = vunpack.c.h.b16 %v469
    %v2662 = vunpack.c.l.b16 %v470
    %v2663 = vunpack.c.h.b16 %v470
    %v2664 = vunpack.c.l.b16 %v471
    %v2665 = vunpack.c.h.b16 %v471
    %v2666 = vunpack.c.l.b16 %v472
    %v2667 = vunpack.c.h.b16 %v472
    %v2668 = vunpack.c.l.b16 %v473
    %v2669 = vunpack.c.h.b16 %v473
    %v2670 = vunpack.c.l.b16 %v474
    %v2671 = vunpack.c.h.b16 %v474
    %v2672 = vunpack.c.l.b16 %v475
    %v2673 = vunpack.c.h.b16 %v475
    %v2674 = vunpack.c.l.b16 %v476
    %v2675 = vunpack.c.h.b16 %v476
    %v2676 = vunpack.c.l.b16 %v477
    %v2677 = vunpack.c.h.b16 %v477
    %v2678 = vunpack.c.l.b16 %v478
    %v2679 = vunpack.c.h.b16 %v478
    %v2680 = vunpack.c.l.b16 %v479
    %v2681 = vunpack.c.h.b16 %v479
    %v2682 = vunpack.c.l.b16 %v480
    %v2683 = vunpack.c.h.b16 %v480
    %v2684 = vunpack.c.l.b16 %v481
    %v2685 = vunpack.c.h.b16 %v481
    %v2686 = vunpack.c.l.b16 %v482
    %v2687 = vunpack.c.h.b16 %v482
    %v2688 = vunpack.c.l.b16 %v483
    %v2689 = vunpack.c.h.b16 %v483
    %v2690 = vunpack.c.l.b16 %v484
    %v2691 = vunpack.c.h.b16 %v484
    %v2692 = vunpack.c.l.b16 %v485
    %v2693 = vunpack.c.h.b16 %v485
    %v2694 = vunpack.c.l.b16 %v486
    %v2695 = vunpack.c.h.b16 %v486
    %v2696 = vunpack.c.l.b16 %v487
    %v2697 = vunpack.c.h.b16 %v487
    %v2698 = vunpack.c.l.b16 %v488
    %v2699 = vunpack.c.h.b16 %v488
    %v2700 = vunpack.c.l.b16 %v489
    %v2701 = vunpack.c.h.b16 %v489
    %v2702 = vunpack.c.l.b16 %v490
    %v2703 = vunpack.c.h.b16 %v490
    %v2704 = vunpack.c.l.b16 %v491
    %v2705 = vunpack.c.h.b16 %v491
    %v2706 = vunpack.c.l.b16 %v492
    %v2707 = vunpack.c.h.b16 %v492
    %v2708 = vunpack.c.l.b16 %v493
    %v2709 = vunpack.c.h.b16 %v493
    %v2710 = vunpack.c.l.b16 %v494
    %v2711 = vunpack.c.h.b16 %v494
    %v2712 = vunpack.c.l.b16 %v495
    %v2713 = vunpack.c.h.b16 %v495
    %v2714 = vunpack.c.l.b16 %v496
    %v2715 = vunpack.c.h.b16 %v496
    %v2716 = vunpack.c.l.b16 %v497
    %v2717 = vunpack.c.h.b16 %v497
    %v2718 = vunpack.c.l.b16 %v498
    %v2719 = vunpack.c.h.b16 %v498
    %v2720 = vunpack.c.l.b16 %v499
    %v2721 = vunpack.c.h.b16 %v499
    %v2722 = vunpack.c.l.b16 %v500
    %v2723 = vunpack.c.h.b16 %v500
    %v2724 = vunpack.c.l.b16 %v501
    %v2725 = vunpack.c.h.b16 %v501
    %v2726 = vunpack.c.l.b16 %v502
    %v2727 = vunpack.c.h.b16 %v502
    %v2728 = vunpack.c.l.b16 %v503
    %v2729 = vunpack.c.h.b16 %v503
    %v2730 = vunpack.c.l.b16 %v504
    %v2731 = vunpack.c.h.b16 %v504
    %v2732 = vunpack.c.l.b16 %v505
    %v2733 = vunpack.c.h.b16 %v505
    %v2734 = vunpack.c.l.b16 %v506
    %v2735 = vunpack.c.h.b16 %v506
    %v2736 = vunpack.c.l.b16 %v507
    %v2737 = vunpack.c.h.b16 %v507
    %v2738 = vunpack.c.l.b16 %v508
    %v2739 = vunpack.c.h.b16 %v508
    %v2740 = vunpack.c.l.b16 %v509
    %v2741 = vunpack.c.h.b16 %v509
    %v2742 = vunpack.c.l.b16 %v510
    %v2743 = vunpack.c.h.b16 %v510
    %v2744 = vunpack.c.l.b16 %v511
    %v2745 = vunpack.c.h.b16 %v511
    %v2746 = vunpack.c.l.b16 %v512
    %v2747 = vunpack.c.h.b16 %v512
    %v2748 = vunpack.c.l.b16 %v513
    %v2749 = vunpack.c.h.b16 %v513
    %v2750 = vunpack.c.l.b16 %v514
    %v2751 = vunpack.c.h.b16 %v514
    %v2752 = vunpack.c.l.b16 %v515
    %v2753 = vunpack.c.h.b16 %v515
    %v2754 = vunpack.c.l.b16 %v516
    %v2755 = vunpack.c.h.b16 %v516
    %v2756 = vunpack.c.l.b16 %v517
    %v2757 = vunpack.c.h.b16 %v517
    %v2758 = vunpack.c.l.b16 %v518
    %v2759 = vunpack.c.h.b16 %v518
    %v2760 = vunpack.c.l.b16 %v519
    %v2761 = vunpack.c.h.b16 %v519
    %v2762 = vunpack.c.l.b16 %v520
    %v2763 = vunpack.c.h.b16 %v520
    %v2764 = vunpack.c.l.b16 %v521
    %v2765 = vunpack.c.h.b16 %v521
    %v2766 = vunpack.c.l.b16 %v522
    %v2767 = vunpack.c.h.b16 %v522
    %v2768 = vunpack.c.l.b16 %v523
    %v2769 = vunpack.c.h.b16 %v523
    %v2770 = vunpack.c.l.b16 %v524
    %v2771 = vunpack.c.h.b16 %v524
    %v2772 = vunpack.c.l.b16 %v525
    %v2773 = vunpack.c.h.b16 %v525
    %v2774 = vunpack.c.l.b16 %v526
    %v2775 = vunpack.c.h.b16 %v526
    %v2776 = vunpack.c.l.b16 %v527
    %v2777 = vunpack.c.h.b16 %v527
    %v2778 = vunpack.c.l.b16 %v528
    %v2779 = vunpack.c.h.b16 %v528
    %v2780 = vunpack.c.l.b16 %v529
    %v2781 = vunpack.c.h.b16 %v529
    %v2782 = vunpack.c.l.b16 %v530
    %v2783 = vunpack.c.h.b16 %v530
    %v2784 = vunpack.c.l.b16 %v531
    %v2785 = vunpack.c.h.b16 %v531
    %v2786 = vunpack.c.l.b16 %v532
    %v2787 = vunpack.c.h.b16 %v532
    %v2788 = vunpack.c.l.b16 %v533
    %v2789 = vunpack.c.h.b16 %v533
    %v2790 = vunpack.c.l.b16 %v534
    %v2791 = vunpack.c.h.b16 %v534
    %v2792 = vunpack.c.l.b16 %v535
    %v2793 = vunpack.c.h.b16 %v535
    %v2794 = vunpack.c.l.b16 %v536
    %v2795 = vunpack.c.h.b16 %v536
    %v2796 = vunpack.c.l.b16 %v537
    %v2797 = vunpack.c.h.b16 %v537
    %v2798 = vunpack.c.l.b16 %v538
    %v2799 = vunpack.c.h.b16 %v538
    %v2800 = vunpack.c.l.b16 %v539
    %v2801 = vunpack.c.h.b16 %v539
    %v2802 = vunpack.c.l.b16 %v540
    %v2803 = vunpack.c.h.b16 %v540
    %v2804 = vunpack.c.l.b16 %v541
    %v2805 = vunpack.c.h.b16 %v541
    %v2806 = vunpack.c.l.b16 %v542
    %v2807 = vunpack.c.h.b16 %v542
    %v2808 = vunpack.c.l.b16 %v543
    %v2809 = vunpack.c.h.b16 %v543
    %v2810 = vunpack.c.l.b16 %v544
    %v2811 = vunpack.c.h.b16 %v544
    %v2812 = vunpack.c.l.b16 %v545
    %v2813 = vunpack.c.h.b16 %v545
    %v2814 = vunpack.c.l.b16 %v546
    %v2815 = vunpack.c.h.b16 %v546
    %v2816 = vunpack.c.l.b16 %v547
    %v2817 = vunpack.c.h.b16 %v547
    %v2818 = vunpack.c.l.b16 %v548
    %v2819 = vunpack.c.h.b16 %v548
    %v2820 = vunpack.c.l.b16 %v549
    %v2821 = vunpack.c.h.b16 %v549
    %v2822 = vunpack.c.l.b16 %v550
    %v2823 = vunpack.c.h.b16 %v550
    %v2824 = vunpack.c.l.b16 %v551
    %v2825 = vunpack.c.h.b16 %v551
    %v2826 = vunpack.c.l.b16 %v552
    %v2827 = vunpack.c.h.b16 %v552
    %v2828 = vunpack.c.l.b16 %v553
    %v2829 = vunpack.c.h.b16 %v553
    %v2830 = vunpack.c.l.b16 %v554
    %v2831 = vunpack.c.h.b16 %v554
    %v2832 = vunpack.c.l.b16 %v555
    %v2833 = vunpack.c.h.b16 %v555
    %v2834 = vunpack.c.l.b16 %v556
    %v2835 = vunpack.c.h.b16 %v556
    %v2836 = vunpack.c.l.b16 %v557
    %v2837 = vunpack.c.h.b16 %v557
    %v2838 = vunpack.c.l.b16 %v558
    %v2839 = vunpack.c.h.b16 %v558
    %v2840 = vunpack.c.l.b16 %v559
    %v2841 = vunpack.c.h.b16 %v559
    %v2842 = vunpack.c.l.b16 %v560
    %v2843 = vunpack.c.h.b16 %v560
    %v2844 = vunpack.c.l.b16 %v561
    %v2845 = vunpack.c.h.b16 %v561
    %v2846 = vunpack.c.l.b16 %v562
    %v2847 = vunpack.c.h.b16 %v562
    %v2848 = vunpack.c.l.b16 %v563
    %v2849 = vunpack.c.h.b16 %v563
    %v2850 = vunpack.c.l.b16 %v564
    %v2851 = vunpack.c.h.b16 %v564
    %v2852 = vunpack.c.l.b16 %v565
    %v2853 = vunpack.c.h.b16 %v565
    %v2854 = vunpack.c.l.b16 %v566
    %v2855 = vunpack.c.h.b16 %v566
    %v2856 = vunpack.c.l.b16 %v567
    %v2857 = vunpack.c.h.b16 %v567
    %v2858 = vunpack.c.l.b16 %v568
    %v2859 = vunpack.c.h.b16 %v568
    %v2860 = vunpack.c.l.b16 %v569
    %v2861 = vunpack.c.h.b16 %v569
    %v2862 = vunpack.c.l.b16 %v570
    %v2863 = vunpack.c.h.b16 %v570
    %v2864 = vunpack.c.l.b16 %v571
    %v2865 = vunpack.c.h.b16 %v571
    %v2866 = vunpack.c.l.b16 %v572
    %v2867 = vunpack.c.h.b16 %v572
    %v2868 = vunpack.c.l.b16 %v573
    %v2869 = vunpack.c.h.b16 %v573
    %v2870 = vunpack.c.l.b16 %v574
    %v2871 = vunpack.c.h.b16 %v574
    %v2872 = vunpack.c.l.b16 %v575
    %v2873 = vunpack.c.h.b16 %v575
    %v2874 = vunpack.c.l.b16 %v576
    %v2875 = vunpack.c.h.b16 %v576
    %v2876 = vunpack.c.l.b16 %v577
    %v2877 = vunpack.c.h.b16 %v577
    %v2878 = vunpack.c.l.b16 %v578
    %v2879 = vunpack.c.h.b16 %v578
    %v2880 = vunpack.c.l.b16 %v579
    %v2881 = vunpack.c.h.b16 %v579
    %v2882 = vunpack.c.l.b16 %v580
    %v2883 = vunpack.c.h.b16 %v580
    %v2884 = vunpack.c.l.b16 %v581
    %v2885 = vunpack.c.h.b16 %v581
    %v2886 = vunpack.c.l.b16 %v582
    %v2887 = vunpack.c.h.b16 %v582
    %v2888 = vunpack.c.l.b16 %v583
    %v2889 = vunpack.c.h.b16 %v583
    %v2890 = vunpack.c.l.b16 %v584
    %v2891 = vunpack.c.h.b16 %v584
    %v2892 = vunpack.c.l.b16 %v585
    %v2893 = vunpack.c.h.b16 %v585
    %v2894 = vunpack.c.l.b16 %v586
    %v2895 = vunpack.c.h.b16 %v586
    %v2896 = vunpack.c.l.b16 %v587
    %v2897 = vunpack.c.h.b16 %v587
    %v2898 = vunpack.c.l.b16 %v588
    %v2899 = vunpack.c.h.b16 %v588
    %v2900 = vunpack.c.l.b16 %v589
    %v2901 = vunpack.c.h.b16 %v589
    %v2902 = vunpack.c.l.b16 %v590
    %v2903 = vunpack.c.h.b16 %v590
    %v2904 = vunpack.c.l.b16 %v591
    %v2905 = vunpack.c.h.b16 %v591
    %v2906 = vunpack.c.l.b16 %v592
    %v2907 = vunpack.c.h.b16 %v592
    %v2908 = vunpack.c.l.b16 %v593
    %v2909 = vunpack.c.h.b16 %v593
    %v2910 = vunpack.c.l.b16 %v594
    %v2911 = vunpack.c.h.b16 %v594
    %v2912 = vunpack.c.l.b16 %v595
    %v2913 = vunpack.c.h.b16 %v595
    %v2914 = vunpack.c.l.b16 %v596
    %v2915 = vunpack.c.h.b16 %v596
    %v2916 = vunpack.c.l.b16 %v597
    %v2917 = vunpack.c.h.b16 %v597
    %v2918 = vunpack.c.l.b16 %v598
    %v2919 = vunpack.c.h.b16 %v598
    %v2920 = vunpack.c.l.b16 %v599
    %v2921 = vunpack.c.h.b16 %v599
    %v2922 = vunpack.c.l.b16 %v600
    %v2923 = vunpack.c.h.b16 %v600
    %v2924 = vunpack.c.l.b16 %v601
    %v2925 = vunpack.c.h.b16 %v601
    %v2926 = vunpack.c.l.b16 %v602
    %v2927 = vunpack.c.h.b16 %v602
    %v2928 = vunpack.c.l.b16 %v603
    %v2929 = vunpack.c.h.b16 %v603
    %v2930 = vunpack.c.l.b16 %v604
    %v2931 = vunpack.c.h.b16 %v604
    %v2932 = vunpack.c.l.b16 %v605
    %v2933 = vunpack.c.h.b16 %v605
    %v2934 = vunpack.c.l.b16 %v606
    %v2935 = vunpack.c.h.b16 %v606
    %v2936 = vunpack.c.l.b16 %v607
    %v2937 = vunpack.c.h.b16 %v607
    %v2938 = vunpack.c.l.b16 %v608
    %v2939 = vunpack.c.h.b16 %v608
    %v2940 = vunpack.c.l.b16 %v609
    %v2941 = vunpack.c.h.b16 %v609
    %v2942 = vunpack.c.l.b16 %v610
    %v2943 = vunpack.c.h.b16 %v610
    %v2944 = vunpack.c.l.b16 %v611
    %v2945 = vunpack.c.h.b16 %v611
    %v2946 = vunpack.c.l.b16 %v612
    %v2947 = vunpack.c.h.b16 %v612
    %v2948 = vunpack.c.l.b16 %v613
    %v2949 = vunpack.c.h.b16 %v613
    %v2950 = vunpack.c.l.b16 %v614
    %v2951 = vunpack.c.h.b16 %v614
    %v2952 = vunpack.c.l.b16 %v615
    %v2953 = vunpack.c.h.b16 %v615
    %v2954 = vunpack.c.l.b16 %v616
    %v2955 = vunpack.c.h.b16 %v616
    %v2956 = vunpack.c.l.b16 %v617
    %v2957 = vunpack.c.h.b16 %v617
    %v2958 = vunpack.c.l.b16 %v618
    %v2959 = vunpack.c.h.b16 %v618
    %v2960 = vunpack.c.l.b16 %v619
    %v2961 = vunpack.c.h.b16 %v619
    %v2962 = vunpack.c.l.b16 %v620
    %v2963 = vunpack.c.h.b16 %v620
    %v2964 = vunpack.c.l.b16 %v621
    %v2965 = vunpack.c.h.b16 %v621
    %v2966 = vunpack.c.l.b16 %v622
    %v2967 = vunpack.c.h.b16 %v622
    %v2968 = vunpack.c.l.b16 %v623
    %v2969 = vunpack.c.h.b16 %v623
    %v2970 = vunpack.c.l.b16 %v624
    %v2971 = vunpack.c.h.b16 %v624
    %v2972 = vunpack.c.l.b16 %v625
    %v2973 = vunpack.c.h.b16 %v625
    %v2974 = vunpack.c.l.b16 %v626
    %v2975 = vunpack.c.h.b16 %v626
    %v2976 = vunpack.c.l.b16 %v627
    %v2977 = vunpack.c.h.b16 %v627
    %v2978 = vunpack.c.l.b16 %v628
    %v2979 = vunpack.c.h.b16 %v628
    %v2980 = vunpack.c.l.b16 %v629
    %v2981 = vunpack.c.h.b16 %v629
    %v2982 = vunpack.c.l.b16 %v630
    %v2983 = vunpack.c.h.b16 %v630
    %v2984 = vunpack.c.l.b16 %v631
    %v2985 = vunpack.c.h.b16 %v631
    %v2986 = vunpack.c.l.b16 %v632
    %v2987 = vunpack.c.h.b16 %v632
    %v2988 = vunpack.c.l.b16 %v633
    %v2989 = vunpack.c.h.b16 %v633
    %v2990 = vunpack.c.l.b16 %v634
    %v2991 = vunpack.c.h.b16 %v634
    %v2992 = vunpack.c.l.b16 %v635
    %v2993 = vunpack.c.h.b16 %v635
    %v2994 = vunpack.c.l.b16 %v636
    %v2995 = vunpack.c.h.b16 %v636
    %v2996 = vunpack.c.l.b16 %v637
    %v2997 = vunpack.c.h.b16 %v637
    %v2998 = vunpack.c.l.b16 %v638
    %v2999 = vunpack.c.h.b16 %v638
    %v3000 = vunpack.c.l.b16 %v639
    %v3001 = vunpack.c.h.b16 %v639
    %v3002 = vunpack.c.l.b16 %v640
    %v3003 = vunpack.c.h.b16 %v640
    %v3004 = vunpack.c.l.b16 %v641
    %v3005 = vunpack.c.h.b16 %v641
    %v3006 = vunpack.c.l.b16 %v642
    %v3007 = vunpack.c.h.b16 %v642
    %v3008 = vunpack.c.l.b16 %v643
    %v3009 = vunpack.c.h.b16 %v643
    %v3010 = vunpack.c.l.b16 %v644
    %v3011 = vunpack.c.h.b16 %v644
    %v3012 = vunpack.c.l.b16 %v645
    %v3013 = vunpack.c.h.b16 %v645
    %v3014 = vunpack.c.l.b16 %v646
    %v3015 = vunpack.c.h.b16 %v646
    %v3016 = vunpack.c.l.b16 %v647
    %v3017 = vunpack.c.h.b16 %v647
    %v3018 = vunpack.c.l.b16 %v648
    %v3019 = vunpack.c.h.b16 %v648
    %v3020 = vunpack.c.l.b16 %v649
    %v3021 = vunpack.c.h.b16 %v649
    %v3022 = vunpack.c.l.b16 %v650
    %v3023 = vunpack.c.h.b16 %v650
    %v3024 = vunpack.c.l.b16 %v651
    %v3025 = vunpack.c.h.b16 %v651
    %v3026 = vunpack.c.l.b16 %v652
    %v3027 = vunpack.c.h.b16 %v652
    %v3028 = vunpack.c.l.b16 %v653
    %v3029 = vunpack.c.h.b16 %v653
    %v3030 = vunpack.c.l.b16 %v654
    %v3031 = vunpack.c.h.b16 %v654
    %v3032 = vunpack.c.l.b16 %v655
    %v3033 = vunpack.c.h.b16 %v655
    %v3034 = vunpack.c.l.b16 %v656
    %v3035 = vunpack.c.h.b16 %v656
    %v3036 = vunpack.c.l.b16 %v657
    %v3037 = vunpack.c.h.b16 %v657
    %v3038 = vunpack.c.l.b16 %v658
    %v3039 = vunpack.c.h.b16 %v658
    %v3040 = vunpack.c.l.b16 %v659
    %v3041 = vunpack.c.h.b16 %v659
    %v3042 = vunpack.c.l.b16 %v660
    %v3043 = vunpack.c.h.b16 %v660
    %v3044 = vunpack.c.l.b16 %v661
    %v3045 = vunpack.c.h.b16 %v661
    %v3046 = vunpack.c.l.b16 %v662
    %v3047 = vunpack.c.h.b16 %v662
    %v3048 = vunpack.c.l.b16 %v663
    %v3049 = vunpack.c.h.b16 %v663
    %v3050 = vunpack.c.l.b16 %v664
    %v3051 = vunpack.c.h.b16 %v664
    %v3052 = vunpack.c.l.b16 %v665
    %v3053 = vunpack.c.h.b16 %v665
    %v3054 = vunpack.c.l.b16 %v666
    %v3055 = vunpack.c.h.b16 %v666
    %v3056 = vunpack.c.l.b16 %v667
    %v3057 = vunpack.c.h.b16 %v667
    %v3058 = vunpack.c.l.b16 %v668
    %v3059 = vunpack.c.h.b16 %v668
    %v3060 = vunpack.c.l.b16 %v669
    %v3061 = vunpack.c.h.b16 %v669
    %v3062 = vunpack.c.l.b16 %v670
    %v3063 = vunpack.c.h.b16 %v670
    %v3064 = vunpack.c.l.b16 %v671
    %v3065 = vunpack.c.h.b16 %v671
    %v3066 = vunpack.c.l.b16 %v672
    %v3067 = vunpack.c.h.b16 %v672
    %v3068 = vunpack.c.l.b16 %v673
    %v3069 = vunpack.c.h.b16 %v673
    %v3070 = vunpack.c.l.b16 %v674
    %v3071 = vunpack.c.h.b16 %v674
    %v3072 = vunpack.c.l.b16 %v675
    %v3073 = vunpack.c.h.b16 %v675
    %v3074 = vunpack.c.l.b16 %v676
    %v3075 = vunpack.c.h.b16 %v676
    %v3076 = vunpack.c.l.b16 %v677
    %v3077 = vunpack.c.h.b16 %v677
    %v3078 = vunpack.c.l.b16 %v678
    %v3079 = vunpack.c.h.b16 %v678
    %v3080 = vunpack.c.l.b16 %v679
    %v3081 = vunpack.c.h.b16 %v679
    %v3082 = vunpack.c.l.b16 %v680
    %v3083 = vunpack.c.h.b16 %v680
    %v3084 = vunpack.c.l.b16 %v681
    %v3085 = vunpack.c.h.b16 %v681
    %v3086 = vunpack.c.l.b16 %v682
    %v3087 = vunpack.c.h.b16 %v682
    %v3088 = vunpack.c.l.b16 %v683
    %v3089 = vunpack.c.h.b16 %v683
    %v3090 = vunpack.c.l.b16 %v684
    %v3091 = vunpack.c.h.b16 %v684
    %v3092 = vunpack.c.l.b16 %v685
    %v3093 = vunpack.c.h.b16 %v685
    %v3094 = vunpack.c.l.b16 %v686
    %v3095 = vunpack.c.h.b16 %v686
    %v3096 = vunpack.c.l.b16 %v687
    %v3097 = vunpack.c.h.b16 %v687
    %v3098 = vunpack.c.l.b16 %v688
    %v3099 = vunpack.c.h.b16 %v688
    %v3100 = vunpack.c.l.b16 %v689
    %v3101 = vunpack.c.h.b16 %v689
    %v3102 = vunpack.c.l.b16 %v690
    %v3103 = vunpack.c.h.b16 %v690
    %v3104 = vunpack.c.l.b16 %v691
    %v3105 = vunpack.c.h.b16 %v691
    %v3106 = vunpack.c.l.b16 %v692
    %v3107 = vunpack.c.h.b16 %v692
    %v3108 = vunpack.c.l.b16 %v693
    %v3109 = vunpack.c.h.b16 %v693
    %v3110 = vunpack.c.l.b16 %v694
    %v3111 = vunpack.c.h.b16 %v694
    %v3112 = vunpack.c.l.b16 %v695
    %v3113 = vunpack.c.h.b16 %v695
    %v3114 = vunpack.c.l.b16 %v696
    %v3115 = vunpack.c.h.b16 %v696
    %v3116 = vunpack.c.l.b16 %v697
    %v3117 = vunpack.c.h.b16 %v697
    %v3118 = vunpack.c.l.b16 %v698
    %v3119 = vunpack.c.h.b16 %v698
    %v3120 = vunpack.c.l.b16 %v699
    %v3121 = vunpack.c.h.b16 %v699
    %v3122 = vunpack.c.l.b16 %v700
    %v3123 = vunpack.c.h.b16 %v700
    %v3124 = vunpack.c.l.b16 %v701
    %v3125 = vunpack.c.h.b16 %v701
    %v3126 = vunpack.c.l.b16 %v702
    %v3127 = vunpack.c.h.b16 %v702
    %v3128 = vunpack.c.l.b16 %v703
    %v3129 = vunpack.c.h.b16 %v703
    %v3130 = vunpack.c.l.b16 %v704
    %v3131 = vunpack.c.h.b16 %v704
    %v3132 = vunpack.c.l.b16 %v705
    %v3133 = vunpack.c.h.b16 %v705
    %v3134 = vunpack.c.l.b16 %v706
    %v3135 = vunpack.c.h.b16 %v706
    %v3136 = vunpack.c.l.b16 %v707
    %v3137 = vunpack.c.h.b16 %v707
    %v3138 = vunpack.c.l.b16 %v708
    %v3139 = vunpack.c.h.b16 %v708
    %v3140 = vunpack.c.l.b16 %v709
    %v3141 = vunpack.c.h.b16 %v709
    %v3142 = vunpack.c.l.b16 %v710
    %v3143 = vunpack.c.h.b16 %v710
    %v3144 = vunpack.c.l.b16 %v711
    %v3145 = vunpack.c.h.b16 %v711
    %v3146 = vunpack.c.l.b16 %v712
    %v3147 = vunpack.c.h.b16 %v712
    %v3148 = vunpack.c.l.b16 %v713
    %v3149 = vunpack.c.h.b16 %v713
    %v3150 = vunpack.c.l.b16 %v714
    %v3151 = vunpack.c.h.b16 %v714
    %v3152 = vunpack.c.l.b16 %v715
    %v3153 = vunpack.c.h.b16 %v715
    %v3154 = vunpack.c.l.b16 %v716
    %v3155 = vunpack.c.h.b16 %v716
    %v3156 = vunpack.c.l.b16 %v717
    %v3157 = vunpack.c.h.b16 %v717
    %v3158 = vunpack.c.l.b16 %v718
    %v3159 = vunpack.c.h.b16 %v718
    %v3160 = vunpack.c.l.b16 %v719
    %v3161 = vunpack.c.h.b16 %v719
    %v3162 = vunpack.c.l.b16 %v720
    %v3163 = vunpack.c.h.b16 %v720
    %v3164 = vunpack.c.l.b16 %v721
    %v3165 = vunpack.c.h.b16 %v721
    %v3166 = vunpack.c.l.b16 %v722
    %v3167 = vunpack.c.h.b16 %v722
    %v3168 = vunpack.c.l.b16 %v723
    %v3169 = vunpack.c.h.b16 %v723
    %v3170 = vunpack.c.l.b16 %v724
    %v3171 = vunpack.c.h.b16 %v724
    %v3172 = vunpack.c.l.b16 %v725
    %v3173 = vunpack.c.h.b16 %v725
    %v3174 = vunpack.c.l.b16 %v726
    %v3175 = vunpack.c.h.b16 %v726
    %v3176 = vunpack.c.l.b16 %v727
    %v3177 = vunpack.c.h.b16 %v727
    %v3178 = vunpack.c.l.b16 %v728
    %v3179 = vunpack.c.h.b16 %v728
    %v3180 = vunpack.c.l.b16 %v729
    %v3181 = vunpack.c.h.b16 %v729
    %v3182 = vunpack.c.l.b16 %v730
    %v3183 = vunpack.c.h.b16 %v730
    %v3184 = vunpack.c.l.b16 %v731
    %v3185 = vunpack.c.h.b16 %v731
    %v3186 = vunpack.c.l.b16 %v732
    %v3187 = vunpack.c.h.b16 %v732
    %v3188 = vunpack.c.l.b16 %v733
    %v3189 = vunpack.c.h.b16 %v733
    %v3190 = vunpack.c.l.b16 %v734
    %v3191 = vunpack.c.h.b16 %v734
    %v3192 = vunpack.c.l.b16 %v735
    %v3193 = vunpack.c.h.b16 %v735
    %v3194 = vunpack.c.l.b16 %v736
    %v3195 = vunpack.c.h.b16 %v736
    %v3196 = vunpack.c.l.b16 %v737
    %v3197 = vunpack.c.h.b16 %v737
    %v3198 = vunpack.c.l.b16 %v738
    %v3199 = vunpack.c.h.b16 %v738
    %v3200 = vunpack.c.l.b16 %v739
    %v3201 = vunpack.c.h.b16 %v739
    %v3202 = vunpack.c.l.b16 %v740
    %v3203 = vunpack.c.h.b16 %v740
    %v3204 = vunpack.c.l.b16 %v741
    %v3205 = vunpack.c.h.b16 %v741
    %v3206 = vunpack.c.l.b16 %v742
    %v3207 = vunpack.c.h.b16 %v742
    %v3208 = vunpack.c.l.b16 %v743
    %v3209 = vunpack.c.h.b16 %v743
    %v3210 = vunpack.c.l.b16 %v744
    %v3211 = vunpack.c.h.b16 %v744
    %v3212 = vunpack.c.l.b16 %v745
    %v3213 = vunpack.c.h.b16 %v745
    %v3214 = vunpack.c.l.b16 %v746
    %v3215 = vunpack.c.h.b16 %v746
    %v3216 = vunpack.c.l.b16 %v747
    %v3217 = vunpack.c.h.b16 %v747
    %v3218 = vunpack.c.l.b16 %v748
    %v3219 = vunpack.c.h.b16 %v748
    %v3220 = vunpack.c.l.b16 %v749
    %v3221 = vunpack.c.h.b16 %v749
    %v3222 = vunpack.c.l.b16 %v750
    %v3223 = vunpack.c.h.b16 %v750
    %v3224 = vunpack.c.l.b16 %v751
    %v3225 = vunpack.c.h.b16 %v751
    %v3226 = vunpack.c.l.b16 %v752
    %v3227 = vunpack.c.h.b16 %v752
    %v3228 = vunpack.c.l.b16 %v753
    %v3229 = vunpack.c.h.b16 %v753
    %v3230 = vunpack.c.l.b16 %v754
    %v3231 = vunpack.c.h.b16 %v754
    %v3232 = vunpack.c.l.b16 %v755
    %v3233 = vunpack.c.h.b16 %v755
    %v3234 = vunpack.c.l.b16 %v756
    %v3235 = vunpack.c.h.b16 %v756
    %v3236 = vunpack.c.l.b16 %v757
    %v3237 = vunpack.c.h.b16 %v757
    %v3238 = vunpack.c.l.b16 %v758
    %v3239 = vunpack.c.h.b16 %v758
    %v3240 = vunpack.c.l.b16 %v759
    %v3241 = vunpack.c.h.b16 %v759
    %v3242 = vunpack.c.l.b16 %v760
    %v3243 = vunpack.c.h.b16 %v760
    %v3244 = vunpack.c.l.b16 %v761
    %v3245 = vunpack.c.h.b16 %v761
    %v3246 = vunpack.c.l.b16 %v762
    %v3247 = vunpack.c.h.b16 %v762
    %v3248 = vunpack.c.l.b16 %v763
    %v3249 = vunpack.c.h.b16 %v763
    %v3250 = vunpack.c.l.b16 %v764
    %v3251 = vunpack.c.h.b16 %v764
    %v3252 = vunpack.c.l.b16 %v765
    %v3253 = vunpack.c.h.b16 %v765
    %v3254 = vunpack.c.l.b16 %v766
    %v3255 = vunpack.c.h.b16 %v766
    %v3256 = vunpack.c.l.b16 %v767
    %v3257 = vunpack.c.h.b16 %v767
    %v3258 = vunpack.c.l.b16 %v768
    %v3259 = vunpack.c.h.b16 %v768
    %v3260 = vunpack.c.l.b16 %v769
    %v3261 = vunpack.c.h.b16 %v769
    %v3262 = vunpack.c.l.b16 %v770
    %v3263 = vunpack.c.h.b16 %v770
    %v3264 = vunpack.c.l.b16 %v771
    %v3265 = vunpack.c.h.b16 %v771
    %v3266 = vunpack.c.l.b16 %v772
    %v3267 = vunpack.c.h.b16 %v772
    %v3268 = vunpack.c.l.b16 %v773
    %v3269 = vunpack.c.h.b16 %v773
    %v3270 = vunpack.c.l.b16 %v774
    %v3271 = vunpack.c.h.b16 %v774
    %v3272 = vunpack.c.l.b16 %v775
    %v3273 = vunpack.c.h.b16 %v775
    %v3274 = vunpack.c.l.b16 %v776
    %v3275 = vunpack.c.h.b16 %v776
    %v3276 = vunpack.c.l.b16 %v777
    %v3277 = vunpack.c.h.b16 %v777
    %v3278 = vunpack.c.l.b16 %v778
    %v3279 = vunpack.c.h.b16 %v778
    %v3280 = vunpack.c.l.b16 %v779
    %v3281 = vunpack.c.h.b16 %v779
    %v3282 = vunpack.c.l.b16 %v780
    %v3283 = vunpack.c.h.b16 %v780
    %v3284 = vunpack.c.l.b16 %v781
    %v3285 = vunpack.c.h.b16 %v781
    %v3286 = vunpack.c.l.b16 %v782
    %v3287 = vunpack.c.h.b16 %v782
    %v3288 = vunpack.c.l.b16 %v783
    %v3289 = vunpack.c.h.b16 %v783
    %v3290 = vunpack.c.l.b16 %v784
    %v3291 = vunpack.c.h.b16 %v784
    %v3292 = vunpack.c.l.b16 %v785
    %v3293 = vunpack.c.h.b16 %v785
    %v3294 = vunpack.c.l.b16 %v786
    %v3295 = vunpack.c.h.b16 %v786
    %v3296 = vunpack.c.l.b16 %v787
    %v3297 = vunpack.c.h.b16 %v787
    %v3298 = vunpack.c.l.b16 %v788
    %v3299 = vunpack.c.h.b16 %v788
    %v3300 = vunpack.c.l.b16 %v789
    %v3301 = vunpack.c.h.b16 %v789
    %v3302 = vunpack.c.l.b16 %v790
    %v3303 = vunpack.c.h.b16 %v790
    %v3304 = vunpack.c.l.b16 %v791
    %v3305 = vunpack.c.h.b16 %v791
    %v3306 = vunpack.c.l.b16 %v792
    %v3307 = vunpack.c.h.b16 %v792
    %v3308 = vunpack.c.l.b16 %v793
    %v3309 = vunpack.c.h.b16 %v793
    %v3310 = vunpack.c.l.b16 %v794
    %v3311 = vunpack.c.h.b16 %v794
    %v3312 = vunpack.c.l.b16 %v795
    %v3313 = vunpack.c.h.b16 %v795
    %v3314 = vunpack.c.l.b16 %v796
    %v3315 = vunpack.c.h.b16 %v796
    %v3316 = vunpack.c.l.b16 %v797
    %v3317 = vunpack.c.h.b16 %v797
    %v3318 = vunpack.c.l.b16 %v798
    %v3319 = vunpack.c.h.b16 %v798
    %v3320 = vunpack.c.l.b16 %v799
    %v3321 = vunpack.c.h.b16 %v799
    %v3322 = vunpack.c.l.b16 %v800
    %v3323 = vunpack.c.h.b16 %v800
    %v3324 = vunpack.c.l.b16 %v801
    %v3325 = vunpack.c.h.b16 %v801
    %v3326 = vunpack.c.l.b16 %v802
    %v3327 = vunpack.c.h.b16 %v802
    %v3328 = vunpack.c.l.b16 %v803
    %v3329 = vunpack.c.h.b16 %v803
    %v3330 = vunpack.c.l.b16 %v804
    %v3331 = vunpack.c.h.b16 %v804
    %v3332 = vunpack.c.l.b16 %v805
    %v3333 = vunpack.c.h.b16 %v805
    %v3334 = vunpack.c.l.b16 %v806
    %v3335 = vunpack.c.h.b16 %v806
    %v3336 = vunpack.c.l.b16 %v807
    %v3337 = vunpack.c.h.b16 %v807
    %v3338 = vunpack.c.l.b16 %v808
    %v3339 = vunpack.c.h.b16 %v808
    %v3340 = vunpack.c.l.b16 %v809
    %v3341 = vunpack.c.h.b16 %v809
    %v3342 = vunpack.c.l.b16 %v810
    %v3343 = vunpack.c.h.b16 %v810
    %v3344 = vunpack.c.l.b16 %v811
    %v3345 = vunpack.c.h.b16 %v811
    %v3346 = vunpack.c.l.b16 %v812
    %v3347 = vunpack.c.h.b16 %v812
    %v3348 = vunpack.c.l.b16 %v813
    %v3349 = vunpack.c.h.b16 %v813
    %v3350 = vunpack.c.l.b16 %v814
    %v3351 = vunpack.c.h.b16 %v814
    %v3352 = vunpack.c.l.b16 %v815
    %v3353 = vunpack.c.h.b16 %v815
    %v3354 = vunpack.c.l.b16 %v816
    %v3355 = vunpack.c.h.b16 %v816
    %v3356 = vunpack.c.l.b16 %v817
    %v3357 = vunpack.c.h.b16 %v817
    %v3358 = vunpack.c.l.b16 %v818
    %v3359 = vunpack.c.h.b16 %v818
    %v3360 = vunpack.c.l.b16 %v819
    %v3361 = vunpack.c.h.b16 %v819
    %v3362 = vunpack.c.l.b16 %v820
    %v3363 = vunpack.c.h.b16 %v820
    %v3364 = vunpack.c.l.b16 %v821
    %v3365 = vunpack.c.h.b16 %v821
    %v3366 = vunpack.c.l.b16 %v822
    %v3367 = vunpack.c.h.b16 %v822
    %v3368 = vunpack.c.l.b16 %v823
    %v3369 = vunpack.c.h.b16 %v823
    %v3370 = vunpack.c.l.b16 %v824
    %v3371 = vunpack.c.h.b16 %v824
    %v3372 = vunpack.c.l.b16 %v825
    %v3373 = vunpack.c.h.b16 %v825
    %v3374 = vunpack.c.l.b16 %v826
    %v3375 = vunpack.c.h.b16 %v826
    %v3376 = vunpack.c.l.b16 %v827
    %v3377 = vunpack.c.h.b16 %v827
    %v3378 = vunpack.c.l.b16 %v828
    %v3379 = vunpack.c.h.b16 %v828
    %v3380 = vunpack.c.l.b16 %v829
    %v3381 = vunpack.c.h.b16 %v829
    %v3382 = vunpack.c.l.b16 %v830
    %v3383 = vunpack.c.h.b16 %v830
    %v3384 = vunpack.c.l.b16 %v831
    %v3385 = vunpack.c.h.b16 %v831
    %v3386 = vunpack.c.l.b16 %v832
    %v3387 = vunpack.c.h.b16 %v832
    %v3388 = vunpack.c.l.b16 %v833
    %v3389 = vunpack.c.h.b16 %v833
    %v3390 = vunpack.c.l.b16 %v834
    %v3391 = vunpack.c.h.b16 %v834
    %v3392 = vunpack.c.l.b16 %v835
    %v3393 = vunpack.c.h.b16 %v835
    %v3394 = vunpack.c.l.b16 %v836
    %v3395 = vunpack.c.h.b16 %v836
    %v3396 = vunpack.c.l.b16 %v837
    %v3397 = vunpack.c.h.b16 %v837
    %v3398 = vunpack.c.l.b16 %v838
    %v3399 = vunpack.c.h.b16 %v838
    %v3400 = vunpack.c.l.b16 %v839
    %v3401 = vunpack.c.h.b16 %v839
    %v3402 = vunpack.c.l.b16 %v840
    %v3403 = vunpack.c.h.b16 %v840
    %v3404 = vpack.c.b16 %v1840, %v1836
    %v3405 = vpack.c.b16 %v1841, %v1837
    %v3406 = vpack.c.b16 %v1842, %v1838
    %v3407 = vpack.c.b16 %v1843, %v1839
    %v3408 = vpack.c.b16 %v1848, %v1844
    %v3409 = vpack.c.b16 %v1849, %v1845
    %v3410 = vpack.c.b16 %v1850, %v1846
    %v3411 = vpack.c.b16 %v1851, %v1847
    %v3412 = vpack.c.b16 %v1856, %v1852
    %v3413 = vpack.c.b16 %v1857, %v1853
    %v3414 = vpack.c.b16 %v1858, %v1854
    %v3415 = vpack.c.b16 %v1859, %v1855
    %v3416 = vpack.c.b16 %v1864, %v1860
    %v3417 = vpack.c.b16 %v1865, %v1861
    %v3418 = vpack.c.b16 %v1866, %v1862
    %v3419 = vpack.c.b16 %v1867, %v1863
    %v3420 = vpack.c.b16 %v1872, %v1868
    %v3421 = vpack.c.b16 %v1873, %v1869
    %v3422 = vpack.c.b16 %v1874, %v1870
    %v3423 = vpack.c.b16 %v1875, %v1871
    %v3424 = vpack.c.b16 %v1880, %v1876
    %v3425 = vpack.c.b16 %v1881, %v1877
    %v3426 = vpack.c.b16 %v1882, %v1878
    %v3427 = vpack.c.b16 %v1883, %v1879
    %v3428 = vpack.c.b16 %v1888, %v1884
    %v3429 = vpack.c.b16 %v1889, %v1885
    %v3430 = vpack.c.b16 %v1890, %v1886
    %v3431 = vpack.c.b16 %v1891, %v1887
    %v3432 = vpack.c.b16 %v1896, %v1892
    %v3433 = vpack.c.b16 %v1897, %v1893
    %v3434 = vpack.c.b16 %v1898, %v1894
    %v3435 = vpack.c.b16 %v1899, %v1895
    %v3436 = vpack.c.b16 %v1904, %v1900
    %v3437 = vpack.c.b16 %v1905, %v1901
    %v3438 = vpack.c.b16 %v1906, %v1902
    %v3439 = vpack.c.b16 %v1907, %v1903
    %v3440 = vpack.c.b16 %v1912, %v1908
    %v3441 = vpack.c.b16 %v1913, %v1909
    %v3442 = vpack.c.b16 %v1914, %v1910
    %v3443 = vpack.c.b16 %v1915, %v1911
    %v3444 = vpack.c.b16 %v1920, %v1916
    %v3445 = vpack.c.b16 %v1921, %v1917
    %v3446 = vpack.c.b16 %v1922, %v1918
    %v3447 = vpack.c.b16 %v1923, %v1919
    %v3448 = vpack.c.b16 %v1928, %v1924
    %v3449 = vpack.c.b16 %v1929, %v1925
    %v3450 = vpack.c.b16 %v1930, %v1926
    %v3451 = vpack.c.b16 %v1931, %v1927
    %v3452 = vpack.c.b16 %v1936, %v1932
    %v3453 = vpack.c.b16 %v1937, %v1933
    %v3454 = vpack.c.b16 %v1938, %v1934
    %v3455 = vpack.c.b16 %v1939, %v1935
    %v3456 = vpack.c.b16 %v1944, %v1940
    %v3457 = vpack.c.b16 %v1945, %v1941
    %v3458 = vpack.c.b16 %v1946, %v1942
    %v3459 = vpack.c.b16 %v1947, %v1943
    %v3460 = vpack.c.b16 %v1952, %v1948
    %v3461 = vpack.c.b16 %v1953, %v1949
    %v3462 = vpack.c.b16 %v1954, %v1950
    %v3463 = vpack.c.b16 %v1955, %v1951
    %v3464 = vpack.c.b16 %v1960, %v1956
    %v3465 = vpack.c.b16 %v1961, %v1957
    %v3466 = vpack.c.b16 %v1962, %v1958
    %v3467 = vpack.c.b16 %v1963, %v1959
    %v3468 = vpack.c.b16 %v1968, %v1964
    %v3469 = vpack.c.b16 %v1969, %v1965
    %v3470 = vpack.c.b16 %v1970, %v1966
    %v3471 = vpack.c.b16 %v1971, %v1967
    %v3472 = vpack.c.b16 %v1976, %v1972
    %v3473 = vpack.c.b16 %v1977, %v1973
    %v3474 = vpack.c.b16 %v1978, %v1974
    %v3475 = vpack.c.b16 %v1979, %v1975
    %v3476 = vpack.c.b16 %v1984, %v1980
    %v3477 = vpack.c.b16 %v1985, %v1981
    %v3478 = vpack.c.b16 %v1986, %v1982
    %v3479 = vpack.c.b16 %v1987, %v1983
    %v3480 = vpack.c.b16 %v1992, %v1988
    %v3481 = vpack.c.b16 %v1993, %v1989
    %v3482 = vpack.c.b16 %v1994, %v1990
    %v3483 = vpack.c.b16 %v1995, %v1991
    %v3484 = vpack.c.b16 %v2000, %v1996
    %v3485 = vpack.c.b16 %v2001, %v1997
    %v3486 = vpack.c.b16 %v2002, %v1998
    %v3487 = vpack.c.b16 %v2003, %v1999
    %v3488 = vpack.c.b16 %v2008, %v2004
    %v3489 = vpack.c.b16 %v2009, %v2005
    %v3490 = vpack.c.b16 %v2010, %v2006
    %v3491 = vpack.c.b16 %v2011, %v2007
    %v3492 = vpack.c.b16 %v2016, %v2012
    %v3493 = vpack.c.b16 %v2017, %v2013
    %v3494 = vpack.c.b16 %v2018, %v2014
    %v3495 = vpack.c.b16 %v2019, %v2015
    %v3496 = vpack.c.b16 %v2024, %v2020
    %v3497 = vpack.c.b16 %v2025, %v2021
    %v3498 = vpack.c.b16 %v2026, %v2022
    %v3499 = vpack.c.b16 %v2027, %v2023
    %v3500 = vpack.c.b16 %v2032, %v2028
    %v3501 = vpack.c.b16 %v2033, %v2029
    %v3502 = vpack.c.b16 %v2034, %v2030
    %v3503 = vpack.c.b16 %v2035, %v2031
    %v3504 = vpack.c.b16 %v2040, %v2036
    %v3505 = vpack.c.b16 %v2041, %v2037
    %v3506 = vpack.c.b16 %v2042, %v2038
    %v3507 = vpack.c.b16 %v2043, %v2039
    %v3508 = vpack.c.b16 %v2048, %v2044
    %v3509 = vpack.c.b16 %v2049, %v2045
    %v3510 = vpack.c.b16 %v2050, %v2046
    %v3511 = vpack.c.b16 %v2051, %v2047
    %v3512 = vpack.c.b16 %v2056, %v2052
    %v3513 = vpack.c.b16 %v2057, %v2053
    %v3514 = vpack.c.b16 %v2058, %v2054
    %v3515 = vpack.c.b16 %v2059, %v2055
    %v3516 = vpack.c.b16 %v2064, %v2060
    %v3517 = vpack.c.b16 %v2065, %v2061
    %v3518 = vpack.c.b16 %v2066, %v2062
    %v3519 = vpack.c.b16 %v2067, %v2063
    %v3520 = vpack.c.b16 %v2072, %v2068
    %v3521 = vpack.c.b16 %v2073, %v2069
    %v3522 = vpack.c.b16 %v2074, %v2070
    %v3523 = vpack.c.b16 %v2075, %v2071
    %v3524 = vpack.c.b16 %v2080, %v2076
    %v3525 = vpack.c.b16 %v2081, %v2077
    %v3526 = vpack.c.b16 %v2082, %v2078
    %v3527 = vpack.c.b16 %v2083, %v2079
    %v3528 = vpack.c.b16 %v2088, %v2084
    %v3529 = vpack.c.b16 %v2089, %v2085
    %v3530 = vpack.c.b16 %v2090, %v2086
    %v3531 = vpack.c.b16 %v2091, %v2087
    %v3532 = vpack.c.b16 %v2096, %v2092
    %v3533 = vpack.c.b16 %v2097, %v2093
    %v3534 = vpack.c.b16 %v2098, %v2094
    %v3535 = vpack.c.b16 %v2099, %v2095
    %v3536 = vpack.c.b16 %v2104, %v2100
    %v3537 = vpack.c.b16 %v2105, %v2101
    %v3538 = vpack.c.b16 %v2106, %v2102
    %v3539 = vpack.c.b16 %v2107, %v2103
    %v3540 = vpack.c.b16 %v2112, %v2108
    %v3541 = vpack.c.b16 %v2113, %v2109
    %v3542 = vpack.c.b16 %v2114, %v2110
    %v3543 = vpack.c.b16 %v2115, %v2111
    %v3544 = vpack.c.b16 %v2120, %v2116
    %v3545 = vpack.c.b16 %v2121, %v2117
    %v3546 = vpack.c.b16 %v2122, %v2118
    %v3547 = vpack.c.b16 %v2123, %v2119
    %v3548 = vpack.c.b16 %v2128, %v2124
    %v3549 = vpack.c.b16 %v2129, %v2125
    %v3550 = vpack.c.b16 %v2130, %v2126
    %v3551 = vpack.c.b16 %v2131, %v2127
    %v3552 = vpack.c.b16 %v2136, %v2132
    %v3553 = vpack.c.b16 %v2137, %v2133
    %v3554 = vpack.c.b16 %v2138, %v2134
    %v3555 = vpack.c.b16 %v2139, %v2135
    %v3556 = vpack.c.b16 %v2144, %v2140
    %v3557 = vpack.c.b16 %v2145, %v2141
    %v3558 = vpack.c.b16 %v2146, %v2142
    %v3559 = vpack.c.b16 %v2147, %v2143
    %v3560 = vpack.c.b16 %v2152, %v2148
    %v3561 = vpack.c.b16 %v2153, %v2149
    %v3562 = vpack.c.b16 %v2154, %v2150
    %v3563 = vpack.c.b16 %v2155, %v2151
    %v3564 = vpack.c.b16 %v2160, %v2156
    %v3565 = vpack.c.b16 %v2161, %v2157
    %v3566 = vpack.c.b16 %v2162, %v2158
    %v3567 = vpack.c.b16 %v2163, %v2159
    %v3568 = vpack.c.b16 %v2168, %v2164
    %v3569 = vpack.c.b16 %v2169, %v2165
    %v3570 = vpack.c.b16 %v2170, %v2166
    %v3571 = vpack.c.b16 %v2171, %v2167
    %v3572 = vpack.c.b16 %v2176, %v2172
    %v3573 = vpack.c.b16 %v2177, %v2173
    %v3574 = vpack.c.b16 %v2178, %v2174
    %v3575 = vpack.c.b16 %v2179, %v2175
    %v3576 = vpack.c.b16 %v2184, %v2180
    %v3577 = vpack.c.b16 %v2185, %v2181
    %v3578 = vpack.c.b16 %v2186, %v2182
    %v3579 = vpack.c.b16 %v2187, %v2183
    %v3580 = vpack.c.b16 %v2192, %v2188
    %v3581 = vpack.c.b16 %v2193, %v2189
    %v3582 = vpack.c.b16 %v2194, %v2190
    %v3583 = vpack.c.b16 %v2195, %v2191
    %v3584 = vpack.c.b16 %v2200, %v2196
    %v3585 = vpack.c.b16 %v2201, %v2197
    %v3586 = vpack.c.b16 %v2202, %v2198
    %v3587 = vpack.c.b16 %v2203, %v2199
    %v3588 = vpack.c.b16 %v2208, %v2204
    %v3589 = vpack.c.b16 %v2209, %v2205
    %v3590 = vpack.c.b16 %v2210, %v2206
    %v3591 = vpack.c.b16 %v2211, %v2207
    %v3592 = vpack.c.b16 %v2216, %v2212
    %v3593 = vpack.c.b16 %v2217, %v2213
    %v3594 = vpack.c.b16 %v2218, %v2214
    %v3595 = vpack.c.b16 %v2219, %v2215
    %v3596 = vpack.c.b16 %v2224, %v2220
    %v3597 = vpack.c.b16 %v2225, %v2221
    %v3598 = vpack.c.b16 %v2226, %v2222
    %v3599 = vpack.c.b16 %v2227, %v2223
    %v3600 = vpack.c.b16 %v2232, %v2228
    %v3601 = vpack.c.b16 %v2233, %v2229
    %v3602 = vpack.c.b16 %v2234, %v2230
    %v3603 = vpack.c.b16 %v2235, %v2231
    %v3604 = vpack.c.b16 %v2240, %v2236
    %v3605 = vpack.c.b16 %v2241, %v2237
    %v3606 = vpack.c.b16 %v2242, %v2238
    %v3607 = vpack.c.b16 %v2243, %v2239
    %v3608 = vpack.c.b16 %v2248, %v2244
    %v3609 = vpack.c.b16 %v2249, %v2245
    %v3610 = vpack.c.b16 %v2250, %v2246
    %v3611 = vpack.c.b16 %v2251, %v2247
    %v3612 = vpack.c.b16 %v2256, %v2252
    %v3613 = vpack.c.b16 %v2257, %v2253
    %v3614 = vpack.c.b16 %v2258, %v2254
    %v3615 = vpack.c.b16 %v2259, %v2255
    %v3616 = vpack.c.b16 %v2264, %v2260
    %v3617 = vpack.c.b16 %v2265, %v2261
    %v3618 = vpack.c.b16 %v2266, %v2262
    %v3619 = vpack.c.b16 %v2267, %v2263
    %v3620 = vpack.c.b16 %v2272, %v2268
    %v3621 = vpack.c.b16 %v2273, %v2269
    %v3622 = vpack.c.b16 %v2274, %v2270
    %v3623 = vpack.c.b16 %v2275, %v2271
    %v3624 = vpack.c.b16 %v2280, %v2276
    %v3625 = vpack.c.b16 %v2281, %v2277
    %v3626 = vpack.c.b16 %v2282, %v2278
    %v3627 = vpack.c.b16 %v2283, %v2279
    %v3628 = vpack.c.b16 %v2288, %v2284
    %v3629 = vpack.c.b16 %v2289, %v2285
    %v3630 = vpack.c.b16 %v2290, %v2286
    %v3631 = vpack.c.b16 %v2291, %v2287
    %v3632 = vpack.c.b16 %v2296, %v2292
    %v3633 = vpack.c.b16 %v2297, %v2293
    %v3634 = vpack.c.b16 %v2298, %v2294
    %v3635 = vpack.c.b16 %v2299, %v2295
    %v3636 = vpack.c.b16 %v2304, %v2300
    %v3637 = vpack.c.b16 %v2305, %v2301
    %v3638 = vpack.c.b16 %v2306, %v2302
    %v3639 = vpack.c.b16 %v2307, %v2303
    %v3640 = vpack.c.b16 %v2312, %v2308
    %v3641 = vpack.c.b16 %v2313, %v2309
    %v3642 = vpack.c.b16 %v2314, %v2310
    %v3643 = vpack.c.b16 %v2315, %v2311
    %v3644 = vpack.c.b16 %v2320, %v2316
    %v3645 = vpack.c.b16 %v2321, %v2317
    %v3646 = vpack.c.b16 %v2322, %v2318
    %v3647 = vpack.c.b16 %v2323, %v2319
    %v3648 = vpack.c.b16 %v2328, %v2324
    %v3649 = vpack.c.b16 %v2329, %v2325
    %v3650 = vpack.c.b16 %v2330, %v2326
    %v3651 = vpack.c.b16 %v2331, %v2327
    %v3652 = vpack.c.b16 %v2336, %v2332
    %v3653 = vpack.c.b16 %v2337, %v2333
    %v3654 = vpack.c.b16 %v2338, %v2334
    %v3655 = vpack.c.b16 %v2339, %v2335
    %v3656 = vpack.c.b16 %v2344, %v2340
    %v3657 = vpack.c.b16 %v2345, %v2341
    %v3658 = vpack.c.b16 %v2346, %v2342
    %v3659 = vpack.c.b16 %v2347, %v2343
    %v3660 = vpack.c.b16 %v2352, %v2348
    %v3661 = vpack.c.b16 %v2353, %v2349
    %v3662 = vpack.c.b16 %v2354, %v2350
    %v3663 = vpack.c.b16 %v2355, %v2351
    %v3664 = vpack.c.b16 %v2360, %v2356
    %v3665 = vpack.c.b16 %v2361, %v2357
    %v3666 = vpack.c.b16 %v2362, %v2358
    %v3667 = vpack.c.b16 %v2363, %v2359
    %v3668 = vpack.c.b16 %v2368, %v2364
    %v3669 = vpack.c.b16 %v2369, %v2365
    %v3670 = vpack.c.b16 %v2370, %v2366
    %v3671 = vpack.c.b16 %v2371, %v2367
    %v3672 = vpack.c.b16 %v2376, %v2372
    %v3673 = vpack.c.b16 %v2377, %v2373
    %v3674 = vpack.c.b16 %v2378, %v2374
    %v3675 = vpack.c.b16 %v2379, %v2375
    %v3676 = vpack.c.b16 %v2384, %v2380
    %v3677 = vpack.c.b16 %v2385, %v2381
    %v3678 = vpack.c.b16 %v2386, %v2382
    %v3679 = vpack.c.b16 %v2387, %v2383
    %v3680 = vpack.c.b16 %v2392, %v2388
    %v3681 = vpack.c.b16 %v2393, %v2389
    %v3682 = vpack.c.b16 %v2394, %v2390
    %v3683 = vpack.c.b16 %v2395, %v2391
    %v3684 = vpack.c.b16 %v2400, %v2396
    %v3685 = vpack.c.b16 %v2401, %v2397
    %v3686 = vpack.c.b16 %v2402, %v2398
    %v3687 = vpack.c.b16 %v2403, %v2399
    %v3688 = vpack.c.b16 %v2408, %v2404
    %v3689 = vpack.c.b16 %v2409, %v2405
    %v3690 = vpack.c.b16 %v2410, %v2406
    %v3691 = vpack.c.b16 %v2411, %v2407
    %v3692 = vpack.c.b16 %v2416, %v2412
    %v3693 = vpack.c.b16 %v2417, %v2413
    %v3694 = vpack.c.b16 %v2418, %v2414
    %v3695 = vpack.c.b16 %v2419, %v2415
    %v3696 = vpack.c.b16 %v2424, %v2420
    %v3697 = vpack.c.b16 %v2425, %v2421
    %v3698 = vpack.c.b16 %v2426, %v2422
    %v3699 = vpack.c.b16 %v2427, %v2423
    %v3700 = vpack.c.b16 %v2432, %v2428
    %v3701 = vpack.c.b16 %v2433, %v2429
    %v3702 = vpack.c.b16 %v2434, %v2430
    %v3703 = vpack.c.b16 %v2435, %v2431
    %v3704 = vpack.c.b16 %v2440, %v2436
    %v3705 = vpack.c.b16 %v2441, %v2437
    %v3706 = vpack.c.b16 %v2442, %v2438
    %v3707 = vpack.c.b16 %v2443, %v2439
    %v3708 = vpack.c.b16 %v2448, %v2444
    %v3709 = vpack.c.b16 %v2449, %v2445
    %v3710 = vpack.c.b16 %v2450, %v2446
    %v3711 = vpack.c.b16 %v2451, %v2447
    %v3712 = vpack.c.b16 %v2456, %v2452
    %v3713 = vpack.c.b16 %v2457, %v2453
    %v3714 = vpack.c.b16 %v2458, %v2454
    %v3715 = vpack.c.b16 %v2459, %v2455
    %v3716 = vpack.c.b16 %v2464, %v2460
    %v3717 = vpack.c.b16 %v2465, %v2461
    %v3718 = vpack.c.b16 %v2466, %v2462
    %v3719 = vpack.c.b16 %v2467, %v2463
    %v3720 = vpack.c.b16 %v2472, %v2468
    %v3721 = vpack.c.b16 %v2473, %v2469
    %v3722 = vpack.c.b16 %v2474, %v2470
    %v3723 = vpack.c.b16 %v2475, %v2471
    %v3724 = vpack.c.b16 %v2480, %v2476
    %v3725 = vpack.c.b16 %v2481, %v2477
    %v3726 = vpack.c.b16 %v2482, %v2478
    %v3727 = vpack.c.b16 %v2483, %v2479
    %v3728 = vpack.c.b16 %v2488, %v2484
    %v3729 = vpack.c.b16 %v2489, %v2485
    %v3730 = vpack.c.b16 %v2490, %v2486
    %v3731 = vpack.c.b16 %v2491, %v2487
    %v3732 = vpack.c.b16 %v2496, %v2492
    %v3733 = vpack.c.b16 %v2497, %v2493
    %v3734 = vpack.c.b16 %v2498, %v2494
    %v3735 = vpack.c.b16 %v2499, %v2495
    %v3736 = vpack.c.b16 %v2504, %v2500
    %v3737 = vpack.c.b16 %v2505, %v2501
    %v3738 = vpack.c.b16 %v2506, %v2502
    %v3739 = vpack.c.b16 %v2507, %v2503
    %v3740 = vpack.c.b16 %v2512, %v2508
    %v3741 = vpack.c.b16 %v2513, %v2509
    %v3742 = vpack.c.b16 %v2514, %v2510
    %v3743 = vpack.c.b16 %v2515, %v2511
    %v3744 = vpack.c.b16 %v2520, %v2516
    %v3745 = vpack.c.b16 %v2521, %v2517
    %v3746 = vpack.c.b16 %v2522, %v2518
    %v3747 = vpack.c.b16 %v2523, %v2519
    %v3748 = vpack.c.b16 %v2528, %v2524
    %v3749 = vpack.c.b16 %v2529, %v2525
    %v3750 = vpack.c.b16 %v2530, %v2526
    %v3751 = vpack.c.b16 %v2531, %v2527
    %v3752 = vpack.c.b16 %v2536, %v2532
    %v3753 = vpack.c.b16 %v2537, %v2533
    %v3754 = vpack.c.b16 %v2538, %v2534
    %v3755 = vpack.c.b16 %v2539, %v2535
    %v3756 = vpack.c.b16 %v2544, %v2540
    %v3757 = vpack.c.b16 %v2545, %v2541
    %v3758 = vpack.c.b16 %v2546, %v2542
    %v3759 = vpack.c.b16 %v2547, %v2543
    %v3760 = vpack.c.b16 %v2552, %v2548
    %v3761 = vpack.c.b16 %v2553, %v2549
    %v3762 = vpack.c.b16 %v2554, %v2550
    %v3763 = vpack.c.b16 %v2555, %v2551
    %v3764 = vpack.c.b16 %v2560, %v2556
    %v3765 = vpack.c.b16 %v2561, %v2557
    %v3766 = vpack.c.b16 %v2562, %v2558
    %v3767 = vpack.c.b16 %v2563, %v2559
    %v3768 = vpack.c.b16 %v2568, %v2564
    %v3769 = vpack.c.b16 %v2569, %v2565
    %v3770 = vpack.c.b16 %v2570, %v2566
    %v3771 = vpack.c.b16 %v2571, %v2567
    %v3772 = vpack.c.b16 %v2576, %v2572
    %v3773 = vpack.c.b16 %v2577, %v2573
    %v3774 = vpack.c.b16 %v2578, %v2574
    %v3775 = vpack.c.b16 %v2579, %v2575
    %v3776 = vpack.c.b16 %v2584, %v2580
    %v3777 = vpack.c.b16 %v2585, %v2581
    %v3778 = vpack.c.b16 %v2586, %v2582
    %v3779 = vpack.c.b16 %v2587, %v2583
    %v3780 = vpack.c.b16 %v2592, %v2588
    %v3781 = vpack.c.b16 %v2593, %v2589
    %v3782 = vpack.c.b16 %v2594, %v2590
    %v3783 = vpack.c.b16 %v2595, %v2591
    %v3784 = vpack.c.b16 %v2600, %v2596
    %v3785 = vpack.c.b16 %v2601, %v2597
    %v3786 = vpack.c.b16 %v2602, %v2598
    %v3787 = vpack.c.b16 %v2603, %v2599
    %v3788 = vpack.c.b16 %v2608, %v2604
    %v3789 = vpack.c.b16 %v2609, %v2605
    %v3790 = vpack.c.b16 %v2610, %v2606
    %v3791 = vpack.c.b16 %v2611, %v2607
    %v3792 = vpack.c.b16 %v2616, %v2612
    %v3793 = vpack.c.b16 %v2617, %v2613
    %v3794 = vpack.c.b16 %v2618, %v2614
    %v3795 = vpack.c.b16 %v2619, %v2615
    %v3796 = vpack.c.b16 %v2624, %v2620
    %v3797 = vpack.c.b16 %v2625, %v2621
    %v3798 = vpack.c.b16 %v2626, %v2622
    %v3799 = vpack.c.b16 %v2627, %v2623
    %v3800 = vpack.c.b16 %v2632, %v2628
    %v3801 = vpack.c.b16 %v2633, %v2629
    %v3802 = vpack.c.b16 %v2634, %v2630
    %v3803 = vpack.c.b16 %v2635, %v2631
    %v3804 = vpack.c.b16 %v2640, %v2636
    %v3805 = vpack.c.b16 %v2641, %v2637
    %v3806 = vpack.c.b16 %v2642, %v2638
    %v3807 = vpack.c.b16 %v2643, %v2639
    %v3808 = vpack.c.b16 %v2648, %v2644
    %v3809 = vpack.c.b16 %v2649, %v2645
    %v3810 = vpack.c.b16 %v2650, %v2646
    %v3811 = vpack.c.b16 %v2651, %v2647
    %v3812 = vpack.c.b16 %v2656, %v2652
    %v3813 = vpack.c.b16 %v2657, %v2653
    %v3814 = vpack.c.b16 %v2658, %v2654
    %v3815 = vpack.c.b16 %v2659, %v2655
    %v3816 = vpack.c.b16 %v2664, %v2660
    %v3817 = vpack.c.b16 %v2665, %v2661
    %v3818 = vpack.c.b16 %v2666, %v2662
    %v3819 = vpack.c.b16 %v2667, %v2663
    %v3820 = vpack.c.b16 %v2672, %v2668
    %v3821 = vpack.c.b16 %v2673, %v2669
    %v3822 = vpack.c.b16 %v2674, %v2670
    %v3823 = vpack.c.b16 %v2675, %v2671
    %v3824 = vpack.c.b16 %v2680, %v2676
    %v3825 = vpack.c.b16 %v2681, %v2677
    %v3826 = vpack.c.b16 %v2682, %v2678
    %v3827 = vpack.c.b16 %v2683, %v2679
    %v3828 = vpack.c.b16 %v2688, %v2684
    %v3829 = vpack.c.b16 %v2689, %v2685
    %v3830 = vpack.c.b16 %v2690, %v2686
    %v3831 = vpack.c.b16 %v2691, %v2687
    %v3832 = vpack.c.b16 %v2696, %v2692
    %v3833 = vpack.c.b16 %v2697, %v2693
    %v3834 = vpack.c.b16 %v2698, %v2694
    %v3835 = vpack.c.b16 %v2699, %v2695
    %v3836 = vpack.c.b16 %v2704, %v2700
    %v3837 = vpack.c.b16 %v2705, %v2701
    %v3838 = vpack.c.b16 %v2706, %v2702
    %v3839 = vpack.c.b16 %v2707, %v2703
    %v3840 = vpack.c.b16 %v2712, %v2708
    %v3841 = vpack.c.b16 %v2713, %v2709
    %v3842 = vpack.c.b16 %v2714, %v2710
    %v3843 = vpack.c.b16 %v2715, %v2711
    %v3844 = vpack.c.b16 %v2720, %v2716
    %v3845 = vpack.c.b16 %v2721, %v2717
    %v3846 = vpack.c.b16 %v2722, %v2718
    %v3847 = vpack.c.b16 %v2723, %v2719
    %v3848 = vpack.c.b16 %v2728, %v2724
    %v3849 = vpack.c.b16 %v2729, %v2725
    %v3850 = vpack.c.b16 %v2730, %v2726
    %v3851 = vpack.c.b16 %v2731, %v2727
    %v3852 = vpack.c.b16 %v2736, %v2732
    %v3853 = vpack.c.b16 %v2737, %v2733
    %v3854 = vpack.c.b16 %v2738, %v2734
    %v3855 = vpack.c.b16 %v2739, %v2735
    %v3856 = vpack.c.b16 %v2744, %v2740
    %v3857 = vpack.c.b16 %v2745, %v2741
    %v3858 = vpack.c.b16 %v2746, %v2742
    %v3859 = vpack.c.b16 %v2747, %v2743
    %v3860 = vpack.c.b16 %v2752, %v2748
    %v3861 = vpack.c.b16 %v2753, %v2749
    %v3862 = vpack.c.b16 %v2754, %v2750
    %v3863 = vpack.c.b16 %v2755, %v2751
    %v3864 = vpack.c.b16 %v2760, %v2756
    %v3865 = vpack.c.b16 %v2761, %v2757
    %v3866 = vpack.c.b16 %v2762, %v2758
    %v3867 = vpack.c.b16 %v2763, %v2759
    %v3868 = vpack.c.b16 %v2768, %v2764
    %v3869 = vpack.c.b16 %v2769, %v2765
    %v3870 = vpack.c.b16 %v2770, %v2766
    %v3871 = vpack.c.b16 %v2771, %v2767
    %v3872 = vpack.c.b16 %v2776, %v2772
    %v3873 = vpack.c.b16 %v2777, %v2773
    %v3874 = vpack.c.b16 %v2778, %v2774
    %v3875 = vpack.c.b16 %v2779, %v2775
    %v3876 = vpack.c.b16 %v2784, %v2780
    %v3877 = vpack.c.b16 %v2785, %v2781
    %v3878 = vpack.c.b16 %v2786, %v2782
    %v3879 = vpack.c.b16 %v2787, %v2783
    %v3880 = vpack.c.b16 %v2792, %v2788
    %v3881 = vpack.c.b16 %v2793, %v2789
    %v3882 = vpack.c.b16 %v2794, %v2790
    %v3883 = vpack.c.b16 %v2795, %v2791
    %v3884 = vpack.c.b16 %v2800, %v2796
    %v3885 = vpack.c.b16 %v2801, %v2797
    %v3886 = vpack.c.b16 %v2802, %v2798
    %v3887 = vpack.c.b16 %v2803, %v2799
    %v3888 = vpack.c.b16 %v2808, %v2804
    %v3889 = vpack.c.b16 %v2809, %v2805
    %v3890 = vpack.c.b16 %v2810, %v2806
    %v3891 = vpack.c.b16 %v2811, %v2807
    %v3892 = vpack.c.b16 %v2816, %v2812
    %v3893 = vpack.c.b16 %v2817, %v2813
    %v3894 = vpack.c.b16 %v2818, %v2814
    %v3895 = vpack.c.b16 %v2819, %v2815
    %v3896 = vpack.c.b16 %v2824, %v2820
    %v3897 = vpack.c.b16 %v2825, %v2821
    %v3898 = vpack.c.b16 %v2826, %v2822
    %v3899 = vpack.c.b16 %v2827, %v2823
    %v3900 = vpack.c.b16 %v2832, %v2828
    %v3901 = vpack.c.b16 %v2833, %v2829
    %v3902 = vpack.c.b16 %v2834, %v2830
    %v3903 = vpack.c.b16 %v2835, %v2831
    %v3904 = vpack.c.b16 %v2840, %v2836
    %v3905 = vpack.c.b16 %v2841, %v2837
    %v3906 = vpack.c.b16 %v2842, %v2838
    %v3907 = vpack.c.b16 %v2843, %v2839
    %v3908 = vpack.c.b16 %v2848, %v2844
    %v3909 = vpack.c.b16 %v2849, %v2845
    %v3910 = vpack.c.b16 %v2850, %v2846
    %v3911 = vpack.c.b16 %v2851, %v2847
    %v3912 = vpack.c.b16 %v2856, %v2852
    %v3913 = vpack.c.b16 %v2857, %v2853
    %v3914 = vpack.c.b16 %v2858, %v2854
    %v3915 = vpack.c.b16 %v2859, %v2855
    %v3916 = vpack.c.b16 %v2864, %v2860
    %v3917 = vpack.c.b16 %v2865, %v2861
    %v3918 = vpack.c.b16 %v2866, %v2862
    %v3919 = vpack.c.b16 %v2867, %v2863
    %v3920 = vpack.c.b16 %v2872, %v2868
    %v3921 = vpack.c.b16 %v2873, %v2869
    %v3922 = vpack.c.b16 %v2874, %v2870
    %v3923 = vpack.c.b16 %v2875, %v2871
    %v3924 = vpack.c.b16 %v2880, %v2876
    %v3925 = vpack.c.b16 %v2881, %v2877
    %v3926 = vpack.c.b16 %v2882, %v2878
    %v3927 = vpack.c.b16 %v2883, %v2879
    %v3928 = vpack.c.b16 %v2888, %v2884
    %v3929 = vpack.c.b16 %v2889, %v2885
    %v3930 = vpack.c.b16 %v2890, %v2886
    %v3931 = vpack.c.b16 %v2891, %v2887
    %v3932 = vpack.c.b16 %v2896, %v2892
    %v3933 = vpack.c.b16 %v2897, %v2893
    %v3934 = vpack.c.b16 %v2898, %v2894
    %v3935 = vpack.c.b16 %v2899, %v2895
    %v3936 = vpack.c.b16 %v2904, %v2900
    %v3937 = vpack.c.b16 %v2905, %v2901
    %v3938 = vpack.c.b16 %v2906, %v2902
    %v3939 = vpack.c.b16 %v2907, %v2903
    %v3940 = vpack.c.b16 %v2912, %v2908
    %v3941 = vpack.c.b16 %v2913, %v2909
    %v3942 = vpack.c.b16 %v2914, %v2910
    %v3943 = vpack.c.b16 %v2915, %v2911
    %v3944 = vpack.c.b16 %v2920, %v2916
    %v3945 = vpack.c.b16 %v2921, %v2917
    %v3946 = vpack.c.b16 %v2922, %v2918
    %v3947 = vpack.c.b16 %v2923, %v2919
    %v3948 = vpack.c.b16 %v2928, %v2924
    %v3949 = vpack.c.b16 %v2929, %v2925
    %v3950 = vpack.c.b16 %v2930, %v2926
    %v3951 = vpack.c.b16 %v2931, %v2927
    %v3952 = vpack.c.b16 %v2936, %v2932
    %v3953 = vpack.c.b16 %v2937, %v2933
    %v3954 = vpack.c.b16 %v2938, %v2934
    %v3955 = vpack.c.b16 %v2939, %v2935
    %v3956 = vpack.c.b16 %v2944, %v2940
    %v3957 = vpack.c.b16 %v2945, %v2941
    %v3958 = vpack.c.b16 %v2946, %v2942
    %v3959 = vpack.c.b16 %v2947, %v2943
    %v3960 = vpack.c.b16 %v2952, %v2948
    %v3961 = vpack.c.b16 %v2953, %v2949
    %v3962 = vpack.c.b16 %v2954, %v2950
    %v3963 = vpack.c.b16 %v2955, %v2951
    %v3964 = vpack.c.b16 %v2960, %v2956
    %v3965 = vpack.c.b16 %v2961, %v2957
    %v3966 = vpack.c.b16 %v2962, %v2958
    %v3967 = vpack.c.b16 %v2963, %v2959
    %v3968 = vpack.c.b16 %v2968, %v2964
    %v3969 = vpack.c.b16 %v2969, %v2965
    %v3970 = vpack.c.b16 %v2970, %v2966
    %v3971 = vpack.c.b16 %v2971, %v2967
    %v3972 = vpack.c.b16 %v2976, %v2972
    %v3973 = vpack.c.b16 %v2977, %v2973
    %v3974 = vpack.c.b16 %v2978, %v2974
    %v3975 = vpack.c.b16 %v2979, %v2975
    %v3976 = vpack.c.b16 %v2984, %v2980
    %v3977 = vpack.c.b16 %v2985, %v2981
    %v3978 = vpack.c.b16 %v2986, %v2982
    %v3979 = vpack.c.b16 %v2987, %v2983
    %v3980 = vpack.c.b16 %v2992, %v2988
    %v3981 = vpack.c.b16 %v2993, %v2989
    %v3982 = vpack.c.b16 %v2994, %v2990
    %v3983 = vpack.c.b16 %v2995, %v2991
    %v3984 = vpack.c.b16 %v3000, %v2996
    %v3985 = vpack.c.b16 %v3001, %v2997
    %v3986 = vpack.c.b16 %v3002, %v2998
    %v3987 = vpack.c.b16 %v3003, %v2999
    %v3988 = vpack.c.b16 %v3008, %v3004
    %v3989 = vpack.c.b16 %v3009, %v3005
    %v3990 = vpack.c.b16 %v3010, %v3006
    %v3991 = vpack.c.b16 %v3011, %v3007
    %v3992 = vpack.c.b16 %v3016, %v3012
    %v3993 = vpack.c.b16 %v3017, %v3013
    %v3994 = vpack.c.b16 %v3018, %v3014
    %v3995 = vpack.c.b16 %v3019, %v3015
    %v3996 = vpack.c.b16 %v3024, %v3020
    %v3997 = vpack.c.b16 %v3025, %v3021
    %v3998 = vpack.c.b16 %v3026, %v3022
    %v3999 = vpack.c.b16 %v3027, %v3023
    %v4000 = vpack.c.b16 %v3032, %v3028
    %v4001 = vpack.c.b16 %v3033, %v3029
    %v4002 = vpack.c.b16 %v3034, %v3030
    %v4003 = vpack.c.b16 %v3035, %v3031
    %v4004 = vpack.c.b16 %v3040, %v3036
    %v4005 = vpack.c.b16 %v3041, %v3037
    %v4006 = vpack.c.b16 %v3042, %v3038
    %v4007 = vpack.c.b16 %v3043, %v3039
    %v4008 = vpack.c.b16 %v3048, %v3044
    %v4009 = vpack.c.b16 %v3049, %v3045
    %v4010 = vpack.c.b16 %v3050, %v3046
    %v4011 = vpack.c.b16 %v3051, %v3047
    %v4012 = vpack.c.b16 %v3056, %v3052
    %v4013 = vpack.c.b16 %v3057, %v3053
    %v4014 = vpack.c.b16 %v3058, %v3054
    %v4015 = vpack.c.b16 %v3059, %v3055
    %v4016 = vpack.c.b16 %v3064, %v3060
    %v4017 = vpack.c.b16 %v3065, %v3061
    %v4018 = vpack.c.b16 %v3066, %v3062
    %v4019 = vpack.c.b16 %v3067, %v3063
    %v4020 = vpack.c.b16 %v3072, %v3068
    %v4021 = vpack.c.b16 %v3073, %v3069
    %v4022 = vpack.c.b16 %v3074, %v3070
    %v4023 = vpack.c.b16 %v3075, %v3071
    %v4024 = vpack.c.b16 %v3080, %v3076
    %v4025 = vpack.c.b16 %v3081, %v3077
    %v4026 = vpack.c.b16 %v3082, %v3078
    %v4027 = vpack.c.b16 %v3083, %v3079
    %v4028 = vpack.c.b16 %v3088, %v3084
    %v4029 = vpack.c.b16 %v3089, %v3085
    %v4030 = vpack.c.b16 %v3090, %v3086
    %v4031 = vpack.c.b16 %v3091, %v3087
    %v4032 = vpack.c.b16 %v3096, %v3092
    %v4033 = vpack.c.b16 %v3097, %v3093
    %v4034 = vpack.c.b16 %v3098, %v3094
    %v4035 = vpack.c.b16 %v3099, %v3095
    %v4036 = vpack.c.b16 %v3104, %v3100
    %v4037 = vpack.c.b16 %v3105, %v3101
    %v4038 = vpack.c.b16 %v3106, %v3102
    %v4039 = vpack.c.b16 %v3107, %v3103
    %v4040 = vpack.c.b16 %v3112, %v3108
    %v4041 = vpack.c.b16 %v3113, %v3109
    %v4042 = vpack.c.b16 %v3114, %v3110
    %v4043 = vpack.c.b16 %v3115, %v3111
    %v4044 = vpack.c.b16 %v3120, %v3116
    %v4045 = vpack.c.b16 %v3121, %v3117
    %v4046 = vpack.c.b16 %v3122, %v3118
    %v4047 = vpack.c.b16 %v3123, %v3119
    %v4048 = vpack.c.b16 %v3128, %v3124
    %v4049 = vpack.c.b16 %v3129, %v3125
    %v4050 = vpack.c.b16 %v3130, %v3126
    %v4051 = vpack.c.b16 %v3131, %v3127
    %v4052 = vpack.c.b16 %v3136, %v3132
    %v4053 = vpack.c.b16 %v3137, %v3133
    %v4054 = vpack.c.b16 %v3138, %v3134
    %v4055 = vpack.c.b16 %v3139, %v3135
    %v4056 = vpack.c.b16 %v3144, %v3140
    %v4057 = vpack.c.b16 %v3145, %v3141
    %v4058 = vpack.c.b16 %v3146, %v3142
    %v4059 = vpack.c.b16 %v3147, %v3143
    %v4060 = vpack.c.b16 %v3152, %v3148
    %v4061 = vpack.c.b16 %v3153, %v3149
    %v4062 = vpack.c.b16 %v3154, %v3150
    %v4063 = vpack.c.b16 %v3155, %v3151
    %v4064 = vpack.c.b16 %v3160, %v3156
    %v4065 = vpack.c.b16 %v3161, %v3157
    %v4066 = vpack.c.b16 %v3162, %v3158
    %v4067 = vpack.c.b16 %v3163, %v3159
    %v4068 = vpack.c.b16 %v3168, %v3164
    %v4069 = vpack.c.b16 %v3169, %v3165
    %v4070 = vpack.c.b16 %v3170, %v3166
    %v4071 = vpack.c.b16 %v3171, %v3167
    %v4072 = vpack.c.b16 %v3176, %v3172
    %v4073 = vpack.c.b16 %v3177, %v3173
    %v4074 = vpack.c.b16 %v3178, %v3174
    %v4075 = vpack.c.b16 %v3179, %v3175
    %v4076 = vpack.c.b16 %v3184, %v3180
    %v4077 = vpack.c.b16 %v3185, %v3181
    %v4078 = vpack.c.b16 %v3186, %v3182
    %v4079 = vpack.c.b16 %v3187, %v3183
    %v4080 = vpack.c.b16 %v3192, %v3188
    %v4081 = vpack.c.b16 %v3193, %v3189
    %v4082 = vpack.c.b16 %v3194, %v3190
    %v4083 = vpack.c.b16 %v3195, %v3191
    %v4084 = vpack.c.b16 %v3200, %v3196
    %v4085 = vpack.c.b16 %v3201, %v3197
    %v4086 = vpack.c.b16 %v3202, %v3198
    %v4087 = vpack.c.b16 %v3203, %v3199
    %v4088 = vpack.c.b16 %v3208, %v3204
    %v4089 = vpack.c.b16 %v3209, %v3205
    %v4090 = vpack.c.b16 %v3210, %v3206
    %v4091 = vpack.c.b16 %v3211, %v3207
    %v4092 = vpack.c.b16 %v3216, %v3212
    %v4093 = vpack.c.b16 %v3217, %v3213
    %v4094 = vpack.c.b16 %v3218, %v3214
    %v4095 = vpack.c.b16 %v3219, %v3215
    %v4096 = vpack.c.b16 %v3224, %v3220
    %v4097 = vpack.c.b16 %v3225, %v3221
    %v4098 = vpack.c.b16 %v3226, %v3222
    %v4099 = vpack.c.b16 %v3227, %v3223
    %v4100 = vpack.c.b16 %v3232, %v3228
    %v4101 = vpack.c.b16 %v3233, %v3229
    %v4102 = vpack.c.b16 %v3234, %v3230
    %v4103 = vpack.c.b16 %v3235, %v3231
    %v4104 = vpack.c.b16 %v3240, %v3236
    %v4105 = vpack.c.b16 %v3241, %v3237
    %v4106 = vpack.c.b16 %v3242, %v3238
    %v4107 = vpack.c.b16 %v3243, %v3239
    %v4108 = vpack.c.b16 %v3248, %v3244
    %v4109 = vpack.c.b16 %v3249, %v3245
    %v4110 = vpack.c.b16 %v3250, %v3246
    %v4111 = vpack.c.b16 %v3251, %v3247
    %v4112 = vpack.c.b16 %v3256, %v3252
    %v4113 = vpack.c.b16 %v3257, %v3253
    %v4114 = vpack.c.b16 %v3258, %v3254
    %v4115 = vpack.c.b16 %v3259, %v3255
    %v4116 = vpack.c.b16 %v3264, %v3260
    %v4117 = vpack.c.b16 %v3265, %v3261
    %v4118 = vpack.c.b16 %v3266, %v3262
    %v4119 = vpack.c.b16 %v3267, %v3263
    %v4120 = vpack.c.b16 %v3272, %v3268
    %v4121 = vpack.c.b16 %v3273, %v3269
    %v4122 = vpack.c.b16 %v3274, %v3270
    %v4123 = vpack.c.b16 %v3275, %v3271
    %v4124 = vpack.c.b16 %v3280, %v3276
    %v4125 = vpack.c.b16 %v3281, %v3277
    %v4126 = vpack.c.b16 %v3282, %v3278
    %v4127 = vpack.c.b16 %v3283, %v3279
    %v4128 = vpack.c.b16 %v3288, %v3284
    %v4129 = vpack.c.b16 %v3289, %v3285
    %v4130 = vpack.c.b16 %v3290, %v3286
    %v4131 = vpack.c.b16 %v3291, %v3287
    %v4132 = vpack.c.b16 %v3296, %v3292
    %v4133 = vpack.c.b16 %v3297, %v3293
    %v4134 = vpack.c.b16 %v3298, %v3294
    %v4135 = vpack.c.b16 %v3299, %v3295
    %v4136 = vpack.c.b16 %v3304, %v3300
    %v4137 = vpack.c.b16 %v3305, %v3301
    %v4138 = vpack.c.b16 %v3306, %v3302
    %v4139 = vpack.c.b16 %v3307, %v3303
    %v4140 = vpack.c.b16 %v3312, %v3308
    %v4141 = vpack.c.b16 %v3313, %v3309
    %v4142 = vpack.c.b16 %v3314, %v3310
    %v4143 = vpack.c.b16 %v3315, %v3311
    %v4144 = vpack.c.b16 %v3320, %v3316
    %v4145 = vpack.c.b16 %v3321, %v3317
    %v4146 = vpack.c.b16 %v3322, %v3318
    %v4147 = vpack.c.b16 %v3323, %v3319
    %v4148 = vpack.c.b16 %v3328, %v3324
    %v4149 = vpack.c.b16 %v3329, %v3325
    %v4150 = vpack.c.b16 %v3330, %v3326
    %v4151 = vpack.c.b16 %v3331, %v3327
    %v4152 = vpack.c.b16 %v3336, %v3332
    %v4153 = vpack.c.b16 %v3337, %v3333
    %v4154 = vpack.c.b16 %v3338, %v3334
    %v4155 = vpack.c.b16 %v3339, %v3335
    %v4156 = vpack.c.b16 %v3344, %v3340
    %v4157 = vpack.c.b16 %v3345, %v3341
    %v4158 = vpack.c.b16 %v3346, %v3342
    %v4159 = vpack.c.b16 %v3347, %v3343
    %v4160 = vpack.c.b16 %v3352, %v3348
    %v4161 = vpack.c.b16 %v3353, %v3349
    %v4162 = vpack.c.b16 %v3354, %v3350
    %v4163 = vpack.c.b16 %v3355, %v3351
    %v4164 = vpack.c.b16 %v3360, %v3356
    %v4165 = vpack.c.b16 %v3361, %v3357
    %v4166 = vpack.c.b16 %v3362, %v3358
    %v4167 = vpack.c.b16 %v3363, %v3359
    %v4168 = vpack.c.b16 %v3368, %v3364
    %v4169 = vpack.c.b16 %v3369, %v3365
    %v4170 = vpack.c.b16 %v3370, %v3366
    %v4171 = vpack.c.b16 %v3371, %v3367
    %v4172 = vpack.c.b16 %v3376, %v3372
    %v4173 = vpack.c.b16 %v3377, %v3373
    %v4174 = vpack.c.b16 %v3378, %v3374
    %v4175 = vpack.c.b16 %v3379, %v3375
    %v4176 = vpack.c.b16 %v3384, %v3380
    %v4177 = vpack.c.b16 %v3385, %v3381
    %v4178 = vpack.c.b16 %v3386, %v3382
    %v4179 = vpack.c.b16 %v3387, %v3383
    %v4180 = vpack.c.b16 %v3392, %v3388
    %v4181 = vpack.c.b16 %v3393, %v3389
    %v4182 = vpack.c.b16 %v3394, %v3390
    %v4183 = vpack.c.b16 %v3395, %v3391
    %v4184 = vpack.c.b16 %v3400, %v3396
    %v4185 = vpack.c.b16 %v3401, %v3397
    %v4186 = vpack.c.b16 %v3402, %v3398
    %v4187 = vpack.c.b16 %v3403, %v3399
    %vm4972 = vcmask 523264
    %v4974 = vsel %vm4972, %v1027, 0
    %4976 = vmatprep.subr.bf16.mxu0 %v3405
    %4977 = vmatpush1.bf16.msra.mxu0 %v3404
    %4978 = vmatprep.subr.bf16.mxu0 %v3409
    %4979 = vmatpush1.bf16.msra.mxu0 %v3408
    %4980 = vmatprep.subr.bf16.mxu0 %v3413
    %4981 = vmatpush1.bf16.msra.mxu0 %v3412
    %4982 = vmatprep.subr.bf16.mxu0 %v3417
    %4983 = vmatpush1.bf16.msra.mxu0 %v3416
    %4984 = vmatprep.subr.bf16.mxu0 %v3421
    %4985 = vmatpush1.bf16.msra.mxu0 %v3420
    %4986 = vmatprep.subr.bf16.mxu0 %v3425
    %4987 = vmatpush1.bf16.msra.mxu0 %v3424
    %4988 = vmatprep.subr.bf16.mxu0 %v3429
    %4989 = vmatpush1.bf16.msra.mxu0 %v3428
    %4990 = vmatprep.subr.bf16.mxu0 %v3433
    %4991 = vmatpush1.bf16.msra.mxu0 %v3432
    %4992 = vmatprep.subr.bf16.mxu0 %v3437
    %4993 = vmatpush1.bf16.msra.mxu0 %v3436
    %4994 = vmatprep.subr.bf16.mxu0 %v3441
    %4995 = vmatpush1.bf16.msra.mxu0 %v3440
    %4996 = vmatprep.subr.bf16.mxu0 %v3445
    %4997 = vmatpush1.bf16.msra.mxu0 %v3444
    %4998 = vmatprep.subr.bf16.mxu0 %v3449
    %4999 = vmatpush1.bf16.msra.mxu0 %v3448
    %5000 = vmatprep.subr.bf16.mxu0 %v3453
    %5001 = vmatpush1.bf16.msra.mxu0 %v3452
    %5002 = vmatprep.subr.bf16.mxu0 %v3457
    %5003 = vmatpush1.bf16.msra.mxu0 %v3456
    %5004 = vmatprep.subr.bf16.mxu0 %v3461
    %5005 = vmatpush1.bf16.msra.mxu0 %v3460
    %5006 = vmatprep.subr.bf16.mxu0 %v3465
    %5007 = vmatpush1.bf16.msra.mxu0 %v3464
    %5008 = vmatprep.mubr.bf16.mxu0 %v904
    %5009 = vmatmul.mubr.bf16.gmra.mrb[0].mxu0 %v890
    %v5010 = vpop.f32.mrb[0].mxu0
    %v5011 = vadd.f32 %v846, %v5010
    %v5012 = vpop.f32.mrb[0].mxu0
    %v5013 = vadd.f32 %v850, %v5012
    %v5014 = vpop.f32.mrb[0].mxu0
    %v5015 = vpop.f32.mrb[0].mxu0
    %5016 = vdwg.mxu0
    %5017 = vmatprep.subr.bf16.mxu0 %v3469
    %5018 = vmatpush1.bf16.msra.mxu0 %v3468
    %5019 = vmatprep.subr.bf16.mxu0 %v3473
    %5020 = vmatpush1.bf16.msra.mxu0 %v3472
    %5021 = vmatprep.subr.bf16.mxu0 %v3477
    %5022 = vmatpush1.bf16.msra.mxu0 %v3476
    %5023 = vmatprep.subr.bf16.mxu0 %v3481
    %5024 = vmatpush1.bf16.msra.mxu0 %v3480
    %5025 = vmatprep.subr.bf16.mxu0 %v3485
    %5026 = vmatpush1.bf16.msra.mxu0 %v3484
    %5027 = vmatprep.subr.bf16.mxu0 %v3489
    %5028 = vmatpush1.bf16.msra.mxu0 %v3488
    %5029 = vmatprep.subr.bf16.mxu0 %v3493
    %5030 = vmatpush1.bf16.msra.mxu0 %v3492
    %5031 = vmatprep.subr.bf16.mxu0 %v3497
    %5032 = vmatpush1.bf16.msra.mxu0 %v3496
    %5033 = vmatprep.subr.bf16.mxu0 %v3501
    %5034 = vmatpush1.bf16.msra.mxu0 %v3500
    %5035 = vmatprep.subr.bf16.mxu0 %v3505
    %5036 = vmatpush1.bf16.msra.mxu0 %v3504
    %5037 = vmatprep.subr.bf16.mxu0 %v3509
    %5038 = vmatpush1.bf16.msra.mxu0 %v3508
    %5039 = vmatprep.subr.bf16.mxu0 %v3513
    %5040 = vmatpush1.bf16.msra.mxu0 %v3512
    %5041 = vmatprep.subr.bf16.mxu0 %v3517
    %5042 = vmatpush1.bf16.msra.mxu0 %v3516
    %5043 = vmatprep.subr.bf16.mxu0 %v3521
    %5044 = vmatpush1.bf16.msra.mxu0 %v3520
    %5045 = vmatprep.subr.bf16.mxu0 %v3525
    %5046 = vmatpush1.bf16.msra.mxu0 %v3524
    %5047 = vmatprep.subr.bf16.mxu0 %v3529
    %5048 = vmatpush1.bf16.msra.mxu0 %v3528
    %5049 = vmatprep.mubr.bf16.mxu0 %v914
    %5050 = vmatmul.mubr.bf16.gmra.mrb[0].mxu0 %v912
    %v5051 = vpop.f32.mrb[0].mxu0
    %v5052 = vadd.f32 %v5011, %v5051
    %v5053 = vpop.f32.mrb[0].mxu0
    %v5054 = vadd.f32 %v5013, %v5053
    %v5055 = vpop.f32.mrb[0].mxu0
    %v5056 = vpop.f32.mrb[0].mxu0
    %5057 = vdwg.mxu0
    %5058 = vmatprep.subr.bf16.mxu0 %v3533
    %5059 = vmatpush1.bf16.msra.mxu0 %v3532
    %5060 = vmatprep.subr.bf16.mxu0 %v3537
    %5061 = vmatpush1.bf16.msra.mxu0 %v3536
    %5062 = vmatprep.subr.bf16.mxu0 %v3541
    %5063 = vmatpush1.bf16.msra.mxu0 %v3540
    %5064 = vmatprep.subr.bf16.mxu0 %v3545
    %5065 = vmatpush1.bf16.msra.mxu0 %v3544
    %5066 = vmatprep.subr.bf16.mxu0 %v3549
    %5067 = vmatpush1.bf16.msra.mxu0 %v3548
    %5068 = vmatprep.subr.bf16.mxu0 %v3553
    %5069 = vmatpush1.bf16.msra.mxu0 %v3552
    %5070 = vmatprep.subr.bf16.mxu0 %v3557
    %5071 = vmatpush1.bf16.msra.mxu0 %v3556
    %5072 = vmatprep.subr.bf16.mxu0 %v3561
    %5073 = vmatpush1.bf16.msra.mxu0 %v3560
    %5074 = vmatprep.subr.bf16.mxu0 %v3565
    %5075 = vmatpush1.bf16.msra.mxu0 %v3564
    %5076 = vmatprep.subr.bf16.mxu0 %v3569
    %5077 = vmatpush1.bf16.msra.mxu0 %v3568
    %5078 = vmatprep.subr.bf16.mxu0 %v3573
    %5079 = vmatpush1.bf16.msra.mxu0 %v3572
    %5080 = vmatprep.subr.bf16.mxu0 %v3577
    %5081 = vmatpush1.bf16.msra.mxu0 %v3576
    %5082 = vmatprep.subr.bf16.mxu0 %v3581
    %5083 = vmatpush1.bf16.msra.mxu0 %v3580
    %5084 = vmatprep.subr.bf16.mxu0 %v3585
    %5085 = vmatpush1.bf16.msra.mxu0 %v3584
    %5086 = vmatprep.subr.bf16.mxu0 %v3589
    %5087 = vmatpush1.bf16.msra.mxu0 %v3588
    %5088 = vmatprep.subr.bf16.mxu0 %v3593
    %5089 = vmatpush1.bf16.msra.mxu0 %v3592
    %5090 = vmatprep.mubr.bf16.mxu0 %v911
    %5091 = vmatmul.mubr.bf16.gmra.mrb[0].mxu0 %v897
    %v5092 = vpop.f32.mrb[0].mxu0
    %v5093 = vadd.f32 %v5052, %v5092
    %v5094 = vpop.f32.mrb[0].mxu0
    %v5095 = vadd.f32 %v5054, %v5094
    %v5096 = vpop.f32.mrb[0].mxu0
    %v5097 = vpop.f32.mrb[0].mxu0
    %5098 = vdwg.mxu0
    %5099 = vmatprep.subr.bf16.mxu0 %v3597
    %5100 = vmatpush1.bf16.msra.mxu0 %v3596
    %5101 = vmatprep.subr.bf16.mxu0 %v3601
    %5102 = vmatpush1.bf16.msra.mxu0 %v3600
    %5103 = vmatprep.subr.bf16.mxu0 %v3605
    %5104 = vmatpush1.bf16.msra.mxu0 %v3604
    %5105 = vmatprep.subr.bf16.mxu0 %v3609
    %5106 = vmatpush1.bf16.msra.mxu0 %v3608
    %5107 = vmatprep.subr.bf16.mxu0 %v3613
    %5108 = vmatpush1.bf16.msra.mxu0 %v3612
    %5109 = vmatprep.subr.bf16.mxu0 %v3617
    %5110 = vmatpush1.bf16.msra.mxu0 %v3616
    %5111 = vmatprep.subr.bf16.mxu0 %v3621
    %5112 = vmatpush1.bf16.msra.mxu0 %v3620
    %5113 = vmatprep.subr.bf16.mxu0 %v3625
    %5114 = vmatpush1.bf16.msra.mxu0 %v3624
    %5115 = vmatprep.subr.bf16.mxu0 %v3629
    %5116 = vmatpush1.bf16.msra.mxu0 %v3628
    %5117 = vmatprep.subr.bf16.mxu0 %v3633
    %5118 = vmatpush1.bf16.msra.mxu0 %v3632
    %5119 = vmatprep.subr.bf16.mxu0 %v3637
    %5120 = vmatpush1.bf16.msra.mxu0 %v3636
    %5121 = vmatprep.subr.bf16.mxu0 %v3641
    %5122 = vmatpush1.bf16.msra.mxu0 %v3640
    %5123 = vmatprep.subr.bf16.mxu0 %v3645
    %5124 = vmatpush1.bf16.msra.mxu0 %v3644
    %5125 = vmatprep.subr.bf16.mxu0 %v3649
    %5126 = vmatpush1.bf16.msra.mxu0 %v3648
    %5127 = vmatprep.subr.bf16.mxu0 %v3653
    %5128 = vmatpush1.bf16.msra.mxu0 %v3652
    %5129 = vmatprep.subr.bf16.mxu0 %v3657
    %5130 = vmatpush1.bf16.msra.mxu0 %v3656
    %5131 = vmatprep.mubr.bf16.mxu0 %v915
    %5132 = vmatmul.mubr.bf16.gmra.mrb[0].mxu0 %v913
    %v5133 = vpop.f32.mrb[0].mxu0
    %v5134 = vadd.f32 %v5093, %v5133
    %v5135 = vpop.f32.mrb[0].mxu0
    %v5136 = vadd.f32 %v5095, %v5135
    %v5137 = vpop.f32.mrb[0].mxu0
    %v5138 = vpop.f32.mrb[0].mxu0
    %5139 = vdwg.mxu0
    %5140 = vmatprep.subr.bf16.mxu0 %v3661
    %5141 = vmatpush1.bf16.msra.mxu0 %v3660
    %5142 = vmatprep.subr.bf16.mxu0 %v3665
    %5143 = vmatpush1.bf16.msra.mxu0 %v3664
    %5144 = vmatprep.subr.bf16.mxu0 %v3669
    %5145 = vmatpush1.bf16.msra.mxu0 %v3668
    %5146 = vmatprep.subr.bf16.mxu0 %v3673
    %5147 = vmatpush1.bf16.msra.mxu0 %v3672
    %5148 = vmatprep.subr.bf16.mxu0 %v3677
    %5149 = vmatpush1.bf16.msra.mxu0 %v3676
    %5150 = vmatprep.subr.bf16.mxu0 %v3681
    %5151 = vmatpush1.bf16.msra.mxu0 %v3680
    %5152 = vmatprep.subr.bf16.mxu0 %v3685
    %5153 = vmatpush1.bf16.msra.mxu0 %v3684
    %5154 = vmatprep.subr.bf16.mxu0 %v3689
    %5155 = vmatpush1.bf16.msra.mxu0 %v3688
    %5156 = vmatprep.subr.bf16.mxu0 %v3693
    %5157 = vmatpush1.bf16.msra.mxu0 %v3692
    %5158 = vmatprep.subr.bf16.mxu0 %v3697
    %5159 = vmatpush1.bf16.msra.mxu0 %v3696
    %5160 = vmatprep.subr.bf16.mxu0 %v3701
    %5161 = vmatpush1.bf16.msra.mxu0 %v3700
    %5162 = vmatprep.subr.bf16.mxu0 %v3705
    %5163 = vmatpush1.bf16.msra.mxu0 %v3704
    %5164 = vmatprep.subr.bf16.mxu0 %v3709
    %5165 = vmatpush1.bf16.msra.mxu0 %v3708
    %5166 = vmatprep.subr.bf16.mxu0 %v3713
    %5167 = vmatpush1.bf16.msra.mxu0 %v3712
    %5168 = vmatprep.subr.bf16.mxu0 %v3717
    %5169 = vmatpush1.bf16.msra.mxu0 %v3716
    %5170 = vmatprep.subr.bf16.mxu0 %v3721
    %5171 = vmatpush1.bf16.msra.mxu0 %v3720
    %5172 = vmatprep.mubr.bf16.mxu0 %v953
    %5173 = vmatmul.mubr.bf16.gmra.mrb[0].mxu0 %v939
    %v5174 = vpop.f32.mrb[0].mxu0
    %v5175 = vadd.f32 %v5134, %v5174
    %v5176 = vpop.f32.mrb[0].mxu0
    %v5177 = vadd.f32 %v5136, %v5176
    %v5178 = vpop.f32.mrb[0].mxu0
    %v5179 = vpop.f32.mrb[0].mxu0
    %5180 = vdwg.mxu0
    %5181 = vmatprep.subr.bf16.mxu0 %v3725
    %5182 = vmatpush1.bf16.msra.mxu0 %v3724
    %5183 = vmatprep.subr.bf16.mxu0 %v3729
    %5184 = vmatpush1.bf16.msra.mxu0 %v3728
    %5185 = vmatprep.subr.bf16.mxu0 %v3733
    %5186 = vmatpush1.bf16.msra.mxu0 %v3732
    %5187 = vmatprep.subr.bf16.mxu0 %v3737
    %5188 = vmatpush1.bf16.msra.mxu0 %v3736
    %5189 = vmatprep.subr.bf16.mxu0 %v3741
    %5190 = vmatpush1.bf16.msra.mxu0 %v3740
    %5191 = vmatprep.subr.bf16.mxu0 %v3745
    %5192 = vmatpush1.bf16.msra.mxu0 %v3744
    %5193 = vmatprep.subr.bf16.mxu0 %v3749
    %5194 = vmatpush1.bf16.msra.mxu0 %v3748
    %5195 = vmatprep.subr.bf16.mxu0 %v3753
    %5196 = vmatpush1.bf16.msra.mxu0 %v3752
    %5197 = vmatprep.subr.bf16.mxu0 %v3757
    %5198 = vmatpush1.bf16.msra.mxu0 %v3756
    %5199 = vmatprep.subr.bf16.mxu0 %v3761
    %5200 = vmatpush1.bf16.msra.mxu0 %v3760
    %5201 = vmatprep.subr.bf16.mxu0 %v3765
    %5202 = vmatpush1.bf16.msra.mxu0 %v3764
    %5203 = vmatprep.subr.bf16.mxu0 %v3769
    %5204 = vmatpush1.bf16.msra.mxu0 %v3768
    %5205 = vmatprep.subr.bf16.mxu0 %v3773
    %5206 = vmatpush1.bf16.msra.mxu0 %v3772
    %5207 = vmatprep.subr.bf16.mxu0 %v3777
    %5208 = vmatpush1.bf16.msra.mxu0 %v3776
    %5209 = vmatprep.subr.bf16.mxu0 %v3781
    %5210 = vmatpush1.bf16.msra.mxu0 %v3780
    %5211 = vmatprep.subr.bf16.mxu0 %v3785
    %5212 = vmatpush1.bf16.msra.mxu0 %v3784
    %5213 = vmatprep.mubr.bf16.mxu0 %v963
    %5214 = vmatmul.mubr.bf16.gmra.mrb[0].mxu0 %v961
    %v5215 = vpop.f32.mrb[0].mxu0
    %v5216 = vadd.f32 %v5175, %v5215
    %v5217 = vpop.f32.mrb[0].mxu0
    %v5218 = vadd.f32 %v5177, %v5217
    %v5219 = vpop.f32.mrb[0].mxu0
    %v5220 = vpop.f32.mrb[0].mxu0
    %5221 = vdwg.mxu0
    %5222 = vmatprep.subr.bf16.mxu0 %v3789
    %5223 = vmatpush1.bf16.msra.mxu0 %v3788
    %5224 = vmatprep.subr.bf16.mxu0 %v3793
    %5225 = vmatpush1.bf16.msra.mxu0 %v3792
    %5226 = vmatprep.subr.bf16.mxu0 %v3797
    %5227 = vmatpush1.bf16.msra.mxu0 %v3796
    %5228 = vmatprep.subr.bf16.mxu0 %v3801
    %5229 = vmatpush1.bf16.msra.mxu0 %v3800
    %5230 = vmatprep.subr.bf16.mxu0 %v3805
    %5231 = vmatpush1.bf16.msra.mxu0 %v3804
    %5232 = vmatprep.subr.bf16.mxu0 %v3809
    %5233 = vmatpush1.bf16.msra.mxu0 %v3808
    %5234 = vmatprep.subr.bf16.mxu0 %v3813
    %5235 = vmatpush1.bf16.msra.mxu0 %v3812
    %5236 = vmatprep.subr.bf16.mxu0 %v3817
    %5237 = vmatpush1.bf16.msra.mxu0 %v3816
    %5238 = vmatprep.subr.bf16.mxu0 %v3821
    %5239 = vmatpush1.bf16.msra.mxu0 %v3820
    %5240 = vmatprep.subr.bf16.mxu0 %v3825
    %5241 = vmatpush1.bf16.msra.mxu0 %v3824
    %5242 = vmatprep.subr.bf16.mxu0 %v3829
    %5243 = vmatpush1.bf16.msra.mxu0 %v3828
    %5244 = vmatprep.subr.bf16.mxu0 %v3833
    %5245 = vmatpush1.bf16.msra.mxu0 %v3832
    %5246 = vmatprep.subr.bf16.mxu0 %v3837
    %5247 = vmatpush1.bf16.msra.mxu0 %v3836
    %5248 = vmatprep.subr.bf16.mxu0 %v3841
    %5249 = vmatpush1.bf16.msra.mxu0 %v3840
    %5250 = vmatprep.subr.bf16.mxu0 %v3845
    %5251 = vmatpush1.bf16.msra.mxu0 %v3844
    %5252 = vmatprep.subr.bf16.mxu0 %v3849
    %5253 = vmatpush1.bf16.msra.mxu0 %v3848
    %5254 = vmatprep.mubr.bf16.mxu0 %v960
    %5255 = vmatmul.mubr.bf16.gmra.mrb[0].mxu0 %v946
    %v5256 = vpop.f32.mrb[0].mxu0
    %v5257 = vadd.f32 %v5216, %v5256
    %v5258 = vpop.f32.mrb[0].mxu0
    %v5259 = vadd.f32 %v5218, %v5258
    %v5260 = vpop.f32.mrb[0].mxu0
    %v5261 = vpop.f32.mrb[0].mxu0
    %5262 = vdwg.mxu0
    %5263 = vmatprep.subr.bf16.mxu0 %v3853
    %5264 = vmatpush1.bf16.msra.mxu0 %v3852
    %5265 = vmatprep.subr.bf16.mxu0 %v3857
    %5266 = vmatpush1.bf16.msra.mxu0 %v3856
    %5267 = vmatprep.subr.bf16.mxu0 %v3861
    %5268 = vmatpush1.bf16.msra.mxu0 %v3860
    %5269 = vmatprep.subr.bf16.mxu0 %v3865
    %5270 = vmatpush1.bf16.msra.mxu0 %v3864
    %5271 = vmatprep.subr.bf16.mxu0 %v3869
    %5272 = vmatpush1.bf16.msra.mxu0 %v3868
    %5273 = vmatprep.subr.bf16.mxu0 %v3873
    %5274 = vmatpush1.bf16.msra.mxu0 %v3872
    %5275 = vmatprep.subr.bf16.mxu0 %v3877
    %5276 = vmatpush1.bf16.msra.mxu0 %v3876
    %5277 = vmatprep.subr.bf16.mxu0 %v3881
    %5278 = vmatpush1.bf16.msra.mxu0 %v3880
    %5279 = vmatprep.subr.bf16.mxu0 %v3885
    %5280 = vmatpush1.bf16.msra.mxu0 %v3884
    %5281 = vmatprep.subr.bf16.mxu0 %v3889
    %5282 = vmatpush1.bf16.msra.mxu0 %v3888
    %5283 = vmatprep.subr.bf16.mxu0 %v3893
    %5284 = vmatpush1.bf16.msra.mxu0 %v3892
    %5285 = vmatprep.subr.bf16.mxu0 %v3897
    %5286 = vmatpush1.bf16.msra.mxu0 %v3896
    %5287 = vmatprep.subr.bf16.mxu0 %v3901
    %5288 = vmatpush1.bf16.msra.mxu0 %v3900
    %5289 = vmatprep.subr.bf16.mxu0 %v3905
    %5290 = vmatpush1.bf16.msra.mxu0 %v3904
    %5291 = vmatprep.subr.bf16.mxu0 %v3909
    %5292 = vmatpush1.bf16.msra.mxu0 %v3908
    %5293 = vmatprep.subr.bf16.mxu0 %v3913
    %5294 = vmatpush1.bf16.msra.mxu0 %v3912
    %5295 = vmatprep.mubr.bf16.mxu0 %v964
    %5296 = vmatmul.mubr.bf16.gmra.mrb[0].mxu0 %v962
    %v5297 = vpop.f32.mrb[0].mxu0
    %v5298 = vadd.f32 %v5257, %v5297
    %v5299 = vpop.f32.mrb[0].mxu0
    %v5300 = vadd.f32 %v5259, %v5299
    %v5301 = vpop.f32.mrb[0].mxu0
    %v5302 = vpop.f32.mrb[0].mxu0
    %5303 = vdwg.mxu0
    %5304 = vmatprep.subr.bf16.mxu0 %v3917
    %5305 = vmatpush1.bf16.msra.mxu0 %v3916
    %5306 = vmatprep.subr.bf16.mxu0 %v3921
    %5307 = vmatpush1.bf16.msra.mxu0 %v3920
    %5308 = vmatprep.subr.bf16.mxu0 %v3925
    %5309 = vmatpush1.bf16.msra.mxu0 %v3924
    %5310 = vmatprep.subr.bf16.mxu0 %v3929
    %5311 = vmatpush1.bf16.msra.mxu0 %v3928
    %5312 = vmatprep.subr.bf16.mxu0 %v3933
    %5313 = vmatpush1.bf16.msra.mxu0 %v3932
    %5314 = vmatprep.subr.bf16.mxu0 %v3937
    %5315 = vmatpush1.bf16.msra.mxu0 %v3936
    %5316 = vmatprep.subr.bf16.mxu0 %v3941
    %5317 = vmatpush1.bf16.msra.mxu0 %v3940
    %5318 = vmatprep.subr.bf16.mxu0 %v3945
    %5319 = vmatpush1.bf16.msra.mxu0 %v3944
    %5320 = vmatprep.subr.bf16.mxu0 %v3949
    %5321 = vmatpush1.bf16.msra.mxu0 %v3948
    %5322 = vmatprep.subr.bf16.mxu0 %v3953
    %5323 = vmatpush1.bf16.msra.mxu0 %v3952
    %5324 = vmatprep.subr.bf16.mxu0 %v3957
    %5325 = vmatpush1.bf16.msra.mxu0 %v3956
    %5326 = vmatprep.subr.bf16.mxu0 %v3961
    %5327 = vmatpush1.bf16.msra.mxu0 %v3960
    %5328 = vmatprep.subr.bf16.mxu0 %v3965
    %5329 = vmatpush1.bf16.msra.mxu0 %v3964
    %5330 = vmatprep.subr.bf16.mxu0 %v3969
    %5331 = vmatpush1.bf16.msra.mxu0 %v3968
    %5332 = vmatprep.subr.bf16.mxu0 %v3973
    %5333 = vmatpush1.bf16.msra.mxu0 %v3972
    %5334 = vmatprep.subr.bf16.mxu0 %v3977
    %5335 = vmatpush1.bf16.msra.mxu0 %v3976
    %5336 = vmatprep.mubr.bf16.mxu0 %v1002
    %5337 = vmatmul.mubr.bf16.gmra.mrb[0].mxu0 %v988
    %v5338 = vpop.f32.mrb[0].mxu0
    %v5339 = vadd.f32 %v5298, %v5338
    %v5340 = vpop.f32.mrb[0].mxu0
    %v5341 = vadd.f32 %v5300, %v5340
    %v5342 = vpop.f32.mrb[0].mxu0
    %v5343 = vpop.f32.mrb[0].mxu0
    %5344 = vdwg.mxu0
    %5345 = vmatprep.subr.bf16.mxu0 %v3981
    %5346 = vmatpush1.bf16.msra.mxu0 %v3980
    %5347 = vmatprep.subr.bf16.mxu0 %v3985
    %5348 = vmatpush1.bf16.msra.mxu0 %v3984
    %5349 = vmatprep.subr.bf16.mxu0 %v3989
    %5350 = vmatpush1.bf16.msra.mxu0 %v3988
    %5351 = vmatprep.subr.bf16.mxu0 %v3993
    %5352 = vmatpush1.bf16.msra.mxu0 %v3992
    %5353 = vmatprep.subr.bf16.mxu0 %v3997
    %5354 = vmatpush1.bf16.msra.mxu0 %v3996
    %5355 = vmatprep.subr.bf16.mxu0 %v4001
    %5356 = vmatpush1.bf16.msra.mxu0 %v4000
    %5357 = vmatprep.subr.bf16.mxu0 %v4005
    %5358 = vmatpush1.bf16.msra.mxu0 %v4004
    %5359 = vmatprep.subr.bf16.mxu0 %v4009
    %5360 = vmatpush1.bf16.msra.mxu0 %v4008
    %5361 = vmatprep.subr.bf16.mxu0 %v4013
    %5362 = vmatpush1.bf16.msra.mxu0 %v4012
    %5363 = vmatprep.subr.bf16.mxu0 %v4017
    %5364 = vmatpush1.bf16.msra.mxu0 %v4016
    %5365 = vmatprep.subr.bf16.mxu0 %v4021
    %5366 = vmatpush1.bf16.msra.mxu0 %v4020
    %5367 = vmatprep.subr.bf16.mxu0 %v4025
    %5368 = vmatpush1.bf16.msra.mxu0 %v4024
    %5369 = vmatprep.subr.bf16.mxu0 %v4029
    %5370 = vmatpush1.bf16.msra.mxu0 %v4028
    %5371 = vmatprep.subr.bf16.mxu0 %v4033
    %5372 = vmatpush1.bf16.msra.mxu0 %v4032
    %5373 = vmatprep.subr.bf16.mxu0 %v4037
    %5374 = vmatpush1.bf16.msra.mxu0 %v4036
    %5375 = vmatprep.subr.bf16.mxu0 %v4041
    %5376 = vmatpush1.bf16.msra.mxu0 %v4040
    %5377 = vmatprep.mubr.bf16.mxu0 %v1012
    %5378 = vmatmul.mubr.bf16.gmra.mrb[0].mxu0 %v1010
    %v5379 = vpop.f32.mrb[0].mxu0
    %v5380 = vadd.f32 %v5339, %v5379
    %v5381 = vpop.f32.mrb[0].mxu0
    %v5382 = vadd.f32 %v5341, %v5381
    %v5383 = vpop.f32.mrb[0].mxu0
    %v5384 = vpop.f32.mrb[0].mxu0
    %5385 = vdwg.mxu0
    %5386 = vmatprep.subr.bf16.mxu0 %v4045
    %5387 = vmatpush1.bf16.msra.mxu0 %v4044
    %5388 = vmatprep.subr.bf16.mxu0 %v4049
    %5389 = vmatpush1.bf16.msra.mxu0 %v4048
    %5390 = vmatprep.subr.bf16.mxu0 %v4053
    %5391 = vmatpush1.bf16.msra.mxu0 %v4052
    %5392 = vmatprep.subr.bf16.mxu0 %v4057
    %5393 = vmatpush1.bf16.msra.mxu0 %v4056
    %5394 = vmatprep.subr.bf16.mxu0 %v4061
    %5395 = vmatpush1.bf16.msra.mxu0 %v4060
    %5396 = vmatprep.subr.bf16.mxu0 %v4065
    %5397 = vmatpush1.bf16.msra.mxu0 %v4064
    %5398 = vmatprep.subr.bf16.mxu0 %v4069
    %5399 = vmatpush1.bf16.msra.mxu0 %v4068
    %5400 = vmatprep.subr.bf16.mxu0 %v4073
    %5401 = vmatpush1.bf16.msra.mxu0 %v4072
    %5402 = vmatprep.subr.bf16.mxu0 %v4077
    %5403 = vmatpush1.bf16.msra.mxu0 %v4076
    %5404 = vmatprep.subr.bf16.mxu0 %v4081
    %5405 = vmatpush1.bf16.msra.mxu0 %v4080
    %5406 = vmatprep.subr.bf16.mxu0 %v4085
    %5407 = vmatpush1.bf16.msra.mxu0 %v4084
    %5408 = vmatprep.subr.bf16.mxu0 %v4089
    %5409 = vmatpush1.bf16.msra.mxu0 %v4088
    %5410 = vmatprep.subr.bf16.mxu0 %v4093
    %5411 = vmatpush1.bf16.msra.mxu0 %v4092
    %5412 = vmatprep.subr.bf16.mxu0 %v4097
    %5413 = vmatpush1.bf16.msra.mxu0 %v4096
    %5414 = vmatprep.subr.bf16.mxu0 %v4101
    %5415 = vmatpush1.bf16.msra.mxu0 %v4100
    %5416 = vmatprep.subr.bf16.mxu0 %v4105
    %5417 = vmatpush1.bf16.msra.mxu0 %v4104
    %5418 = vmatprep.mubr.bf16.mxu0 %v1009
    %5419 = vmatmul.mubr.bf16.gmra.mrb[0].mxu0 %v995
    %v5420 = vpop.f32.mrb[0].mxu0
    %v5421 = vadd.f32 %v5380, %v5420
    %v5422 = vpop.f32.mrb[0].mxu0
    %v5423 = vadd.f32 %v5382, %v5422
    %v5424 = vpop.f32.mrb[0].mxu0
    %v5425 = vpop.f32.mrb[0].mxu0
    %5426 = vdwg.mxu0
    %5427 = vmatprep.subr.bf16.mxu0 %v4109
    %5428 = vmatpush1.bf16.msra.mxu0 %v4108
    %5429 = vmatprep.subr.bf16.mxu0 %v4113
    %5430 = vmatpush1.bf16.msra.mxu0 %v4112
    %5431 = vmatprep.subr.bf16.mxu0 %v4117
    %5432 = vmatpush1.bf16.msra.mxu0 %v4116
    %5433 = vmatprep.subr.bf16.mxu0 %v4121
    %5434 = vmatpush1.bf16.msra.mxu0 %v4120
    %5435 = vmatprep.subr.bf16.mxu0 %v4125
    %5436 = vmatpush1.bf16.msra.mxu0 %v4124
    %5437 = vmatprep.subr.bf16.mxu0 %v4129
    %5438 = vmatpush1.bf16.msra.mxu0 %v4128
    %5439 = vmatprep.subr.bf16.mxu0 %v4133
    %5440 = vmatpush1.bf16.msra.mxu0 %v4132
    %5441 = vmatprep.subr.bf16.mxu0 %v4137
    %5442 = vmatpush1.bf16.msra.mxu0 %v4136
    %5443 = vmatprep.subr.bf16.mxu0 %v4141
    %5444 = vmatpush1.bf16.msra.mxu0 %v4140
    %5445 = vmatprep.subr.bf16.mxu0 %v4145
    %5446 = vmatpush1.bf16.msra.mxu0 %v4144
    %5447 = vmatprep.subr.bf16.mxu0 %v4149
    %5448 = vmatpush1.bf16.msra.mxu0 %v4148
    %5449 = vmatprep.subr.bf16.mxu0 %v4153
    %5450 = vmatpush1.bf16.msra.mxu0 %v4152
    %5451 = vmatprep.subr.bf16.mxu0 %v4157
    %5452 = vmatpush1.bf16.msra.mxu0 %v4156
    %5453 = vmatprep.subr.bf16.mxu0 %v4161
    %5454 = vmatpush1.bf16.msra.mxu0 %v4160
    %5455 = vmatprep.subr.bf16.mxu0 %v4165
    %5456 = vmatpush1.bf16.msra.mxu0 %v4164
    %5457 = vmatprep.subr.bf16.mxu0 %v4169
    %5458 = vmatpush1.bf16.msra.mxu0 %v4168
    %5459 = vmatprep.mubr.bf16.mxu0 %v1013
    %5460 = vmatmul.mubr.bf16.gmra.mrb[0].mxu0 %v1011
    %v5461 = vpop.f32.mrb[0].mxu0
    %v5462 = vadd.f32 %v5421, %v5461
    %v5463 = vpop.f32.mrb[0].mxu0
    %v5464 = vadd.f32 %v5423, %v5463
    %v5465 = vpop.f32.mrb[0].mxu0
    %v5466 = vpop.f32.mrb[0].mxu0
    %5467 = vdwg.mxu0
    %5468 = vmatprep.subr.bf16.mxu0 %v4173
    %5469 = vmatpush1.bf16.msra.mxu0 %v4172
    %5470 = vmatprep.subr.bf16.mxu0 %v4177
    %5471 = vmatpush1.bf16.msra.mxu0 %v4176
    %5472 = vmatprep.subr.bf16.mxu0 %v4181
    %5473 = vmatpush1.bf16.msra.mxu0 %v4180
    %5474 = vmatprep.subr.bf16.mxu0 %v4185
    %5475 = vmatpush1.bf16.msra.mxu0 %v4184
    %5476 = vmatprep.subr.bf16.mxu0 0
    %5477 = vmatpush1.bf16.msra.mxu0 0
    %5478 = vmatprep.subr.bf16.mxu0 0
    %5479 = vmatpush1.bf16.msra.mxu0 0
    %5480 = vmatprep.subr.bf16.mxu0 0
    %5481 = vmatpush1.bf16.msra.mxu0 0
    %5482 = vmatprep.subr.bf16.mxu0 0
    %5483 = vmatpush1.bf16.msra.mxu0 0
    %5484 = vmatprep.subr.bf16.mxu0 0
    %5485 = vmatpush1.bf16.msra.mxu0 0
    %5486 = vmatprep.subr.bf16.mxu0 0
    %5487 = vmatpush1.bf16.msra.mxu0 0
    %5488 = vmatprep.subr.bf16.mxu0 0
    %5489 = vmatpush1.bf16.msra.mxu0 0
    %5490 = vmatprep.subr.bf16.mxu0 0
    %5491 = vmatpush1.bf16.msra.mxu0 0
    %5492 = vmatprep.subr.bf16.mxu0 0
    %5493 = vmatpush1.bf16.msra.mxu0 0
    %5494 = vmatprep.subr.bf16.mxu0 0
    %5495 = vmatpush1.bf16.msra.mxu0 0
    %5496 = vmatprep.subr.bf16.mxu0 0
    %5497 = vmatpush1.bf16.msra.mxu0 0
    %5498 = vmatprep.subr.bf16.mxu0 0
    %5499 = vmatpush1.bf16.msra.mxu0 0
    %5500 = vmatprep.mubr.bf16.mxu0 0
    %5501 = vmatmul.mubr.bf16.gmra.mrb[0].mxu0 %v4974
    %v5502 = vpop.f32.mrb[0].mxu0
    %v5503 = vadd.f32 %v5462, %v5502
    %v5504 = vpop.f32.mrb[0].mxu0
    %v5505 = vadd.f32 %v5464, %v5504
    %v5506 = vpop.f32.mrb[0].mxu0
    %v5507 = vpop.f32.mrb[0].mxu0
    %5508 = vdwg.mxu0
    %5509 = vmatprep.subr.bf16.mxu0 %v3407
    %5510 = vmatpush1.bf16.msra.mxu0 %v3406
    %5511 = vmatprep.subr.bf16.mxu0 %v3411
    %5512 = vmatpush1.bf16.msra.mxu0 %v3410
    %5513 = vmatprep.subr.bf16.mxu0 %v3415
    %5514 = vmatpush1.bf16.msra.mxu0 %v3414
    %5515 = vmatprep.subr.bf16.mxu0 %v3419
    %5516 = vmatpush1.bf16.msra.mxu0 %v3418
    %5517 = vmatprep.subr.bf16.mxu0 %v3423
    %5518 = vmatpush1.bf16.msra.mxu0 %v3422
    %5519 = vmatprep.subr.bf16.mxu0 %v3427
    %5520 = vmatpush1.bf16.msra.mxu0 %v3426
    %5521 = vmatprep.subr.bf16.mxu0 %v3431
    %5522 = vmatpush1.bf16.msra.mxu0 %v3430
    %5523 = vmatprep.subr.bf16.mxu0 %v3435
    %5524 = vmatpush1.bf16.msra.mxu0 %v3434
    %5525 = vmatprep.subr.bf16.mxu0 %v3439
    %5526 = vmatpush1.bf16.msra.mxu0 %v3438
    %5527 = vmatprep.subr.bf16.mxu0 %v3443
    %5528 = vmatpush1.bf16.msra.mxu0 %v3442
    %5529 = vmatprep.subr.bf16.mxu0 %v3447
    %5530 = vmatpush1.bf16.msra.mxu0 %v3446
    %5531 = vmatprep.subr.bf16.mxu0 %v3451
    %5532 = vmatpush1.bf16.msra.mxu0 %v3450
    %5533 = vmatprep.subr.bf16.mxu0 %v3455
    %5534 = vmatpush1.bf16.msra.mxu0 %v3454
    %5535 = vmatprep.subr.bf16.mxu0 %v3459
    %5536 = vmatpush1.bf16.msra.mxu0 %v3458
    %5537 = vmatprep.subr.bf16.mxu0 %v3463
    %5538 = vmatpush1.bf16.msra.mxu0 %v3462
    %5539 = vmatprep.subr.bf16.mxu0 %v3467
    %5540 = vmatpush1.bf16.msra.mxu0 %v3466
    %5541 = vmatprep.mubr.bf16.mxu0 %v904
    %5542 = vmatmul.mubr.bf16.gmra.mrb[0].mxu0 %v890
    %v5543 = vpop.f32.mrb[0].mxu0
    %v5544 = vadd.f32 %v854, %v5543
    %v5545 = vpop.f32.mrb[0].mxu0
    %v5546 = vadd.f32 %v858, %v5545
    %v5547 = vpop.f32.mrb[0].mxu0
    %v5548 = vpop.f32.mrb[0].mxu0
    %5549 = vdwg.mxu0
    %5550 = vmatprep.subr.bf16.mxu0 %v3471
    %5551 = vmatpush1.bf16.msra.mxu0 %v3470
    %5552 = vmatprep.subr.bf16.mxu0 %v3475
    %5553 = vmatpush1.bf16.msra.mxu0 %v3474
    %5554 = vmatprep.subr.bf16.mxu0 %v3479
    %5555 = vmatpush1.bf16.msra.mxu0 %v3478
    %5556 = vmatprep.subr.bf16.mxu0 %v3483
    %5557 = vmatpush1.bf16.msra.mxu0 %v3482
    %5558 = vmatprep.subr.bf16.mxu0 %v3487
    %5559 = vmatpush1.bf16.msra.mxu0 %v3486
    %5560 = vmatprep.subr.bf16.mxu0 %v3491
    %5561 = vmatpush1.bf16.msra.mxu0 %v3490
    %5562 = vmatprep.subr.bf16.mxu0 %v3495
    %5563 = vmatpush1.bf16.msra.mxu0 %v3494
    %5564 = vmatprep.subr.bf16.mxu0 %v3499
    %5565 = vmatpush1.bf16.msra.mxu0 %v3498
    %5566 = vmatprep.subr.bf16.mxu0 %v3503
    %5567 = vmatpush1.bf16.msra.mxu0 %v3502
    %5568 = vmatprep.subr.bf16.mxu0 %v3507
    %5569 = vmatpush1.bf16.msra.mxu0 %v3506
    %5570 = vmatprep.subr.bf16.mxu0 %v3511
    %5571 = vmatpush1.bf16.msra.mxu0 %v3510
    %5572 = vmatprep.subr.bf16.mxu0 %v3515
    %5573 = vmatpush1.bf16.msra.mxu0 %v3514
    %5574 = vmatprep.subr.bf16.mxu0 %v3519
    %5575 = vmatpush1.bf16.msra.mxu0 %v3518
    %5576 = vmatprep.subr.bf16.mxu0 %v3523
    %5577 = vmatpush1.bf16.msra.mxu0 %v3522
    %5578 = vmatprep.subr.bf16.mxu0 %v3527
    %5579 = vmatpush1.bf16.msra.mxu0 %v3526
    %5580 = vmatprep.subr.bf16.mxu0 %v3531
    %5581 = vmatpush1.bf16.msra.mxu0 %v3530
    %5582 = vmatprep.mubr.bf16.mxu0 %v914
    %5583 = vmatmul.mubr.bf16.gmra.mrb[0].mxu0 %v912
    %v5584 = vpop.f32.mrb[0].mxu0
    %v5585 = vadd.f32 %v5544, %v5584
    %v5586 = vpop.f32.mrb[0].mxu0
    %v5587 = vadd.f32 %v5546, %v5586
    %v5588 = vpop.f32.mrb[0].mxu0
    %v5589 = vpop.f32.mrb[0].mxu0
    %5590 = vdwg.mxu0
    %5591 = vmatprep.subr.bf16.mxu0 %v3535
    %5592 = vmatpush1.bf16.msra.mxu0 %v3534
    %5593 = vmatprep.subr.bf16.mxu0 %v3539
    %5594 = vmatpush1.bf16.msra.mxu0 %v3538
    %5595 = vmatprep.subr.bf16.mxu0 %v3543
    %5596 = vmatpush1.bf16.msra.mxu0 %v3542
    %5597 = vmatprep.subr.bf16.mxu0 %v3547
    %5598 = vmatpush1.bf16.msra.mxu0 %v3546
    %5599 = vmatprep.subr.bf16.mxu0 %v3551
    %5600 = vmatpush1.bf16.msra.mxu0 %v3550
    %5601 = vmatprep.subr.bf16.mxu0 %v3555
    %5602 = vmatpush1.bf16.msra.mxu0 %v3554
    %5603 = vmatprep.subr.bf16.mxu0 %v3559
    %5604 = vmatpush1.bf16.msra.mxu0 %v3558
    %5605 = vmatprep.subr.bf16.mxu0 %v3563
    %5606 = vmatpush1.bf16.msra.mxu0 %v3562
    %5607 = vmatprep.subr.bf16.mxu0 %v3567
    %5608 = vmatpush1.bf16.msra.mxu0 %v3566
    %5609 = vmatprep.subr.bf16.mxu0 %v3571
    %5610 = vmatpush1.bf16.msra.mxu0 %v3570
    %5611 = vmatprep.subr.bf16.mxu0 %v3575
    %5612 = vmatpush1.bf16.msra.mxu0 %v3574
    %5613 = vmatprep.subr.bf16.mxu0 %v3579
    %5614 = vmatpush1.bf16.msra.mxu0 %v3578
    %5615 = vmatprep.subr.bf16.mxu0 %v3583
    %5616 = vmatpush1.bf16.msra.mxu0 %v3582
    %5617 = vmatprep.subr.bf16.mxu0 %v3587
    %5618 = vmatpush1.bf16.msra.mxu0 %v3586
    %5619 = vmatprep.subr.bf16.mxu0 %v3591
    %5620 = vmatpush1.bf16.msra.mxu0 %v3590
    %5621 = vmatprep.subr.bf16.mxu0 %v3595
    %5622 = vmatpush1.bf16.msra.mxu0 %v3594
    %5623 = vmatprep.mubr.bf16.mxu0 %v911
    %5624 = vmatmul.mubr.bf16.gmra.mrb[0].mxu0 %v897
    %v5625 = vpop.f32.mrb[0].mxu0
    %v5626 = vadd.f32 %v5585, %v5625
    %v5627 = vpop.f32.mrb[0].mxu0
    %v5628 = vadd.f32 %v5587, %v5627
    %v5629 = vpop.f32.mrb[0].mxu0
    %v5630 = vpop.f32.mrb[0].mxu0
    %5631 = vdwg.mxu0
    %5632 = vmatprep.subr.bf16.mxu0 %v3599
    %5633 = vmatpush1.bf16.msra.mxu0 %v3598
    %5634 = vmatprep.subr.bf16.mxu0 %v3603
    %5635 = vmatpush1.bf16.msra.mxu0 %v3602
    %5636 = vmatprep.subr.bf16.mxu0 %v3607
    %5637 = vmatpush1.bf16.msra.mxu0 %v3606
    %5638 = vmatprep.subr.bf16.mxu0 %v3611
    %5639 = vmatpush1.bf16.msra.mxu0 %v3610
    %5640 = vmatprep.subr.bf16.mxu0 %v3615
    %5641 = vmatpush1.bf16.msra.mxu0 %v3614
    %5642 = vmatprep.subr.bf16.mxu0 %v3619
    %5643 = vmatpush1.bf16.msra.mxu0 %v3618
    %5644 = vmatprep.subr.bf16.mxu0 %v3623
    %5645 = vmatpush1.bf16.msra.mxu0 %v3622
    %5646 = vmatprep.subr.bf16.mxu0 %v3627
    %5647 = vmatpush1.bf16.msra.mxu0 %v3626
    %5648 = vmatprep.subr.bf16.mxu0 %v3631
    %5649 = vmatpush1.bf16.msra.mxu0 %v3630
    %5650 = vmatprep.subr.bf16.mxu0 %v3635
    %5651 = vmatpush1.bf16.msra.mxu0 %v3634
    %5652 = vmatprep.subr.bf16.mxu0 %v3639
    %5653 = vmatpush1.bf16.msra.mxu0 %v3638
    %5654 = vmatprep.subr.bf16.mxu0 %v3643
    %5655 = vmatpush1.bf16.msra.mxu0 %v3642
    %5656 = vmatprep.subr.bf16.mxu0 %v3647
    %5657 = vmatpush1.bf16.msra.mxu0 %v3646
    %5658 = vmatprep.subr.bf16.mxu0 %v3651
    %5659 = vmatpush1.bf16.msra.mxu0 %v3650
    %5660 = vmatprep.subr.bf16.mxu0 %v3655
    %5661 = vmatpush1.bf16.msra.mxu0 %v3654
    %5662 = vmatprep.subr.bf16.mxu0 %v3659
    %5663 = vmatpush1.bf16.msra.mxu0 %v3658
    %5664 = vmatprep.mubr.bf16.mxu0 %v915
    %5665 = vmatmul.mubr.bf16.gmra.mrb[0].mxu0 %v913
    %v5666 = vpop.f32.mrb[0].mxu0
    %v5667 = vadd.f32 %v5626, %v5666
    %v5668 = vpop.f32.mrb[0].mxu0
    %v5669 = vadd.f32 %v5628, %v5668
    %v5670 = vpop.f32.mrb[0].mxu0
    %v5671 = vpop.f32.mrb[0].mxu0
    %5672 = vdwg.mxu0
    %5673 = vmatprep.subr.bf16.mxu0 %v3663
    %5674 = vmatpush1.bf16.msra.mxu0 %v3662
    %5675 = vmatprep.subr.bf16.mxu0 %v3667
    %5676 = vmatpush1.bf16.msra.mxu0 %v3666
    %5677 = vmatprep.subr.bf16.mxu0 %v3671
    %5678 = vmatpush1.bf16.msra.mxu0 %v3670
    %5679 = vmatprep.subr.bf16.mxu0 %v3675
    %5680 = vmatpush1.bf16.msra.mxu0 %v3674
    %5681 = vmatprep.subr.bf16.mxu0 %v3679
    %5682 = vmatpush1.bf16.msra.mxu0 %v3678
    %5683 = vmatprep.subr.bf16.mxu0 %v3683
    %5684 = vmatpush1.bf16.msra.mxu0 %v3682
    %5685 = vmatprep.subr.bf16.mxu0 %v3687
    %5686 = vmatpush1.bf16.msra.mxu0 %v3686
    %5687 = vmatprep.subr.bf16.mxu0 %v3691
    %5688 = vmatpush1.bf16.msra.mxu0 %v3690
    %5689 = vmatprep.subr.bf16.mxu0 %v3695
    %5690 = vmatpush1.bf16.msra.mxu0 %v3694
    %5691 = vmatprep.subr.bf16.mxu0 %v3699
    %5692 = vmatpush1.bf16.msra.mxu0 %v3698
    %5693 = vmatprep.subr.bf16.mxu0 %v3703
    %5694 = vmatpush1.bf16.msra.mxu0 %v3702
    %5695 = vmatprep.subr.bf16.mxu0 %v3707
    %5696 = vmatpush1.bf16.msra.mxu0 %v3706
    %5697 = vmatprep.subr.bf16.mxu0 %v3711
    %5698 = vmatpush1.bf16.msra.mxu0 %v3710
    %5699 = vmatprep.subr.bf16.mxu0 %v3715
    %5700 = vmatpush1.bf16.msra.mxu0 %v3714
    %5701 = vmatprep.subr.bf16.mxu0 %v3719
    %5702 = vmatpush1.bf16.msra.mxu0 %v3718
    %5703 = vmatprep.subr.bf16.mxu0 %v3723
    %5704 = vmatpush1.bf16.msra.mxu0 %v3722
    %5705 = vmatprep.mubr.bf16.mxu0 %v953
    %5706 = vmatmul.mubr.bf16.gmra.mrb[0].mxu0 %v939
    %v5707 = vpop.f32.mrb[0].mxu0
    %v5708 = vadd.f32 %v5667, %v5707
    %v5709 = vpop.f32.mrb[0].mxu0
    %v5710 = vadd.f32 %v5669, %v5709
    %v5711 = vpop.f32.mrb[0].mxu0
    %v5712 = vpop.f32.mrb[0].mxu0
    %5713 = vdwg.mxu0
    %5714 = vmatprep.subr.bf16.mxu0 %v3727
    %5715 = vmatpush1.bf16.msra.mxu0 %v3726
    %5716 = vmatprep.subr.bf16.mxu0 %v3731
    %5717 = vmatpush1.bf16.msra.mxu0 %v3730
    %5718 = vmatprep.subr.bf16.mxu0 %v3735
    %5719 = vmatpush1.bf16.msra.mxu0 %v3734
    %5720 = vmatprep.subr.bf16.mxu0 %v3739
    %5721 = vmatpush1.bf16.msra.mxu0 %v3738
    %5722 = vmatprep.subr.bf16.mxu0 %v3743
    %5723 = vmatpush1.bf16.msra.mxu0 %v3742
    %5724 = vmatprep.subr.bf16.mxu0 %v3747
    %5725 = vmatpush1.bf16.msra.mxu0 %v3746
    %5726 = vmatprep.subr.bf16.mxu0 %v3751
    %5727 = vmatpush1.bf16.msra.mxu0 %v3750
    %5728 = vmatprep.subr.bf16.mxu0 %v3755
    %5729 = vmatpush1.bf16.msra.mxu0 %v3754
    %5730 = vmatprep.subr.bf16.mxu0 %v3759
    %5731 = vmatpush1.bf16.msra.mxu0 %v3758
    %5732 = vmatprep.subr.bf16.mxu0 %v3763
    %5733 = vmatpush1.bf16.msra.mxu0 %v3762
    %5734 = vmatprep.subr.bf16.mxu0 %v3767
    %5735 = vmatpush1.bf16.msra.mxu0 %v3766
    %5736 = vmatprep.subr.bf16.mxu0 %v3771
    %5737 = vmatpush1.bf16.msra.mxu0 %v3770
    %5738 = vmatprep.subr.bf16.mxu0 %v3775
    %5739 = vmatpush1.bf16.msra.mxu0 %v3774
    %5740 = vmatprep.subr.bf16.mxu0 %v3779
    %5741 = vmatpush1.bf16.msra.mxu0 %v3778
    %5742 = vmatprep.subr.bf16.mxu0 %v3783
    %5743 = vmatpush1.bf16.msra.mxu0 %v3782
    %5744 = vmatprep.subr.bf16.mxu0 %v3787
    %5745 = vmatpush1.bf16.msra.mxu0 %v3786
    %5746 = vmatprep.mubr.bf16.mxu0 %v963
    %5747 = vmatmul.mubr.bf16.gmra.mrb[0].mxu0 %v961
    %v5748 = vpop.f32.mrb[0].mxu0
    %v5749 = vadd.f32 %v5708, %v5748
    %v5750 = vpop.f32.mrb[0].mxu0
    %v5751 = vadd.f32 %v5710, %v5750
    %v5752 = vpop.f32.mrb[0].mxu0
    %v5753 = vpop.f32.mrb[0].mxu0
    %5754 = vdwg.mxu0
    %5755 = vmatprep.subr.bf16.mxu0 %v3791
    %5756 = vmatpush1.bf16.msra.mxu0 %v3790
    %5757 = vmatprep.subr.bf16.mxu0 %v3795
    %5758 = vmatpush1.bf16.msra.mxu0 %v3794
    %5759 = vmatprep.subr.bf16.mxu0 %v3799
    %5760 = vmatpush1.bf16.msra.mxu0 %v3798
    %5761 = vmatprep.subr.bf16.mxu0 %v3803
    %5762 = vmatpush1.bf16.msra.mxu0 %v3802
    %5763 = vmatprep.subr.bf16.mxu0 %v3807
    %5764 = vmatpush1.bf16.msra.mxu0 %v3806
    %5765 = vmatprep.subr.bf16.mxu0 %v3811
    %5766 = vmatpush1.bf16.msra.mxu0 %v3810
    %5767 = vmatprep.subr.bf16.mxu0 %v3815
    %5768 = vmatpush1.bf16.msra.mxu0 %v3814
    %5769 = vmatprep.subr.bf16.mxu0 %v3819
    %5770 = vmatpush1.bf16.msra.mxu0 %v3818
    %5771 = vmatprep.subr.bf16.mxu0 %v3823
    %5772 = vmatpush1.bf16.msra.mxu0 %v3822
    %5773 = vmatprep.subr.bf16.mxu0 %v3827
    %5774 = vmatpush1.bf16.msra.mxu0 %v3826
    %5775 = vmatprep.subr.bf16.mxu0 %v3831
    %5776 = vmatpush1.bf16.msra.mxu0 %v3830
    %5777 = vmatprep.subr.bf16.mxu0 %v3835
    %5778 = vmatpush1.bf16.msra.mxu0 %v3834
    %5779 = vmatprep.subr.bf16.mxu0 %v3839
    %5780 = vmatpush1.bf16.msra.mxu0 %v3838
    %5781 = vmatprep.subr.bf16.mxu0 %v3843
    %5782 = vmatpush1.bf16.msra.mxu0 %v3842
    %5783 = vmatprep.subr.bf16.mxu0 %v3847
    %5784 = vmatpush1.bf16.msra.mxu0 %v3846
    %5785 = vmatprep.subr.bf16.mxu0 %v3851
    %5786 = vmatpush1.bf16.msra.mxu0 %v3850
    %5787 = vmatprep.mubr.bf16.mxu0 %v960
    %5788 = vmatmul.mubr.bf16.gmra.mrb[0].mxu0 %v946
    %v5789 = vpop.f32.mrb[0].mxu0
    %v5790 = vadd.f32 %v5749, %v5789
    %v5791 = vpop.f32.mrb[0].mxu0
    %v5792 = vadd.f32 %v5751, %v5791
    %v5793 = vpop.f32.mrb[0].mxu0
    %v5794 = vpop.f32.mrb[0].mxu0
    %5795 = vdwg.mxu0
    %5796 = vmatprep.subr.bf16.mxu0 %v3855
    %5797 = vmatpush1.bf16.msra.mxu0 %v3854
    %5798 = vmatprep.subr.bf16.mxu0 %v3859
    %5799 = vmatpush1.bf16.msra.mxu0 %v3858
    %5800 = vmatprep.subr.bf16.mxu0 %v3863
    %5801 = vmatpush1.bf16.msra.mxu0 %v3862
    %5802 = vmatprep.subr.bf16.mxu0 %v3867
    %5803 = vmatpush1.bf16.msra.mxu0 %v3866
    %5804 = vmatprep.subr.bf16.mxu0 %v3871
    %5805 = vmatpush1.bf16.msra.mxu0 %v3870
    %5806 = vmatprep.subr.bf16.mxu0 %v3875
    %5807 = vmatpush1.bf16.msra.mxu0 %v3874
    %5808 = vmatprep.subr.bf16.mxu0 %v3879
    %5809 = vmatpush1.bf16.msra.mxu0 %v3878
    %5810 = vmatprep.subr.bf16.mxu0 %v3883
    %5811 = vmatpush1.bf16.msra.mxu0 %v3882
    %5812 = vmatprep.subr.bf16.mxu0 %v3887
    %5813 = vmatpush1.bf16.msra.mxu0 %v3886
    %5814 = vmatprep.subr.bf16.mxu0 %v3891
    %5815 = vmatpush1.bf16.msra.mxu0 %v3890
    %5816 = vmatprep.subr.bf16.mxu0 %v3895
    %5817 = vmatpush1.bf16.msra.mxu0 %v3894
    %5818 = vmatprep.subr.bf16.mxu0 %v3899
    %5819 = vmatpush1.bf16.msra.mxu0 %v3898
    %5820 = vmatprep.subr.bf16.mxu0 %v3903
    %5821 = vmatpush1.bf16.msra.mxu0 %v3902
    %5822 = vmatprep.subr.bf16.mxu0 %v3907
    %5823 = vmatpush1.bf16.msra.mxu0 %v3906
    %5824 = vmatprep.subr.bf16.mxu0 %v3911
    %5825 = vmatpush1.bf16.msra.mxu0 %v3910
    %5826 = vmatprep.subr.bf16.mxu0 %v3915
    %5827 = vmatpush1.bf16.msra.mxu0 %v3914
    %5828 = vmatprep.mubr.bf16.mxu0 %v964
    %5829 = vmatmul.mubr.bf16.gmra.mrb[0].mxu0 %v962
    %v5830 = vpop.f32.mrb[0].mxu0
    %v5831 = vadd.f32 %v5790, %v5830
    %v5832 = vpop.f32.mrb[0].mxu0
    %v5833 = vadd.f32 %v5792, %v5832
    %v5834 = vpop.f32.mrb[0].mxu0
    %v5835 = vpop.f32.mrb[0].mxu0
    %5836 = vdwg.mxu0
    %5837 = vmatprep.subr.bf16.mxu0 %v3919
    %5838 = vmatpush1.bf16.msra.mxu0 %v3918
    %5839 = vmatprep.subr.bf16.mxu0 %v3923
    %5840 = vmatpush1.bf16.msra.mxu0 %v3922
    %5841 = vmatprep.subr.bf16.mxu0 %v3927
    %5842 = vmatpush1.bf16.msra.mxu0 %v3926
    %5843 = vmatprep.subr.bf16.mxu0 %v3931
    %5844 = vmatpush1.bf16.msra.mxu0 %v3930
    %5845 = vmatprep.subr.bf16.mxu0 %v3935
    %5846 = vmatpush1.bf16.msra.mxu0 %v3934
    %5847 = vmatprep.subr.bf16.mxu0 %v3939
    %5848 = vmatpush1.bf16.msra.mxu0 %v3938
    %5849 = vmatprep.subr.bf16.mxu0 %v3943
    %5850 = vmatpush1.bf16.msra.mxu0 %v3942
    %5851 = vmatprep.subr.bf16.mxu0 %v3947
    %5852 = vmatpush1.bf16.msra.mxu0 %v3946
    %5853 = vmatprep.subr.bf16.mxu0 %v3951
    %5854 = vmatpush1.bf16.msra.mxu0 %v3950
    %5855 = vmatprep.subr.bf16.mxu0 %v3955
    %5856 = vmatpush1.bf16.msra.mxu0 %v3954
    %5857 = vmatprep.subr.bf16.mxu0 %v3959
    %5858 = vmatpush1.bf16.msra.mxu0 %v3958
    %5859 = vmatprep.subr.bf16.mxu0 %v3963
    %5860 = vmatpush1.bf16.msra.mxu0 %v3962
    %5861 = vmatprep.subr.bf16.mxu0 %v3967
    %5862 = vmatpush1.bf16.msra.mxu0 %v3966
    %5863 = vmatprep.subr.bf16.mxu0 %v3971
    %5864 = vmatpush1.bf16.msra.mxu0 %v3970
    %5865 = vmatprep.subr.bf16.mxu0 %v3975
    %5866 = vmatpush1.bf16.msra.mxu0 %v3974
    %5867 = vmatprep.subr.bf16.mxu0 %v3979
    %5868 = vmatpush1.bf16.msra.mxu0 %v3978
    %5869 = vmatprep.mubr.bf16.mxu0 %v1002
    %5870 = vmatmul.mubr.bf16.gmra.mrb[0].mxu0 %v988
    %v5871 = vpop.f32.mrb[0].mxu0
    %v5872 = vadd.f32 %v5831, %v5871
    %v5873 = vpop.f32.mrb[0].mxu0
    %v5874 = vadd.f32 %v5833, %v5873
    %v5875 = vpop.f32.mrb[0].mxu0
    %v5876 = vpop.f32.mrb[0].mxu0
    %5877 = vdwg.mxu0
    %5878 = vmatprep.subr.bf16.mxu0 %v3983
    %5879 = vmatpush1.bf16.msra.mxu0 %v3982
    %5880 = vmatprep.subr.bf16.mxu0 %v3987
    %5881 = vmatpush1.bf16.msra.mxu0 %v3986
    %5882 = vmatprep.subr.bf16.mxu0 %v3991
    %5883 = vmatpush1.bf16.msra.mxu0 %v3990
    %5884 = vmatprep.subr.bf16.mxu0 %v3995
    %5885 = vmatpush1.bf16.msra.mxu0 %v3994
    %5886 = vmatprep.subr.bf16.mxu0 %v3999
    %5887 = vmatpush1.bf16.msra.mxu0 %v3998
    %5888 = vmatprep.subr.bf16.mxu0 %v4003
    %5889 = vmatpush1.bf16.msra.mxu0 %v4002
    %5890 = vmatprep.subr.bf16.mxu0 %v4007
    %5891 = vmatpush1.bf16.msra.mxu0 %v4006
    %5892 = vmatprep.subr.bf16.mxu0 %v4011
    %5893 = vmatpush1.bf16.msra.mxu0 %v4010
    %5894 = vmatprep.subr.bf16.mxu0 %v4015
    %5895 = vmatpush1.bf16.msra.mxu0 %v4014
    %5896 = vmatprep.subr.bf16.mxu0 %v4019
    %5897 = vmatpush1.bf16.msra.mxu0 %v4018
    %5898 = vmatprep.subr.bf16.mxu0 %v4023
    %5899 = vmatpush1.bf16.msra.mxu0 %v4022
    %5900 = vmatprep.subr.bf16.mxu0 %v4027
    %5901 = vmatpush1.bf16.msra.mxu0 %v4026
    %5902 = vmatprep.subr.bf16.mxu0 %v4031
    %5903 = vmatpush1.bf16.msra.mxu0 %v4030
    %5904 = vmatprep.subr.bf16.mxu0 %v4035
    %5905 = vmatpush1.bf16.msra.mxu0 %v4034
    %5906 = vmatprep.subr.bf16.mxu0 %v4039
    %5907 = vmatpush1.bf16.msra.mxu0 %v4038
    %5908 = vmatprep.subr.bf16.mxu0 %v4043
    %5909 = vmatpush1.bf16.msra.mxu0 %v4042
    %5910 = vmatprep.mubr.bf16.mxu0 %v1012
    %5911 = vmatmul.mubr.bf16.gmra.mrb[0].mxu0 %v1010
    %v5912 = vpop.f32.mrb[0].mxu0
    %v5913 = vadd.f32 %v5872, %v5912
    %v5914 = vpop.f32.mrb[0].mxu0
    %v5915 = vadd.f32 %v5874, %v5914
    %v5916 = vpop.f32.mrb[0].mxu0
    %v5917 = vpop.f32.mrb[0].mxu0
    %5918 = vdwg.mxu0
    %5919 = vmatprep.subr.bf16.mxu0 %v4047
    %5920 = vmatpush1.bf16.msra.mxu0 %v4046
    %5921 = vmatprep.subr.bf16.mxu0 %v4051
    %5922 = vmatpush1.bf16.msra.mxu0 %v4050
    %5923 = vmatprep.subr.bf16.mxu0 %v4055
    %5924 = vmatpush1.bf16.msra.mxu0 %v4054
    %5925 = vmatprep.subr.bf16.mxu0 %v4059
    %5926 = vmatpush1.bf16.msra.mxu0 %v4058
    %5927 = vmatprep.subr.bf16.mxu0 %v4063
    %5928 = vmatpush1.bf16.msra.mxu0 %v4062
    %5929 = vmatprep.subr.bf16.mxu0 %v4067
    %5930 = vmatpush1.bf16.msra.mxu0 %v4066
    %5931 = vmatprep.subr.bf16.mxu0 %v4071
    %5932 = vmatpush1.bf16.msra.mxu0 %v4070
    %5933 = vmatprep.subr.bf16.mxu0 %v4075
    %5934 = vmatpush1.bf16.msra.mxu0 %v4074
    %5935 = vmatprep.subr.bf16.mxu0 %v4079
    %5936 = vmatpush1.bf16.msra.mxu0 %v4078
    %5937 = vmatprep.subr.bf16.mxu0 %v4083
    %5938 = vmatpush1.bf16.msra.mxu0 %v4082
    %5939 = vmatprep.subr.bf16.mxu0 %v4087
    %5940 = vmatpush1.bf16.msra.mxu0 %v4086
    %5941 = vmatprep.subr.bf16.mxu0 %v4091
    %5942 = vmatpush1.bf16.msra.mxu0 %v4090
    %5943 = vmatprep.subr.bf16.mxu0 %v4095
    %5944 = vmatpush1.bf16.msra.mxu0 %v4094
    %5945 = vmatprep.subr.bf16.mxu0 %v4099
    %5946 = vmatpush1.bf16.msra.mxu0 %v4098
    %5947 = vmatprep.subr.bf16.mxu0 %v4103
    %5948 = vmatpush1.bf16.msra.mxu0 %v4102
    %5949 = vmatprep.subr.bf16.mxu0 %v4107
    %5950 = vmatpush1.bf16.msra.mxu0 %v4106
    %5951 = vmatprep.mubr.bf16.mxu0 %v1009
    %5952 = vmatmul.mubr.bf16.gmra.mrb[0].mxu0 %v995
    %v5953 = vpop.f32.mrb[0].mxu0
    %v5954 = vadd.f32 %v5913, %v5953
    %v5955 = vpop.f32.mrb[0].mxu0
    %v5956 = vadd.f32 %v5915, %v5955
    %v5957 = vpop.f32.mrb[0].mxu0
    %v5958 = vpop.f32.mrb[0].mxu0
    %5959 = vdwg.mxu0
    %5960 = vmatprep.subr.bf16.mxu0 %v4111
    %5961 = vmatpush1.bf16.msra.mxu0 %v4110
    %5962 = vmatprep.subr.bf16.mxu0 %v4115
    %5963 = vmatpush1.bf16.msra.mxu0 %v4114
    %5964 = vmatprep.subr.bf16.mxu0 %v4119
    %5965 = vmatpush1.bf16.msra.mxu0 %v4118
    %5966 = vmatprep.subr.bf16.mxu0 %v4123
    %5967 = vmatpush1.bf16.msra.mxu0 %v4122
    %5968 = vmatprep.subr.bf16.mxu0 %v4127
    %5969 = vmatpush1.bf16.msra.mxu0 %v4126
    %5970 = vmatprep.subr.bf16.mxu0 %v4131
    %5971 = vmatpush1.bf16.msra.mxu0 %v4130
    %5972 = vmatprep.subr.bf16.mxu0 %v4135
    %5973 = vmatpush1.bf16.msra.mxu0 %v4134
    %5974 = vmatprep.subr.bf16.mxu0 %v4139
    %5975 = vmatpush1.bf16.msra.mxu0 %v4138
    %5976 = vmatprep.subr.bf16.mxu0 %v4143
    %5977 = vmatpush1.bf16.msra.mxu0 %v4142
    %5978 = vmatprep.subr.bf16.mxu0 %v4147
    %5979 = vmatpush1.bf16.msra.mxu0 %v4146
    %5980 = vmatprep.subr.bf16.mxu0 %v4151
    %5981 = vmatpush1.bf16.msra.mxu0 %v4150
    %5982 = vmatprep.subr.bf16.mxu0 %v4155
    %5983 = vmatpush1.bf16.msra.mxu0 %v4154
    %5984 = vmatprep.subr.bf16.mxu0 %v4159
    %5985 = vmatpush1.bf16.msra.mxu0 %v4158
    %5986 = vmatprep.subr.bf16.mxu0 %v4163
    %5987 = vmatpush1.bf16.msra.mxu0 %v4162
    %5988 = vmatprep.subr.bf16.mxu0 %v4167
    %5989 = vmatpush1.bf16.msra.mxu0 %v4166
    %5990 = vmatprep.subr.bf16.mxu0 %v4171
    %5991 = vmatpush1.bf16.msra.mxu0 %v4170
    %5992 = vmatprep.mubr.bf16.mxu0 %v1013
    %5993 = vmatmul.mubr.bf16.gmra.mrb[0].mxu0 %v1011
    %v5994 = vpop.f32.mrb[0].mxu0
    %v5995 = vadd.f32 %v5954, %v5994
    %v5996 = vpop.f32.mrb[0].mxu0
    %v5997 = vadd.f32 %v5956, %v5996
    %v5998 = vpop.f32.mrb[0].mxu0
    %v5999 = vpop.f32.mrb[0].mxu0
    %6000 = vdwg.mxu0
    %6001 = vmatprep.subr.bf16.mxu0 %v4175
    %6002 = vmatpush1.bf16.msra.mxu0 %v4174
    %6003 = vmatprep.subr.bf16.mxu0 %v4179
    %6004 = vmatpush1.bf16.msra.mxu0 %v4178
    %6005 = vmatprep.subr.bf16.mxu0 %v4183
    %6006 = vmatpush1.bf16.msra.mxu0 %v4182
    %6007 = vmatprep.subr.bf16.mxu0 %v4187
    %6008 = vmatpush1.bf16.msra.mxu0 %v4186
    %6009 = vmatprep.subr.bf16.mxu0 0
    %6010 = vmatpush1.bf16.msra.mxu0 0
    %6011 = vmatprep.subr.bf16.mxu0 0
    %6012 = vmatpush1.bf16.msra.mxu0 0
    %6013 = vmatprep.subr.bf16.mxu0 0
    %6014 = vmatpush1.bf16.msra.mxu0 0
    %6015 = vmatprep.subr.bf16.mxu0 0
    %6016 = vmatpush1.bf16.msra.mxu0 0
    %6017 = vmatprep.subr.bf16.mxu0 0
    %6018 = vmatpush1.bf16.msra.mxu0 0
    %6019 = vmatprep.subr.bf16.mxu0 0
    %6020 = vmatpush1.bf16.msra.mxu0 0
    %6021 = vmatprep.subr.bf16.mxu0 0
    %6022 = vmatpush1.bf16.msra.mxu0 0
    %6023 = vmatprep.subr.bf16.mxu0 0
    %6024 = vmatpush1.bf16.msra.mxu0 0
    %6025 = vmatprep.subr.bf16.mxu0 0
    %6026 = vmatpush1.bf16.msra.mxu0 0
    %6027 = vmatprep.subr.bf16.mxu0 0
    %6028 = vmatpush1.bf16.msra.mxu0 0
    %6029 = vmatprep.subr.bf16.mxu0 0
    %6030 = vmatpush1.bf16.msra.mxu0 0
    %6031 = vmatprep.subr.bf16.mxu0 0
    %6032 = vmatpush1.bf16.msra.mxu0 0
    %6033 = vmatprep.mubr.bf16.mxu0 0
    %6034 = vmatmul.mubr.bf16.gmra.mrb[0].mxu0 %v4974
    %v6035 = vpop.f32.mrb[0].mxu0
    %v6036 = vadd.f32 %v5995, %v6035
    %v6037 = vpop.f32.mrb[0].mxu0
    %v6038 = vadd.f32 %v5997, %v6037
    %v6039 = vpop.f32.mrb[0].mxu0
    %v6040 = vpop.f32.mrb[0].mxu0
    %6041 = vdwg.mxu0
    %v6042 = vmax.f32 %v5503, 0.0
    %v6043 = vmax.f32 %v5505, 0.0
    %v6044 = vmax.f32 %v6036, 0.0
    %v6045 = vmax.f32 %v6038, 0.0
    %v6050 = vcombine.low %v6042, %v6043
    %v6051 = vcombine.low %v6044, %v6045
    %v6053 = vunpack.c.l.s4 1983009808
    %v6054 = vunpack.c.0.s8 %v6053
    %v6055 = vlaneseq
    %v6056 = vshrl.u32 %v6055, 7
    %v6057 = vsub.s32 %v6054, %v6056
    %v6058 = vrot.slane %v6050, %v6057
    %v6060 = vunpack.c.l.s4 1983009808
    %v6061 = vunpack.c.0.s8 %v6060
    %v6062 = vlaneseq
    %v6063 = vshrl.u32 %v6062, 7
    %v6064 = vsub.s32 %v6061, %v6063
    %v6065 = vrot.slane %v6051, %v6064
    %v6066 = vcombine.low %v6058, %v6065
    %6068 = vst [vmem:[#allocation8] sm:$0xff] %v6066
    // Predicated region
    $region26: #{atari_cnn_forward.7} parent=1 // pred_check
      _
    $region27: #{atari_cnn_forward.7} parent=1 // pred_check_branch
      %6070 = sbr.rel (0) target = $region29
    $region28: #{atari_cnn_forward.7} parent=1 // pred_region
      %s6072 = ssub.s32 128, 128
      %6073 = vsyncadd [#allocation4], %s6072
      %s6075 = sshll.u32 [#allocation8], 4
      %s6076 = int_to_ptr.vmem [resolvable:$true] %s6075
      %6078 = dma.vmem_to_hbm [thread:$0]  %s6076, 128, %s3, [#allocation4]
    $region29: #{atari_cnn_forward.7} parent=1 // pred_fallthru
      _
    // Predicated region
    $region30: #{atari_cnn_forward.7} parent=1 // pred_check
      _
    $region31: #{atari_cnn_forward.7} parent=1 // pred_check_branch
      %6080 = sbr.rel (0) target = $region33
    $region32: #{atari_cnn_forward.7} parent=1 // pred_region
      %6081 = dma.done [#allocation4], 128
    $region33: #{atari_cnn_forward.7} parent=1 // pred_fallthru
      _
    %6082 = vsyncpa [#allocation3], 1
    %6083 = vsyncpa [#allocation6], 1
    %6084 = vsyncpa [#allocation4], 1

</llo_original>
